<compile_context>
chip_gen: v5e
topology: v5e:2x2
jax: 0.10.0
libtpu: 0.0.40
codegen_flags: <defaults>
</compile_context>

<pallas_src>
import jax
import jax.numpy as jnp
from jax.experimental import pallas as pl
from jax.experimental.pallas import tpu as pltpu

BN_EPS = 1e-5
VMEM_LIMIT = 48 * 1024 * 1024  # explicit scoped-VMEM cap (above default limit)


def _vmem():
    return pl.BlockSpec(memory_space=pltpu.MemorySpace.VMEM)


# ---------------- ConvRNNBlock fused over the full time axis ----------------
def conv_rnn_seq_kernel(p_ref, wc_ref, bc_ref, gamma_ref, beta_ref,
                        wih_ref, whh_ref, bg_ref,
                        h_seq_ref, h_scr, c_scr):
    t = pl.program_id(0)

    @pl.when(t == 0)
    def _init():  # LSTMCell default h0 = c0 = 0
        h_scr[...] = jnp.zeros_like(h_scr)
        c_scr[...] = jnp.zeros_like(c_scr)

    # Conv2d(3x3, stride 2, pad 1) as im2col matmul: bf16 MXU feed, f32 accum.
    conv = jnp.dot(p_ref[...], wc_ref[...],
                   preferred_element_type=jnp.float32) + bc_ref[...]

    # BatchNorm2d, training-mode batch stats over the N*Ho*Wo rows.
    # Single pass: var = E[x^2] - mean^2; fold gamma*rsqrt into one scale.
    inv_m = 1.0 / conv.shape[0]
    mean = jnp.sum(conv, axis=0, keepdims=True) * inv_m
    ex2 = jnp.sum(conv * conv, axis=0, keepdims=True) * inv_m
    var = ex2 - mean * mean
    scale = gamma_ref[...] * jax.lax.rsqrt(var + BN_EPS)
    shift = beta_ref[...] - mean * scale
    act = jnp.maximum(conv * scale + shift, 0.0)          # ReLU

    # LSTMCell (PyTorch gate order i, f, g, o); per-gate lane-aligned matmuls.
    act_b = act.astype(jnp.bfloat16)
    h_prev_b = h_scr[...].astype(jnp.bfloat16)

    def gate(g):
        return (jnp.dot(act_b, wih_ref[g], preferred_element_type=jnp.float32)
                + jnp.dot(h_prev_b, whh_ref[g],
                          preferred_element_type=jnp.float32)
                + bg_ref[g])

    i_g = jax.nn.sigmoid(gate(0))
    f_g = jax.nn.sigmoid(gate(1))
    g_g = jnp.tanh(gate(2))
    o_g = jax.nn.sigmoid(gate(3))

    c_new = f_g * c_scr[...] + i_g * g_g
    h_new = o_g * jnp.tanh(c_new)
    c_scr[...] = c_new
    h_scr[...] = h_new
    h_seq_ref[...] = h_new.astype(h_seq_ref.dtype)


def conv_rnn_layer(patches_seq, lp):
    """patches_seq: (T, M, K) bf16 im2col for the whole sequence of one layer.

    Returns the layer's hidden-state sequence (T, M, out_ch) bf16.
    """
    t_steps, m, k = patches_seq.shape
    out_ch = lp["wc"].shape[1]

    flops_step = 2 * m * k * out_ch + 16 * m * out_ch * out_ch
    cost = pl.CostEstimate(
        flops=int(t_steps * flops_step),
        transcendentals=int(t_steps * 5 * m * out_ch),
        bytes_accessed=int(t_steps * (m * k + m * out_ch) * 2
                           + (k * out_ch + 8 * out_ch * out_ch) * 2
                           + 7 * out_ch * 4),
    )

    args = (patches_seq, lp["wc"], lp["bc"], lp["gamma"], lp["beta"],
            lp["wih"], lp["whh"], lp["bg"])
    return pl.pallas_call(
        conv_rnn_seq_kernel,
        out_shape=jax.ShapeDtypeStruct((t_steps, m, out_ch), jnp.bfloat16),
        grid_spec=pltpu.PrefetchScalarGridSpec(
            num_scalar_prefetch=0,
            grid=(t_steps,),
            in_specs=[
                pl.BlockSpec((None, m, k), lambda t: (t, 0, 0)),        # per-t
                pl.BlockSpec(lp["wc"].shape, lambda t: (0, 0)),         # resident
                pl.BlockSpec(lp["bc"].shape, lambda t: (0, 0)),
                pl.BlockSpec(lp["gamma"].shape, lambda t: (0, 0)),
                pl.BlockSpec(lp["beta"].shape, lambda t: (0, 0)),
                pl.BlockSpec(lp["wih"].shape, lambda t: (0, 0, 0)),
                pl.BlockSpec(lp["whh"].shape, lambda t: (0, 0, 0)),
                pl.BlockSpec(lp["bg"].shape, lambda t: (0, 0, 0)),
            ],
            out_specs=pl.BlockSpec((None, m, out_ch), lambda t: (t, 0, 0)),
            scratch_shapes=[pltpu.VMEM((m, out_ch), jnp.float32),   # h state
                            pltpu.VMEM((m, out_ch), jnp.float32)],  # c state
        ),
        compiler_params=pltpu.CompilerParams(
            dimension_semantics=("arbitrary",),       # sequential recurrence
            vmem_limit_bytes=VMEM_LIMIT),
        cost_estimate=cost,
    )(*args)


# ------------------------- FC head fused kernel ------------------------------
def head_kernel(x_ref, w1_ref, b1_ref, w2_ref, b2_ref, w3_ref, b3_ref, o_ref):
    # x_ref: (T, N, F) bf16 — temporal mean in f32, matmuls fed bf16.
    x = jnp.mean(x_ref[...].astype(jnp.float32), axis=0)       # (N, F)
    h1 = jnp.maximum(
        jnp.dot(x.astype(jnp.bfloat16), w1_ref[...],
                preferred_element_type=jnp.float32) + b1_ref[...], 0.0)
    # TODO(synk): nn.Dropout(0.5) here (and after fc2) is eval-mode identity;
    # training-mode dropout randomness is not reproduced.
    h2 = jnp.maximum(
        jnp.dot(h1.astype(jnp.bfloat16), w2_ref[...],
                preferred_element_type=jnp.float32) + b2_ref[...], 0.0)
    o_ref[...] = (jnp.dot(h2.astype(jnp.bfloat16), w3_ref[...],
                          preferred_element_type=jnp.float32) + b3_ref[...])


def head(feats_tnf, hp):
    n = feats_tnf.shape[1]
    ncls = hp["w3"].shape[1]
    args = (feats_tnf, hp["w1"], hp["b1"], hp["w2"], hp["b2"], hp["w3"], hp["b3"])
    return pl.pallas_call(
        head_kernel,
        out_shape=jax.ShapeDtypeStruct((n, ncls), jnp.float32),
        in_specs=[_vmem() for _ in args],
        out_specs=_vmem(),
        compiler_params=pltpu.CompilerParams(vmem_limit_bytes=VMEM_LIMIT),
    )(*args)


# ------------------------- JAX glue (NHWC, no transposes) --------------------
def extract_patches_seq(x_tnhwc, k=3, stride=2, pad=1):
    """im2col for the whole sequence.

    x: (T, N, H, W, C) -> (T, N*Ho*Wo, kh*kw*C); per-row feature order is
    (kh, kw, cin), matching the conv-weight layout below. Pure pad+slice+concat
    (no transposes), rows ordered (n, ho, wo).
    """
    t, n, h, w, c = x_tnhwc.shape
    ho = (h + 2 * pad - k) // stride + 1
    wo = (w + 2 * pad - k) // stride + 1
    xp = jnp.pad(x_tnhwc, ((0, 0), (0, 0), (pad, pad), (pad, pad), (0, 0)))
    cols = []
    for di in range(k):
        for dj in range(k):
            cols.append(xp[:, :, di:di + stride * ho:stride,
                               dj:dj + stride * wo:stride, :])
    p = jnp.concatenate(cols, axis=-1)                 # (T, N, Ho, Wo, 9*C)
    return p.reshape(t, n * ho * wo, k * k * c), ho, wo


def rcnn_forward(x, params):
    """x: (N, T, C, H, W) float32 (PyTorch layout at the boundary)."""
    n, t_steps = x.shape[0], x.shape[1]
    # Single NCHW->NHWC transpose at the boundary; bf16 inside the pipeline.
    cur = jnp.transpose(x, (1, 0, 3, 4, 2)).astype(jnp.bfloat16)  # (T,N,H,W,C)
    for lp in params["layers"]:
        patches, ho, wo = extract_patches_seq(cur)        # (T, M, K) bf16
        h_seq = conv_rnn_layer(patches, lp)               # (T, M, Cout) bf16
        cur = h_seq.reshape(t_steps, n, ho, wo, -1)       # pure reshape (NHWC)
    # Flatten per-sample features. Feature order is (ho, wo, c) vs. PyTorch's
    # (c, ho, wo); identical when Ho=Wo=1 (height=width=16), otherwise it is a
    # fixed column permutation of fc1's weight.
    feats = cur.reshape(t_steps, n, -1)                   # (T, N, F)
    return head(feats, params["head"])


def init_params(key, height=16, width=16, num_classes=8):
    chans = [(3, 16), (16, 32), (32, 64), (64, 128)]
    layers = []
    for cin, cout in chans:
        key, *ks = jax.random.split(key, 9)
        wc = jax.random.normal(ks[0], (cout, cin, 3, 3), jnp.float32) * 0.1
        wih = jax.random.normal(ks[4], (4 * cout, cout), jnp.float32) * 0.1
        whh = jax.random.normal(ks[5], (4 * cout, cout), jnp.float32) * 0.1
        bih = jax.random.normal(ks[6], (4 * cout,), jnp.float32) * 0.1
        bhh = jax.random.normal(ks[7], (4 * cout,), jnp.float32) * 0.1
        layers.append(dict(
            # (kh, kw, cin) -> cout row order to match NHWC im2col features.
            wc=wc.transpose(2, 3, 1, 0).reshape(9 * cin, cout).astype(jnp.bfloat16),
            bc=jax.random.normal(ks[1], (1, cout), jnp.float32) * 0.1,
            gamma=1.0 + 0.1 * jax.random.normal(ks[2], (1, cout), jnp.float32),
            beta=0.1 * jax.random.normal(ks[3], (1, cout), jnp.float32),
            # Per-gate (i, f, g, o) stacked weights: (4, in, hid), bf16.
            wih=wih.reshape(4, cout, cout).transpose(0, 2, 1).astype(jnp.bfloat16),
            whh=whh.reshape(4, cout, cout).transpose(0, 2, 1).astype(jnp.bfloat16),
            # bih + bhh pre-summed per gate: (4, 1, hid) f32.
            bg=(bih + bhh).reshape(4, 1, cout),
        ))
    flat = 128 * (height // 16) * (width // 16)
    key, k1, k2, k3, k4, k5, k6 = jax.random.split(key, 7)
    head_p = dict(
        w1=(jax.random.normal(k1, (1024, flat), jnp.float32) * 0.05).T.astype(jnp.bfloat16),
        b1=jax.random.normal(k2, (1, 1024), jnp.float32) * 0.05,
        w2=(jax.random.normal(k3, (256, 1024), jnp.float32) * 0.05).T.astype(jnp.bfloat16),
        b2=jax.random.normal(k4, (1, 256), jnp.float32) * 0.05,
        w3=(jax.random.normal(k5, (num_classes, 256), jnp.float32) * 0.05).T.astype(jnp.bfloat16),
        b3=jax.random.normal(k6, (1, num_classes), jnp.float32) * 0.05,
    )
    return dict(layers=layers, head=head_p)


if __name__ == "__main__":
    key = jax.random.PRNGKey(0)
    pkey, xkey = jax.random.split(key)
    # height=width=16 so flattened_size = 128*(16//16)*(16//16) = 128
    params = init_params(pkey, height=16, width=16, num_classes=8)
    x = jax.random.normal(xkey, (2, 3, 3, 16, 16), jnp.float32)  # (N, T, C, H, W)
    fwd = jax.jit(rcnn_forward)
    out = jax.block_until_ready(fwd(x, params))
    assert out.shape == (2, 8) and out.dtype == jnp.float32
    assert bool(jnp.all(jnp.isfinite(out)))
    print("KERNEL_OK")
</pallas_src>

<mosaic_0001>
module attributes {stable_mosaic.version = 11 : i64} {
  func.func @conv_rnn_seq_kernel(%arg0: i32, %arg1: memref<1x128x27xbf16, #tpu.memory_space<vmem>>, %arg2: memref<27x16xbf16, #tpu.memory_space<vmem>>, %arg3: memref<1x16xf32, #tpu.memory_space<vmem>>, %arg4: memref<1x16xf32, #tpu.memory_space<vmem>>, %arg5: memref<1x16xf32, #tpu.memory_space<vmem>>, %arg6: memref<4x16x16xbf16, #tpu.memory_space<vmem>>, %arg7: memref<4x16x16xbf16, #tpu.memory_space<vmem>>, %arg8: memref<4x1x16xf32, #tpu.memory_space<vmem>>, %arg9: memref<1x128x16xbf16, #tpu.memory_space<vmem>>, %arg10: memref<128x16xf32, #tpu.memory_space<vmem>>, %arg11: memref<128x16xf32, #tpu.memory_space<vmem>>) attributes {dimension_semantics = [#tpu.dimension_semantics<arbitrary>], iteration_bounds = array<i64: 3>, scalar_prefetch = 0 : i64, scratch_operands = 2 : i64, tpu.core_type = #tpu.core_type<tc>, window_params = [{transform_indices = @transform_0, window_bounds = array<i64: 1, 128, 27>}, {pipeline_mode = #tpu.pipeline_mode<synchronous>, transform_indices = @transform_1, window_bounds = array<i64: 27, 16>}, {pipeline_mode = #tpu.pipeline_mode<synchronous>, transform_indices = @transform_2, window_bounds = array<i64: 1, 16>}, {pipeline_mode = #tpu.pipeline_mode<synchronous>, transform_indices = @transform_3, window_bounds = array<i64: 1, 16>}, {pipeline_mode = #tpu.pipeline_mode<synchronous>, transform_indices = @transform_4, window_bounds = array<i64: 1, 16>}, {pipeline_mode = #tpu.pipeline_mode<synchronous>, transform_indices = @transform_5, window_bounds = array<i64: 4, 16, 16>}, {pipeline_mode = #tpu.pipeline_mode<synchronous>, transform_indices = @transform_6, window_bounds = array<i64: 4, 16, 16>}, {pipeline_mode = #tpu.pipeline_mode<synchronous>, transform_indices = @transform_7, window_bounds = array<i64: 4, 1, 16>}, {transform_indices = @transform_8, window_bounds = array<i64: 1, 128, 16>}]} {
    %c0_i32 = arith.constant 0 : i32
    %0 = arith.cmpi eq, %arg0, %c0_i32 : i32
    %1 = arith.extui %0 : i1 to i32
    %c0_i32_0 = arith.constant 0 : i32
    %2 = arith.cmpi ne, %1, %c0_i32_0 : i32
    scf.if %2 {
      %cst_72 = arith.constant 0.000000e+00 : f32
      %110 = vector.broadcast %cst_72 : f32 to vector<128x16xf32>
      %c0_73 = arith.constant 0 : index
      %c0_74 = arith.constant 0 : index
      %111 = vector.load %arg10[%c0_73, %c0_74] : memref<128x16xf32, #tpu.memory_space<vmem>>, vector<128x16xf32>
      tpu.vector_store %arg10[%c0_73, %c0_74], %110 {strides = array<i32>} : memref<128x16xf32, #tpu.memory_space<vmem>>, vector<128x16xf32>,
      %cst_75 = arith.constant 0.000000e+00 : f32
      %112 = vector.broadcast %cst_75 : f32 to vector<128x16xf32>
      %c0_76 = arith.constant 0 : index
      %c0_77 = arith.constant 0 : index
      %113 = vector.load %arg11[%c0_76, %c0_77] : memref<128x16xf32, #tpu.memory_space<vmem>>, vector<128x16xf32>
      tpu.vector_store %arg11[%c0_76, %c0_77], %112 {strides = array<i32>} : memref<128x16xf32, #tpu.memory_space<vmem>>, vector<128x16xf32>,
    } else {
    }
    %c0 = arith.constant 0 : index
    %c0_1 = arith.constant 0 : index
    %c0_2 = arith.constant 0 : index
    %3 = vector.load %arg1[%c0, %c0_1, %c0_2] : memref<1x128x27xbf16, #tpu.memory_space<vmem>>, vector<1x128x27xbf16>
    %4 = vector.shape_cast %3 : vector<1x128x27xbf16> to vector<128x27xbf16>
    %c0_3 = arith.constant 0 : index
    %c0_4 = arith.constant 0 : index
    %5 = vector.load %arg2[%c0_3, %c0_4] : memref<27x16xbf16, #tpu.memory_space<vmem>>, vector<27x16xbf16>
    %cst = arith.constant dense<0.000000e+00> : vector<128x16xf32>
    %6 = tpu.matmul %4, %5, %cst {dimension_numbers = #tpu.dot_dimension_numbers<[1], [0], [0], [1], [0, 0, 1, 1], [], []>} : vector<128x27xbf16>, vector<27x16xbf16>, vector<128x16xf32> -> vector<128x16xf32>
    %c0_5 = arith.constant 0 : index
    %c0_6 = arith.constant 0 : index
    %7 = vector.load %arg3[%c0_5, %c0_6] : memref<1x16xf32, #tpu.memory_space<vmem>>, vector<1x16xf32>
    %8 = vector.broadcast %7 : vector<1x16xf32> to vector<128x16xf32>
    %9 = arith.addf %6, %8 : vector<128x16xf32>
    %cst_7 = arith.constant dense<0.000000e+00> : vector<16xf32>
    %10 = vector.multi_reduction <add>, %9, %cst_7 [0] : vector<128x16xf32> to vector<16xf32>
    %11 = vector.shape_cast %10 : vector<16xf32> to vector<1x16xf32>
    %cst_8 = arith.constant 7.812500e-03 : f32
    %12 = vector.broadcast %cst_8 : f32 to vector<1x16xf32>
    %13 = arith.mulf %11, %12 : vector<1x16xf32>
    %14 = arith.mulf %9, %9 : vector<128x16xf32>
    %cst_9 = arith.constant dense<0.000000e+00> : vector<16xf32>
    %15 = vector.multi_reduction <add>, %14, %cst_9 [0] : vector<128x16xf32> to vector<16xf32>
    %16 = vector.shape_cast %15 : vector<16xf32> to vector<1x16xf32>
    %cst_10 = arith.constant 7.812500e-03 : f32
    %17 = vector.broadcast %cst_10 : f32 to vector<1x16xf32>
    %18 = arith.mulf %16, %17 : vector<1x16xf32>
    %19 = arith.mulf %13, %13 : vector<1x16xf32>
    %20 = arith.subf %18, %19 : vector<1x16xf32>
    %c0_11 = arith.constant 0 : index
    %c0_12 = arith.constant 0 : index
    %21 = vector.load %arg4[%c0_11, %c0_12] : memref<1x16xf32, #tpu.memory_space<vmem>>, vector<1x16xf32>
    %cst_13 = arith.constant 9.99999974E-6 : f32
    %22 = vector.broadcast %cst_13 : f32 to vector<1x16xf32>
    %23 = arith.addf %20, %22 : vector<1x16xf32>
    %24 = math.rsqrt %23 : vector<1x16xf32>
    %25 = arith.mulf %21, %24 : vector<1x16xf32>
    %c0_14 = arith.constant 0 : index
    %c0_15 = arith.constant 0 : index
    %26 = vector.load %arg5[%c0_14, %c0_15] : memref<1x16xf32, #tpu.memory_space<vmem>>, vector<1x16xf32>
    %27 = arith.mulf %13, %25 : vector<1x16xf32>
    %28 = arith.subf %26, %27 : vector<1x16xf32>
    %29 = vector.broadcast %25 : vector<1x16xf32> to vector<128x16xf32>
    %30 = arith.mulf %9, %29 : vector<128x16xf32>
    %31 = vector.broadcast %28 : vector<1x16xf32> to vector<128x16xf32>
    %32 = arith.addf %30, %31 : vector<128x16xf32>
    %cst_16 = arith.constant 0.000000e+00 : f32
    %33 = vector.broadcast %cst_16 : f32 to vector<128x16xf32>
    %34 = arith.maximumf %32, %33 : vector<128x16xf32>
    %35 = arith.truncf %34 : vector<128x16xf32> to vector<128x16xbf16>
    %c0_17 = arith.constant 0 : index
    %c0_18 = arith.constant 0 : index
    %36 = vector.load %arg10[%c0_17, %c0_18] : memref<128x16xf32, #tpu.memory_space<vmem>>, vector<128x16xf32>
    %37 = arith.truncf %36 : vector<128x16xf32> to vector<128x16xbf16>
    %c0_19 = arith.constant 0 : index
    %c0_20 = arith.constant 0 : index
    %c0_21 = arith.constant 0 : index
    %38 = vector.load %arg6[%c0_19, %c0_20, %c0_21] : memref<4x16x16xbf16, #tpu.memory_space<vmem>>, vector<1x16x16xbf16>
    %39 = vector.shape_cast %38 : vector<1x16x16xbf16> to vector<16x16xbf16>
    %cst_22 = arith.constant dense<0.000000e+00> : vector<128x16xf32>
    %40 = tpu.matmul %35, %39, %cst_22 {dimension_numbers = #tpu.dot_dimension_numbers<[1], [0], [0], [1], [0, 0, 1, 1], [], []>} : vector<128x16xbf16>, vector<16x16xbf16>, vector<128x16xf32> -> vector<128x16xf32>
    %c0_23 = arith.constant 0 : index
    %c0_24 = arith.constant 0 : index
    %c0_25 = arith.constant 0 : index
    %41 = vector.load %arg7[%c0_23, %c0_24, %c0_25] : memref<4x16x16xbf16, #tpu.memory_space<vmem>>, vector<1x16x16xbf16>
    %42 = vector.shape_cast %41 : vector<1x16x16xbf16> to vector<16x16xbf16>
    %cst_26 = arith.constant dense<0.000000e+00> : vector<128x16xf32>
    %43 = tpu.matmul %37, %42, %cst_26 {dimension_numbers = #tpu.dot_dimension_numbers<[1], [0], [0], [1], [0, 0, 1, 1], [], []>} : vector<128x16xbf16>, vector<16x16xbf16>, vector<128x16xf32> -> vector<128x16xf32>
    %44 = arith.addf %40, %43 : vector<128x16xf32>
    %c0_27 = arith.constant 0 : index
    %c0_28 = arith.constant 0 : index
    %c0_29 = arith.constant 0 : index
    %45 = vector.load %arg8[%c0_27, %c0_28, %c0_29] : memref<4x1x16xf32, #tpu.memory_space<vmem>>, vector<1x1x16xf32>
    %46 = vector.shape_cast %45 : vector<1x1x16xf32> to vector<1x16xf32>
    %47 = vector.broadcast %46 : vector<1x16xf32> to vector<128x16xf32>
    %48 = arith.addf %44, %47 : vector<128x16xf32>
    %49 = arith.negf %48 : vector<128x16xf32>
    %50 = math.exp %49 : vector<128x16xf32>
    %cst_30 = arith.constant 1.000000e+00 : f32
    %51 = vector.broadcast %cst_30 : f32 to vector<128x16xf32>
    %52 = arith.addf %51, %50 : vector<128x16xf32>
    %53 = arith.divf %51, %52 : vector<128x16xf32>
    %c1 = arith.constant 1 : index
    %c0_31 = arith.constant 0 : index
    %c0_32 = arith.constant 0 : index
    %54 = vector.load %arg6[%c1, %c0_31, %c0_32] : memref<4x16x16xbf16, #tpu.memory_space<vmem>>, vector<1x16x16xbf16>
    %55 = vector.shape_cast %54 : vector<1x16x16xbf16> to vector<16x16xbf16>
    %cst_33 = arith.constant dense<0.000000e+00> : vector<128x16xf32>
    %56 = tpu.matmul %35, %55, %cst_33 {dimension_numbers = #tpu.dot_dimension_numbers<[1], [0], [0], [1], [0, 0, 1, 1], [], []>} : vector<128x16xbf16>, vector<16x16xbf16>, vector<128x16xf32> -> vector<128x16xf32>
    %c1_34 = arith.constant 1 : index
    %c0_35 = arith.constant 0 : index
    %c0_36 = arith.constant 0 : index
    %57 = vector.load %arg7[%c1_34, %c0_35, %c0_36] : memref<4x16x16xbf16, #tpu.memory_space<vmem>>, vector<1x16x16xbf16>
    %58 = vector.shape_cast %57 : vector<1x16x16xbf16> to vector<16x16xbf16>
    %cst_37 = arith.constant dense<0.000000e+00> : vector<128x16xf32>
    %59 = tpu.matmul %37, %58, %cst_37 {dimension_numbers = #tpu.dot_dimension_numbers<[1], [0], [0], [1], [0, 0, 1, 1], [], []>} : vector<128x16xbf16>, vector<16x16xbf16>, vector<128x16xf32> -> vector<128x16xf32>
    %60 = arith.addf %56, %59 : vector<128x16xf32>
    %c1_38 = arith.constant 1 : index
    %c0_39 = arith.constant 0 : index
    %c0_40 = arith.constant 0 : index
    %61 = vector.load %arg8[%c1_38, %c0_39, %c0_40] : memref<4x1x16xf32, #tpu.memory_space<vmem>>, vector<1x1x16xf32>
    %62 = vector.shape_cast %61 : vector<1x1x16xf32> to vector<1x16xf32>
    %63 = vector.broadcast %62 : vector<1x16xf32> to vector<128x16xf32>
    %64 = arith.addf %60, %63 : vector<128x16xf32>
    %65 = arith.negf %64 : vector<128x16xf32>
    %66 = math.exp %65 : vector<128x16xf32>
    %cst_41 = arith.constant 1.000000e+00 : f32
    %67 = vector.broadcast %cst_41 : f32 to vector<128x16xf32>
    %68 = arith.addf %67, %66 : vector<128x16xf32>
    %69 = arith.divf %67, %68 : vector<128x16xf32>
    %c2 = arith.constant 2 : index
    %c0_42 = arith.constant 0 : index
    %c0_43 = arith.constant 0 : index
    %70 = vector.load %arg6[%c2, %c0_42, %c0_43] : memref<4x16x16xbf16, #tpu.memory_space<vmem>>, vector<1x16x16xbf16>
    %71 = vector.shape_cast %70 : vector<1x16x16xbf16> to vector<16x16xbf16>
    %cst_44 = arith.constant dense<0.000000e+00> : vector<128x16xf32>
    %72 = tpu.matmul %35, %71, %cst_44 {dimension_numbers = #tpu.dot_dimension_numbers<[1], [0], [0], [1], [0, 0, 1, 1], [], []>} : vector<128x16xbf16>, vector<16x16xbf16>, vector<128x16xf32> -> vector<128x16xf32>
    %c2_45 = arith.constant 2 : index
    %c0_46 = arith.constant 0 : index
    %c0_47 = arith.constant 0 : index
    %73 = vector.load %arg7[%c2_45, %c0_46, %c0_47] : memref<4x16x16xbf16, #tpu.memory_space<vmem>>, vector<1x16x16xbf16>
    %74 = vector.shape_cast %73 : vector<1x16x16xbf16> to vector<16x16xbf16>
    %cst_48 = arith.constant dense<0.000000e+00> : vector<128x16xf32>
    %75 = tpu.matmul %37, %74, %cst_48 {dimension_numbers = #tpu.dot_dimension_numbers<[1], [0], [0], [1], [0, 0, 1, 1], [], []>} : vector<128x16xbf16>, vector<16x16xbf16>, vector<128x16xf32> -> vector<128x16xf32>
    %76 = arith.addf %72, %75 : vector<128x16xf32>
    %c2_49 = arith.constant 2 : index
    %c0_50 = arith.constant 0 : index
    %c0_51 = arith.constant 0 : index
    %77 = vector.load %arg8[%c2_49, %c0_50, %c0_51] : memref<4x1x16xf32, #tpu.memory_space<vmem>>, vector<1x1x16xf32>
    %78 = vector.shape_cast %77 : vector<1x1x16xf32> to vector<1x16xf32>
    %79 = vector.broadcast %78 : vector<1x16xf32> to vector<128x16xf32>
    %80 = arith.addf %76, %79 : vector<128x16xf32>
    %81 = math.tanh %80 : vector<128x16xf32>
    %c3 = arith.constant 3 : index
    %c0_52 = arith.constant 0 : index
    %c0_53 = arith.constant 0 : index
    %82 = vector.load %arg6[%c3, %c0_52, %c0_53] : memref<4x16x16xbf16, #tpu.memory_space<vmem>>, vector<1x16x16xbf16>
    %83 = vector.shape_cast %82 : vector<1x16x16xbf16> to vector<16x16xbf16>
    %cst_54 = arith.constant dense<0.000000e+00> : vector<128x16xf32>
    %84 = tpu.matmul %35, %83, %cst_54 {dimension_numbers = #tpu.dot_dimension_numbers<[1], [0], [0], [1], [0, 0, 1, 1], [], []>} : vector<128x16xbf16>, vector<16x16xbf16>, vector<128x16xf32> -> vector<128x16xf32>
    %c3_55 = arith.constant 3 : index
    %c0_56 = arith.constant 0 : index
    %c0_57 = arith.constant 0 : index
    %85 = vector.load %arg7[%c3_55, %c0_56, %c0_57] : memref<4x16x16xbf16, #tpu.memory_space<vmem>>, vector<1x16x16xbf16>
    %86 = vector.shape_cast %85 : vector<1x16x16xbf16> to vector<16x16xbf16>
    %cst_58 = arith.constant dense<0.000000e+00> : vector<128x16xf32>
    %87 = tpu.matmul %37, %86, %cst_58 {dimension_numbers = #tpu.dot_dimension_numbers<[1], [0], [0], [1], [0, 0, 1, 1], [], []>} : vector<128x16xbf16>, vector<16x16xbf16>, vector<128x16xf32> -> vector<128x16xf32>
    %88 = arith.addf %84, %87 : vector<128x16xf32>
    %c3_59 = arith.constant 3 : index
    %c0_60 = arith.constant 0 : index
    %c0_61 = arith.constant 0 : index
    %89 = vector.load %arg8[%c3_59, %c0_60, %c0_61] : memref<4x1x16xf32, #tpu.memory_space<vmem>>, vector<1x1x16xf32>
    %90 = vector.shape_cast %89 : vector<1x1x16xf32> to vector<1x16xf32>
    %91 = vector.broadcast %90 : vector<1x16xf32> to vector<128x16xf32>
    %92 = arith.addf %88, %91 : vector<128x16xf32>
    %93 = arith.negf %92 : vector<128x16xf32>
    %94 = math.exp %93 : vector<128x16xf32>
    %cst_62 = arith.constant 1.000000e+00 : f32
    %95 = vector.broadcast %cst_62 : f32 to vector<128x16xf32>
    %96 = arith.addf %95, %94 : vector<128x16xf32>
    %97 = arith.divf %95, %96 : vector<128x16xf32>
    %c0_63 = arith.constant 0 : index
    %c0_64 = arith.constant 0 : index
    %98 = vector.load %arg11[%c0_63, %c0_64] : memref<128x16xf32, #tpu.memory_space<vmem>>, vector<128x16xf32>
    %99 = arith.mulf %69, %98 : vector<128x16xf32>
    %100 = arith.mulf %53, %81 : vector<128x16xf32>
    %101 = arith.addf %99, %100 : vector<128x16xf32>
    %102 = math.tanh %101 : vector<128x16xf32>
    %103 = arith.mulf %97, %102 : vector<128x16xf32>
    %c0_65 = arith.constant 0 : index
    %c0_66 = arith.constant 0 : index
    %104 = vector.load %arg11[%c0_65, %c0_66] : memref<128x16xf32, #tpu.memory_space<vmem>>, vector<128x16xf32>
    tpu.vector_store %arg11[%c0_65, %c0_66], %101 {strides = array<i32>} : memref<128x16xf32, #tpu.memory_space<vmem>>, vector<128x16xf32>,
    %c0_67 = arith.constant 0 : index
    %c0_68 = arith.constant 0 : index
    %105 = vector.load %arg10[%c0_67, %c0_68] : memref<128x16xf32, #tpu.memory_space<vmem>>, vector<128x16xf32>
    tpu.vector_store %arg10[%c0_67, %c0_68], %103 {strides = array<i32>} : memref<128x16xf32, #tpu.memory_space<vmem>>, vector<128x16xf32>,
    %106 = arith.truncf %103 : vector<128x16xf32> to vector<128x16xbf16>
    %c0_69 = arith.constant 0 : index
    %c0_70 = arith.constant 0 : index
    %c0_71 = arith.constant 0 : index
    %107 = vector.load %arg9[%c0_69, %c0_70, %c0_71] : memref<1x128x16xbf16, #tpu.memory_space<vmem>>, vector<1x128x16xbf16>
    %108 = vector.shape_cast %107 : vector<1x128x16xbf16> to vector<128x16xbf16>
    %109 = vector.shape_cast %106 : vector<128x16xbf16> to vector<1x128x16xbf16>
    tpu.vector_store %arg9[%c0_69, %c0_70, %c0_71], %109 {strides = array<i32>} : memref<1x128x16xbf16, #tpu.memory_space<vmem>>, vector<1x128x16xbf16>,
    return
  }
  func.func @transform_0(%arg0: i32) -> (i32, i32, i32) {
    %c0_i32 = arith.constant 0 : i32
    %c0_i32_0 = arith.constant 0 : i32
    %c0_i32_1 = arith.constant 0 : i32
    return %arg0, %c0_i32, %c0_i32_0 : i32, i32, i32
  }
  func.func @transform_1(%arg0: i32) -> (i32, i32) {
    %c0_i32 = arith.constant 0 : i32
    %c0_i32_0 = arith.constant 0 : i32
    %c0_i32_1 = arith.constant 0 : i32
    return %c0_i32, %c0_i32_0 : i32, i32
  }
  func.func @transform_2(%arg0: i32) -> (i32, i32) {
    %c0_i32 = arith.constant 0 : i32
    %c0_i32_0 = arith.constant 0 : i32
    %c0_i32_1 = arith.constant 0 : i32
    return %c0_i32, %c0_i32_0 : i32, i32
  }
  func.func @transform_3(%arg0: i32) -> (i32, i32) {
    %c0_i32 = arith.constant 0 : i32
    %c0_i32_0 = arith.constant 0 : i32
    %c0_i32_1 = arith.constant 0 : i32
    return %c0_i32, %c0_i32_0 : i32, i32
  }
  func.func @transform_4(%arg0: i32) -> (i32, i32) {
    %c0_i32 = arith.constant 0 : i32
    %c0_i32_0 = arith.constant 0 : i32
    %c0_i32_1 = arith.constant 0 : i32
    return %c0_i32, %c0_i32_0 : i32, i32
  }
  func.func @transform_5(%arg0: i32) -> (i32, i32, i32) {
    %c0_i32 = arith.constant 0 : i32
    %c0_i32_0 = arith.constant 0 : i32
    %c0_i32_1 = arith.constant 0 : i32
    %c0_i32_2 = arith.constant 0 : i32
    return %c0_i32, %c0_i32_0, %c0_i32_1 : i32, i32, i32
  }
  func.func @transform_6(%arg0: i32) -> (i32, i32, i32) {
    %c0_i32 = arith.constant 0 : i32
    %c0_i32_0 = arith.constant 0 : i32
    %c0_i32_1 = arith.constant 0 : i32
    %c0_i32_2 = arith.constant 0 : i32
    return %c0_i32, %c0_i32_0, %c0_i32_1 : i32, i32, i32
  }
  func.func @transform_7(%arg0: i32) -> (i32, i32, i32) {
    %c0_i32 = arith.constant 0 : i32
    %c0_i32_0 = arith.constant 0 : i32
    %c0_i32_1 = arith.constant 0 : i32
    %c0_i32_2 = arith.constant 0 : i32
    return %c0_i32, %c0_i32_0, %c0_i32_1 : i32, i32, i32
  }
  func.func @transform_8(%arg0: i32) -> (i32, i32, i32) {
    %c0_i32 = arith.constant 0 : i32
    %c0_i32_0 = arith.constant 0 : i32
    %c0_i32_1 = arith.constant 0 : i32
    return %arg0, %c0_i32, %c0_i32_0 : i32, i32, i32
  }
}

module attributes {stable_mosaic.version = 11 : i64} {
  func.func @conv_rnn_seq_kernel(%arg0: i32, %arg1: memref<1x32x144xbf16, #tpu.memory_space<vmem>>, %arg2: memref<144x32xbf16, #tpu.memory_space<vmem>>, %arg3: memref<1x32xf32, #tpu.memory_space<vmem>>, %arg4: memref<1x32xf32, #tpu.memory_space<vmem>>, %arg5: memref<1x32xf32, #tpu.memory_space<vmem>>, %arg6: memref<4x32x32xbf16, #tpu.memory_space<vmem>>, %arg7: memref<4x32x32xbf16, #tpu.memory_space<vmem>>, %arg8: memref<4x1x32xf32, #tpu.memory_space<vmem>>, %arg9: memref<1x32x32xbf16, #tpu.memory_space<vmem>>, %arg10: memref<32x32xf32, #tpu.memory_space<vmem>>, %arg11: memref<32x32xf32, #tpu.memory_space<vmem>>) attributes {dimension_semantics = [#tpu.dimension_semantics<arbitrary>], iteration_bounds = array<i64: 3>, scalar_prefetch = 0 : i64, scratch_operands = 2 : i64, tpu.core_type = #tpu.core_type<tc>, window_params = [{transform_indices = @transform_0, window_bounds = array<i64: 1, 32, 144>}, {pipeline_mode = #tpu.pipeline_mode<synchronous>, transform_indices = @transform_1, window_bounds = array<i64: 144, 32>}, {pipeline_mode = #tpu.pipeline_mode<synchronous>, transform_indices = @transform_2, window_bounds = array<i64: 1, 32>}, {pipeline_mode = #tpu.pipeline_mode<synchronous>, transform_indices = @transform_3, window_bounds = array<i64: 1, 32>}, {pipeline_mode = #tpu.pipeline_mode<synchronous>, transform_indices = @transform_4, window_bounds = array<i64: 1, 32>}, {pipeline_mode = #tpu.pipeline_mode<synchronous>, transform_indices = @transform_5, window_bounds = array<i64: 4, 32, 32>}, {pipeline_mode = #tpu.pipeline_mode<synchronous>, transform_indices = @transform_6, window_bounds = array<i64: 4, 32, 32>}, {pipeline_mode = #tpu.pipeline_mode<synchronous>, transform_indices = @transform_7, window_bounds = array<i64: 4, 1, 32>}, {transform_indices = @transform_8, window_bounds = array<i64: 1, 32, 32>}]} {
    %c0_i32 = arith.constant 0 : i32
    %0 = arith.cmpi eq, %arg0, %c0_i32 : i32
    %1 = arith.extui %0 : i1 to i32
    %c0_i32_0 = arith.constant 0 : i32
    %2 = arith.cmpi ne, %1, %c0_i32_0 : i32
    scf.if %2 {
      %cst_72 = arith.constant 0.000000e+00 : f32
      %110 = vector.broadcast %cst_72 : f32 to vector<32x32xf32>
      %c0_73 = arith.constant 0 : index
      %c0_74 = arith.constant 0 : index
      %111 = vector.load %arg10[%c0_73, %c0_74] : memref<32x32xf32, #tpu.memory_space<vmem>>, vector<32x32xf32>
      tpu.vector_store %arg10[%c0_73, %c0_74], %110 {strides = array<i32>} : memref<32x32xf32, #tpu.memory_space<vmem>>, vector<32x32xf32>,
      %cst_75 = arith.constant 0.000000e+00 : f32
      %112 = vector.broadcast %cst_75 : f32 to vector<32x32xf32>
      %c0_76 = arith.constant 0 : index
      %c0_77 = arith.constant 0 : index
      %113 = vector.load %arg11[%c0_76, %c0_77] : memref<32x32xf32, #tpu.memory_space<vmem>>, vector<32x32xf32>
      tpu.vector_store %arg11[%c0_76, %c0_77], %112 {strides = array<i32>} : memref<32x32xf32, #tpu.memory_space<vmem>>, vector<32x32xf32>,
    } else {
    }
    %c0 = arith.constant 0 : index
    %c0_1 = arith.constant 0 : index
    %c0_2 = arith.constant 0 : index
    %3 = vector.load %arg1[%c0, %c0_1, %c0_2] : memref<1x32x144xbf16, #tpu.memory_space<vmem>>, vector<1x32x144xbf16>
    %4 = vector.shape_cast %3 : vector<1x32x144xbf16> to vector<32x144xbf16>
    %c0_3 = arith.constant 0 : index
    %c0_4 = arith.constant 0 : index
    %5 = vector.load %arg2[%c0_3, %c0_4] : memref<144x32xbf16, #tpu.memory_space<vmem>>, vector<144x32xbf16>
    %cst = arith.constant dense<0.000000e+00> : vector<32x32xf32>
    %6 = tpu.matmul %4, %5, %cst {dimension_numbers = #tpu.dot_dimension_numbers<[1], [0], [0], [1], [0, 0, 1, 1], [], []>} : vector<32x144xbf16>, vector<144x32xbf16>, vector<32x32xf32> -> vector<32x32xf32>
    %c0_5 = arith.constant 0 : index
    %c0_6 = arith.constant 0 : index
    %7 = vector.load %arg3[%c0_5, %c0_6] : memref<1x32xf32, #tpu.memory_space<vmem>>, vector<1x32xf32>
    %8 = vector.broadcast %7 : vector<1x32xf32> to vector<32x32xf32>
    %9 = arith.addf %6, %8 : vector<32x32xf32>
    %cst_7 = arith.constant dense<0.000000e+00> : vector<32xf32>
    %10 = vector.multi_reduction <add>, %9, %cst_7 [0] : vector<32x32xf32> to vector<32xf32>
    %11 = vector.shape_cast %10 : vector<32xf32> to vector<1x32xf32>
    %cst_8 = arith.constant 3.125000e-02 : f32
    %12 = vector.broadcast %cst_8 : f32 to vector<1x32xf32>
    %13 = arith.mulf %11, %12 : vector<1x32xf32>
    %14 = arith.mulf %9, %9 : vector<32x32xf32>
    %cst_9 = arith.constant dense<0.000000e+00> : vector<32xf32>
    %15 = vector.multi_reduction <add>, %14, %cst_9 [0] : vector<32x32xf32> to vector<32xf32>
    %16 = vector.shape_cast %15 : vector<32xf32> to vector<1x32xf32>
    %cst_10 = arith.constant 3.125000e-02 : f32
    %17 = vector.broadcast %cst_10 : f32 to vector<1x32xf32>
    %18 = arith.mulf %16, %17 : vector<1x32xf32>
    %19 = arith.mulf %13, %13 : vector<1x32xf32>
    %20 = arith.subf %18, %19 : vector<1x32xf32>
    %c0_11 = arith.constant 0 : index
    %c0_12 = arith.constant 0 : index
    %21 = vector.load %arg4[%c0_11, %c0_12] : memref<1x32xf32, #tpu.memory_space<vmem>>, vector<1x32xf32>
    %cst_13 = arith.constant 9.99999974E-6 : f32
    %22 = vector.broadcast %cst_13 : f32 to vector<1x32xf32>
    %23 = arith.addf %20, %22 : vector<1x32xf32>
    %24 = math.rsqrt %23 : vector<1x32xf32>
    %25 = arith.mulf %21, %24 : vector<1x32xf32>
    %c0_14 = arith.constant 0 : index
    %c0_15 = arith.constant 0 : index
    %26 = vector.load %arg5[%c0_14, %c0_15] : memref<1x32xf32, #tpu.memory_space<vmem>>, vector<1x32xf32>
    %27 = arith.mulf %13, %25 : vector<1x32xf32>
    %28 = arith.subf %26, %27 : vector<1x32xf32>
    %29 = vector.broadcast %25 : vector<1x32xf32> to vector<32x32xf32>
    %30 = arith.mulf %9, %29 : vector<32x32xf32>
    %31 = vector.broadcast %28 : vector<1x32xf32> to vector<32x32xf32>
    %32 = arith.addf %30, %31 : vector<32x32xf32>
    %cst_16 = arith.constant 0.000000e+00 : f32
    %33 = vector.broadcast %cst_16 : f32 to vector<32x32xf32>
    %34 = arith.maximumf %32, %33 : vector<32x32xf32>
    %35 = arith.truncf %34 : vector<32x32xf32> to vector<32x32xbf16>
    %c0_17 = arith.constant 0 : index
    %c0_18 = arith.constant 0 : index
    %36 = vector.load %arg10[%c0_17, %c0_18] : memref<32x32xf32, #tpu.memory_space<vmem>>, vector<32x32xf32>
    %37 = arith.truncf %36 : vector<32x32xf32> to vector<32x32xbf16>
    %c0_19 = arith.constant 0 : index
    %c0_20 = arith.constant 0 : index
    %c0_21 = arith.constant 0 : index
    %38 = vector.load %arg6[%c0_19, %c0_20, %c0_21] : memref<4x32x32xbf16, #tpu.memory_space<vmem>>, vector<1x32x32xbf16>
    %39 = vector.shape_cast %38 : vector<1x32x32xbf16> to vector<32x32xbf16>
    %cst_22 = arith.constant dense<0.000000e+00> : vector<32x32xf32>
    %40 = tpu.matmul %35, %39, %cst_22 {dimension_numbers = #tpu.dot_dimension_numbers<[1], [0], [0], [1], [0, 0, 1, 1], [], []>} : vector<32x32xbf16>, vector<32x32xbf16>, vector<32x32xf32> -> vector<32x32xf32>
    %c0_23 = arith.constant 0 : index
    %c0_24 = arith.constant 0 : index
    %c0_25 = arith.constant 0 : index
    %41 = vector.load %arg7[%c0_23, %c0_24, %c0_25] : memref<4x32x32xbf16, #tpu.memory_space<vmem>>, vector<1x32x32xbf16>
    %42 = vector.shape_cast %41 : vector<1x32x32xbf16> to vector<32x32xbf16>
    %cst_26 = arith.constant dense<0.000000e+00> : vector<32x32xf32>
    %43 = tpu.matmul %37, %42, %cst_26 {dimension_numbers = #tpu.dot_dimension_numbers<[1], [0], [0], [1], [0, 0, 1, 1], [], []>} : vector<32x32xbf16>, vector<32x32xbf16>, vector<32x32xf32> -> vector<32x32xf32>
    %44 = arith.addf %40, %43 : vector<32x32xf32>
    %c0_27 = arith.constant 0 : index
    %c0_28 = arith.constant 0 : index
    %c0_29 = arith.constant 0 : index
    %45 = vector.load %arg8[%c0_27, %c0_28, %c0_29] : memref<4x1x32xf32, #tpu.memory_space<vmem>>, vector<1x1x32xf32>
    %46 = vector.shape_cast %45 : vector<1x1x32xf32> to vector<1x32xf32>
    %47 = vector.broadcast %46 : vector<1x32xf32> to vector<32x32xf32>
    %48 = arith.addf %44, %47 : vector<32x32xf32>
    %49 = arith.negf %48 : vector<32x32xf32>
    %50 = math.exp %49 : vector<32x32xf32>
    %cst_30 = arith.constant 1.000000e+00 : f32
    %51 = vector.broadcast %cst_30 : f32 to vector<32x32xf32>
    %52 = arith.addf %51, %50 : vector<32x32xf32>
    %53 = arith.divf %51, %52 : vector<32x32xf32>
    %c1 = arith.constant 1 : index
    %c0_31 = arith.constant 0 : index
    %c0_32 = arith.constant 0 : index
    %54 = vector.load %arg6[%c1, %c0_31, %c0_32] : memref<4x32x32xbf16, #tpu.memory_space<vmem>>, vector<1x32x32xbf16>
    %55 = vector.shape_cast %54 : vector<1x32x32xbf16> to vector<32x32xbf16>
    %cst_33 = arith.constant dense<0.000000e+00> : vector<32x32xf32>
    %56 = tpu.matmul %35, %55, %cst_33 {dimension_numbers = #tpu.dot_dimension_numbers<[1], [0], [0], [1], [0, 0, 1, 1], [], []>} : vector<32x32xbf16>, vector<32x32xbf16>, vector<32x32xf32> -> vector<32x32xf32>
    %c1_34 = arith.constant 1 : index
    %c0_35 = arith.constant 0 : index
    %c0_36 = arith.constant 0 : index
    %57 = vector.load %arg7[%c1_34, %c0_35, %c0_36] : memref<4x32x32xbf16, #tpu.memory_space<vmem>>, vector<1x32x32xbf16>
    %58 = vector.shape_cast %57 : vector<1x32x32xbf16> to vector<32x32xbf16>
    %cst_37 = arith.constant dense<0.000000e+00> : vector<32x32xf32>
    %59 = tpu.matmul %37, %58, %cst_37 {dimension_numbers = #tpu.dot_dimension_numbers<[1], [0], [0], [1], [0, 0, 1, 1], [], []>} : vector<32x32xbf16>, vector<32x32xbf16>, vector<32x32xf32> -> vector<32x32xf32>
    %60 = arith.addf %56, %59 : vector<32x32xf32>
    %c1_38 = arith.constant 1 : index
    %c0_39 = arith.constant 0 : index
    %c0_40 = arith.constant 0 : index
    %61 = vector.load %arg8[%c1_38, %c0_39, %c0_40] : memref<4x1x32xf32, #tpu.memory_space<vmem>>, vector<1x1x32xf32>
    %62 = vector.shape_cast %61 : vector<1x1x32xf32> to vector<1x32xf32>
    %63 = vector.broadcast %62 : vector<1x32xf32> to vector<32x32xf32>
    %64 = arith.addf %60, %63 : vector<32x32xf32>
    %65 = arith.negf %64 : vector<32x32xf32>
    %66 = math.exp %65 : vector<32x32xf32>
    %cst_41 = arith.constant 1.000000e+00 : f32
    %67 = vector.broadcast %cst_41 : f32 to vector<32x32xf32>
    %68 = arith.addf %67, %66 : vector<32x32xf32>
    %69 = arith.divf %67, %68 : vector<32x32xf32>
    %c2 = arith.constant 2 : index
    %c0_42 = arith.constant 0 : index
    %c0_43 = arith.constant 0 : index
    %70 = vector.load %arg6[%c2, %c0_42, %c0_43] : memref<4x32x32xbf16, #tpu.memory_space<vmem>>, vector<1x32x32xbf16>
    %71 = vector.shape_cast %70 : vector<1x32x32xbf16> to vector<32x32xbf16>
    %cst_44 = arith.constant dense<0.000000e+00> : vector<32x32xf32>
    %72 = tpu.matmul %35, %71, %cst_44 {dimension_numbers = #tpu.dot_dimension_numbers<[1], [0], [0], [1], [0, 0, 1, 1], [], []>} : vector<32x32xbf16>, vector<32x32xbf16>, vector<32x32xf32> -> vector<32x32xf32>
    %c2_45 = arith.constant 2 : index
    %c0_46 = arith.constant 0 : index
    %c0_47 = arith.constant 0 : index
    %73 = vector.load %arg7[%c2_45, %c0_46, %c0_47] : memref<4x32x32xbf16, #tpu.memory_space<vmem>>, vector<1x32x32xbf16>
    %74 = vector.shape_cast %73 : vector<1x32x32xbf16> to vector<32x32xbf16>
    %cst_48 = arith.constant dense<0.000000e+00> : vector<32x32xf32>
    %75 = tpu.matmul %37, %74, %cst_48 {dimension_numbers = #tpu.dot_dimension_numbers<[1], [0], [0], [1], [0, 0, 1, 1], [], []>} : vector<32x32xbf16>, vector<32x32xbf16>, vector<32x32xf32> -> vector<32x32xf32>
    %76 = arith.addf %72, %75 : vector<32x32xf32>
    %c2_49 = arith.constant 2 : index
    %c0_50 = arith.constant 0 : index
    %c0_51 = arith.constant 0 : index
    %77 = vector.load %arg8[%c2_49, %c0_50, %c0_51] : memref<4x1x32xf32, #tpu.memory_space<vmem>>, vector<1x1x32xf32>
    %78 = vector.shape_cast %77 : vector<1x1x32xf32> to vector<1x32xf32>
    %79 = vector.broadcast %78 : vector<1x32xf32> to vector<32x32xf32>
    %80 = arith.addf %76, %79 : vector<32x32xf32>
    %81 = math.tanh %80 : vector<32x32xf32>
    %c3 = arith.constant 3 : index
    %c0_52 = arith.constant 0 : index
    %c0_53 = arith.constant 0 : index
    %82 = vector.load %arg6[%c3, %c0_52, %c0_53] : memref<4x32x32xbf16, #tpu.memory_space<vmem>>, vector<1x32x32xbf16>
    %83 = vector.shape_cast %82 : vector<1x32x32xbf16> to vector<32x32xbf16>
    %cst_54 = arith.constant dense<0.000000e+00> : vector<32x32xf32>
    %84 = tpu.matmul %35, %83, %cst_54 {dimension_numbers = #tpu.dot_dimension_numbers<[1], [0], [0], [1], [0, 0, 1, 1], [], []>} : vector<32x32xbf16>, vector<32x32xbf16>, vector<32x32xf32> -> vector<32x32xf32>
    %c3_55 = arith.constant 3 : index
    %c0_56 = arith.constant 0 : index
    %c0_57 = arith.constant 0 : index
    %85 = vector.load %arg7[%c3_55, %c0_56, %c0_57] : memref<4x32x32xbf16, #tpu.memory_space<vmem>>, vector<1x32x32xbf16>
    %86 = vector.shape_cast %85 : vector<1x32x32xbf16> to vector<32x32xbf16>
    %cst_58 = arith.constant dense<0.000000e+00> : vector<32x32xf32>
    %87 = tpu.matmul %37, %86, %cst_58 {dimension_numbers = #tpu.dot_dimension_numbers<[1], [0], [0], [1], [0, 0, 1, 1], [], []>} : vector<32x32xbf16>, vector<32x32xbf16>, vector<32x32xf32> -> vector<32x32xf32>
    %88 = arith.addf %84, %87 : vector<32x32xf32>
    %c3_59 = arith.constant 3 : index
    %c0_60 = arith.constant 0 : index
    %c0_61 = arith.constant 0 : index
    %89 = vector.load %arg8[%c3_59, %c0_60, %c0_61] : memref<4x1x32xf32, #tpu.memory_space<vmem>>, vector<1x1x32xf32>
    %90 = vector.shape_cast %89 : vector<1x1x32xf32> to vector<1x32xf32>
    %91 = vector.broadcast %90 : vector<1x32xf32> to vector<32x32xf32>
    %92 = arith.addf %88, %91 : vector<32x32xf32>
    %93 = arith.negf %92 : vector<32x32xf32>
    %94 = math.exp %93 : vector<32x32xf32>
    %cst_62 = arith.constant 1.000000e+00 : f32
    %95 = vector.broadcast %cst_62 : f32 to vector<32x32xf32>
    %96 = arith.addf %95, %94 : vector<32x32xf32>
    %97 = arith.divf %95, %96 : vector<32x32xf32>
    %c0_63 = arith.constant 0 : index
    %c0_64 = arith.constant 0 : index
    %98 = vector.load %arg11[%c0_63, %c0_64] : memref<32x32xf32, #tpu.memory_space<vmem>>, vector<32x32xf32>
    %99 = arith.mulf %69, %98 : vector<32x32xf32>
    %100 = arith.mulf %53, %81 : vector<32x32xf32>
    %101 = arith.addf %99, %100 : vector<32x32xf32>
    %102 = math.tanh %101 : vector<32x32xf32>
    %103 = arith.mulf %97, %102 : vector<32x32xf32>
    %c0_65 = arith.constant 0 : index
    %c0_66 = arith.constant 0 : index
    %104 = vector.load %arg11[%c0_65, %c0_66] : memref<32x32xf32, #tpu.memory_space<vmem>>, vector<32x32xf32>
    tpu.vector_store %arg11[%c0_65, %c0_66], %101 {strides = array<i32>} : memref<32x32xf32, #tpu.memory_space<vmem>>, vector<32x32xf32>,
    %c0_67 = arith.constant 0 : index
    %c0_68 = arith.constant 0 : index
    %105 = vector.load %arg10[%c0_67, %c0_68] : memref<32x32xf32, #tpu.memory_space<vmem>>, vector<32x32xf32>
    tpu.vector_store %arg10[%c0_67, %c0_68], %103 {strides = array<i32>} : memref<32x32xf32, #tpu.memory_space<vmem>>, vector<32x32xf32>,
    %106 = arith.truncf %103 : vector<32x32xf32> to vector<32x32xbf16>
    %c0_69 = arith.constant 0 : index
    %c0_70 = arith.constant 0 : index
    %c0_71 = arith.constant 0 : index
    %107 = vector.load %arg9[%c0_69, %c0_70, %c0_71] : memref<1x32x32xbf16, #tpu.memory_space<vmem>>, vector<1x32x32xbf16>
    %108 = vector.shape_cast %107 : vector<1x32x32xbf16> to vector<32x32xbf16>
    %109 = vector.shape_cast %106 : vector<32x32xbf16> to vector<1x32x32xbf16>
    tpu.vector_store %arg9[%c0_69, %c0_70, %c0_71], %109 {strides = array<i32>} : memref<1x32x32xbf16, #tpu.memory_space<vmem>>, vector<1x32x32xbf16>,
    return
  }
  func.func @transform_0(%arg0: i32) -> (i32, i32, i32) {
    %c0_i32 = arith.constant 0 : i32
    %c0_i32_0 = arith.constant 0 : i32
    %c0_i32_1 = arith.constant 0 : i32
    return %arg0, %c0_i32, %c0_i32_0 : i32, i32, i32
  }
  func.func @transform_1(%arg0: i32) -> (i32, i32) {
    %c0_i32 = arith.constant 0 : i32
    %c0_i32_0 = arith.constant 0 : i32
    %c0_i32_1 = arith.constant 0 : i32
    return %c0_i32, %c0_i32_0 : i32, i32
  }
  func.func @transform_2(%arg0: i32) -> (i32, i32) {
    %c0_i32 = arith.constant 0 : i32
    %c0_i32_0 = arith.constant 0 : i32
    %c0_i32_1 = arith.constant 0 : i32
    return %c0_i32, %c0_i32_0 : i32, i32
  }
  func.func @transform_3(%arg0: i32) -> (i32, i32) {
    %c0_i32 = arith.constant 0 : i32
    %c0_i32_0 = arith.constant 0 : i32
    %c0_i32_1 = arith.constant 0 : i32
    return %c0_i32, %c0_i32_0 : i32, i32
  }
  func.func @transform_4(%arg0: i32) -> (i32, i32) {
    %c0_i32 = arith.constant 0 : i32
    %c0_i32_0 = arith.constant 0 : i32
    %c0_i32_1 = arith.constant 0 : i32
    return %c0_i32, %c0_i32_0 : i32, i32
  }
  func.func @transform_5(%arg0: i32) -> (i32, i32, i32) {
    %c0_i32 = arith.constant 0 : i32
    %c0_i32_0 = arith.constant 0 : i32
    %c0_i32_1 = arith.constant 0 : i32
    %c0_i32_2 = arith.constant 0 : i32
    return %c0_i32, %c0_i32_0, %c0_i32_1 : i32, i32, i32
  }
  func.func @transform_6(%arg0: i32) -> (i32, i32, i32) {
    %c0_i32 = arith.constant 0 : i32
    %c0_i32_0 = arith.constant 0 : i32
    %c0_i32_1 = arith.constant 0 : i32
    %c0_i32_2 = arith.constant 0 : i32
    return %c0_i32, %c0_i32_0, %c0_i32_1 : i32, i32, i32
  }
  func.func @transform_7(%arg0: i32) -> (i32, i32, i32) {
    %c0_i32 = arith.constant 0 : i32
    %c0_i32_0 = arith.constant 0 : i32
    %c0_i32_1 = arith.constant 0 : i32
    %c0_i32_2 = arith.constant 0 : i32
    return %c0_i32, %c0_i32_0, %c0_i32_1 : i32, i32, i32
  }
  func.func @transform_8(%arg0: i32) -> (i32, i32, i32) {
    %c0_i32 = arith.constant 0 : i32
    %c0_i32_0 = arith.constant 0 : i32
    %c0_i32_1 = arith.constant 0 : i32
    return %arg0, %c0_i32, %c0_i32_0 : i32, i32, i32
  }
}

module attributes {stable_mosaic.version = 11 : i64} {
  func.func @conv_rnn_seq_kernel(%arg0: i32, %arg1: memref<1x8x288xbf16, #tpu.memory_space<vmem>>, %arg2: memref<288x64xbf16, #tpu.memory_space<vmem>>, %arg3: memref<1x64xf32, #tpu.memory_space<vmem>>, %arg4: memref<1x64xf32, #tpu.memory_space<vmem>>, %arg5: memref<1x64xf32, #tpu.memory_space<vmem>>, %arg6: memref<4x64x64xbf16, #tpu.memory_space<vmem>>, %arg7: memref<4x64x64xbf16, #tpu.memory_space<vmem>>, %arg8: memref<4x1x64xf32, #tpu.memory_space<vmem>>, %arg9: memref<1x8x64xbf16, #tpu.memory_space<vmem>>, %arg10: memref<8x64xf32, #tpu.memory_space<vmem>>, %arg11: memref<8x64xf32, #tpu.memory_space<vmem>>) attributes {dimension_semantics = [#tpu.dimension_semantics<arbitrary>], iteration_bounds = array<i64: 3>, scalar_prefetch = 0 : i64, scratch_operands = 2 : i64, tpu.core_type = #tpu.core_type<tc>, window_params = [{transform_indices = @transform_0, window_bounds = array<i64: 1, 8, 288>}, {pipeline_mode = #tpu.pipeline_mode<synchronous>, transform_indices = @transform_1, window_bounds = array<i64: 288, 64>}, {pipeline_mode = #tpu.pipeline_mode<synchronous>, transform_indices = @transform_2, window_bounds = array<i64: 1, 64>}, {pipeline_mode = #tpu.pipeline_mode<synchronous>, transform_indices = @transform_3, window_bounds = array<i64: 1, 64>}, {pipeline_mode = #tpu.pipeline_mode<synchronous>, transform_indices = @transform_4, window_bounds = array<i64: 1, 64>}, {pipeline_mode = #tpu.pipeline_mode<synchronous>, transform_indices = @transform_5, window_bounds = array<i64: 4, 64, 64>}, {pipeline_mode = #tpu.pipeline_mode<synchronous>, transform_indices = @transform_6, window_bounds = array<i64: 4, 64, 64>}, {pipeline_mode = #tpu.pipeline_mode<synchronous>, transform_indices = @transform_7, window_bounds = array<i64: 4, 1, 64>}, {transform_indices = @transform_8, window_bounds = array<i64: 1, 8, 64>}]} {
    %c0_i32 = arith.constant 0 : i32
    %0 = arith.cmpi eq, %arg0, %c0_i32 : i32
    %1 = arith.extui %0 : i1 to i32
    %c0_i32_0 = arith.constant 0 : i32
    %2 = arith.cmpi ne, %1, %c0_i32_0 : i32
    scf.if %2 {
      %cst_72 = arith.constant 0.000000e+00 : f32
      %110 = vector.broadcast %cst_72 : f32 to vector<8x64xf32>
      %c0_73 = arith.constant 0 : index
      %c0_74 = arith.constant 0 : index
      %111 = vector.load %arg10[%c0_73, %c0_74] : memref<8x64xf32, #tpu.memory_space<vmem>>, vector<8x64xf32>
      tpu.vector_store %arg10[%c0_73, %c0_74], %110 {strides = array<i32>} : memref<8x64xf32, #tpu.memory_space<vmem>>, vector<8x64xf32>,
      %cst_75 = arith.constant 0.000000e+00 : f32
      %112 = vector.broadcast %cst_75 : f32 to vector<8x64xf32>
      %c0_76 = arith.constant 0 : index
      %c0_77 = arith.constant 0 : index
      %113 = vector.load %arg11[%c0_76, %c0_77] : memref<8x64xf32, #tpu.memory_space<vmem>>, vector<8x64xf32>
      tpu.vector_store %arg11[%c0_76, %c0_77], %112 {strides = array<i32>} : memref<8x64xf32, #tpu.memory_space<vmem>>, vector<8x64xf32>,
    } else {
    }
    %c0 = arith.constant 0 : index
    %c0_1 = arith.constant 0 : index
    %c0_2 = arith.constant 0 : index
    %3 = vector.load %arg1[%c0, %c0_1, %c0_2] : memref<1x8x288xbf16, #tpu.memory_space<vmem>>, vector<1x8x288xbf16>
    %4 = vector.shape_cast %3 : vector<1x8x288xbf16> to vector<8x288xbf16>
    %c0_3 = arith.constant 0 : index
    %c0_4 = arith.constant 0 : index
    %5 = vector.load %arg2[%c0_3, %c0_4] : memref<288x64xbf16, #tpu.memory_space<vmem>>, vector<288x64xbf16>
    %cst = arith.constant dense<0.000000e+00> : vector<8x64xf32>
    %6 = tpu.matmul %4, %5, %cst {dimension_numbers = #tpu.dot_dimension_numbers<[1], [0], [0], [1], [0, 0, 1, 1], [], []>} : vector<8x288xbf16>, vector<288x64xbf16>, vector<8x64xf32> -> vector<8x64xf32>
    %c0_5 = arith.constant 0 : index
    %c0_6 = arith.constant 0 : index
    %7 = vector.load %arg3[%c0_5, %c0_6] : memref<1x64xf32, #tpu.memory_space<vmem>>, vector<1x64xf32>
    %8 = vector.broadcast %7 : vector<1x64xf32> to vector<8x64xf32>
    %9 = arith.addf %6, %8 : vector<8x64xf32>
    %cst_7 = arith.constant dense<0.000000e+00> : vector<64xf32>
    %10 = vector.multi_reduction <add>, %9, %cst_7 [0] : vector<8x64xf32> to vector<64xf32>
    %11 = vector.shape_cast %10 : vector<64xf32> to vector<1x64xf32>
    %cst_8 = arith.constant 1.250000e-01 : f32
    %12 = vector.broadcast %cst_8 : f32 to vector<1x64xf32>
    %13 = arith.mulf %11, %12 : vector<1x64xf32>
    %14 = arith.mulf %9, %9 : vector<8x64xf32>
    %cst_9 = arith.constant dense<0.000000e+00> : vector<64xf32>
    %15 = vector.multi_reduction <add>, %14, %cst_9 [0] : vector<8x64xf32> to vector<64xf32>
    %16 = vector.shape_cast %15 : vector<64xf32> to vector<1x64xf32>
    %cst_10 = arith.constant 1.250000e-01 : f32
    %17 = vector.broadcast %cst_10 : f32 to vector<1x64xf32>
    %18 = arith.mulf %16, %17 : vector<1x64xf32>
    %19 = arith.mulf %13, %13 : vector<1x64xf32>
    %20 = arith.subf %18, %19 : vector<1x64xf32>
    %c0_11 = arith.constant 0 : index
    %c0_12 = arith.constant 0 : index
    %21 = vector.load %arg4[%c0_11, %c0_12] : memref<1x64xf32, #tpu.memory_space<vmem>>, vector<1x64xf32>
    %cst_13 = arith.constant 9.99999974E-6 : f32
    %22 = vector.broadcast %cst_13 : f32 to vector<1x64xf32>
    %23 = arith.addf %20, %22 : vector<1x64xf32>
    %24 = math.rsqrt %23 : vector<1x64xf32>
    %25 = arith.mulf %21, %24 : vector<1x64xf32>
    %c0_14 = arith.constant 0 : index
    %c0_15 = arith.constant 0 : index
    %26 = vector.load %arg5[%c0_14, %c0_15] : memref<1x64xf32, #tpu.memory_space<vmem>>, vector<1x64xf32>
    %27 = arith.mulf %13, %25 : vector<1x64xf32>
    %28 = arith.subf %26, %27 : vector<1x64xf32>
    %29 = vector.broadcast %25 : vector<1x64xf32> to vector<8x64xf32>
    %30 = arith.mulf %9, %29 : vector<8x64xf32>
    %31 = vector.broadcast %28 : vector<1x64xf32> to vector<8x64xf32>
    %32 = arith.addf %30, %31 : vector<8x64xf32>
    %cst_16 = arith.constant 0.000000e+00 : f32
    %33 = vector.broadcast %cst_16 : f32 to vector<8x64xf32>
    %34 = arith.maximumf %32, %33 : vector<8x64xf32>
    %35 = arith.truncf %34 : vector<8x64xf32> to vector<8x64xbf16>
    %c0_17 = arith.constant 0 : index
    %c0_18 = arith.constant 0 : index
    %36 = vector.load %arg10[%c0_17, %c0_18] : memref<8x64xf32, #tpu.memory_space<vmem>>, vector<8x64xf32>
    %37 = arith.truncf %36 : vector<8x64xf32> to vector<8x64xbf16>
    %c0_19 = arith.constant 0 : index
    %c0_20 = arith.constant 0 : index
    %c0_21 = arith.constant 0 : index
    %38 = vector.load %arg6[%c0_19, %c0_20, %c0_21] : memref<4x64x64xbf16, #tpu.memory_space<vmem>>, vector<1x64x64xbf16>
    %39 = vector.shape_cast %38 : vector<1x64x64xbf16> to vector<64x64xbf16>
    %cst_22 = arith.constant dense<0.000000e+00> : vector<8x64xf32>
    %40 = tpu.matmul %35, %39, %cst_22 {dimension_numbers = #tpu.dot_dimension_numbers<[1], [0], [0], [1], [0, 0, 1, 1], [], []>} : vector<8x64xbf16>, vector<64x64xbf16>, vector<8x64xf32> -> vector<8x64xf32>
    %c0_23 = arith.constant 0 : index
    %c0_24 = arith.constant 0 : index
    %c0_25 = arith.constant 0 : index
    %41 = vector.load %arg7[%c0_23, %c0_24, %c0_25] : memref<4x64x64xbf16, #tpu.memory_space<vmem>>, vector<1x64x64xbf16>
    %42 = vector.shape_cast %41 : vector<1x64x64xbf16> to vector<64x64xbf16>
    %cst_26 = arith.constant dense<0.000000e+00> : vector<8x64xf32>
    %43 = tpu.matmul %37, %42, %cst_26 {dimension_numbers = #tpu.dot_dimension_numbers<[1], [0], [0], [1], [0, 0, 1, 1], [], []>} : vector<8x64xbf16>, vector<64x64xbf16>, vector<8x64xf32> -> vector<8x64xf32>
    %44 = arith.addf %40, %43 : vector<8x64xf32>
    %c0_27 = arith.constant 0 : index
    %c0_28 = arith.constant 0 : index
    %c0_29 = arith.constant 0 : index
    %45 = vector.load %arg8[%c0_27, %c0_28, %c0_29] : memref<4x1x64xf32, #tpu.memory_space<vmem>>, vector<1x1x64xf32>
    %46 = vector.shape_cast %45 : vector<1x1x64xf32> to vector<1x64xf32>
    %47 = vector.broadcast %46 : vector<1x64xf32> to vector<8x64xf32>
    %48 = arith.addf %44, %47 : vector<8x64xf32>
    %49 = arith.negf %48 : vector<8x64xf32>
    %50 = math.exp %49 : vector<8x64xf32>
    %cst_30 = arith.constant 1.000000e+00 : f32
    %51 = vector.broadcast %cst_30 : f32 to vector<8x64xf32>
    %52 = arith.addf %51, %50 : vector<8x64xf32>
    %53 = arith.divf %51, %52 : vector<8x64xf32>
    %c1 = arith.constant 1 : index
    %c0_31 = arith.constant 0 : index
    %c0_32 = arith.constant 0 : index
    %54 = vector.load %arg6[%c1, %c0_31, %c0_32] : memref<4x64x64xbf16, #tpu.memory_space<vmem>>, vector<1x64x64xbf16>
    %55 = vector.shape_cast %54 : vector<1x64x64xbf16> to vector<64x64xbf16>
    %cst_33 = arith.constant dense<0.000000e+00> : vector<8x64xf32>
    %56 = tpu.matmul %35, %55, %cst_33 {dimension_numbers = #tpu.dot_dimension_numbers<[1], [0], [0], [1], [0, 0, 1, 1], [], []>} : vector<8x64xbf16>, vector<64x64xbf16>, vector<8x64xf32> -> vector<8x64xf32>
    %c1_34 = arith.constant 1 : index
    %c0_35 = arith.constant 0 : index
    %c0_36 = arith.constant 0 : index
    %57 = vector.load %arg7[%c1_34, %c0_35, %c0_36] : memref<4x64x64xbf16, #tpu.memory_space<vmem>>, vector<1x64x64xbf16>
    %58 = vector.shape_cast %57 : vector<1x64x64xbf16> to vector<64x64xbf16>
    %cst_37 = arith.constant dense<0.000000e+00> : vector<8x64xf32>
    %59 = tpu.matmul %37, %58, %cst_37 {dimension_numbers = #tpu.dot_dimension_numbers<[1], [0], [0], [1], [0, 0, 1, 1], [], []>} : vector<8x64xbf16>, vector<64x64xbf16>, vector<8x64xf32> -> vector<8x64xf32>
    %60 = arith.addf %56, %59 : vector<8x64xf32>
    %c1_38 = arith.constant 1 : index
    %c0_39 = arith.constant 0 : index
    %c0_40 = arith.constant 0 : index
    %61 = vector.load %arg8[%c1_38, %c0_39, %c0_40] : memref<4x1x64xf32, #tpu.memory_space<vmem>>, vector<1x1x64xf32>
    %62 = vector.shape_cast %61 : vector<1x1x64xf32> to vector<1x64xf32>
    %63 = vector.broadcast %62 : vector<1x64xf32> to vector<8x64xf32>
    %64 = arith.addf %60, %63 : vector<8x64xf32>
    %65 = arith.negf %64 : vector<8x64xf32>
    %66 = math.exp %65 : vector<8x64xf32>
    %cst_41 = arith.constant 1.000000e+00 : f32
    %67 = vector.broadcast %cst_41 : f32 to vector<8x64xf32>
    %68 = arith.addf %67, %66 : vector<8x64xf32>
    %69 = arith.divf %67, %68 : vector<8x64xf32>
    %c2 = arith.constant 2 : index
    %c0_42 = arith.constant 0 : index
    %c0_43 = arith.constant 0 : index
    %70 = vector.load %arg6[%c2, %c0_42, %c0_43] : memref<4x64x64xbf16, #tpu.memory_space<vmem>>, vector<1x64x64xbf16>
    %71 = vector.shape_cast %70 : vector<1x64x64xbf16> to vector<64x64xbf16>
    %cst_44 = arith.constant dense<0.000000e+00> : vector<8x64xf32>
    %72 = tpu.matmul %35, %71, %cst_44 {dimension_numbers = #tpu.dot_dimension_numbers<[1], [0], [0], [1], [0, 0, 1, 1], [], []>} : vector<8x64xbf16>, vector<64x64xbf16>, vector<8x64xf32> -> vector<8x64xf32>
    %c2_45 = arith.constant 2 : index
    %c0_46 = arith.constant 0 : index
    %c0_47 = arith.constant 0 : index
    %73 = vector.load %arg7[%c2_45, %c0_46, %c0_47] : memref<4x64x64xbf16, #tpu.memory_space<vmem>>, vector<1x64x64xbf16>
    %74 = vector.shape_cast %73 : vector<1x64x64xbf16> to vector<64x64xbf16>
    %cst_48 = arith.constant dense<0.000000e+00> : vector<8x64xf32>
    %75 = tpu.matmul %37, %74, %cst_48 {dimension_numbers = #tpu.dot_dimension_numbers<[1], [0], [0], [1], [0, 0, 1, 1], [], []>} : vector<8x64xbf16>, vector<64x64xbf16>, vector<8x64xf32> -> vector<8x64xf32>
    %76 = arith.addf %72, %75 : vector<8x64xf32>
    %c2_49 = arith.constant 2 : index
    %c0_50 = arith.constant 0 : index
    %c0_51 = arith.constant 0 : index
    %77 = vector.load %arg8[%c2_49, %c0_50, %c0_51] : memref<4x1x64xf32, #tpu.memory_space<vmem>>, vector<1x1x64xf32>
    %78 = vector.shape_cast %77 : vector<1x1x64xf32> to vector<1x64xf32>
    %79 = vector.broadcast %78 : vector<1x64xf32> to vector<8x64xf32>
    %80 = arith.addf %76, %79 : vector<8x64xf32>
    %81 = math.tanh %80 : vector<8x64xf32>
    %c3 = arith.constant 3 : index
    %c0_52 = arith.constant 0 : index
    %c0_53 = arith.constant 0 : index
    %82 = vector.load %arg6[%c3, %c0_52, %c0_53] : memref<4x64x64xbf16, #tpu.memory_space<vmem>>, vector<1x64x64xbf16>
    %83 = vector.shape_cast %82 : vector<1x64x64xbf16> to vector<64x64xbf16>
    %cst_54 = arith.constant dense<0.000000e+00> : vector<8x64xf32>
    %84 = tpu.matmul %35, %83, %cst_54 {dimension_numbers = #tpu.dot_dimension_numbers<[1], [0], [0], [1], [0, 0, 1, 1], [], []>} : vector<8x64xbf16>, vector<64x64xbf16>, vector<8x64xf32> -> vector<8x64xf32>
    %c3_55 = arith.constant 3 : index
    %c0_56 = arith.constant 0 : index
    %c0_57 = arith.constant 0 : index
    %85 = vector.load %arg7[%c3_55, %c0_56, %c0_57] : memref<4x64x64xbf16, #tpu.memory_space<vmem>>, vector<1x64x64xbf16>
    %86 = vector.shape_cast %85 : vector<1x64x64xbf16> to vector<64x64xbf16>
    %cst_58 = arith.constant dense<0.000000e+00> : vector<8x64xf32>
    %87 = tpu.matmul %37, %86, %cst_58 {dimension_numbers = #tpu.dot_dimension_numbers<[1], [0], [0], [1], [0, 0, 1, 1], [], []>} : vector<8x64xbf16>, vector<64x64xbf16>, vector<8x64xf32> -> vector<8x64xf32>
    %88 = arith.addf %84, %87 : vector<8x64xf32>
    %c3_59 = arith.constant 3 : index
    %c0_60 = arith.constant 0 : index
    %c0_61 = arith.constant 0 : index
    %89 = vector.load %arg8[%c3_59, %c0_60, %c0_61] : memref<4x1x64xf32, #tpu.memory_space<vmem>>, vector<1x1x64xf32>
    %90 = vector.shape_cast %89 : vector<1x1x64xf32> to vector<1x64xf32>
    %91 = vector.broadcast %90 : vector<1x64xf32> to vector<8x64xf32>
    %92 = arith.addf %88, %91 : vector<8x64xf32>
    %93 = arith.negf %92 : vector<8x64xf32>
    %94 = math.exp %93 : vector<8x64xf32>
    %cst_62 = arith.constant 1.000000e+00 : f32
    %95 = vector.broadcast %cst_62 : f32 to vector<8x64xf32>
    %96 = arith.addf %95, %94 : vector<8x64xf32>
    %97 = arith.divf %95, %96 : vector<8x64xf32>
    %c0_63 = arith.constant 0 : index
    %c0_64 = arith.constant 0 : index
    %98 = vector.load %arg11[%c0_63, %c0_64] : memref<8x64xf32, #tpu.memory_space<vmem>>, vector<8x64xf32>
    %99 = arith.mulf %69, %98 : vector<8x64xf32>
    %100 = arith.mulf %53, %81 : vector<8x64xf32>
    %101 = arith.addf %99, %100 : vector<8x64xf32>
    %102 = math.tanh %101 : vector<8x64xf32>
    %103 = arith.mulf %97, %102 : vector<8x64xf32>
    %c0_65 = arith.constant 0 : index
    %c0_66 = arith.constant 0 : index
    %104 = vector.load %arg11[%c0_65, %c0_66] : memref<8x64xf32, #tpu.memory_space<vmem>>, vector<8x64xf32>
    tpu.vector_store %arg11[%c0_65, %c0_66], %101 {strides = array<i32>} : memref<8x64xf32, #tpu.memory_space<vmem>>, vector<8x64xf32>,
    %c0_67 = arith.constant 0 : index
    %c0_68 = arith.constant 0 : index
    %105 = vector.load %arg10[%c0_67, %c0_68] : memref<8x64xf32, #tpu.memory_space<vmem>>, vector<8x64xf32>
    tpu.vector_store %arg10[%c0_67, %c0_68], %103 {strides = array<i32>} : memref<8x64xf32, #tpu.memory_space<vmem>>, vector<8x64xf32>,
    %106 = arith.truncf %103 : vector<8x64xf32> to vector<8x64xbf16>
    %c0_69 = arith.constant 0 : index
    %c0_70 = arith.constant 0 : index
    %c0_71 = arith.constant 0 : index
    %107 = vector.load %arg9[%c0_69, %c0_70, %c0_71] : memref<1x8x64xbf16, #tpu.memory_space<vmem>>, vector<1x8x64xbf16>
    %108 = vector.shape_cast %107 : vector<1x8x64xbf16> to vector<8x64xbf16>
    %109 = vector.shape_cast %106 : vector<8x64xbf16> to vector<1x8x64xbf16>
    tpu.vector_store %arg9[%c0_69, %c0_70, %c0_71], %109 {strides = array<i32>} : memref<1x8x64xbf16, #tpu.memory_space<vmem>>, vector<1x8x64xbf16>,
    return
  }
  func.func @transform_0(%arg0: i32) -> (i32, i32, i32) {
    %c0_i32 = arith.constant 0 : i32
    %c0_i32_0 = arith.constant 0 : i32
    %c0_i32_1 = arith.constant 0 : i32
    return %arg0, %c0_i32, %c0_i32_0 : i32, i32, i32
  }
  func.func @transform_1(%arg0: i32) -> (i32, i32) {
    %c0_i32 = arith.constant 0 : i32
    %c0_i32_0 = arith.constant 0 : i32
    %c0_i32_1 = arith.constant 0 : i32
    return %c0_i32, %c0_i32_0 : i32, i32
  }
  func.func @transform_2(%arg0: i32) -> (i32, i32) {
    %c0_i32 = arith.constant 0 : i32
    %c0_i32_0 = arith.constant 0 : i32
    %c0_i32_1 = arith.constant 0 : i32
    return %c0_i32, %c0_i32_0 : i32, i32
  }
  func.func @transform_3(%arg0: i32) -> (i32, i32) {
    %c0_i32 = arith.constant 0 : i32
    %c0_i32_0 = arith.constant 0 : i32
    %c0_i32_1 = arith.constant 0 : i32
    return %c0_i32, %c0_i32_0 : i32, i32
  }
  func.func @transform_4(%arg0: i32) -> (i32, i32) {
    %c0_i32 = arith.constant 0 : i32
    %c0_i32_0 = arith.constant 0 : i32
    %c0_i32_1 = arith.constant 0 : i32
    return %c0_i32, %c0_i32_0 : i32, i32
  }
  func.func @transform_5(%arg0: i32) -> (i32, i32, i32) {
    %c0_i32 = arith.constant 0 : i32
    %c0_i32_0 = arith.constant 0 : i32
    %c0_i32_1 = arith.constant 0 : i32
    %c0_i32_2 = arith.constant 0 : i32
    return %c0_i32, %c0_i32_0, %c0_i32_1 : i32, i32, i32
  }
  func.func @transform_6(%arg0: i32) -> (i32, i32, i32) {
    %c0_i32 = arith.constant 0 : i32
    %c0_i32_0 = arith.constant 0 : i32
    %c0_i32_1 = arith.constant 0 : i32
    %c0_i32_2 = arith.constant 0 : i32
    return %c0_i32, %c0_i32_0, %c0_i32_1 : i32, i32, i32
  }
  func.func @transform_7(%arg0: i32) -> (i32, i32, i32) {
    %c0_i32 = arith.constant 0 : i32
    %c0_i32_0 = arith.constant 0 : i32
    %c0_i32_1 = arith.constant 0 : i32
    %c0_i32_2 = arith.constant 0 : i32
    return %c0_i32, %c0_i32_0, %c0_i32_1 : i32, i32, i32
  }
  func.func @transform_8(%arg0: i32) -> (i32, i32, i32) {
    %c0_i32 = arith.constant 0 : i32
    %c0_i32_0 = arith.constant 0 : i32
    %c0_i32_1 = arith.constant 0 : i32
    return %arg0, %c0_i32, %c0_i32_0 : i32, i32, i32
  }
}

module attributes {stable_mosaic.version = 11 : i64} {
  func.func @conv_rnn_seq_kernel(%arg0: i32, %arg1: memref<1x2x576xbf16, #tpu.memory_space<vmem>>, %arg2: memref<576x128xbf16, #tpu.memory_space<vmem>>, %arg3: memref<1x128xf32, #tpu.memory_space<vmem>>, %arg4: memref<1x128xf32, #tpu.memory_space<vmem>>, %arg5: memref<1x128xf32, #tpu.memory_space<vmem>>, %arg6: memref<4x128x128xbf16, #tpu.memory_space<vmem>>, %arg7: memref<4x128x128xbf16, #tpu.memory_space<vmem>>, %arg8: memref<4x1x128xf32, #tpu.memory_space<vmem>>, %arg9: memref<1x2x128xbf16, #tpu.memory_space<vmem>>, %arg10: memref<2x128xf32, #tpu.memory_space<vmem>>, %arg11: memref<2x128xf32, #tpu.memory_space<vmem>>) attributes {dimension_semantics = [#tpu.dimension_semantics<arbitrary>], iteration_bounds = array<i64: 3>, scalar_prefetch = 0 : i64, scratch_operands = 2 : i64, tpu.core_type = #tpu.core_type<tc>, window_params = [{transform_indices = @transform_0, window_bounds = array<i64: 1, 2, 576>}, {pipeline_mode = #tpu.pipeline_mode<synchronous>, transform_indices = @transform_1, window_bounds = array<i64: 576, 128>}, {pipeline_mode = #tpu.pipeline_mode<synchronous>, transform_indices = @transform_2, window_bounds = array<i64: 1, 128>}, {pipeline_mode = #tpu.pipeline_mode<synchronous>, transform_indices = @transform_3, window_bounds = array<i64: 1, 128>}, {pipeline_mode = #tpu.pipeline_mode<synchronous>, transform_indices = @transform_4, window_bounds = array<i64: 1, 128>}, {pipeline_mode = #tpu.pipeline_mode<synchronous>, transform_indices = @transform_5, window_bounds = array<i64: 4, 128, 128>}, {pipeline_mode = #tpu.pipeline_mode<synchronous>, transform_indices = @transform_6, window_bounds = array<i64: 4, 128, 128>}, {pipeline_mode = #tpu.pipeline_mode<synchronous>, transform_indices = @transform_7, window_bounds = array<i64: 4, 1, 128>}, {transform_indices = @transform_8, window_bounds = array<i64: 1, 2, 128>}]} {
    %c0_i32 = arith.constant 0 : i32
    %0 = arith.cmpi eq, %arg0, %c0_i32 : i32
    %1 = arith.extui %0 : i1 to i32
    %c0_i32_0 = arith.constant 0 : i32
    %2 = arith.cmpi ne, %1, %c0_i32_0 : i32
    scf.if %2 {
      %cst_72 = arith.constant 0.000000e+00 : f32
      %110 = vector.broadcast %cst_72 : f32 to vector<2x128xf32>
      %c0_73 = arith.constant 0 : index
      %c0_74 = arith.constant 0 : index
      %111 = vector.load %arg10[%c0_73, %c0_74] : memref<2x128xf32, #tpu.memory_space<vmem>>, vector<2x128xf32>
      tpu.vector_store %arg10[%c0_73, %c0_74], %110 {strides = array<i32>} : memref<2x128xf32, #tpu.memory_space<vmem>>, vector<2x128xf32>,
      %cst_75 = arith.constant 0.000000e+00 : f32
      %112 = vector.broadcast %cst_75 : f32 to vector<2x128xf32>
      %c0_76 = arith.constant 0 : index
      %c0_77 = arith.constant 0 : index
      %113 = vector.load %arg11[%c0_76, %c0_77] : memref<2x128xf32, #tpu.memory_space<vmem>>, vector<2x128xf32>
      tpu.vector_store %arg11[%c0_76, %c0_77], %112 {strides = array<i32>} : memref<2x128xf32, #tpu.memory_space<vmem>>, vector<2x128xf32>,
    } else {
    }
    %c0 = arith.constant 0 : index
    %c0_1 = arith.constant 0 : index
    %c0_2 = arith.constant 0 : index
    %3 = vector.load %arg1[%c0, %c0_1, %c0_2] : memref<1x2x576xbf16, #tpu.memory_space<vmem>>, vector<1x2x576xbf16>
    %4 = vector.shape_cast %3 : vector<1x2x576xbf16> to vector<2x576xbf16>
    %c0_3 = arith.constant 0 : index
    %c0_4 = arith.constant 0 : index
    %5 = vector.load %arg2[%c0_3, %c0_4] : memref<576x128xbf16, #tpu.memory_space<vmem>>, vector<576x128xbf16>
    %cst = arith.constant dense<0.000000e+00> : vector<2x128xf32>
    %6 = tpu.matmul %4, %5, %cst {dimension_numbers = #tpu.dot_dimension_numbers<[1], [0], [0], [1], [0, 0, 1, 1], [], []>} : vector<2x576xbf16>, vector<576x128xbf16>, vector<2x128xf32> -> vector<2x128xf32>
    %c0_5 = arith.constant 0 : index
    %c0_6 = arith.constant 0 : index
    %7 = vector.load %arg3[%c0_5, %c0_6] : memref<1x128xf32, #tpu.memory_space<vmem>>, vector<1x128xf32>
    %8 = vector.broadcast %7 : vector<1x128xf32> to vector<2x128xf32>
    %9 = arith.addf %6, %8 : vector<2x128xf32>
    %cst_7 = arith.constant dense<0.000000e+00> : vector<128xf32>
    %10 = vector.multi_reduction <add>, %9, %cst_7 [0] : vector<2x128xf32> to vector<128xf32>
    %11 = vector.shape_cast %10 : vector<128xf32> to vector<1x128xf32>
    %cst_8 = arith.constant 5.000000e-01 : f32
    %12 = vector.broadcast %cst_8 : f32 to vector<1x128xf32>
    %13 = arith.mulf %11, %12 : vector<1x128xf32>
    %14 = arith.mulf %9, %9 : vector<2x128xf32>
    %cst_9 = arith.constant dense<0.000000e+00> : vector<128xf32>
    %15 = vector.multi_reduction <add>, %14, %cst_9 [0] : vector<2x128xf32> to vector<128xf32>
    %16 = vector.shape_cast %15 : vector<128xf32> to vector<1x128xf32>
    %cst_10 = arith.constant 5.000000e-01 : f32
    %17 = vector.broadcast %cst_10 : f32 to vector<1x128xf32>
    %18 = arith.mulf %16, %17 : vector<1x128xf32>
    %19 = arith.mulf %13, %13 : vector<1x128xf32>
    %20 = arith.subf %18, %19 : vector<1x128xf32>
    %c0_11 = arith.constant 0 : index
    %c0_12 = arith.constant 0 : index
    %21 = vector.load %arg4[%c0_11, %c0_12] : memref<1x128xf32, #tpu.memory_space<vmem>>, vector<1x128xf32>
    %cst_13 = arith.constant 9.99999974E-6 : f32
    %22 = vector.broadcast %cst_13 : f32 to vector<1x128xf32>
    %23 = arith.addf %20, %22 : vector<1x128xf32>
    %24 = math.rsqrt %23 : vector<1x128xf32>
    %25 = arith.mulf %21, %24 : vector<1x128xf32>
    %c0_14 = arith.constant 0 : index
    %c0_15 = arith.constant 0 : index
    %26 = vector.load %arg5[%c0_14, %c0_15] : memref<1x128xf32, #tpu.memory_space<vmem>>, vector<1x128xf32>
    %27 = arith.mulf %13, %25 : vector<1x128xf32>
    %28 = arith.subf %26, %27 : vector<1x128xf32>
    %29 = vector.broadcast %25 : vector<1x128xf32> to vector<2x128xf32>
    %30 = arith.mulf %9, %29 : vector<2x128xf32>
    %31 = vector.broadcast %28 : vector<1x128xf32> to vector<2x128xf32>
    %32 = arith.addf %30, %31 : vector<2x128xf32>
    %cst_16 = arith.constant 0.000000e+00 : f32
    %33 = vector.broadcast %cst_16 : f32 to vector<2x128xf32>
    %34 = arith.maximumf %32, %33 : vector<2x128xf32>
    %35 = arith.truncf %34 : vector<2x128xf32> to vector<2x128xbf16>
    %c0_17 = arith.constant 0 : index
    %c0_18 = arith.constant 0 : index
    %36 = vector.load %arg10[%c0_17, %c0_18] : memref<2x128xf32, #tpu.memory_space<vmem>>, vector<2x128xf32>
    %37 = arith.truncf %36 : vector<2x128xf32> to vector<2x128xbf16>
    %c0_19 = arith.constant 0 : index
    %c0_20 = arith.constant 0 : index
    %c0_21 = arith.constant 0 : index
    %38 = vector.load %arg6[%c0_19, %c0_20, %c0_21] : memref<4x128x128xbf16, #tpu.memory_space<vmem>>, vector<1x128x128xbf16>
    %39 = vector.shape_cast %38 : vector<1x128x128xbf16> to vector<128x128xbf16>
    %cst_22 = arith.constant dense<0.000000e+00> : vector<2x128xf32>
    %40 = tpu.matmul %35, %39, %cst_22 {dimension_numbers = #tpu.dot_dimension_numbers<[1], [0], [0], [1], [0, 0, 1, 1], [], []>} : vector<2x128xbf16>, vector<128x128xbf16>, vector<2x128xf32> -> vector<2x128xf32>
    %c0_23 = arith.constant 0 : index
    %c0_24 = arith.constant 0 : index
    %c0_25 = arith.constant 0 : index
    %41 = vector.load %arg7[%c0_23, %c0_24, %c0_25] : memref<4x128x128xbf16, #tpu.memory_space<vmem>>, vector<1x128x128xbf16>
    %42 = vector.shape_cast %41 : vector<1x128x128xbf16> to vector<128x128xbf16>
    %cst_26 = arith.constant dense<0.000000e+00> : vector<2x128xf32>
    %43 = tpu.matmul %37, %42, %cst_26 {dimension_numbers = #tpu.dot_dimension_numbers<[1], [0], [0], [1], [0, 0, 1, 1], [], []>} : vector<2x128xbf16>, vector<128x128xbf16>, vector<2x128xf32> -> vector<2x128xf32>
    %44 = arith.addf %40, %43 : vector<2x128xf32>
    %c0_27 = arith.constant 0 : index
    %c0_28 = arith.constant 0 : index
    %c0_29 = arith.constant 0 : index
    %45 = vector.load %arg8[%c0_27, %c0_28, %c0_29] : memref<4x1x128xf32, #tpu.memory_space<vmem>>, vector<1x1x128xf32>
    %46 = vector.shape_cast %45 : vector<1x1x128xf32> to vector<1x128xf32>
    %47 = vector.broadcast %46 : vector<1x128xf32> to vector<2x128xf32>
    %48 = arith.addf %44, %47 : vector<2x128xf32>
    %49 = arith.negf %48 : vector<2x128xf32>
    %50 = math.exp %49 : vector<2x128xf32>
    %cst_30 = arith.constant 1.000000e+00 : f32
    %51 = vector.broadcast %cst_30 : f32 to vector<2x128xf32>
    %52 = arith.addf %51, %50 : vector<2x128xf32>
    %53 = arith.divf %51, %52 : vector<2x128xf32>
    %c1 = arith.constant 1 : index
    %c0_31 = arith.constant 0 : index
    %c0_32 = arith.constant 0 : index
    %54 = vector.load %arg6[%c1, %c0_31, %c0_32] : memref<4x128x128xbf16, #tpu.memory_space<vmem>>, vector<1x128x128xbf16>
    %55 = vector.shape_cast %54 : vector<1x128x128xbf16> to vector<128x128xbf16>
    %cst_33 = arith.constant dense<0.000000e+00> : vector<2x128xf32>
    %56 = tpu.matmul %35, %55, %cst_33 {dimension_numbers = #tpu.dot_dimension_numbers<[1], [0], [0], [1], [0, 0, 1, 1], [], []>} : vector<2x128xbf16>, vector<128x128xbf16>, vector<2x128xf32> -> vector<2x128xf32>
    %c1_34 = arith.constant 1 : index
    %c0_35 = arith.constant 0 : index
    %c0_36 = arith.constant 0 : index
    %57 = vector.load %arg7[%c1_34, %c0_35, %c0_36] : memref<4x128x128xbf16, #tpu.memory_space<vmem>>, vector<1x128x128xbf16>
    %58 = vector.shape_cast %57 : vector<1x128x128xbf16> to vector<128x128xbf16>
    %cst_37 = arith.constant dense<0.000000e+00> : vector<2x128xf32>
    %59 = tpu.matmul %37, %58, %cst_37 {dimension_numbers = #tpu.dot_dimension_numbers<[1], [0], [0], [1], [0, 0, 1, 1], [], []>} : vector<2x128xbf16>, vector<128x128xbf16>, vector<2x128xf32> -> vector<2x128xf32>
    %60 = arith.addf %56, %59 : vector<2x128xf32>
    %c1_38 = arith.constant 1 : index
    %c0_39 = arith.constant 0 : index
    %c0_40 = arith.constant 0 : index
    %61 = vector.load %arg8[%c1_38, %c0_39, %c0_40] : memref<4x1x128xf32, #tpu.memory_space<vmem>>, vector<1x1x128xf32>
    %62 = vector.shape_cast %61 : vector<1x1x128xf32> to vector<1x128xf32>
    %63 = vector.broadcast %62 : vector<1x128xf32> to vector<2x128xf32>
    %64 = arith.addf %60, %63 : vector<2x128xf32>
    %65 = arith.negf %64 : vector<2x128xf32>
    %66 = math.exp %65 : vector<2x128xf32>
    %cst_41 = arith.constant 1.000000e+00 : f32
    %67 = vector.broadcast %cst_41 : f32 to vector<2x128xf32>
    %68 = arith.addf %67, %66 : vector<2x128xf32>
    %69 = arith.divf %67, %68 : vector<2x128xf32>
    %c2 = arith.constant 2 : index
    %c0_42 = arith.constant 0 : index
    %c0_43 = arith.constant 0 : index
    %70 = vector.load %arg6[%c2, %c0_42, %c0_43] : memref<4x128x128xbf16, #tpu.memory_space<vmem>>, vector<1x128x128xbf16>
    %71 = vector.shape_cast %70 : vector<1x128x128xbf16> to vector<128x128xbf16>
    %cst_44 = arith.constant dense<0.000000e+00> : vector<2x128xf32>
    %72 = tpu.matmul %35, %71, %cst_44 {dimension_numbers = #tpu.dot_dimension_numbers<[1], [0], [0], [1], [0, 0, 1, 1], [], []>} : vector<2x128xbf16>, vector<128x128xbf16>, vector<2x128xf32> -> vector<2x128xf32>
    %c2_45 = arith.constant 2 : index
    %c0_46 = arith.constant 0 : index
    %c0_47 = arith.constant 0 : index
    %73 = vector.load %arg7[%c2_45, %c0_46, %c0_47] : memref<4x128x128xbf16, #tpu.memory_space<vmem>>, vector<1x128x128xbf16>
    %74 = vector.shape_cast %73 : vector<1x128x128xbf16> to vector<128x128xbf16>
    %cst_48 = arith.constant dense<0.000000e+00> : vector<2x128xf32>
    %75 = tpu.matmul %37, %74, %cst_48 {dimension_numbers = #tpu.dot_dimension_numbers<[1], [0], [0], [1], [0, 0, 1, 1], [], []>} : vector<2x128xbf16>, vector<128x128xbf16>, vector<2x128xf32> -> vector<2x128xf32>
    %76 = arith.addf %72, %75 : vector<2x128xf32>
    %c2_49 = arith.constant 2 : index
    %c0_50 = arith.constant 0 : index
    %c0_51 = arith.constant 0 : index
    %77 = vector.load %arg8[%c2_49, %c0_50, %c0_51] : memref<4x1x128xf32, #tpu.memory_space<vmem>>, vector<1x1x128xf32>
    %78 = vector.shape_cast %77 : vector<1x1x128xf32> to vector<1x128xf32>
    %79 = vector.broadcast %78 : vector<1x128xf32> to vector<2x128xf32>
    %80 = arith.addf %76, %79 : vector<2x128xf32>
    %81 = math.tanh %80 : vector<2x128xf32>
    %c3 = arith.constant 3 : index
    %c0_52 = arith.constant 0 : index
    %c0_53 = arith.constant 0 : index
    %82 = vector.load %arg6[%c3, %c0_52, %c0_53] : memref<4x128x128xbf16, #tpu.memory_space<vmem>>, vector<1x128x128xbf16>
    %83 = vector.shape_cast %82 : vector<1x128x128xbf16> to vector<128x128xbf16>
    %cst_54 = arith.constant dense<0.000000e+00> : vector<2x128xf32>
    %84 = tpu.matmul %35, %83, %cst_54 {dimension_numbers = #tpu.dot_dimension_numbers<[1], [0], [0], [1], [0, 0, 1, 1], [], []>} : vector<2x128xbf16>, vector<128x128xbf16>, vector<2x128xf32> -> vector<2x128xf32>
    %c3_55 = arith.constant 3 : index
    %c0_56 = arith.constant 0 : index
    %c0_57 = arith.constant 0 : index
    %85 = vector.load %arg7[%c3_55, %c0_56, %c0_57] : memref<4x128x128xbf16, #tpu.memory_space<vmem>>, vector<1x128x128xbf16>
    %86 = vector.shape_cast %85 : vector<1x128x128xbf16> to vector<128x128xbf16>
    %cst_58 = arith.constant dense<0.000000e+00> : vector<2x128xf32>
    %87 = tpu.matmul %37, %86, %cst_58 {dimension_numbers = #tpu.dot_dimension_numbers<[1], [0], [0], [1], [0, 0, 1, 1], [], []>} : vector<2x128xbf16>, vector<128x128xbf16>, vector<2x128xf32> -> vector<2x128xf32>
    %88 = arith.addf %84, %87 : vector<2x128xf32>
    %c3_59 = arith.constant 3 : index
    %c0_60 = arith.constant 0 : index
    %c0_61 = arith.constant 0 : index
    %89 = vector.load %arg8[%c3_59, %c0_60, %c0_61] : memref<4x1x128xf32, #tpu.memory_space<vmem>>, vector<1x1x128xf32>
    %90 = vector.shape_cast %89 : vector<1x1x128xf32> to vector<1x128xf32>
    %91 = vector.broadcast %90 : vector<1x128xf32> to vector<2x128xf32>
    %92 = arith.addf %88, %91 : vector<2x128xf32>
    %93 = arith.negf %92 : vector<2x128xf32>
    %94 = math.exp %93 : vector<2x128xf32>
    %cst_62 = arith.constant 1.000000e+00 : f32
    %95 = vector.broadcast %cst_62 : f32 to vector<2x128xf32>
    %96 = arith.addf %95, %94 : vector<2x128xf32>
    %97 = arith.divf %95, %96 : vector<2x128xf32>
    %c0_63 = arith.constant 0 : index
    %c0_64 = arith.constant 0 : index
    %98 = vector.load %arg11[%c0_63, %c0_64] : memref<2x128xf32, #tpu.memory_space<vmem>>, vector<2x128xf32>
    %99 = arith.mulf %69, %98 : vector<2x128xf32>
    %100 = arith.mulf %53, %81 : vector<2x128xf32>
    %101 = arith.addf %99, %100 : vector<2x128xf32>
    %102 = math.tanh %101 : vector<2x128xf32>
    %103 = arith.mulf %97, %102 : vector<2x128xf32>
    %c0_65 = arith.constant 0 : index
    %c0_66 = arith.constant 0 : index
    %104 = vector.load %arg11[%c0_65, %c0_66] : memref<2x128xf32, #tpu.memory_space<vmem>>, vector<2x128xf32>
    tpu.vector_store %arg11[%c0_65, %c0_66], %101 {strides = array<i32>} : memref<2x128xf32, #tpu.memory_space<vmem>>, vector<2x128xf32>,
    %c0_67 = arith.constant 0 : index
    %c0_68 = arith.constant 0 : index
    %105 = vector.load %arg10[%c0_67, %c0_68] : memref<2x128xf32, #tpu.memory_space<vmem>>, vector<2x128xf32>
    tpu.vector_store %arg10[%c0_67, %c0_68], %103 {strides = array<i32>} : memref<2x128xf32, #tpu.memory_space<vmem>>, vector<2x128xf32>,
    %106 = arith.truncf %103 : vector<2x128xf32> to vector<2x128xbf16>
    %c0_69 = arith.constant 0 : index
    %c0_70 = arith.constant 0 : index
    %c0_71 = arith.constant 0 : index
    %107 = vector.load %arg9[%c0_69, %c0_70, %c0_71] : memref<1x2x128xbf16, #tpu.memory_space<vmem>>, vector<1x2x128xbf16>
    %108 = vector.shape_cast %107 : vector<1x2x128xbf16> to vector<2x128xbf16>
    %109 = vector.shape_cast %106 : vector<2x128xbf16> to vector<1x2x128xbf16>
    tpu.vector_store %arg9[%c0_69, %c0_70, %c0_71], %109 {strides = array<i32>} : memref<1x2x128xbf16, #tpu.memory_space<vmem>>, vector<1x2x128xbf16>,
    return
  }
  func.func @transform_0(%arg0: i32) -> (i32, i32, i32) {
    %c0_i32 = arith.constant 0 : i32
    %c0_i32_0 = arith.constant 0 : i32
    %c0_i32_1 = arith.constant 0 : i32
    return %arg0, %c0_i32, %c0_i32_0 : i32, i32, i32
  }
  func.func @transform_1(%arg0: i32) -> (i32, i32) {
    %c0_i32 = arith.constant 0 : i32
    %c0_i32_0 = arith.constant 0 : i32
    %c0_i32_1 = arith.constant 0 : i32
    return %c0_i32, %c0_i32_0 : i32, i32
  }
  func.func @transform_2(%arg0: i32) -> (i32, i32) {
    %c0_i32 = arith.constant 0 : i32
    %c0_i32_0 = arith.constant 0 : i32
    %c0_i32_1 = arith.constant 0 : i32
    return %c0_i32, %c0_i32_0 : i32, i32
  }
  func.func @transform_3(%arg0: i32) -> (i32, i32) {
    %c0_i32 = arith.constant 0 : i32
    %c0_i32_0 = arith.constant 0 : i32
    %c0_i32_1 = arith.constant 0 : i32
    return %c0_i32, %c0_i32_0 : i32, i32
  }
  func.func @transform_4(%arg0: i32) -> (i32, i32) {
    %c0_i32 = arith.constant 0 : i32
    %c0_i32_0 = arith.constant 0 : i32
    %c0_i32_1 = arith.constant 0 : i32
    return %c0_i32, %c0_i32_0 : i32, i32
  }
  func.func @transform_5(%arg0: i32) -> (i32, i32, i32) {
    %c0_i32 = arith.constant 0 : i32
    %c0_i32_0 = arith.constant 0 : i32
    %c0_i32_1 = arith.constant 0 : i32
    %c0_i32_2 = arith.constant 0 : i32
    return %c0_i32, %c0_i32_0, %c0_i32_1 : i32, i32, i32
  }
  func.func @transform_6(%arg0: i32) -> (i32, i32, i32) {
    %c0_i32 = arith.constant 0 : i32
    %c0_i32_0 = arith.constant 0 : i32
    %c0_i32_1 = arith.constant 0 : i32
    %c0_i32_2 = arith.constant 0 : i32
    return %c0_i32, %c0_i32_0, %c0_i32_1 : i32, i32, i32
  }
  func.func @transform_7(%arg0: i32) -> (i32, i32, i32) {
    %c0_i32 = arith.constant 0 : i32
    %c0_i32_0 = arith.constant 0 : i32
    %c0_i32_1 = arith.constant 0 : i32
    %c0_i32_2 = arith.constant 0 : i32
    return %c0_i32, %c0_i32_0, %c0_i32_1 : i32, i32, i32
  }
  func.func @transform_8(%arg0: i32) -> (i32, i32, i32) {
    %c0_i32 = arith.constant 0 : i32
    %c0_i32_0 = arith.constant 0 : i32
    %c0_i32_1 = arith.constant 0 : i32
    return %arg0, %c0_i32, %c0_i32_0 : i32, i32, i32
  }
}

module attributes {stable_mosaic.version = 11 : i64} {
  func.func @head_kernel(%arg0: memref<3x2x128xbf16, #tpu.memory_space<vmem>>, %arg1: memref<128x1024xbf16, #tpu.memory_space<vmem>>, %arg2: memref<1x1024xf32, #tpu.memory_space<vmem>>, %arg3: memref<1024x256xbf16, #tpu.memory_space<vmem>>, %arg4: memref<1x256xf32, #tpu.memory_space<vmem>>, %arg5: memref<256x8xbf16, #tpu.memory_space<vmem>>, %arg6: memref<1x8xf32, #tpu.memory_space<vmem>>, %arg7: memref<2x8xf32, #tpu.memory_space<vmem>>) attributes {dimension_semantics = [], scalar_prefetch = 0 : i64, scratch_operands = 0 : i64, tpu.core_type = #tpu.core_type<tc>} {
    %c0 = arith.constant 0 : index
    %c0_0 = arith.constant 0 : index
    %c0_1 = arith.constant 0 : index
    %0 = vector.load %arg0[%c0, %c0_0, %c0_1] : memref<3x2x128xbf16, #tpu.memory_space<vmem>>, vector<3x2x128xbf16>
    %1 = arith.extf %0 : vector<3x2x128xbf16> to vector<3x2x128xf32>
    %cst = arith.constant dense<0.000000e+00> : vector<2x128xf32>
    %2 = vector.multi_reduction <add>, %1, %cst [0] : vector<3x2x128xf32> to vector<2x128xf32>
    %cst_2 = arith.constant 3.000000e+00 : f32
    %3 = vector.broadcast %cst_2 : f32 to vector<2x128xf32>
    %4 = arith.divf %2, %3 : vector<2x128xf32>
    %5 = arith.truncf %4 : vector<2x128xf32> to vector<2x128xbf16>
    %c0_3 = arith.constant 0 : index
    %c0_4 = arith.constant 0 : index
    %6 = vector.load %arg1[%c0_3, %c0_4] : memref<128x1024xbf16, #tpu.memory_space<vmem>>, vector<128x1024xbf16>
    %cst_5 = arith.constant dense<0.000000e+00> : vector<2x1024xf32>
    %7 = tpu.matmul %5, %6, %cst_5 {dimension_numbers = #tpu.dot_dimension_numbers<[1], [0], [0], [1], [0, 0, 1, 1], [], []>} : vector<2x128xbf16>, vector<128x1024xbf16>, vector<2x1024xf32> -> vector<2x1024xf32>
    %c0_6 = arith.constant 0 : index
    %c0_7 = arith.constant 0 : index
    %8 = vector.load %arg2[%c0_6, %c0_7] : memref<1x1024xf32, #tpu.memory_space<vmem>>, vector<1x1024xf32>
    %9 = vector.broadcast %8 : vector<1x1024xf32> to vector<2x1024xf32>
    %10 = arith.addf %7, %9 : vector<2x1024xf32>
    %cst_8 = arith.constant 0.000000e+00 : f32
    %11 = vector.broadcast %cst_8 : f32 to vector<2x1024xf32>
    %12 = arith.maximumf %10, %11 : vector<2x1024xf32>
    %13 = arith.truncf %12 : vector<2x1024xf32> to vector<2x1024xbf16>
    %c0_9 = arith.constant 0 : index
    %c0_10 = arith.constant 0 : index
    %14 = vector.load %arg3[%c0_9, %c0_10] : memref<1024x256xbf16, #tpu.memory_space<vmem>>, vector<1024x256xbf16>
    %cst_11 = arith.constant dense<0.000000e+00> : vector<2x256xf32>
    %15 = tpu.matmul %13, %14, %cst_11 {dimension_numbers = #tpu.dot_dimension_numbers<[1], [0], [0], [1], [0, 0, 1, 1], [], []>} : vector<2x1024xbf16>, vector<1024x256xbf16>, vector<2x256xf32> -> vector<2x256xf32>
    %c0_12 = arith.constant 0 : index
    %c0_13 = arith.constant 0 : index
    %16 = vector.load %arg4[%c0_12, %c0_13] : memref<1x256xf32, #tpu.memory_space<vmem>>, vector<1x256xf32>
    %17 = vector.broadcast %16 : vector<1x256xf32> to vector<2x256xf32>
    %18 = arith.addf %15, %17 : vector<2x256xf32>
    %cst_14 = arith.constant 0.000000e+00 : f32
    %19 = vector.broadcast %cst_14 : f32 to vector<2x256xf32>
    %20 = arith.maximumf %18, %19 : vector<2x256xf32>
    %21 = arith.truncf %20 : vector<2x256xf32> to vector<2x256xbf16>
    %c0_15 = arith.constant 0 : index
    %c0_16 = arith.constant 0 : index
    %22 = vector.load %arg5[%c0_15, %c0_16] : memref<256x8xbf16, #tpu.memory_space<vmem>>, vector<256x8xbf16>
    %cst_17 = arith.constant dense<0.000000e+00> : vector<2x8xf32>
    %23 = tpu.matmul %21, %22, %cst_17 {dimension_numbers = #tpu.dot_dimension_numbers<[1], [0], [0], [1], [0, 0, 1, 1], [], []>} : vector<2x256xbf16>, vector<256x8xbf16>, vector<2x8xf32> -> vector<2x8xf32>
    %c0_18 = arith.constant 0 : index
    %c0_19 = arith.constant 0 : index
    %24 = vector.load %arg6[%c0_18, %c0_19] : memref<1x8xf32, #tpu.memory_space<vmem>>, vector<1x8xf32>
    %25 = vector.broadcast %24 : vector<1x8xf32> to vector<2x8xf32>
    %26 = arith.addf %23, %25 : vector<2x8xf32>
    %c0_20 = arith.constant 0 : index
    %c0_21 = arith.constant 0 : index
    %27 = vector.load %arg7[%c0_20, %c0_21] : memref<2x8xf32, #tpu.memory_space<vmem>>, vector<2x8xf32>
    tpu.vector_store %arg7[%c0_20, %c0_21], %26 {strides = array<i32>} : memref<2x8xf32, #tpu.memory_space<vmem>>, vector<2x8xf32>,
    return
  }
}

</mosaic_0001>

<llo_original>
// kernel: rcnn_forward.5
$region0: #{rcnn_forward.5}
  #allocation0 [shape = 'u32[]', space=smem, size = 0x4, offset = 0x4, fixed_abs, tag = 'smem constant byte address 0x4 - core index']
  #allocation1 [shape = 'u32[72,128]{1,0:T(1,128)}', space=vmem, size = 0x9000, scoped, tag = 'internal scratch']
  #allocation2 [shape = 'f32[128,16]{1,0:T(8,128)}', space=vmem, size = 0x10000, scoped, tag = 'scratch operand']
  #allocation3 [shape = 'f32[128,16]{1,0:T(8,128)}', space=vmem, size = 0x10000, scoped, tag = 'scratch operand']
  %s0 = inlined_call_operand.vmem [shape: bf16[3,128,27], index: 0, kind: input, shape index: {}]
  %s1 = inlined_call_operand.vmem [shape: bf16[27,16], index: 1, kind: input, shape index: {}]
  %s2 = inlined_call_operand.vmem [shape: f32[1,16], index: 2, kind: input, shape index: {}]
  %s3 = inlined_call_operand.vmem [shape: f32[1,16], index: 3, kind: input, shape index: {}]
  %s4 = inlined_call_operand.vmem [shape: f32[1,16], index: 4, kind: input, shape index: {}]
  %s5 = inlined_call_operand.vmem [shape: bf16[4,16,16], index: 5, kind: input, shape index: {}]
  %s6 = inlined_call_operand.vmem [shape: bf16[4,16,16], index: 6, kind: input, shape index: {}]
  %s7 = inlined_call_operand.vmem [shape: f32[4,1,16], index: 7, kind: input, shape index: {}]
  %s8 = inlined_call_operand.vmem [shape: bf16[3,128,16], index: 8, kind: output, shape index: {}]
  %s9 = sld [smem:[#allocation0]]
  $region69: #{rcnn_forward.5} parent=0
    _
  %s11 = ssub.s32 1, %s9
  %s12 = scalar_select 0, %s11, %s9
  loop: start=0, step=1, limit=5
  $region2: #{rcnn_forward.5} parent=0 // loop_pre_header
    _
  $region3: #{rcnn_forward.5} parent=0 // loop_header
    %s14 = sphi 0, %s18
    %p15 = scmp.ge.s32.totalorder %s14, 5
    %s24 = sphi 0, %s26
    %s27 = sphi 0, %s24
    %s28 = sphi 0, %s27
    %s44 = sphi 0, %s28
    %s48 = sphi 0, %s48
    %s50 = sphi 0, %s48
    %s51 = sphi 0, %s50
    %s65 = sphi 0, %s51
    %s69 = sphi 0, %s69
    %s71 = sphi 0, %s69
    %s72 = sphi 0, %s71
    %s86 = sphi 0, %s72
    %s90 = sphi 0, %s90
    %s92 = sphi 0, %s90
    %s93 = sphi 0, %s92
    %s107 = sphi 0, %s93
    %s111 = sphi 0, %s111
    %s113 = sphi 0, %s111
    %s114 = sphi 0, %s113
    %s128 = sphi 0, %s114
    %s132 = sphi 0, %s132
    %s134 = sphi 0, %s132
    %s135 = sphi 0, %s134
    %s149 = sphi 0, %s135
    %s153 = sphi 0, %s153
    %s155 = sphi 0, %s153
    %s156 = sphi 0, %s155
    %s170 = sphi 0, %s156
    %s174 = sphi 0, %s174
    %s176 = sphi 0, %s174
    %s177 = sphi 0, %s176
    %s191 = sphi 0, %s177
    %s197 = sphi 0, %s199
    %s200 = sphi 0, %s197
    %s201 = sphi 0, %s200
    %s217 = sphi 0, %s201
  $region4: #{rcnn_forward.5} parent=0 // loop_header_branch
    %17 = sbr.rel (%p15) target = $region8
  $region5: #{rcnn_forward.5} parent=0 // loop_body
    %s19 = ssub.s32 %s14, 1
    %s20 = ssub.s32 %s14, 2
    %s21 = sadd.s32 %s14, 1
    %s22 = ssub.s32 %s14, %s21
    %p23 = scmp.eq.s32.totalorder %s22, 0
    %s25 = sadd.s32 %s24, 1
    %s26 = scalar_select %p23, %s24, %s25
    %p29 = pneg %p23
    %p30 = scmp.eq.s32.totalorder %s14, 2
    %p31 = por %p29, %p30
    %p32 = scmp.ne.s32.totalorder %s24, %s27
    %p33 = scmp.eq.s32.totalorder %s14, 0
    %p34 = por %p32, %p33
    %p35 = scmp.ne.s32.totalorder %s24, %s27
    %p36 = scmp.eq.s32.totalorder %s19, 2
    %p37 = por %p35, %p36
    %p38 = scmp.ne.s32.totalorder %s27, %s28
    %p39 = scmp.eq.s32.totalorder %s19, 0
    %p40 = por %p38, %p39
    %p41 = scmp.ne.s32.totalorder %s27, %s28
    %p42 = scmp.eq.s32.totalorder %s20, 2
    %p43 = por %p41, %p42
    %p45 = scmp.ne.s32.totalorder %s28, %s44
    %p46 = scmp.eq.s32.totalorder %s20, 0
    %p47 = por %p45, %p46
    %s49 = sadd.s32 %s48, 1
    %p52 = scmp.eq.s32.totalorder %s14, 2
    %p53 = scmp.ne.s32.totalorder %s48, %s50
    %p54 = scmp.eq.s32.totalorder %s14, 0
    %p55 = por %p53, %p54
    %p56 = scmp.ne.s32.totalorder %s48, %s50
    %p57 = scmp.eq.s32.totalorder %s19, 2
    %p58 = por %p56, %p57
    %p59 = scmp.ne.s32.totalorder %s50, %s51
    %p60 = scmp.eq.s32.totalorder %s19, 0
    %p61 = por %p59, %p60
    %p62 = scmp.ne.s32.totalorder %s50, %s51
    %p63 = scmp.eq.s32.totalorder %s20, 2
    %p64 = por %p62, %p63
    %p66 = scmp.ne.s32.totalorder %s51, %s65
    %p67 = scmp.eq.s32.totalorder %s20, 0
    %p68 = por %p66, %p67
    %s70 = sadd.s32 %s69, 1
    %p73 = scmp.eq.s32.totalorder %s14, 2
    %p74 = scmp.ne.s32.totalorder %s69, %s71
    %p75 = scmp.eq.s32.totalorder %s14, 0
    %p76 = por %p74, %p75
    %p77 = scmp.ne.s32.totalorder %s69, %s71
    %p78 = scmp.eq.s32.totalorder %s19, 2
    %p79 = por %p77, %p78
    %p80 = scmp.ne.s32.totalorder %s71, %s72
    %p81 = scmp.eq.s32.totalorder %s19, 0
    %p82 = por %p80, %p81
    %p83 = scmp.ne.s32.totalorder %s71, %s72
    %p84 = scmp.eq.s32.totalorder %s20, 2
    %p85 = por %p83, %p84
    %p87 = scmp.ne.s32.totalorder %s72, %s86
    %p88 = scmp.eq.s32.totalorder %s20, 0
    %p89 = por %p87, %p88
    %s91 = sadd.s32 %s90, 1
    %p94 = scmp.eq.s32.totalorder %s14, 2
    %p95 = scmp.ne.s32.totalorder %s90, %s92
    %p96 = scmp.eq.s32.totalorder %s14, 0
    %p97 = por %p95, %p96
    %p98 = scmp.ne.s32.totalorder %s90, %s92
    %p99 = scmp.eq.s32.totalorder %s19, 2
    %p100 = por %p98, %p99
    %p101 = scmp.ne.s32.totalorder %s92, %s93
    %p102 = scmp.eq.s32.totalorder %s19, 0
    %p103 = por %p101, %p102
    %p104 = scmp.ne.s32.totalorder %s92, %s93
    %p105 = scmp.eq.s32.totalorder %s20, 2
    %p106 = por %p104, %p105
    %p108 = scmp.ne.s32.totalorder %s93, %s107
    %p109 = scmp.eq.s32.totalorder %s20, 0
    %p110 = por %p108, %p109
    %s112 = sadd.s32 %s111, 1
    %p115 = scmp.eq.s32.totalorder %s14, 2
    %p116 = scmp.ne.s32.totalorder %s111, %s113
    %p117 = scmp.eq.s32.totalorder %s14, 0
    %p118 = por %p116, %p117
    %p119 = scmp.ne.s32.totalorder %s111, %s113
    %p120 = scmp.eq.s32.totalorder %s19, 2
    %p121 = por %p119, %p120
    %p122 = scmp.ne.s32.totalorder %s113, %s114
    %p123 = scmp.eq.s32.totalorder %s19, 0
    %p124 = por %p122, %p123
    %p125 = scmp.ne.s32.totalorder %s113, %s114
    %p126 = scmp.eq.s32.totalorder %s20, 2
    %p127 = por %p125, %p126
    %p129 = scmp.ne.s32.totalorder %s114, %s128
    %p130 = scmp.eq.s32.totalorder %s20, 0
    %p131 = por %p129, %p130
    %s133 = sadd.s32 %s132, 1
    %p136 = scmp.eq.s32.totalorder %s14, 2
    %p137 = scmp.ne.s32.totalorder %s132, %s134
    %p138 = scmp.eq.s32.totalorder %s14, 0
    %p139 = por %p137, %p138
    %p140 = scmp.ne.s32.totalorder %s132, %s134
    %p141 = scmp.eq.s32.totalorder %s19, 2
    %p142 = por %p140, %p141
    %p143 = scmp.ne.s32.totalorder %s134, %s135
    %p144 = scmp.eq.s32.totalorder %s19, 0
    %p145 = por %p143, %p144
    %p146 = scmp.ne.s32.totalorder %s134, %s135
    %p147 = scmp.eq.s32.totalorder %s20, 2
    %p148 = por %p146, %p147
    %p150 = scmp.ne.s32.totalorder %s135, %s149
    %p151 = scmp.eq.s32.totalorder %s20, 0
    %p152 = por %p150, %p151
    %s154 = sadd.s32 %s153, 1
    %p157 = scmp.eq.s32.totalorder %s14, 2
    %p158 = scmp.ne.s32.totalorder %s153, %s155
    %p159 = scmp.eq.s32.totalorder %s14, 0
    %p160 = por %p158, %p159
    %p161 = scmp.ne.s32.totalorder %s153, %s155
    %p162 = scmp.eq.s32.totalorder %s19, 2
    %p163 = por %p161, %p162
    %p164 = scmp.ne.s32.totalorder %s155, %s156
    %p165 = scmp.eq.s32.totalorder %s19, 0
    %p166 = por %p164, %p165
    %p167 = scmp.ne.s32.totalorder %s155, %s156
    %p168 = scmp.eq.s32.totalorder %s20, 2
    %p169 = por %p167, %p168
    %p171 = scmp.ne.s32.totalorder %s156, %s170
    %p172 = scmp.eq.s32.totalorder %s20, 0
    %p173 = por %p171, %p172
    %s175 = sadd.s32 %s174, 1
    %p178 = scmp.eq.s32.totalorder %s14, 2
    %p179 = scmp.ne.s32.totalorder %s174, %s176
    %p180 = scmp.eq.s32.totalorder %s14, 0
    %p181 = por %p179, %p180
    %p182 = scmp.ne.s32.totalorder %s174, %s176
    %p183 = scmp.eq.s32.totalorder %s19, 2
    %p184 = por %p182, %p183
    %p185 = scmp.ne.s32.totalorder %s176, %s177
    %p186 = scmp.eq.s32.totalorder %s19, 0
    %p187 = por %p185, %p186
    %p188 = scmp.ne.s32.totalorder %s176, %s177
    %p189 = scmp.eq.s32.totalorder %s20, 2
    %p190 = por %p188, %p189
    %p192 = scmp.ne.s32.totalorder %s177, %s191
    %p193 = scmp.eq.s32.totalorder %s20, 0
    %p194 = por %p192, %p193
    %s195 = ssub.s32 %s14, %s21
    %p196 = scmp.eq.s32.totalorder %s195, 0
    %s198 = sadd.s32 %s197, 1
    %s199 = scalar_select %p196, %s197, %s198
    %p202 = pneg %p196
    %p203 = scmp.eq.s32.totalorder %s14, 2
    %p204 = por %p202, %p203
    %p205 = scmp.ne.s32.totalorder %s197, %s200
    %p206 = scmp.eq.s32.totalorder %s14, 0
    %p207 = por %p205, %p206
    %p208 = scmp.ne.s32.totalorder %s197, %s200
    %p209 = scmp.eq.s32.totalorder %s19, 2
    %p210 = por %p208, %p209
    %p211 = scmp.ne.s32.totalorder %s200, %s201
    %p212 = scmp.eq.s32.totalorder %s19, 0
    %p213 = por %p211, %p212
    %p214 = scmp.ne.s32.totalorder %s200, %s201
    %p215 = scmp.eq.s32.totalorder %s20, 2
    %p216 = por %p214, %p215
    %p218 = scmp.ne.s32.totalorder %s201, %s217
    %p219 = scmp.eq.s32.totalorder %s20, 0
    %p220 = por %p218, %p219
    %p221 = scmp.le.s32.totalorder 1, %s14
    %p222 = scmp.lt.s32.totalorder %s14, 4
    %p223 = pnand %p221, %p222
    %p224 = pneg %p223
    // Predicated region
    $region9: #{rcnn_forward.5} parent=5 // pred_check
      _
    $region10: #{rcnn_forward.5} parent=5 // pred_check_branch
      %226 = sbr.rel (%p223) target = $region12
    $region11: #{rcnn_forward.5} parent=5 // pred_region
      %s227 = ssub.s32 %s14, 1
      // Predicated region
      $region13: #{rcnn_forward.5} parent=11 // pred_check
        %p228 = pneg %p61
      $region14: #{rcnn_forward.5} parent=11 // pred_check_branch
        %230 = sbr.rel (%p228) target = $region16
      $region15: #{rcnn_forward.5} parent=11 // pred_region
        _
      $region16: #{rcnn_forward.5} parent=11 // pred_fallthru
        _
      // Predicated region
      $region17: #{rcnn_forward.5} parent=11 // pred_check
        %p231 = pneg %p82
      $region18: #{rcnn_forward.5} parent=11 // pred_check_branch
        %233 = sbr.rel (%p231) target = $region20
      $region19: #{rcnn_forward.5} parent=11 // pred_region
        _
      $region20: #{rcnn_forward.5} parent=11 // pred_fallthru
        _
      // Predicated region
      $region21: #{rcnn_forward.5} parent=11 // pred_check
        %p234 = pneg %p103
      $region22: #{rcnn_forward.5} parent=11 // pred_check_branch
        %236 = sbr.rel (%p234) target = $region24
      $region23: #{rcnn_forward.5} parent=11 // pred_region
        _
      $region24: #{rcnn_forward.5} parent=11 // pred_fallthru
        _
      // Predicated region
      $region25: #{rcnn_forward.5} parent=11 // pred_check
        %p237 = pneg %p124
      $region26: #{rcnn_forward.5} parent=11 // pred_check_branch
        %239 = sbr.rel (%p237) target = $region28
      $region27: #{rcnn_forward.5} parent=11 // pred_region
        _
      $region28: #{rcnn_forward.5} parent=11 // pred_fallthru
        _
      // Predicated region
      $region29: #{rcnn_forward.5} parent=11 // pred_check
        %p240 = pneg %p145
      $region30: #{rcnn_forward.5} parent=11 // pred_check_branch
        %242 = sbr.rel (%p240) target = $region32
      $region31: #{rcnn_forward.5} parent=11 // pred_region
        _
      $region32: #{rcnn_forward.5} parent=11 // pred_fallthru
        _
      // Predicated region
      $region33: #{rcnn_forward.5} parent=11 // pred_check
        %p243 = pneg %p166
      $region34: #{rcnn_forward.5} parent=11 // pred_check_branch
        %245 = sbr.rel (%p243) target = $region36
      $region35: #{rcnn_forward.5} parent=11 // pred_region
        _
      $region36: #{rcnn_forward.5} parent=11 // pred_fallthru
        _
      // Predicated region
      $region37: #{rcnn_forward.5} parent=11 // pred_check
        %p246 = pneg %p187
      $region38: #{rcnn_forward.5} parent=11 // pred_check_branch
        %248 = sbr.rel (%p246) target = $region40
      $region39: #{rcnn_forward.5} parent=11 // pred_region
        _
      $region40: #{rcnn_forward.5} parent=11 // pred_fallthru
        _
    $region12: #{rcnn_forward.5} parent=5 // pred_fallthru
      _
    %p249 = scmp.lt.s32.totalorder %s14, 3
    // Predicated region
    $region41: #{rcnn_forward.5} parent=5 // pred_check
      %p250 = pneg %p249
    $region42: #{rcnn_forward.5} parent=5 // pred_check_branch
      %252 = sbr.rel (%p250) target = $region44
    $region43: #{rcnn_forward.5} parent=5 // pred_region
      // Predicated region
      $region45: #{rcnn_forward.5} parent=43 // pred_check
        %p253 = pneg %p34
      $region46: #{rcnn_forward.5} parent=43 // pred_check_branch
        %255 = sbr.rel (%p253) target = $region48
      $region47: #{rcnn_forward.5} parent=43 // pred_region
        %p256 = scmp.lt.s32.totalorder %s14, 2
        %s257 = scalar_select %p256, %s14, 2
        %s258 = smul.addr %s257, 16
        %s259 = smul.addr %s258, 4
        %s260 = scalar_lea.vmem %s0, %s259
      $region48: #{rcnn_forward.5} parent=43 // pred_fallthru
        _
    $region44: #{rcnn_forward.5} parent=5 // pred_fallthru
      _
    %p261 = scmp.le.s32.totalorder 1, %s14
    %p262 = scmp.lt.s32.totalorder %s14, 4
    %p263 = pnand %p261, %p262
    %p264 = pneg %p263
    // Predicated region
    $region49: #{rcnn_forward.5} parent=5 // pred_check
      _
    $region50: #{rcnn_forward.5} parent=5 // pred_check_branch
      %266 = sbr.rel (%p263) target = $region52
    $region51: #{rcnn_forward.5} parent=5 // pred_region
      %s267 = ssub.s32 %s14, 1
      %p268 = scmp.lt.s32.totalorder %s19, 2
      %s269 = scalar_select %p268, %s19, 2
      %s270 = smul.addr %s269, 16
      %s271 = smul.addr %s270, 4
      %s272 = scalar_lea.vmem %s0, %s271
      %p273 = pneg %p40
      %p274 = pneg %p37
      %p275 = pneg %p61
      %p276 = pneg %p58
      %p277 = pneg %p82
      %p278 = pneg %p79
      %p279 = pneg %p103
      %p280 = pneg %p100
      %p281 = pneg %p124
      %p282 = pneg %p121
      %p283 = pneg %p145
      %p284 = pneg %p142
      %p285 = pneg %p166
      %p286 = pneg %p163
      %p287 = pneg %p187
      %p288 = pneg %p184
      %p289 = pneg %p213
      %p290 = pneg %p210
      %p291 = scmp.lt.s32.totalorder %s19, 2
      %s292 = scalar_select %p291, %s19, 2
      %s293 = smul.addr %s292, 16
      %s294 = smul.addr %s293, 4
      %s295 = scalar_lea.vmem %s8, %s294
      %p296 = scmp.lt.s32.totalorder %s19, 2
      %s297 = scalar_select %p296, %s19, 2
      %s298 = smul.addr %s297, 16
      %s299 = smul.addr %s298, 4
      %s300 = scalar_lea.vmem %s0, %s299
      %p301 = scmp.lt.s32.totalorder %s19, 2
      %s302 = scalar_select %p301, %s19, 2
      %s303 = smul.addr %s302, 16
      %s304 = smul.addr %s303, 4
      %s305 = scalar_lea.vmem %s8, %s304
      %p307 = scmp.eq.s32.totalorder %s19, 0
      // Predicated region
      $region53: #{rcnn_forward.5} parent=51 // pred_check
        %p308 = pneg %p307
      $region54: #{rcnn_forward.5} parent=51 // pred_check_branch
        %310 = sbr.rel (%p308) target = $region56
      $region55: #{rcnn_forward.5} parent=51 // pred_region
        %vm311 = vcmask 130048
        %312 = vst.msk [vmem:[#allocation2] sm:$0xff] %vm311, 0.0
        %313 = vst.msk [vmem:[#allocation2 + $0x8] sm:$0xff] %vm311, 0.0
        %314 = vst.msk [vmem:[#allocation2 + $0x10] sm:$0xff] %vm311, 0.0
        %315 = vst.msk [vmem:[#allocation2 + $0x18] sm:$0xff] %vm311, 0.0
        %316 = vst.msk [vmem:[#allocation2 + $0x20] sm:$0xff] %vm311, 0.0
        %317 = vst.msk [vmem:[#allocation2 + $0x28] sm:$0xff] %vm311, 0.0
        %318 = vst.msk [vmem:[#allocation2 + $0x30] sm:$0xff] %vm311, 0.0
        %319 = vst.msk [vmem:[#allocation2 + $0x38] sm:$0xff] %vm311, 0.0
        %320 = vst.msk [vmem:[#allocation2 + $0x40] sm:$0xff] %vm311, 0.0
        %321 = vst.msk [vmem:[#allocation2 + $0x48] sm:$0xff] %vm311, 0.0
        %322 = vst.msk [vmem:[#allocation2 + $0x50] sm:$0xff] %vm311, 0.0
        %323 = vst.msk [vmem:[#allocation2 + $0x58] sm:$0xff] %vm311, 0.0
        %324 = vst.msk [vmem:[#allocation2 + $0x60] sm:$0xff] %vm311, 0.0
        %325 = vst.msk [vmem:[#allocation2 + $0x68] sm:$0xff] %vm311, 0.0
        %326 = vst.msk [vmem:[#allocation2 + $0x70] sm:$0xff] %vm311, 0.0
        %327 = vst.msk [vmem:[#allocation2 + $0x78] sm:$0xff] %vm311, 0.0
        %328 = vst.msk [vmem:[#allocation3] sm:$0xff] %vm311, 0.0
        %329 = vst.msk [vmem:[#allocation3 + $0x8] sm:$0xff] %vm311, 0.0
        %330 = vst.msk [vmem:[#allocation3 + $0x10] sm:$0xff] %vm311, 0.0
        %331 = vst.msk [vmem:[#allocation3 + $0x18] sm:$0xff] %vm311, 0.0
        %332 = vst.msk [vmem:[#allocation3 + $0x20] sm:$0xff] %vm311, 0.0
        %333 = vst.msk [vmem:[#allocation3 + $0x28] sm:$0xff] %vm311, 0.0
        %334 = vst.msk [vmem:[#allocation3 + $0x30] sm:$0xff] %vm311, 0.0
        %335 = vst.msk [vmem:[#allocation3 + $0x38] sm:$0xff] %vm311, 0.0
        %336 = vst.msk [vmem:[#allocation3 + $0x40] sm:$0xff] %vm311, 0.0
        %337 = vst.msk [vmem:[#allocation3 + $0x48] sm:$0xff] %vm311, 0.0
        %338 = vst.msk [vmem:[#allocation3 + $0x50] sm:$0xff] %vm311, 0.0
        %339 = vst.msk [vmem:[#allocation3 + $0x58] sm:$0xff] %vm311, 0.0
        %340 = vst.msk [vmem:[#allocation3 + $0x60] sm:$0xff] %vm311, 0.0
        %341 = vst.msk [vmem:[#allocation3 + $0x68] sm:$0xff] %vm311, 0.0
        %342 = vst.msk [vmem:[#allocation3 + $0x70] sm:$0xff] %vm311, 0.0
        %343 = vst.msk [vmem:[#allocation3 + $0x78] sm:$0xff] %vm311, 0.0
      $region56: #{rcnn_forward.5} parent=51 // pred_fallthru
        _
      %v344 = vld [vmem:[%s300] sm:$0xf]
      %v345 = vld [vmem:[%s300 + $0x4] sm:$0xf]
      %v346 = vld [vmem:[%s300 + $0x8] sm:$0xf]
      %v347 = vld [vmem:[%s300 + $0xc] sm:$0xf]
      %v348 = vld [vmem:[%s300 + $0x10] sm:$0xf]
      %v349 = vld [vmem:[%s300 + $0x14] sm:$0xf]
      %v350 = vld [vmem:[%s300 + $0x18] sm:$0xf]
      %v351 = vld [vmem:[%s300 + $0x1c] sm:$0xf]
      %v352 = vld [vmem:[%s300 + $0x20] sm:$0xf]
      %v353 = vld [vmem:[%s300 + $0x24] sm:$0xf]
      %v354 = vld [vmem:[%s300 + $0x28] sm:$0xf]
      %v355 = vld [vmem:[%s300 + $0x2c] sm:$0xf]
      %v356 = vld [vmem:[%s300 + $0x30] sm:$0xf]
      %v357 = vld [vmem:[%s300 + $0x34] sm:$0xf]
      %v358 = vld [vmem:[%s300 + $0x38] sm:$0xf]
      %v359 = vld [vmem:[%s300 + $0x3c] sm:$0xf]
      %v360 = vld [vmem:[%s1] sm:$0xf]
      %v361 = vld [vmem:[%s1 + $0x4] sm:$0xf]
      %v362 = vld [vmem:[%s1 + $0x8] sm:$0xf]
      %v363 = vld [vmem:[%s1 + $0xc] sm:$0x3]
      %v364 = vld [vmem:[%s2] sm:$0x1]
      %v366 = vperm.slane %v364, 0
      %v384 = vunpack.c.l.b16 %v344
      %v385 = vunpack.c.l.b16 %v345
      %v386 = vunpack.c.l.b16 %v346
      %v387 = vunpack.c.l.b16 %v347
      %v388 = vunpack.c.l.b16 %v348
      %v389 = vunpack.c.l.b16 %v349
      %v390 = vunpack.c.l.b16 %v350
      %v391 = vunpack.c.l.b16 %v351
      %v392 = vunpack.c.l.b16 %v352
      %v393 = vunpack.c.l.b16 %v353
      %v394 = vunpack.c.l.b16 %v354
      %v395 = vunpack.c.l.b16 %v355
      %v396 = vunpack.c.l.b16 %v356
      %v397 = vunpack.c.l.b16 %v357
      %v398 = vunpack.c.l.b16 %v358
      %v399 = vunpack.c.l.b16 %v359
      %v400 = vpack.c.b16 %v385, %v384
      %v401 = vpack.c.b16 %v387, %v386
      %v402 = vpack.c.b16 %v389, %v388
      %v403 = vpack.c.b16 %v391, %v390
      %v404 = vpack.c.b16 %v393, %v392
      %v405 = vpack.c.b16 %v395, %v394
      %v406 = vpack.c.b16 %v397, %v396
      %v407 = vpack.c.b16 %v399, %v398
      %v412 = vunpack.c.l.b16 %v360
      %v413 = vunpack.c.l.b16 %v361
      %v414 = vunpack.c.l.b16 %v362
      %v415 = vunpack.c.l.b16 %v363
      %v416 = vpack.c.b16 %v413, %v412
      %v417 = vpack.c.b16 %v415, %v414
      %vm419 = vcmask 220160
      %v421 = vsel %vm419, %v400, 0
      %v424 = vsel %vm419, %v401, 0
      %v427 = vsel %vm419, %v402, 0
      %v430 = vsel %vm419, %v403, 0
      %v433 = vsel %vm419, %v404, 0
      %v436 = vsel %vm419, %v405, 0
      %v439 = vsel %vm419, %v406, 0
      %v442 = vsel %vm419, %v407, 0
      %vm444 = vcmask 1044480
      %vm445 = vcmask 1045504
      %v446 = vsel %vm444, 4294967295, 65535
      %v447 = vsel %vm445, %v446, 0
      %v449 = vand.u32 %v417, %v447
      %451 = vmatpush.bf16.msra.mxu0 0
      %452 = vmatpush.bf16.msra.mxu0 0
      %453 = vmatpush.bf16.msra.mxu0 0
      %454 = vmatpush.bf16.msra.mxu0 0
      %455 = vmatpush.bf16.msra.mxu0 0
      %456 = vmatpush.bf16.msra.mxu0 0
      %457 = vmatpush.bf16.msra.mxu0 %v449
      %458 = vmatpush.bf16.msra.mxu0 %v416
      %459 = vmatmul.bf16.gmra.mxu0 %v421
      %v460 = vpop.f32.mrf.mxu0
      %v461 = vadd.f32 %v366, %v460
      %v462 = vpop.f32.mrf.mxu0
      %v463 = vadd.f32 %v366, %v462
      %464 = vmatmul.bf16.gmra.mxu0 %v424
      %v465 = vpop.f32.mrf.mxu0
      %v466 = vadd.f32 %v366, %v465
      %v467 = vpop.f32.mrf.mxu0
      %v468 = vadd.f32 %v366, %v467
      %469 = vmatmul.bf16.gmra.mxu0 %v427
      %v470 = vpop.f32.mrf.mxu0
      %v471 = vadd.f32 %v366, %v470
      %v472 = vpop.f32.mrf.mxu0
      %v473 = vadd.f32 %v366, %v472
      %474 = vmatmul.bf16.gmra.mxu0 %v430
      %v475 = vpop.f32.mrf.mxu0
      %v476 = vadd.f32 %v366, %v475
      %v477 = vpop.f32.mrf.mxu0
      %v478 = vadd.f32 %v366, %v477
      %479 = vmatmul.bf16.gmra.mxu0 %v433
      %v480 = vpop.f32.mrf.mxu0
      %v481 = vadd.f32 %v366, %v480
      %v482 = vpop.f32.mrf.mxu0
      %v483 = vadd.f32 %v366, %v482
      %484 = vmatmul.bf16.gmra.mxu0 %v436
      %v485 = vpop.f32.mrf.mxu0
      %v486 = vadd.f32 %v366, %v485
      %v487 = vpop.f32.mrf.mxu0
      %v488 = vadd.f32 %v366, %v487
      %489 = vmatmul.bf16.gmra.mxu0 %v439
      %v490 = vpop.f32.mrf.mxu0
      %v491 = vadd.f32 %v366, %v490
      %v492 = vpop.f32.mrf.mxu0
      %v493 = vadd.f32 %v366, %v492
      %494 = vmatmul.bf16.gmra.mxu0 %v442
      %v495 = vpop.f32.mrf.mxu0
      %v496 = vadd.f32 %v366, %v495
      %v497 = vpop.f32.mrf.mxu0
      %v498 = vadd.f32 %v366, %v497
      %499 = vdwg.mxu0
      %vm500 = vcmask 130048
      %v501 = vsel %vm500, %v461, 0.0
      %v502 = vsel %vm500, %v463, 0.0
      %v503 = vadd.f32 %v501, %v502
      %v504 = vsel %vm500, %v466, 0.0
      %v505 = vadd.f32 %v503, %v504
      %v506 = vsel %vm500, %v468, 0.0
      %v507 = vadd.f32 %v505, %v506
      %v508 = vsel %vm500, %v471, 0.0
      %v509 = vadd.f32 %v507, %v508
      %v510 = vsel %vm500, %v473, 0.0
      %v511 = vadd.f32 %v509, %v510
      %v512 = vsel %vm500, %v476, 0.0
      %v513 = vadd.f32 %v511, %v512
      %v514 = vsel %vm500, %v478, 0.0
      %v515 = vadd.f32 %v513, %v514
      %v516 = vsel %vm500, %v481, 0.0
      %v517 = vadd.f32 %v515, %v516
      %v518 = vsel %vm500, %v483, 0.0
      %v519 = vadd.f32 %v517, %v518
      %v520 = vsel %vm500, %v486, 0.0
      %v521 = vadd.f32 %v519, %v520
      %v522 = vsel %vm500, %v488, 0.0
      %v523 = vadd.f32 %v521, %v522
      %v524 = vsel %vm500, %v491, 0.0
      %v525 = vadd.f32 %v523, %v524
      %v526 = vsel %vm500, %v493, 0.0
      %v527 = vadd.f32 %v525, %v526
      %v528 = vsel %vm500, %v496, 0.0
      %v529 = vadd.f32 %v527, %v528
      %v530 = vsel %vm500, %v498, 0.0
      %v531 = vadd.f32 %v529, %v530
      %v532 = vrot.slane %v531, 4
      %v533 = vadd.f32 %v531, %v532
      %v534 = vrot.slane %v533, 2
      %v535 = vadd.f32 %v533, %v534
      %v536 = vrot.slane %v535, 1
      %v537 = vadd.f32 %v535, %v536
      %v538 = vmul.f32 %v537, 0.0078125
      %v539 = vmul.f32 %v461, %v461
      %v540 = vmul.f32 %v463, %v463
      %v541 = vmul.f32 %v466, %v466
      %v542 = vmul.f32 %v468, %v468
      %v543 = vmul.f32 %v471, %v471
      %v544 = vmul.f32 %v473, %v473
      %v545 = vmul.f32 %v476, %v476
      %v546 = vmul.f32 %v478, %v478
      %v547 = vmul.f32 %v481, %v481
      %v548 = vmul.f32 %v483, %v483
      %v549 = vmul.f32 %v486, %v486
      %v550 = vmul.f32 %v488, %v488
      %v551 = vmul.f32 %v491, %v491
      %v552 = vmul.f32 %v493, %v493
      %v553 = vmul.f32 %v496, %v496
      %v554 = vmul.f32 %v498, %v498
      %v555 = vsel %vm500, %v539, 0.0
      %v556 = vsel %vm500, %v540, 0.0
      %v557 = vadd.f32 %v555, %v556
      %v558 = vsel %vm500, %v541, 0.0
      %v559 = vadd.f32 %v557, %v558
      %v560 = vsel %vm500, %v542, 0.0
      %v561 = vadd.f32 %v559, %v560
      %v562 = vsel %vm500, %v543, 0.0
      %v563 = vadd.f32 %v561, %v562
      %v564 = vsel %vm500, %v544, 0.0
      %v565 = vadd.f32 %v563, %v564
      %v566 = vsel %vm500, %v545, 0.0
      %v567 = vadd.f32 %v565, %v566
      %v568 = vsel %vm500, %v546, 0.0
      %v569 = vadd.f32 %v567, %v568
      %v570 = vsel %vm500, %v547, 0.0
      %v571 = vadd.f32 %v569, %v570
      %v572 = vsel %vm500, %v548, 0.0
      %v573 = vadd.f32 %v571, %v572
      %v574 = vsel %vm500, %v549, 0.0
      %v575 = vadd.f32 %v573, %v574
      %v576 = vsel %vm500, %v550, 0.0
      %v577 = vadd.f32 %v575, %v576
      %v578 = vsel %vm500, %v551, 0.0
      %v579 = vadd.f32 %v577, %v578
      %v580 = vsel %vm500, %v552, 0.0
      %v581 = vadd.f32 %v579, %v580
      %v582 = vsel %vm500, %v553, 0.0
      %v583 = vadd.f32 %v581, %v582
      %v584 = vsel %vm500, %v554, 0.0
      %v585 = vadd.f32 %v583, %v584
      %v586 = vrot.slane %v585, 4
      %v587 = vadd.f32 %v585, %v586
      %v588 = vrot.slane %v587, 2
      %v589 = vadd.f32 %v587, %v588
      %v590 = vrot.slane %v589, 1
      %v591 = vadd.f32 %v589, %v590
      %v592 = vmul.f32 %v591, 0.0078125
      %v593 = vmul.f32 %v538, %v538
      %v594 = vsub.f32 %v592, %v593
      %v595 = vld [vmem:[%s3] sm:$0x1]
      %v596 = vadd.f32 %v594, 1e-05
      %v597 = vrsqrt.pop %v596
      %v598 = vmul.f32 %v597, %v596
      %v599 = vmul.f32 %v598, %v597
      %v600 = vmul.f32 0.5, %v599
      %v601 = vsub.f32 1.5, %v600
      %v602 = vmul.f32 %v597, %v601
      %vm603 = vweird.f32 %v596
      %vm604 = vweird.f32 %v597
      %vm605 = vmor %vm603, %vm604
      %v606 = vsel %vm605, %v597, %v602
      %v607 = vmul.f32 %v595, %v606
      %v608 = vld [vmem:[%s4] sm:$0x1]
      %v609 = vmul.f32 %v538, %v607
      %v610 = vsub.f32 %v608, %v609
      %v612 = vperm.slane %v607, 0
      %v614 = vmul.f32 %v461, %v612
      %v615 = vmul.f32 %v463, %v612
      %v616 = vmul.f32 %v466, %v612
      %v617 = vmul.f32 %v468, %v612
      %v618 = vmul.f32 %v471, %v612
      %v619 = vmul.f32 %v473, %v612
      %v620 = vmul.f32 %v476, %v612
      %v621 = vmul.f32 %v478, %v612
      %v622 = vmul.f32 %v481, %v612
      %v623 = vmul.f32 %v483, %v612
      %v624 = vmul.f32 %v486, %v612
      %v625 = vmul.f32 %v488, %v612
      %v626 = vmul.f32 %v491, %v612
      %v627 = vmul.f32 %v493, %v612
      %v628 = vmul.f32 %v496, %v612
      %v629 = vmul.f32 %v498, %v612
      %v631 = vperm.slane %v610, 0
      %v633 = vadd.f32 %v614, %v631
      %v634 = vadd.f32 %v615, %v631
      %v635 = vadd.f32 %v616, %v631
      %v636 = vadd.f32 %v617, %v631
      %v637 = vadd.f32 %v618, %v631
      %v638 = vadd.f32 %v619, %v631
      %v639 = vadd.f32 %v620, %v631
      %v640 = vadd.f32 %v621, %v631
      %v641 = vadd.f32 %v622, %v631
      %v642 = vadd.f32 %v623, %v631
      %v643 = vadd.f32 %v624, %v631
      %v644 = vadd.f32 %v625, %v631
      %v645 = vadd.f32 %v626, %v631
      %v646 = vadd.f32 %v627, %v631
      %v647 = vadd.f32 %v628, %v631
      %v648 = vadd.f32 %v629, %v631
      %v649 = vmax.f32 %v633, 0.0
      %v650 = vmax.f32 %v634, 0.0
      %v651 = vmax.f32 %v635, 0.0
      %v652 = vmax.f32 %v636, 0.0
      %v653 = vmax.f32 %v637, 0.0
      %v654 = vmax.f32 %v638, 0.0
      %v655 = vmax.f32 %v639, 0.0
      %v656 = vmax.f32 %v640, 0.0
      %v657 = vmax.f32 %v641, 0.0
      %v658 = vmax.f32 %v642, 0.0
      %v659 = vmax.f32 %v643, 0.0
      %v660 = vmax.f32 %v644, 0.0
      %v661 = vmax.f32 %v645, 0.0
      %v662 = vmax.f32 %v646, 0.0
      %v663 = vmax.f32 %v647, 0.0
      %v664 = vmax.f32 %v648, 0.0
      %v665 = vpack.c.bf16 %v650, %v649
      %v666 = vpack.c.bf16 %v652, %v651
      %v667 = vpack.c.bf16 %v654, %v653
      %v668 = vpack.c.bf16 %v656, %v655
      %v669 = vpack.c.bf16 %v658, %v657
      %v670 = vpack.c.bf16 %v660, %v659
      %v671 = vpack.c.bf16 %v662, %v661
      %v672 = vpack.c.bf16 %v664, %v663
      %v673 = vld [vmem:[#allocation2] sm:$0xff]
      %v674 = vld [vmem:[#allocation2 + $0x8] sm:$0xff]
      %v675 = vld [vmem:[#allocation2 + $0x10] sm:$0xff]
      %v676 = vld [vmem:[#allocation2 + $0x18] sm:$0xff]
      %v677 = vld [vmem:[#allocation2 + $0x20] sm:$0xff]
      %v678 = vld [vmem:[#allocation2 + $0x28] sm:$0xff]
      %v679 = vld [vmem:[#allocation2 + $0x30] sm:$0xff]
      %v680 = vld [vmem:[#allocation2 + $0x38] sm:$0xff]
      %v681 = vld [vmem:[#allocation2 + $0x40] sm:$0xff]
      %v682 = vld [vmem:[#allocation2 + $0x48] sm:$0xff]
      %v683 = vld [vmem:[#allocation2 + $0x50] sm:$0xff]
      %v684 = vld [vmem:[#allocation2 + $0x58] sm:$0xff]
      %v685 = vld [vmem:[#allocation2 + $0x60] sm:$0xff]
      %v686 = vld [vmem:[#allocation2 + $0x68] sm:$0xff]
      %v687 = vld [vmem:[#allocation2 + $0x70] sm:$0xff]
      %v688 = vld [vmem:[#allocation2 + $0x78] sm:$0xff]
      %v689 = vpack.c.bf16 %v674, %v673
      %v690 = vpack.c.bf16 %v676, %v675
      %v691 = vpack.c.bf16 %v678, %v677
      %v692 = vpack.c.bf16 %v680, %v679
      %v693 = vpack.c.bf16 %v682, %v681
      %v694 = vpack.c.bf16 %v684, %v683
      %v695 = vpack.c.bf16 %v686, %v685
      %v696 = vpack.c.bf16 %v688, %v687
      %v697 = vld [vmem:[%s5] sm:$0xf]
      %v698 = vld [vmem:[%s5 + $0x4] sm:$0xf]
      %v699 = vld [vmem:[%s6] sm:$0xf]
      %v700 = vld [vmem:[%s6 + $0x4] sm:$0xf]
      %v703 = vunpack.c.l.b16 %v699
      %v704 = vunpack.c.l.b16 %v700
      %v705 = vpack.c.b16 %v704, %v703
      %v708 = vsel %vm500, %v689, 0
      %v711 = vsel %vm500, %v690, 0
      %v714 = vsel %vm500, %v691, 0
      %v717 = vsel %vm500, %v692, 0
      %v720 = vsel %vm500, %v693, 0
      %v723 = vsel %vm500, %v694, 0
      %v726 = vsel %vm500, %v695, 0
      %v729 = vsel %vm500, %v696, 0
      %731 = vmatpush.bf16.msra.mxu0 0
      %732 = vmatpush.bf16.msra.mxu0 0
      %733 = vmatpush.bf16.msra.mxu0 0
      %734 = vmatpush.bf16.msra.mxu0 0
      %735 = vmatpush.bf16.msra.mxu0 0
      %736 = vmatpush.bf16.msra.mxu0 0
      %737 = vmatpush.bf16.msra.mxu0 0
      %738 = vmatpush.bf16.msra.mxu0 %v705
      %739 = vmatmul.bf16.gmra.mxu0 %v708
      %v740 = vpop.f32.mrf.mxu0
      %v741 = vadd.f32 0.0, %v740
      %v742 = vpop.f32.mrf.mxu0
      %v743 = vadd.f32 0.0, %v742
      %744 = vmatmul.bf16.gmra.mxu0 %v711
      %v745 = vpop.f32.mrf.mxu0
      %v746 = vadd.f32 0.0, %v745
      %v747 = vpop.f32.mrf.mxu0
      %v748 = vadd.f32 0.0, %v747
      %749 = vmatmul.bf16.gmra.mxu0 %v714
      %v750 = vpop.f32.mrf.mxu0
      %v751 = vadd.f32 0.0, %v750
      %v752 = vpop.f32.mrf.mxu0
      %v753 = vadd.f32 0.0, %v752
      %754 = vmatmul.bf16.gmra.mxu0 %v717
      %v755 = vpop.f32.mrf.mxu0
      %v756 = vadd.f32 0.0, %v755
      %v757 = vpop.f32.mrf.mxu0
      %v758 = vadd.f32 0.0, %v757
      %759 = vmatmul.bf16.gmra.mxu0 %v720
      %v760 = vpop.f32.mrf.mxu0
      %v761 = vadd.f32 0.0, %v760
      %v762 = vpop.f32.mrf.mxu0
      %v763 = vadd.f32 0.0, %v762
      %764 = vmatmul.bf16.gmra.mxu0 %v723
      %v765 = vpop.f32.mrf.mxu0
      %v766 = vadd.f32 0.0, %v765
      %v767 = vpop.f32.mrf.mxu0
      %v768 = vadd.f32 0.0, %v767
      %769 = vmatmul.bf16.gmra.mxu0 %v726
      %v770 = vpop.f32.mrf.mxu0
      %v771 = vadd.f32 0.0, %v770
      %v772 = vpop.f32.mrf.mxu0
      %v773 = vadd.f32 0.0, %v772
      %774 = vmatmul.bf16.gmra.mxu0 %v729
      %v775 = vpop.f32.mrf.mxu0
      %v776 = vadd.f32 0.0, %v775
      %v777 = vpop.f32.mrf.mxu0
      %v778 = vadd.f32 0.0, %v777
      %779 = vdwg.mxu0
      %v782 = vunpack.c.l.b16 %v697
      %v783 = vunpack.c.l.b16 %v698
      %v784 = vpack.c.b16 %v783, %v782
      %v787 = vsel %vm500, %v665, 0
      %v790 = vsel %vm500, %v666, 0
      %v793 = vsel %vm500, %v667, 0
      %v796 = vsel %vm500, %v668, 0
      %v799 = vsel %vm500, %v669, 0
      %v802 = vsel %vm500, %v670, 0
      %v805 = vsel %vm500, %v671, 0
      %v808 = vsel %vm500, %v672, 0
      %810 = vmatpush.bf16.msra.mxu0 0
      %811 = vmatpush.bf16.msra.mxu0 0
      %812 = vmatpush.bf16.msra.mxu0 0
      %813 = vmatpush.bf16.msra.mxu0 0
      %814 = vmatpush.bf16.msra.mxu0 0
      %815 = vmatpush.bf16.msra.mxu0 0
      %816 = vmatpush.bf16.msra.mxu0 0
      %817 = vmatpush.bf16.msra.mxu0 %v784
      %818 = vmatmul.bf16.gmra.mxu0 %v787
      %v819 = vpop.f32.mrf.mxu0
      %v820 = vadd.f32 %v741, %v819
      %v821 = vpop.f32.mrf.mxu0
      %v822 = vadd.f32 %v743, %v821
      %823 = vmatmul.bf16.gmra.mxu0 %v790
      %v824 = vpop.f32.mrf.mxu0
      %v825 = vadd.f32 %v746, %v824
      %v826 = vpop.f32.mrf.mxu0
      %v827 = vadd.f32 %v748, %v826
      %828 = vmatmul.bf16.gmra.mxu0 %v793
      %v829 = vpop.f32.mrf.mxu0
      %v830 = vadd.f32 %v751, %v829
      %v831 = vpop.f32.mrf.mxu0
      %v832 = vadd.f32 %v753, %v831
      %833 = vmatmul.bf16.gmra.mxu0 %v796
      %v834 = vpop.f32.mrf.mxu0
      %v835 = vadd.f32 %v756, %v834
      %v836 = vpop.f32.mrf.mxu0
      %v837 = vadd.f32 %v758, %v836
      %838 = vmatmul.bf16.gmra.mxu0 %v799
      %v839 = vpop.f32.mrf.mxu0
      %v840 = vadd.f32 %v761, %v839
      %v841 = vpop.f32.mrf.mxu0
      %v842 = vadd.f32 %v763, %v841
      %843 = vmatmul.bf16.gmra.mxu0 %v802
      %v844 = vpop.f32.mrf.mxu0
      %v845 = vadd.f32 %v766, %v844
      %v846 = vpop.f32.mrf.mxu0
      %v847 = vadd.f32 %v768, %v846
      %848 = vmatmul.bf16.gmra.mxu0 %v805
      %v849 = vpop.f32.mrf.mxu0
      %v850 = vadd.f32 %v771, %v849
      %v851 = vpop.f32.mrf.mxu0
      %v852 = vadd.f32 %v773, %v851
      %853 = vmatmul.bf16.gmra.mxu0 %v808
      %v854 = vpop.f32.mrf.mxu0
      %v855 = vadd.f32 %v776, %v854
      %v856 = vpop.f32.mrf.mxu0
      %v857 = vadd.f32 %v778, %v856
      %858 = vdwg.mxu0
      %v859 = vld [vmem:[%s7] sm:$0x1]
      %v861 = vperm.slane %v859, 0
      %v863 = vadd.f32 %v820, %v861
      %v864 = vadd.f32 %v822, %v861
      %v865 = vadd.f32 %v825, %v861
      %v866 = vadd.f32 %v827, %v861
      %v867 = vadd.f32 %v830, %v861
      %v868 = vadd.f32 %v832, %v861
      %v869 = vadd.f32 %v835, %v861
      %v870 = vadd.f32 %v837, %v861
      %v871 = vadd.f32 %v840, %v861
      %v872 = vadd.f32 %v842, %v861
      %v873 = vadd.f32 %v845, %v861
      %v874 = vadd.f32 %v847, %v861
      %v875 = vadd.f32 %v850, %v861
      %v876 = vadd.f32 %v852, %v861
      %v877 = vadd.f32 %v855, %v861
      %v878 = vadd.f32 %v857, %v861
      %v879 = vxor.u32 %v863, 2147483648
      %v880 = vxor.u32 %v864, 2147483648
      %v881 = vxor.u32 %v865, 2147483648
      %v882 = vxor.u32 %v866, 2147483648
      %v883 = vxor.u32 %v867, 2147483648
      %v884 = vxor.u32 %v868, 2147483648
      %v885 = vxor.u32 %v869, 2147483648
      %v886 = vxor.u32 %v870, 2147483648
      %v887 = vxor.u32 %v871, 2147483648
      %v888 = vxor.u32 %v872, 2147483648
      %v889 = vxor.u32 %v873, 2147483648
      %v890 = vxor.u32 %v874, 2147483648
      %v891 = vxor.u32 %v875, 2147483648
      %v892 = vxor.u32 %v876, 2147483648
      %v893 = vxor.u32 %v877, 2147483648
      %v894 = vxor.u32 %v878, 2147483648
      %v895 = vmul.f32 %v879, 1.442695
      %v896 = vpow.pop %v895
      %v897 = vmul.f32 %v880, 1.442695
      %v898 = vpow.pop %v897
      %v899 = vmul.f32 %v881, 1.442695
      %v900 = vpow.pop %v899
      %v901 = vmul.f32 %v882, 1.442695
      %v902 = vpow.pop %v901
      %v903 = vmul.f32 %v883, 1.442695
      %v904 = vpow.pop %v903
      %v905 = vmul.f32 %v884, 1.442695
      %v906 = vpow.pop %v905
      %v907 = vmul.f32 %v885, 1.442695
      %v908 = vpow.pop %v907
      %v909 = vmul.f32 %v886, 1.442695
      %v910 = vpow.pop %v909
      %v911 = vmul.f32 %v887, 1.442695
      %v912 = vpow.pop %v911
      %v913 = vmul.f32 %v888, 1.442695
      %v914 = vpow.pop %v913
      %v915 = vmul.f32 %v889, 1.442695
      %v916 = vpow.pop %v915
      %v917 = vmul.f32 %v890, 1.442695
      %v918 = vpow.pop %v917
      %v919 = vmul.f32 %v891, 1.442695
      %v920 = vpow.pop %v919
      %v921 = vmul.f32 %v892, 1.442695
      %v922 = vpow.pop %v921
      %v923 = vmul.f32 %v893, 1.442695
      %v924 = vpow.pop %v923
      %v925 = vmul.f32 %v894, 1.442695
      %v926 = vpow.pop %v925
      %v927 = vadd.f32 %v896, 1.0
      %v928 = vadd.f32 %v898, 1.0
      %v929 = vadd.f32 %v900, 1.0
      %v930 = vadd.f32 %v902, 1.0
      %v931 = vadd.f32 %v904, 1.0
      %v932 = vadd.f32 %v906, 1.0
      %v933 = vadd.f32 %v908, 1.0
      %v934 = vadd.f32 %v910, 1.0
      %v935 = vadd.f32 %v912, 1.0
      %v936 = vadd.f32 %v914, 1.0
      %v937 = vadd.f32 %v916, 1.0
      %v938 = vadd.f32 %v918, 1.0
      %v939 = vadd.f32 %v920, 1.0
      %v940 = vadd.f32 %v922, 1.0
      %v941 = vadd.f32 %v924, 1.0
      %v942 = vadd.f32 %v926, 1.0
      %v943 = vrcp.pop %v927
      %v944 = vmul.f32 %v927, %v943
      %v945 = vsub.f32 1.0, %v944
      %v946 = vmul.f32 %v943, %v945
      %v947 = vadd.f32 %v943, %v946
      %vm948 = vweird.f32 %v927
      %vm949 = vweird.f32 %v943
      %vm950 = vmor %vm948, %vm949
      %v951 = vsel %vm950, %v943, %v947
      %v952 = vand.u32 2147483647, %v927
      %vm953 = vcmp.eq.f32.partialorder %v952, 8.507059e+37
      %v954 = vand.u32 %v927, 2147483648
      %v955 = vor.u32 1.1754944e-38, %v954
      %v956 = vsel %vm953, %v955, %v951
      %v957 = vmul.f32 1.0, %v956
      %v958 = vrcp.pop %v928
      %v959 = vmul.f32 %v928, %v958
      %v960 = vsub.f32 1.0, %v959
      %v961 = vmul.f32 %v958, %v960
      %v962 = vadd.f32 %v958, %v961
      %vm963 = vweird.f32 %v928
      %vm964 = vweird.f32 %v958
      %vm965 = vmor %vm963, %vm964
      %v966 = vsel %vm965, %v958, %v962
      %v967 = vand.u32 2147483647, %v928
      %vm968 = vcmp.eq.f32.partialorder %v967, 8.507059e+37
      %v969 = vand.u32 %v928, 2147483648
      %v970 = vor.u32 1.1754944e-38, %v969
      %v971 = vsel %vm968, %v970, %v966
      %v972 = vmul.f32 1.0, %v971
      %v973 = vrcp.pop %v929
      %v974 = vmul.f32 %v929, %v973
      %v975 = vsub.f32 1.0, %v974
      %v976 = vmul.f32 %v973, %v975
      %v977 = vadd.f32 %v973, %v976
      %vm978 = vweird.f32 %v929
      %vm979 = vweird.f32 %v973
      %vm980 = vmor %vm978, %vm979
      %v981 = vsel %vm980, %v973, %v977
      %v982 = vand.u32 2147483647, %v929
      %vm983 = vcmp.eq.f32.partialorder %v982, 8.507059e+37
      %v984 = vand.u32 %v929, 2147483648
      %v985 = vor.u32 1.1754944e-38, %v984
      %v986 = vsel %vm983, %v985, %v981
      %v987 = vmul.f32 1.0, %v986
      %v988 = vrcp.pop %v930
      %v989 = vmul.f32 %v930, %v988
      %v990 = vsub.f32 1.0, %v989
      %v991 = vmul.f32 %v988, %v990
      %v992 = vadd.f32 %v988, %v991
      %vm993 = vweird.f32 %v930
      %vm994 = vweird.f32 %v988
      %vm995 = vmor %vm993, %vm994
      %v996 = vsel %vm995, %v988, %v992
      %v997 = vand.u32 2147483647, %v930
      %vm998 = vcmp.eq.f32.partialorder %v997, 8.507059e+37
      %v999 = vand.u32 %v930, 2147483648
      %v1000 = vor.u32 1.1754944e-38, %v999
      %v1001 = vsel %vm998, %v1000, %v996
      %v1002 = vmul.f32 1.0, %v1001
      %v1003 = vrcp.pop %v931
      %v1004 = vmul.f32 %v931, %v1003
      %v1005 = vsub.f32 1.0, %v1004
      %v1006 = vmul.f32 %v1003, %v1005
      %v1007 = vadd.f32 %v1003, %v1006
      %vm1008 = vweird.f32 %v931
      %vm1009 = vweird.f32 %v1003
      %vm1010 = vmor %vm1008, %vm1009
      %v1011 = vsel %vm1010, %v1003, %v1007
      %v1012 = vand.u32 2147483647, %v931
      %vm1013 = vcmp.eq.f32.partialorder %v1012, 8.507059e+37
      %v1014 = vand.u32 %v931, 2147483648
      %v1015 = vor.u32 1.1754944e-38, %v1014
      %v1016 = vsel %vm1013, %v1015, %v1011
      %v1017 = vmul.f32 1.0, %v1016
      %v1018 = vrcp.pop %v932
      %v1019 = vmul.f32 %v932, %v1018
      %v1020 = vsub.f32 1.0, %v1019
      %v1021 = vmul.f32 %v1018, %v1020
      %v1022 = vadd.f32 %v1018, %v1021
      %vm1023 = vweird.f32 %v932
      %vm1024 = vweird.f32 %v1018
      %vm1025 = vmor %vm1023, %vm1024
      %v1026 = vsel %vm1025, %v1018, %v1022
      %v1027 = vand.u32 2147483647, %v932
      %vm1028 = vcmp.eq.f32.partialorder %v1027, 8.507059e+37
      %v1029 = vand.u32 %v932, 2147483648
      %v1030 = vor.u32 1.1754944e-38, %v1029
      %v1031 = vsel %vm1028, %v1030, %v1026
      %v1032 = vmul.f32 1.0, %v1031
      %v1033 = vrcp.pop %v933
      %v1034 = vmul.f32 %v933, %v1033
      %v1035 = vsub.f32 1.0, %v1034
      %v1036 = vmul.f32 %v1033, %v1035
      %v1037 = vadd.f32 %v1033, %v1036
      %vm1038 = vweird.f32 %v933
      %vm1039 = vweird.f32 %v1033
      %vm1040 = vmor %vm1038, %vm1039
      %v1041 = vsel %vm1040, %v1033, %v1037
      %v1042 = vand.u32 2147483647, %v933
      %vm1043 = vcmp.eq.f32.partialorder %v1042, 8.507059e+37
      %v1044 = vand.u32 %v933, 2147483648
      %v1045 = vor.u32 1.1754944e-38, %v1044
      %v1046 = vsel %vm1043, %v1045, %v1041
      %v1047 = vmul.f32 1.0, %v1046
      %v1048 = vrcp.pop %v934
      %v1049 = vmul.f32 %v934, %v1048
      %v1050 = vsub.f32 1.0, %v1049
      %v1051 = vmul.f32 %v1048, %v1050
      %v1052 = vadd.f32 %v1048, %v1051
      %vm1053 = vweird.f32 %v934
      %vm1054 = vweird.f32 %v1048
      %vm1055 = vmor %vm1053, %vm1054
      %v1056 = vsel %vm1055, %v1048, %v1052
      %v1057 = vand.u32 2147483647, %v934
      %vm1058 = vcmp.eq.f32.partialorder %v1057, 8.507059e+37
      %v1059 = vand.u32 %v934, 2147483648
      %v1060 = vor.u32 1.1754944e-38, %v1059
      %v1061 = vsel %vm1058, %v1060, %v1056
      %v1062 = vmul.f32 1.0, %v1061
      %v1063 = vrcp.pop %v935
      %v1064 = vmul.f32 %v935, %v1063
      %v1065 = vsub.f32 1.0, %v1064
      %v1066 = vmul.f32 %v1063, %v1065
      %v1067 = vadd.f32 %v1063, %v1066
      %vm1068 = vweird.f32 %v935
      %vm1069 = vweird.f32 %v1063
      %vm1070 = vmor %vm1068, %vm1069
      %v1071 = vsel %vm1070, %v1063, %v1067
      %v1072 = vand.u32 2147483647, %v935
      %vm1073 = vcmp.eq.f32.partialorder %v1072, 8.507059e+37
      %v1074 = vand.u32 %v935, 2147483648
      %v1075 = vor.u32 1.1754944e-38, %v1074
      %v1076 = vsel %vm1073, %v1075, %v1071
      %v1077 = vmul.f32 1.0, %v1076
      %v1078 = vrcp.pop %v936
      %v1079 = vmul.f32 %v936, %v1078
      %v1080 = vsub.f32 1.0, %v1079
      %v1081 = vmul.f32 %v1078, %v1080
      %v1082 = vadd.f32 %v1078, %v1081
      %vm1083 = vweird.f32 %v936
      %vm1084 = vweird.f32 %v1078
      %vm1085 = vmor %vm1083, %vm1084
      %v1086 = vsel %vm1085, %v1078, %v1082
      %v1087 = vand.u32 2147483647, %v936
      %vm1088 = vcmp.eq.f32.partialorder %v1087, 8.507059e+37
      %v1089 = vand.u32 %v936, 2147483648
      %v1090 = vor.u32 1.1754944e-38, %v1089
      %v1091 = vsel %vm1088, %v1090, %v1086
      %v1092 = vmul.f32 1.0, %v1091
      %v1093 = vrcp.pop %v937
      %v1094 = vmul.f32 %v937, %v1093
      %v1095 = vsub.f32 1.0, %v1094
      %v1096 = vmul.f32 %v1093, %v1095
      %v1097 = vadd.f32 %v1093, %v1096
      %vm1098 = vweird.f32 %v937
      %vm1099 = vweird.f32 %v1093
      %vm1100 = vmor %vm1098, %vm1099
      %v1101 = vsel %vm1100, %v1093, %v1097
      %v1102 = vand.u32 2147483647, %v937
      %vm1103 = vcmp.eq.f32.partialorder %v1102, 8.507059e+37
      %v1104 = vand.u32 %v937, 2147483648
      %v1105 = vor.u32 1.1754944e-38, %v1104
      %v1106 = vsel %vm1103, %v1105, %v1101
      %v1107 = vmul.f32 1.0, %v1106
      %v1108 = vrcp.pop %v938
      %v1109 = vmul.f32 %v938, %v1108
      %v1110 = vsub.f32 1.0, %v1109
      %v1111 = vmul.f32 %v1108, %v1110
      %v1112 = vadd.f32 %v1108, %v1111
      %vm1113 = vweird.f32 %v938
      %vm1114 = vweird.f32 %v1108
      %vm1115 = vmor %vm1113, %vm1114
      %v1116 = vsel %vm1115, %v1108, %v1112
      %v1117 = vand.u32 2147483647, %v938
      %vm1118 = vcmp.eq.f32.partialorder %v1117, 8.507059e+37
      %v1119 = vand.u32 %v938, 2147483648
      %v1120 = vor.u32 1.1754944e-38, %v1119
      %v1121 = vsel %vm1118, %v1120, %v1116
      %v1122 = vmul.f32 1.0, %v1121
      %v1123 = vrcp.pop %v939
      %v1124 = vmul.f32 %v939, %v1123
      %v1125 = vsub.f32 1.0, %v1124
      %v1126 = vmul.f32 %v1123, %v1125
      %v1127 = vadd.f32 %v1123, %v1126
      %vm1128 = vweird.f32 %v939
      %vm1129 = vweird.f32 %v1123
      %vm1130 = vmor %vm1128, %vm1129
      %v1131 = vsel %vm1130, %v1123, %v1127
      %v1132 = vand.u32 2147483647, %v939
      %vm1133 = vcmp.eq.f32.partialorder %v1132, 8.507059e+37
      %v1134 = vand.u32 %v939, 2147483648
      %v1135 = vor.u32 1.1754944e-38, %v1134
      %v1136 = vsel %vm1133, %v1135, %v1131
      %v1137 = vmul.f32 1.0, %v1136
      %v1138 = vrcp.pop %v940
      %v1139 = vmul.f32 %v940, %v1138
      %v1140 = vsub.f32 1.0, %v1139
      %v1141 = vmul.f32 %v1138, %v1140
      %v1142 = vadd.f32 %v1138, %v1141
      %vm1143 = vweird.f32 %v940
      %vm1144 = vweird.f32 %v1138
      %vm1145 = vmor %vm1143, %vm1144
      %v1146 = vsel %vm1145, %v1138, %v1142
      %v1147 = vand.u32 2147483647, %v940
      %vm1148 = vcmp.eq.f32.partialorder %v1147, 8.507059e+37
      %v1149 = vand.u32 %v940, 2147483648
      %v1150 = vor.u32 1.1754944e-38, %v1149
      %v1151 = vsel %vm1148, %v1150, %v1146
      %v1152 = vmul.f32 1.0, %v1151
      %v1153 = vrcp.pop %v941
      %v1154 = vmul.f32 %v941, %v1153
      %v1155 = vsub.f32 1.0, %v1154
      %v1156 = vmul.f32 %v1153, %v1155
      %v1157 = vadd.f32 %v1153, %v1156
      %vm1158 = vweird.f32 %v941
      %vm1159 = vweird.f32 %v1153
      %vm1160 = vmor %vm1158, %vm1159
      %v1161 = vsel %vm1160, %v1153, %v1157
      %v1162 = vand.u32 2147483647, %v941
      %vm1163 = vcmp.eq.f32.partialorder %v1162, 8.507059e+37
      %v1164 = vand.u32 %v941, 2147483648
      %v1165 = vor.u32 1.1754944e-38, %v1164
      %v1166 = vsel %vm1163, %v1165, %v1161
      %v1167 = vmul.f32 1.0, %v1166
      %v1168 = vrcp.pop %v942
      %v1169 = vmul.f32 %v942, %v1168
      %v1170 = vsub.f32 1.0, %v1169
      %v1171 = vmul.f32 %v1168, %v1170
      %v1172 = vadd.f32 %v1168, %v1171
      %vm1173 = vweird.f32 %v942
      %vm1174 = vweird.f32 %v1168
      %vm1175 = vmor %vm1173, %vm1174
      %v1176 = vsel %vm1175, %v1168, %v1172
      %v1177 = vand.u32 2147483647, %v942
      %vm1178 = vcmp.eq.f32.partialorder %v1177, 8.507059e+37
      %v1179 = vand.u32 %v942, 2147483648
      %v1180 = vor.u32 1.1754944e-38, %v1179
      %v1181 = vsel %vm1178, %v1180, %v1176
      %v1182 = vmul.f32 1.0, %v1181
      %s1183 = scalar_lea.vmem %s5, 8
      %v1184 = vld [vmem:[%s1183] sm:$0xf]
      %v1185 = vld [vmem:[%s1183 + $0x4] sm:$0xf]
      %s1186 = scalar_lea.vmem %s6, 8
      %v1187 = vld [vmem:[%s1186] sm:$0xf]
      %v1188 = vld [vmem:[%s1186 + $0x4] sm:$0xf]
      %v1191 = vunpack.c.l.b16 %v1187
      %v1192 = vunpack.c.l.b16 %v1188
      %v1193 = vpack.c.b16 %v1192, %v1191
      %1195 = vmatpush.bf16.msra.mxu0 0
      %1196 = vmatpush.bf16.msra.mxu0 0
      %1197 = vmatpush.bf16.msra.mxu0 0
      %1198 = vmatpush.bf16.msra.mxu0 0
      %1199 = vmatpush.bf16.msra.mxu0 0
      %1200 = vmatpush.bf16.msra.mxu0 0
      %1201 = vmatpush.bf16.msra.mxu0 0
      %1202 = vmatpush.bf16.msra.mxu0 %v1193
      %1203 = vmatmul.bf16.gmra.mxu0 %v708
      %v1204 = vpop.f32.mrf.mxu0
      %v1205 = vadd.f32 0.0, %v1204
      %v1206 = vpop.f32.mrf.mxu0
      %v1207 = vadd.f32 0.0, %v1206
      %1208 = vmatmul.bf16.gmra.mxu0 %v711
      %v1209 = vpop.f32.mrf.mxu0
      %v1210 = vadd.f32 0.0, %v1209
      %v1211 = vpop.f32.mrf.mxu0
      %v1212 = vadd.f32 0.0, %v1211
      %1213 = vmatmul.bf16.gmra.mxu0 %v714
      %v1214 = vpop.f32.mrf.mxu0
      %v1215 = vadd.f32 0.0, %v1214
      %v1216 = vpop.f32.mrf.mxu0
      %v1217 = vadd.f32 0.0, %v1216
      %1218 = vmatmul.bf16.gmra.mxu0 %v717
      %v1219 = vpop.f32.mrf.mxu0
      %v1220 = vadd.f32 0.0, %v1219
      %v1221 = vpop.f32.mrf.mxu0
      %v1222 = vadd.f32 0.0, %v1221
      %1223 = vmatmul.bf16.gmra.mxu0 %v720
      %v1224 = vpop.f32.mrf.mxu0
      %v1225 = vadd.f32 0.0, %v1224
      %v1226 = vpop.f32.mrf.mxu0
      %v1227 = vadd.f32 0.0, %v1226
      %1228 = vmatmul.bf16.gmra.mxu0 %v723
      %v1229 = vpop.f32.mrf.mxu0
      %v1230 = vadd.f32 0.0, %v1229
      %v1231 = vpop.f32.mrf.mxu0
      %v1232 = vadd.f32 0.0, %v1231
      %1233 = vmatmul.bf16.gmra.mxu0 %v726
      %v1234 = vpop.f32.mrf.mxu0
      %v1235 = vadd.f32 0.0, %v1234
      %v1236 = vpop.f32.mrf.mxu0
      %v1237 = vadd.f32 0.0, %v1236
      %1238 = vmatmul.bf16.gmra.mxu0 %v729
      %v1239 = vpop.f32.mrf.mxu0
      %v1240 = vadd.f32 0.0, %v1239
      %v1241 = vpop.f32.mrf.mxu0
      %v1242 = vadd.f32 0.0, %v1241
      %1243 = vdwg.mxu0
      %v1246 = vunpack.c.l.b16 %v1184
      %v1247 = vunpack.c.l.b16 %v1185
      %v1248 = vpack.c.b16 %v1247, %v1246
      %1250 = vmatpush.bf16.msra.mxu0 0
      %1251 = vmatpush.bf16.msra.mxu0 0
      %1252 = vmatpush.bf16.msra.mxu0 0
      %1253 = vmatpush.bf16.msra.mxu0 0
      %1254 = vmatpush.bf16.msra.mxu0 0
      %1255 = vmatpush.bf16.msra.mxu0 0
      %1256 = vmatpush.bf16.msra.mxu0 0
      %1257 = vmatpush.bf16.msra.mxu0 %v1248
      %1258 = vmatmul.bf16.gmra.mxu0 %v787
      %v1259 = vpop.f32.mrf.mxu0
      %v1260 = vadd.f32 %v1205, %v1259
      %v1261 = vpop.f32.mrf.mxu0
      %v1262 = vadd.f32 %v1207, %v1261
      %1263 = vmatmul.bf16.gmra.mxu0 %v790
      %v1264 = vpop.f32.mrf.mxu0
      %v1265 = vadd.f32 %v1210, %v1264
      %v1266 = vpop.f32.mrf.mxu0
      %v1267 = vadd.f32 %v1212, %v1266
      %1268 = vmatmul.bf16.gmra.mxu0 %v793
      %v1269 = vpop.f32.mrf.mxu0
      %v1270 = vadd.f32 %v1215, %v1269
      %v1271 = vpop.f32.mrf.mxu0
      %v1272 = vadd.f32 %v1217, %v1271
      %1273 = vmatmul.bf16.gmra.mxu0 %v796
      %v1274 = vpop.f32.mrf.mxu0
      %v1275 = vadd.f32 %v1220, %v1274
      %v1276 = vpop.f32.mrf.mxu0
      %v1277 = vadd.f32 %v1222, %v1276
      %1278 = vmatmul.bf16.gmra.mxu0 %v799
      %v1279 = vpop.f32.mrf.mxu0
      %v1280 = vadd.f32 %v1225, %v1279
      %v1281 = vpop.f32.mrf.mxu0
      %v1282 = vadd.f32 %v1227, %v1281
      %1283 = vmatmul.bf16.gmra.mxu0 %v802
      %v1284 = vpop.f32.mrf.mxu0
      %v1285 = vadd.f32 %v1230, %v1284
      %v1286 = vpop.f32.mrf.mxu0
      %v1287 = vadd.f32 %v1232, %v1286
      %1288 = vmatmul.bf16.gmra.mxu0 %v805
      %v1289 = vpop.f32.mrf.mxu0
      %v1290 = vadd.f32 %v1235, %v1289
      %v1291 = vpop.f32.mrf.mxu0
      %v1292 = vadd.f32 %v1237, %v1291
      %1293 = vmatmul.bf16.gmra.mxu0 %v808
      %v1294 = vpop.f32.mrf.mxu0
      %v1295 = vadd.f32 %v1240, %v1294
      %v1296 = vpop.f32.mrf.mxu0
      %v1297 = vadd.f32 %v1242, %v1296
      %1298 = vdwg.mxu0
      %s1299 = scalar_lea.vmem %s7, 1
      %v1300 = vld [vmem:[%s1299] sm:$0x1]
      %v1302 = vperm.slane %v1300, 0
      %v1304 = vadd.f32 %v1260, %v1302
      %v1305 = vadd.f32 %v1262, %v1302
      %v1306 = vadd.f32 %v1265, %v1302
      %v1307 = vadd.f32 %v1267, %v1302
      %v1308 = vadd.f32 %v1270, %v1302
      %v1309 = vadd.f32 %v1272, %v1302
      %v1310 = vadd.f32 %v1275, %v1302
      %v1311 = vadd.f32 %v1277, %v1302
      %v1312 = vadd.f32 %v1280, %v1302
      %v1313 = vadd.f32 %v1282, %v1302
      %v1314 = vadd.f32 %v1285, %v1302
      %v1315 = vadd.f32 %v1287, %v1302
      %v1316 = vadd.f32 %v1290, %v1302
      %v1317 = vadd.f32 %v1292, %v1302
      %v1318 = vadd.f32 %v1295, %v1302
      %v1319 = vadd.f32 %v1297, %v1302
      %v1320 = vxor.u32 %v1304, 2147483648
      %v1321 = vxor.u32 %v1305, 2147483648
      %v1322 = vxor.u32 %v1306, 2147483648
      %v1323 = vxor.u32 %v1307, 2147483648
      %v1324 = vxor.u32 %v1308, 2147483648
      %v1325 = vxor.u32 %v1309, 2147483648
      %v1326 = vxor.u32 %v1310, 2147483648
      %v1327 = vxor.u32 %v1311, 2147483648
      %v1328 = vxor.u32 %v1312, 2147483648
      %v1329 = vxor.u32 %v1313, 2147483648
      %v1330 = vxor.u32 %v1314, 2147483648
      %v1331 = vxor.u32 %v1315, 2147483648
      %v1332 = vxor.u32 %v1316, 2147483648
      %v1333 = vxor.u32 %v1317, 2147483648
      %v1334 = vxor.u32 %v1318, 2147483648
      %v1335 = vxor.u32 %v1319, 2147483648
      %v1336 = vmul.f32 %v1320, 1.442695
      %v1337 = vpow.pop %v1336
      %v1338 = vmul.f32 %v1321, 1.442695
      %v1339 = vpow.pop %v1338
      %v1340 = vmul.f32 %v1322, 1.442695
      %v1341 = vpow.pop %v1340
      %v1342 = vmul.f32 %v1323, 1.442695
      %v1343 = vpow.pop %v1342
      %v1344 = vmul.f32 %v1324, 1.442695
      %v1345 = vpow.pop %v1344
      %v1346 = vmul.f32 %v1325, 1.442695
      %v1347 = vpow.pop %v1346
      %v1348 = vmul.f32 %v1326, 1.442695
      %v1349 = vpow.pop %v1348
      %v1350 = vmul.f32 %v1327, 1.442695
      %v1351 = vpow.pop %v1350
      %v1352 = vmul.f32 %v1328, 1.442695
      %v1353 = vpow.pop %v1352
      %v1354 = vmul.f32 %v1329, 1.442695
      %v1355 = vpow.pop %v1354
      %v1356 = vmul.f32 %v1330, 1.442695
      %v1357 = vpow.pop %v1356
      %v1358 = vmul.f32 %v1331, 1.442695
      %v1359 = vpow.pop %v1358
      %v1360 = vmul.f32 %v1332, 1.442695
      %v1361 = vpow.pop %v1360
      %v1362 = vmul.f32 %v1333, 1.442695
      %v1363 = vpow.pop %v1362
      %v1364 = vmul.f32 %v1334, 1.442695
      %v1365 = vpow.pop %v1364
      %v1366 = vmul.f32 %v1335, 1.442695
      %v1367 = vpow.pop %v1366
      %v1368 = vadd.f32 %v1337, 1.0
      %v1369 = vadd.f32 %v1339, 1.0
      %v1370 = vadd.f32 %v1341, 1.0
      %v1371 = vadd.f32 %v1343, 1.0
      %v1372 = vadd.f32 %v1345, 1.0
      %v1373 = vadd.f32 %v1347, 1.0
      %v1374 = vadd.f32 %v1349, 1.0
      %v1375 = vadd.f32 %v1351, 1.0
      %v1376 = vadd.f32 %v1353, 1.0
      %v1377 = vadd.f32 %v1355, 1.0
      %v1378 = vadd.f32 %v1357, 1.0
      %v1379 = vadd.f32 %v1359, 1.0
      %v1380 = vadd.f32 %v1361, 1.0
      %v1381 = vadd.f32 %v1363, 1.0
      %v1382 = vadd.f32 %v1365, 1.0
      %v1383 = vadd.f32 %v1367, 1.0
      %v1384 = vrcp.pop %v1368
      %v1385 = vmul.f32 %v1368, %v1384
      %v1386 = vsub.f32 1.0, %v1385
      %v1387 = vmul.f32 %v1384, %v1386
      %v1388 = vadd.f32 %v1384, %v1387
      %vm1389 = vweird.f32 %v1368
      %vm1390 = vweird.f32 %v1384
      %vm1391 = vmor %vm1389, %vm1390
      %v1392 = vsel %vm1391, %v1384, %v1388
      %v1393 = vand.u32 2147483647, %v1368
      %vm1394 = vcmp.eq.f32.partialorder %v1393, 8.507059e+37
      %v1395 = vand.u32 %v1368, 2147483648
      %v1396 = vor.u32 1.1754944e-38, %v1395
      %v1397 = vsel %vm1394, %v1396, %v1392
      %v1398 = vmul.f32 1.0, %v1397
      %v1399 = vrcp.pop %v1369
      %v1400 = vmul.f32 %v1369, %v1399
      %v1401 = vsub.f32 1.0, %v1400
      %v1402 = vmul.f32 %v1399, %v1401
      %v1403 = vadd.f32 %v1399, %v1402
      %vm1404 = vweird.f32 %v1369
      %vm1405 = vweird.f32 %v1399
      %vm1406 = vmor %vm1404, %vm1405
      %v1407 = vsel %vm1406, %v1399, %v1403
      %v1408 = vand.u32 2147483647, %v1369
      %vm1409 = vcmp.eq.f32.partialorder %v1408, 8.507059e+37
      %v1410 = vand.u32 %v1369, 2147483648
      %v1411 = vor.u32 1.1754944e-38, %v1410
      %v1412 = vsel %vm1409, %v1411, %v1407
      %v1413 = vmul.f32 1.0, %v1412
      %v1414 = vrcp.pop %v1370
      %v1415 = vmul.f32 %v1370, %v1414
      %v1416 = vsub.f32 1.0, %v1415
      %v1417 = vmul.f32 %v1414, %v1416
      %v1418 = vadd.f32 %v1414, %v1417
      %vm1419 = vweird.f32 %v1370
      %vm1420 = vweird.f32 %v1414
      %vm1421 = vmor %vm1419, %vm1420
      %v1422 = vsel %vm1421, %v1414, %v1418
      %v1423 = vand.u32 2147483647, %v1370
      %vm1424 = vcmp.eq.f32.partialorder %v1423, 8.507059e+37
      %v1425 = vand.u32 %v1370, 2147483648
      %v1426 = vor.u32 1.1754944e-38, %v1425
      %v1427 = vsel %vm1424, %v1426, %v1422
      %v1428 = vmul.f32 1.0, %v1427
      %v1429 = vrcp.pop %v1371
      %v1430 = vmul.f32 %v1371, %v1429
      %v1431 = vsub.f32 1.0, %v1430
      %v1432 = vmul.f32 %v1429, %v1431
      %v1433 = vadd.f32 %v1429, %v1432
      %vm1434 = vweird.f32 %v1371
      %vm1435 = vweird.f32 %v1429
      %vm1436 = vmor %vm1434, %vm1435
      %v1437 = vsel %vm1436, %v1429, %v1433
      %v1438 = vand.u32 2147483647, %v1371
      %vm1439 = vcmp.eq.f32.partialorder %v1438, 8.507059e+37
      %v1440 = vand.u32 %v1371, 2147483648
      %v1441 = vor.u32 1.1754944e-38, %v1440
      %v1442 = vsel %vm1439, %v1441, %v1437
      %v1443 = vmul.f32 1.0, %v1442
      %v1444 = vrcp.pop %v1372
      %v1445 = vmul.f32 %v1372, %v1444
      %v1446 = vsub.f32 1.0, %v1445
      %v1447 = vmul.f32 %v1444, %v1446
      %v1448 = vadd.f32 %v1444, %v1447
      %vm1449 = vweird.f32 %v1372
      %vm1450 = vweird.f32 %v1444
      %vm1451 = vmor %vm1449, %vm1450
      %v1452 = vsel %vm1451, %v1444, %v1448
      %v1453 = vand.u32 2147483647, %v1372
      %vm1454 = vcmp.eq.f32.partialorder %v1453, 8.507059e+37
      %v1455 = vand.u32 %v1372, 2147483648
      %v1456 = vor.u32 1.1754944e-38, %v1455
      %v1457 = vsel %vm1454, %v1456, %v1452
      %v1458 = vmul.f32 1.0, %v1457
      %v1459 = vrcp.pop %v1373
      %v1460 = vmul.f32 %v1373, %v1459
      %v1461 = vsub.f32 1.0, %v1460
      %v1462 = vmul.f32 %v1459, %v1461
      %v1463 = vadd.f32 %v1459, %v1462
      %vm1464 = vweird.f32 %v1373
      %vm1465 = vweird.f32 %v1459
      %vm1466 = vmor %vm1464, %vm1465
      %v1467 = vsel %vm1466, %v1459, %v1463
      %v1468 = vand.u32 2147483647, %v1373
      %vm1469 = vcmp.eq.f32.partialorder %v1468, 8.507059e+37
      %v1470 = vand.u32 %v1373, 2147483648
      %v1471 = vor.u32 1.1754944e-38, %v1470
      %v1472 = vsel %vm1469, %v1471, %v1467
      %v1473 = vmul.f32 1.0, %v1472
      %v1474 = vrcp.pop %v1374
      %v1475 = vmul.f32 %v1374, %v1474
      %v1476 = vsub.f32 1.0, %v1475
      %v1477 = vmul.f32 %v1474, %v1476
      %v1478 = vadd.f32 %v1474, %v1477
      %vm1479 = vweird.f32 %v1374
      %vm1480 = vweird.f32 %v1474
      %vm1481 = vmor %vm1479, %vm1480
      %v1482 = vsel %vm1481, %v1474, %v1478
      %v1483 = vand.u32 2147483647, %v1374
      %vm1484 = vcmp.eq.f32.partialorder %v1483, 8.507059e+37
      %v1485 = vand.u32 %v1374, 2147483648
      %v1486 = vor.u32 1.1754944e-38, %v1485
      %v1487 = vsel %vm1484, %v1486, %v1482
      %v1488 = vmul.f32 1.0, %v1487
      %v1489 = vrcp.pop %v1375
      %v1490 = vmul.f32 %v1375, %v1489
      %v1491 = vsub.f32 1.0, %v1490
      %v1492 = vmul.f32 %v1489, %v1491
      %v1493 = vadd.f32 %v1489, %v1492
      %vm1494 = vweird.f32 %v1375
      %vm1495 = vweird.f32 %v1489
      %vm1496 = vmor %vm1494, %vm1495
      %v1497 = vsel %vm1496, %v1489, %v1493
      %v1498 = vand.u32 2147483647, %v1375
      %vm1499 = vcmp.eq.f32.partialorder %v1498, 8.507059e+37
      %v1500 = vand.u32 %v1375, 2147483648
      %v1501 = vor.u32 1.1754944e-38, %v1500
      %v1502 = vsel %vm1499, %v1501, %v1497
      %v1503 = vmul.f32 1.0, %v1502
      %v1504 = vrcp.pop %v1376
      %v1505 = vmul.f32 %v1376, %v1504
      %v1506 = vsub.f32 1.0, %v1505
      %v1507 = vmul.f32 %v1504, %v1506
      %v1508 = vadd.f32 %v1504, %v1507
      %vm1509 = vweird.f32 %v1376
      %vm1510 = vweird.f32 %v1504
      %vm1511 = vmor %vm1509, %vm1510
      %v1512 = vsel %vm1511, %v1504, %v1508
      %v1513 = vand.u32 2147483647, %v1376
      %vm1514 = vcmp.eq.f32.partialorder %v1513, 8.507059e+37
      %v1515 = vand.u32 %v1376, 2147483648
      %v1516 = vor.u32 1.1754944e-38, %v1515
      %v1517 = vsel %vm1514, %v1516, %v1512
      %v1518 = vmul.f32 1.0, %v1517
      %v1519 = vrcp.pop %v1377
      %v1520 = vmul.f32 %v1377, %v1519
      %v1521 = vsub.f32 1.0, %v1520
      %v1522 = vmul.f32 %v1519, %v1521
      %v1523 = vadd.f32 %v1519, %v1522
      %vm1524 = vweird.f32 %v1377
      %vm1525 = vweird.f32 %v1519
      %vm1526 = vmor %vm1524, %vm1525
      %v1527 = vsel %vm1526, %v1519, %v1523
      %v1528 = vand.u32 2147483647, %v1377
      %vm1529 = vcmp.eq.f32.partialorder %v1528, 8.507059e+37
      %v1530 = vand.u32 %v1377, 2147483648
      %v1531 = vor.u32 1.1754944e-38, %v1530
      %v1532 = vsel %vm1529, %v1531, %v1527
      %v1533 = vmul.f32 1.0, %v1532
      %v1534 = vrcp.pop %v1378
      %v1535 = vmul.f32 %v1378, %v1534
      %v1536 = vsub.f32 1.0, %v1535
      %v1537 = vmul.f32 %v1534, %v1536
      %v1538 = vadd.f32 %v1534, %v1537
      %vm1539 = vweird.f32 %v1378
      %vm1540 = vweird.f32 %v1534
      %vm1541 = vmor %vm1539, %vm1540
      %v1542 = vsel %vm1541, %v1534, %v1538
      %v1543 = vand.u32 2147483647, %v1378
      %vm1544 = vcmp.eq.f32.partialorder %v1543, 8.507059e+37
      %v1545 = vand.u32 %v1378, 2147483648
      %v1546 = vor.u32 1.1754944e-38, %v1545
      %v1547 = vsel %vm1544, %v1546, %v1542
      %v1548 = vmul.f32 1.0, %v1547
      %v1549 = vrcp.pop %v1379
      %v1550 = vmul.f32 %v1379, %v1549
      %v1551 = vsub.f32 1.0, %v1550
      %v1552 = vmul.f32 %v1549, %v1551
      %v1553 = vadd.f32 %v1549, %v1552
      %vm1554 = vweird.f32 %v1379
      %vm1555 = vweird.f32 %v1549
      %vm1556 = vmor %vm1554, %vm1555
      %v1557 = vsel %vm1556, %v1549, %v1553
      %v1558 = vand.u32 2147483647, %v1379
      %vm1559 = vcmp.eq.f32.partialorder %v1558, 8.507059e+37
      %v1560 = vand.u32 %v1379, 2147483648
      %v1561 = vor.u32 1.1754944e-38, %v1560
      %v1562 = vsel %vm1559, %v1561, %v1557
      %v1563 = vmul.f32 1.0, %v1562
      %v1564 = vrcp.pop %v1380
      %v1565 = vmul.f32 %v1380, %v1564
      %v1566 = vsub.f32 1.0, %v1565
      %v1567 = vmul.f32 %v1564, %v1566
      %v1568 = vadd.f32 %v1564, %v1567
      %vm1569 = vweird.f32 %v1380
      %vm1570 = vweird.f32 %v1564
      %vm1571 = vmor %vm1569, %vm1570
      %v1572 = vsel %vm1571, %v1564, %v1568
      %v1573 = vand.u32 2147483647, %v1380
      %vm1574 = vcmp.eq.f32.partialorder %v1573, 8.507059e+37
      %v1575 = vand.u32 %v1380, 2147483648
      %v1576 = vor.u32 1.1754944e-38, %v1575
      %v1577 = vsel %vm1574, %v1576, %v1572
      %v1578 = vmul.f32 1.0, %v1577
      %v1579 = vrcp.pop %v1381
      %v1580 = vmul.f32 %v1381, %v1579
      %v1581 = vsub.f32 1.0, %v1580
      %v1582 = vmul.f32 %v1579, %v1581
      %v1583 = vadd.f32 %v1579, %v1582
      %vm1584 = vweird.f32 %v1381
      %vm1585 = vweird.f32 %v1579
      %vm1586 = vmor %vm1584, %vm1585
      %v1587 = vsel %vm1586, %v1579, %v1583
      %v1588 = vand.u32 2147483647, %v1381
      %vm1589 = vcmp.eq.f32.partialorder %v1588, 8.507059e+37
      %v1590 = vand.u32 %v1381, 2147483648
      %v1591 = vor.u32 1.1754944e-38, %v1590
      %v1592 = vsel %vm1589, %v1591, %v1587
      %v1593 = vmul.f32 1.0, %v1592
      %v1594 = vrcp.pop %v1382
      %v1595 = vmul.f32 %v1382, %v1594
      %v1596 = vsub.f32 1.0, %v1595
      %v1597 = vmul.f32 %v1594, %v1596
      %v1598 = vadd.f32 %v1594, %v1597
      %vm1599 = vweird.f32 %v1382
      %vm1600 = vweird.f32 %v1594
      %vm1601 = vmor %vm1599, %vm1600
      %v1602 = vsel %vm1601, %v1594, %v1598
      %v1603 = vand.u32 2147483647, %v1382
      %vm1604 = vcmp.eq.f32.partialorder %v1603, 8.507059e+37
      %v1605 = vand.u32 %v1382, 2147483648
      %v1606 = vor.u32 1.1754944e-38, %v1605
      %v1607 = vsel %vm1604, %v1606, %v1602
      %v1608 = vmul.f32 1.0, %v1607
      %v1609 = vrcp.pop %v1383
      %v1610 = vmul.f32 %v1383, %v1609
      %v1611 = vsub.f32 1.0, %v1610
      %v1612 = vmul.f32 %v1609, %v1611
      %v1613 = vadd.f32 %v1609, %v1612
      %vm1614 = vweird.f32 %v1383
      %vm1615 = vweird.f32 %v1609
      %vm1616 = vmor %vm1614, %vm1615
      %v1617 = vsel %vm1616, %v1609, %v1613
      %v1618 = vand.u32 2147483647, %v1383
      %vm1619 = vcmp.eq.f32.partialorder %v1618, 8.507059e+37
      %v1620 = vand.u32 %v1383, 2147483648
      %v1621 = vor.u32 1.1754944e-38, %v1620
      %v1622 = vsel %vm1619, %v1621, %v1617
      %v1623 = vmul.f32 1.0, %v1622
      %s1624 = scalar_lea.vmem %s5, 16
      %v1625 = vld [vmem:[%s1624] sm:$0xf]
      %v1626 = vld [vmem:[%s1624 + $0x4] sm:$0xf]
      %s1627 = scalar_lea.vmem %s6, 16
      %v1628 = vld [vmem:[%s1627] sm:$0xf]
      %v1629 = vld [vmem:[%s1627 + $0x4] sm:$0xf]
      %v1632 = vunpack.c.l.b16 %v1628
      %v1633 = vunpack.c.l.b16 %v1629
      %v1634 = vpack.c.b16 %v1633, %v1632
      %1636 = vmatpush.bf16.msra.mxu0 0
      %1637 = vmatpush.bf16.msra.mxu0 0
      %1638 = vmatpush.bf16.msra.mxu0 0
      %1639 = vmatpush.bf16.msra.mxu0 0
      %1640 = vmatpush.bf16.msra.mxu0 0
      %1641 = vmatpush.bf16.msra.mxu0 0
      %1642 = vmatpush.bf16.msra.mxu0 0
      %1643 = vmatpush.bf16.msra.mxu0 %v1634
      %1644 = vmatmul.bf16.gmra.mxu0 %v708
      %v1645 = vpop.f32.mrf.mxu0
      %v1646 = vadd.f32 0.0, %v1645
      %v1647 = vpop.f32.mrf.mxu0
      %v1648 = vadd.f32 0.0, %v1647
      %1649 = vmatmul.bf16.gmra.mxu0 %v711
      %v1650 = vpop.f32.mrf.mxu0
      %v1651 = vadd.f32 0.0, %v1650
      %v1652 = vpop.f32.mrf.mxu0
      %v1653 = vadd.f32 0.0, %v1652
      %1654 = vmatmul.bf16.gmra.mxu0 %v714
      %v1655 = vpop.f32.mrf.mxu0
      %v1656 = vadd.f32 0.0, %v1655
      %v1657 = vpop.f32.mrf.mxu0
      %v1658 = vadd.f32 0.0, %v1657
      %1659 = vmatmul.bf16.gmra.mxu0 %v717
      %v1660 = vpop.f32.mrf.mxu0
      %v1661 = vadd.f32 0.0, %v1660
      %v1662 = vpop.f32.mrf.mxu0
      %v1663 = vadd.f32 0.0, %v1662
      %1664 = vmatmul.bf16.gmra.mxu0 %v720
      %v1665 = vpop.f32.mrf.mxu0
      %v1666 = vadd.f32 0.0, %v1665
      %v1667 = vpop.f32.mrf.mxu0
      %v1668 = vadd.f32 0.0, %v1667
      %1669 = vmatmul.bf16.gmra.mxu0 %v723
      %v1670 = vpop.f32.mrf.mxu0
      %v1671 = vadd.f32 0.0, %v1670
      %v1672 = vpop.f32.mrf.mxu0
      %v1673 = vadd.f32 0.0, %v1672
      %1674 = vmatmul.bf16.gmra.mxu0 %v726
      %v1675 = vpop.f32.mrf.mxu0
      %v1676 = vadd.f32 0.0, %v1675
      %v1677 = vpop.f32.mrf.mxu0
      %v1678 = vadd.f32 0.0, %v1677
      %1679 = vmatmul.bf16.gmra.mxu0 %v729
      %v1680 = vpop.f32.mrf.mxu0
      %v1681 = vadd.f32 0.0, %v1680
      %v1682 = vpop.f32.mrf.mxu0
      %v1683 = vadd.f32 0.0, %v1682
      %1684 = vdwg.mxu0
      %v1687 = vunpack.c.l.b16 %v1625
      %v1688 = vunpack.c.l.b16 %v1626
      %v1689 = vpack.c.b16 %v1688, %v1687
      %1691 = vmatpush.bf16.msra.mxu0 0
      %1692 = vmatpush.bf16.msra.mxu0 0
      %1693 = vmatpush.bf16.msra.mxu0 0
      %1694 = vmatpush.bf16.msra.mxu0 0
      %1695 = vmatpush.bf16.msra.mxu0 0
      %1696 = vmatpush.bf16.msra.mxu0 0
      %1697 = vmatpush.bf16.msra.mxu0 0
      %1698 = vmatpush.bf16.msra.mxu0 %v1689
      %1699 = vmatmul.bf16.gmra.mxu0 %v787
      %v1700 = vpop.f32.mrf.mxu0
      %v1701 = vadd.f32 %v1646, %v1700
      %v1702 = vpop.f32.mrf.mxu0
      %v1703 = vadd.f32 %v1648, %v1702
      %1704 = vmatmul.bf16.gmra.mxu0 %v790
      %v1705 = vpop.f32.mrf.mxu0
      %v1706 = vadd.f32 %v1651, %v1705
      %v1707 = vpop.f32.mrf.mxu0
      %v1708 = vadd.f32 %v1653, %v1707
      %1709 = vmatmul.bf16.gmra.mxu0 %v793
      %v1710 = vpop.f32.mrf.mxu0
      %v1711 = vadd.f32 %v1656, %v1710
      %v1712 = vpop.f32.mrf.mxu0
      %v1713 = vadd.f32 %v1658, %v1712
      %1714 = vmatmul.bf16.gmra.mxu0 %v796
      %v1715 = vpop.f32.mrf.mxu0
      %v1716 = vadd.f32 %v1661, %v1715
      %v1717 = vpop.f32.mrf.mxu0
      %v1718 = vadd.f32 %v1663, %v1717
      %1719 = vmatmul.bf16.gmra.mxu0 %v799
      %v1720 = vpop.f32.mrf.mxu0
      %v1721 = vadd.f32 %v1666, %v1720
      %v1722 = vpop.f32.mrf.mxu0
      %v1723 = vadd.f32 %v1668, %v1722
      %1724 = vmatmul.bf16.gmra.mxu0 %v802
      %v1725 = vpop.f32.mrf.mxu0
      %v1726 = vadd.f32 %v1671, %v1725
      %v1727 = vpop.f32.mrf.mxu0
      %v1728 = vadd.f32 %v1673, %v1727
      %1729 = vmatmul.bf16.gmra.mxu0 %v805
      %v1730 = vpop.f32.mrf.mxu0
      %v1731 = vadd.f32 %v1676, %v1730
      %v1732 = vpop.f32.mrf.mxu0
      %v1733 = vadd.f32 %v1678, %v1732
      %1734 = vmatmul.bf16.gmra.mxu0 %v808
      %v1735 = vpop.f32.mrf.mxu0
      %v1736 = vadd.f32 %v1681, %v1735
      %v1737 = vpop.f32.mrf.mxu0
      %v1738 = vadd.f32 %v1683, %v1737
      %1739 = vdwg.mxu0
      %s1740 = scalar_lea.vmem %s7, 2
      %v1741 = vld [vmem:[%s1740] sm:$0x1]
      %v1743 = vperm.slane %v1741, 0
      %v1745 = vadd.f32 %v1701, %v1743
      %v1746 = vadd.f32 %v1703, %v1743
      %v1747 = vadd.f32 %v1706, %v1743
      %v1748 = vadd.f32 %v1708, %v1743
      %v1749 = vadd.f32 %v1711, %v1743
      %v1750 = vadd.f32 %v1713, %v1743
      %v1751 = vadd.f32 %v1716, %v1743
      %v1752 = vadd.f32 %v1718, %v1743
      %v1753 = vadd.f32 %v1721, %v1743
      %v1754 = vadd.f32 %v1723, %v1743
      %v1755 = vadd.f32 %v1726, %v1743
      %v1756 = vadd.f32 %v1728, %v1743
      %v1757 = vadd.f32 %v1731, %v1743
      %v1758 = vadd.f32 %v1733, %v1743
      %v1759 = vadd.f32 %v1736, %v1743
      %v1760 = vadd.f32 %v1738, %v1743
      %v1761 = vtanh.pop %v1745
      %v1762 = vtanh.pop %v1746
      %v1763 = vtanh.pop %v1747
      %v1764 = vtanh.pop %v1748
      %v1765 = vtanh.pop %v1749
      %v1766 = vtanh.pop %v1750
      %v1767 = vtanh.pop %v1751
      %v1768 = vtanh.pop %v1752
      %v1769 = vtanh.pop %v1753
      %v1770 = vtanh.pop %v1754
      %v1771 = vtanh.pop %v1755
      %v1772 = vtanh.pop %v1756
      %v1773 = vtanh.pop %v1757
      %v1774 = vtanh.pop %v1758
      %v1775 = vtanh.pop %v1759
      %v1776 = vtanh.pop %v1760
      %s1777 = scalar_lea.vmem %s5, 24
      %v1778 = vld [vmem:[%s1777] sm:$0xf]
      %v1779 = vld [vmem:[%s1777 + $0x4] sm:$0xf]
      %s1780 = scalar_lea.vmem %s6, 24
      %v1781 = vld [vmem:[%s1780] sm:$0xf]
      %v1782 = vld [vmem:[%s1780 + $0x4] sm:$0xf]
      %v1785 = vunpack.c.l.b16 %v1781
      %v1786 = vunpack.c.l.b16 %v1782
      %v1787 = vpack.c.b16 %v1786, %v1785
      %1789 = vmatpush.bf16.msra.mxu0 0
      %1790 = vmatpush.bf16.msra.mxu0 0
      %1791 = vmatpush.bf16.msra.mxu0 0
      %1792 = vmatpush.bf16.msra.mxu0 0
      %1793 = vmatpush.bf16.msra.mxu0 0
      %1794 = vmatpush.bf16.msra.mxu0 0
      %1795 = vmatpush.bf16.msra.mxu0 0
      %1796 = vmatpush.bf16.msra.mxu0 %v1787
      %1797 = vmatmul.bf16.gmra.mxu0 %v708
      %v1798 = vpop.f32.mrf.mxu0
      %v1799 = vadd.f32 0.0, %v1798
      %v1800 = vpop.f32.mrf.mxu0
      %v1801 = vadd.f32 0.0, %v1800
      %1802 = vmatmul.bf16.gmra.mxu0 %v711
      %v1803 = vpop.f32.mrf.mxu0
      %v1804 = vadd.f32 0.0, %v1803
      %v1805 = vpop.f32.mrf.mxu0
      %v1806 = vadd.f32 0.0, %v1805
      %1807 = vmatmul.bf16.gmra.mxu0 %v714
      %v1808 = vpop.f32.mrf.mxu0
      %v1809 = vadd.f32 0.0, %v1808
      %v1810 = vpop.f32.mrf.mxu0
      %v1811 = vadd.f32 0.0, %v1810
      %1812 = vmatmul.bf16.gmra.mxu0 %v717
      %v1813 = vpop.f32.mrf.mxu0
      %v1814 = vadd.f32 0.0, %v1813
      %v1815 = vpop.f32.mrf.mxu0
      %v1816 = vadd.f32 0.0, %v1815
      %1817 = vmatmul.bf16.gmra.mxu0 %v720
      %v1818 = vpop.f32.mrf.mxu0
      %v1819 = vadd.f32 0.0, %v1818
      %v1820 = vpop.f32.mrf.mxu0
      %v1821 = vadd.f32 0.0, %v1820
      %1822 = vmatmul.bf16.gmra.mxu0 %v723
      %v1823 = vpop.f32.mrf.mxu0
      %v1824 = vadd.f32 0.0, %v1823
      %v1825 = vpop.f32.mrf.mxu0
      %v1826 = vadd.f32 0.0, %v1825
      %1827 = vmatmul.bf16.gmra.mxu0 %v726
      %v1828 = vpop.f32.mrf.mxu0
      %v1829 = vadd.f32 0.0, %v1828
      %v1830 = vpop.f32.mrf.mxu0
      %v1831 = vadd.f32 0.0, %v1830
      %1832 = vmatmul.bf16.gmra.mxu0 %v729
      %v1833 = vpop.f32.mrf.mxu0
      %v1834 = vadd.f32 0.0, %v1833
      %v1835 = vpop.f32.mrf.mxu0
      %v1836 = vadd.f32 0.0, %v1835
      %1837 = vdwg.mxu0
      %v1840 = vunpack.c.l.b16 %v1778
      %v1841 = vunpack.c.l.b16 %v1779
      %v1842 = vpack.c.b16 %v1841, %v1840
      %1844 = vmatpush.bf16.msra.mxu0 0
      %1845 = vmatpush.bf16.msra.mxu0 0
      %1846 = vmatpush.bf16.msra.mxu0 0
      %1847 = vmatpush.bf16.msra.mxu0 0
      %1848 = vmatpush.bf16.msra.mxu0 0
      %1849 = vmatpush.bf16.msra.mxu0 0
      %1850 = vmatpush.bf16.msra.mxu0 0
      %1851 = vmatpush.bf16.msra.mxu0 %v1842
      %1852 = vmatmul.bf16.gmra.mxu0 %v787
      %v1853 = vpop.f32.mrf.mxu0
      %v1854 = vadd.f32 %v1799, %v1853
      %v1855 = vpop.f32.mrf.mxu0
      %v1856 = vadd.f32 %v1801, %v1855
      %1857 = vmatmul.bf16.gmra.mxu0 %v790
      %v1858 = vpop.f32.mrf.mxu0
      %v1859 = vadd.f32 %v1804, %v1858
      %v1860 = vpop.f32.mrf.mxu0
      %v1861 = vadd.f32 %v1806, %v1860
      %1862 = vmatmul.bf16.gmra.mxu0 %v793
      %v1863 = vpop.f32.mrf.mxu0
      %v1864 = vadd.f32 %v1809, %v1863
      %v1865 = vpop.f32.mrf.mxu0
      %v1866 = vadd.f32 %v1811, %v1865
      %1867 = vmatmul.bf16.gmra.mxu0 %v796
      %v1868 = vpop.f32.mrf.mxu0
      %v1869 = vadd.f32 %v1814, %v1868
      %v1870 = vpop.f32.mrf.mxu0
      %v1871 = vadd.f32 %v1816, %v1870
      %1872 = vmatmul.bf16.gmra.mxu0 %v799
      %v1873 = vpop.f32.mrf.mxu0
      %v1874 = vadd.f32 %v1819, %v1873
      %v1875 = vpop.f32.mrf.mxu0
      %v1876 = vadd.f32 %v1821, %v1875
      %1877 = vmatmul.bf16.gmra.mxu0 %v802
      %v1878 = vpop.f32.mrf.mxu0
      %v1879 = vadd.f32 %v1824, %v1878
      %v1880 = vpop.f32.mrf.mxu0
      %v1881 = vadd.f32 %v1826, %v1880
      %1882 = vmatmul.bf16.gmra.mxu0 %v805
      %v1883 = vpop.f32.mrf.mxu0
      %v1884 = vadd.f32 %v1829, %v1883
      %v1885 = vpop.f32.mrf.mxu0
      %v1886 = vadd.f32 %v1831, %v1885
      %1887 = vmatmul.bf16.gmra.mxu0 %v808
      %v1888 = vpop.f32.mrf.mxu0
      %v1889 = vadd.f32 %v1834, %v1888
      %v1890 = vpop.f32.mrf.mxu0
      %v1891 = vadd.f32 %v1836, %v1890
      %1892 = vdwg.mxu0
      %s1893 = scalar_lea.vmem %s7, 3
      %v1894 = vld [vmem:[%s1893] sm:$0x1]
      %v1896 = vperm.slane %v1894, 0
      %v1898 = vadd.f32 %v1854, %v1896
      %v1899 = vadd.f32 %v1856, %v1896
      %v1900 = vadd.f32 %v1859, %v1896
      %v1901 = vadd.f32 %v1861, %v1896
      %v1902 = vadd.f32 %v1864, %v1896
      %v1903 = vadd.f32 %v1866, %v1896
      %v1904 = vadd.f32 %v1869, %v1896
      %v1905 = vadd.f32 %v1871, %v1896
      %v1906 = vadd.f32 %v1874, %v1896
      %v1907 = vadd.f32 %v1876, %v1896
      %v1908 = vadd.f32 %v1879, %v1896
      %v1909 = vadd.f32 %v1881, %v1896
      %v1910 = vadd.f32 %v1884, %v1896
      %v1911 = vadd.f32 %v1886, %v1896
      %v1912 = vadd.f32 %v1889, %v1896
      %v1913 = vadd.f32 %v1891, %v1896
      %v1914 = vxor.u32 %v1898, 2147483648
      %v1915 = vxor.u32 %v1899, 2147483648
      %v1916 = vxor.u32 %v1900, 2147483648
      %v1917 = vxor.u32 %v1901, 2147483648
      %v1918 = vxor.u32 %v1902, 2147483648
      %v1919 = vxor.u32 %v1903, 2147483648
      %v1920 = vxor.u32 %v1904, 2147483648
      %v1921 = vxor.u32 %v1905, 2147483648
      %v1922 = vxor.u32 %v1906, 2147483648
      %v1923 = vxor.u32 %v1907, 2147483648
      %v1924 = vxor.u32 %v1908, 2147483648
      %v1925 = vxor.u32 %v1909, 2147483648
      %v1926 = vxor.u32 %v1910, 2147483648
      %v1927 = vxor.u32 %v1911, 2147483648
      %v1928 = vxor.u32 %v1912, 2147483648
      %v1929 = vxor.u32 %v1913, 2147483648
      %v1930 = vmul.f32 %v1914, 1.442695
      %v1931 = vpow.pop %v1930
      %v1932 = vmul.f32 %v1915, 1.442695
      %v1933 = vpow.pop %v1932
      %v1934 = vmul.f32 %v1916, 1.442695
      %v1935 = vpow.pop %v1934
      %v1936 = vmul.f32 %v1917, 1.442695
      %v1937 = vpow.pop %v1936
      %v1938 = vmul.f32 %v1918, 1.442695
      %v1939 = vpow.pop %v1938
      %v1940 = vmul.f32 %v1919, 1.442695
      %v1941 = vpow.pop %v1940
      %v1942 = vmul.f32 %v1920, 1.442695
      %v1943 = vpow.pop %v1942
      %v1944 = vmul.f32 %v1921, 1.442695
      %v1945 = vpow.pop %v1944
      %v1946 = vmul.f32 %v1922, 1.442695
      %v1947 = vpow.pop %v1946
      %v1948 = vmul.f32 %v1923, 1.442695
      %v1949 = vpow.pop %v1948
      %v1950 = vmul.f32 %v1924, 1.442695
      %v1951 = vpow.pop %v1950
      %v1952 = vmul.f32 %v1925, 1.442695
      %v1953 = vpow.pop %v1952
      %v1954 = vmul.f32 %v1926, 1.442695
      %v1955 = vpow.pop %v1954
      %v1956 = vmul.f32 %v1927, 1.442695
      %v1957 = vpow.pop %v1956
      %v1958 = vmul.f32 %v1928, 1.442695
      %v1959 = vpow.pop %v1958
      %v1960 = vmul.f32 %v1929, 1.442695
      %v1961 = vpow.pop %v1960
      %v1962 = vadd.f32 %v1931, 1.0
      %v1963 = vadd.f32 %v1933, 1.0
      %v1964 = vadd.f32 %v1935, 1.0
      %v1965 = vadd.f32 %v1937, 1.0
      %v1966 = vadd.f32 %v1939, 1.0
      %v1967 = vadd.f32 %v1941, 1.0
      %v1968 = vadd.f32 %v1943, 1.0
      %v1969 = vadd.f32 %v1945, 1.0
      %v1970 = vadd.f32 %v1947, 1.0
      %v1971 = vadd.f32 %v1949, 1.0
      %v1972 = vadd.f32 %v1951, 1.0
      %v1973 = vadd.f32 %v1953, 1.0
      %v1974 = vadd.f32 %v1955, 1.0
      %v1975 = vadd.f32 %v1957, 1.0
      %v1976 = vadd.f32 %v1959, 1.0
      %v1977 = vadd.f32 %v1961, 1.0
      %v1978 = vrcp.pop %v1962
      %v1979 = vmul.f32 %v1962, %v1978
      %v1980 = vsub.f32 1.0, %v1979
      %v1981 = vmul.f32 %v1978, %v1980
      %v1982 = vadd.f32 %v1978, %v1981
      %vm1983 = vweird.f32 %v1962
      %vm1984 = vweird.f32 %v1978
      %vm1985 = vmor %vm1983, %vm1984
      %v1986 = vsel %vm1985, %v1978, %v1982
      %v1987 = vand.u32 2147483647, %v1962
      %vm1988 = vcmp.eq.f32.partialorder %v1987, 8.507059e+37
      %v1989 = vand.u32 %v1962, 2147483648
      %v1990 = vor.u32 1.1754944e-38, %v1989
      %v1991 = vsel %vm1988, %v1990, %v1986
      %v1992 = vmul.f32 1.0, %v1991
      %v1993 = vrcp.pop %v1963
      %v1994 = vmul.f32 %v1963, %v1993
      %v1995 = vsub.f32 1.0, %v1994
      %v1996 = vmul.f32 %v1993, %v1995
      %v1997 = vadd.f32 %v1993, %v1996
      %vm1998 = vweird.f32 %v1963
      %vm1999 = vweird.f32 %v1993
      %vm2000 = vmor %vm1998, %vm1999
      %v2001 = vsel %vm2000, %v1993, %v1997
      %v2002 = vand.u32 2147483647, %v1963
      %vm2003 = vcmp.eq.f32.partialorder %v2002, 8.507059e+37
      %v2004 = vand.u32 %v1963, 2147483648
      %v2005 = vor.u32 1.1754944e-38, %v2004
      %v2006 = vsel %vm2003, %v2005, %v2001
      %v2007 = vmul.f32 1.0, %v2006
      %v2008 = vrcp.pop %v1964
      %v2009 = vmul.f32 %v1964, %v2008
      %v2010 = vsub.f32 1.0, %v2009
      %v2011 = vmul.f32 %v2008, %v2010
      %v2012 = vadd.f32 %v2008, %v2011
      %vm2013 = vweird.f32 %v1964
      %vm2014 = vweird.f32 %v2008
      %vm2015 = vmor %vm2013, %vm2014
      %v2016 = vsel %vm2015, %v2008, %v2012
      %v2017 = vand.u32 2147483647, %v1964
      %vm2018 = vcmp.eq.f32.partialorder %v2017, 8.507059e+37
      %v2019 = vand.u32 %v1964, 2147483648
      %v2020 = vor.u32 1.1754944e-38, %v2019
      %v2021 = vsel %vm2018, %v2020, %v2016
      %v2022 = vmul.f32 1.0, %v2021
      %v2023 = vrcp.pop %v1965
      %v2024 = vmul.f32 %v1965, %v2023
      %v2025 = vsub.f32 1.0, %v2024
      %v2026 = vmul.f32 %v2023, %v2025
      %v2027 = vadd.f32 %v2023, %v2026
      %vm2028 = vweird.f32 %v1965
      %vm2029 = vweird.f32 %v2023
      %vm2030 = vmor %vm2028, %vm2029
      %v2031 = vsel %vm2030, %v2023, %v2027
      %v2032 = vand.u32 2147483647, %v1965
      %vm2033 = vcmp.eq.f32.partialorder %v2032, 8.507059e+37
      %v2034 = vand.u32 %v1965, 2147483648
      %v2035 = vor.u32 1.1754944e-38, %v2034
      %v2036 = vsel %vm2033, %v2035, %v2031
      %v2037 = vmul.f32 1.0, %v2036
      %v2038 = vrcp.pop %v1966
      %v2039 = vmul.f32 %v1966, %v2038
      %v2040 = vsub.f32 1.0, %v2039
      %v2041 = vmul.f32 %v2038, %v2040
      %v2042 = vadd.f32 %v2038, %v2041
      %vm2043 = vweird.f32 %v1966
      %vm2044 = vweird.f32 %v2038
      %vm2045 = vmor %vm2043, %vm2044
      %v2046 = vsel %vm2045, %v2038, %v2042
      %v2047 = vand.u32 2147483647, %v1966
      %vm2048 = vcmp.eq.f32.partialorder %v2047, 8.507059e+37
      %v2049 = vand.u32 %v1966, 2147483648
      %v2050 = vor.u32 1.1754944e-38, %v2049
      %v2051 = vsel %vm2048, %v2050, %v2046
      %v2052 = vmul.f32 1.0, %v2051
      %v2053 = vrcp.pop %v1967
      %v2054 = vmul.f32 %v1967, %v2053
      %v2055 = vsub.f32 1.0, %v2054
      %v2056 = vmul.f32 %v2053, %v2055
      %v2057 = vadd.f32 %v2053, %v2056
      %vm2058 = vweird.f32 %v1967
      %vm2059 = vweird.f32 %v2053
      %vm2060 = vmor %vm2058, %vm2059
      %v2061 = vsel %vm2060, %v2053, %v2057
      %v2062 = vand.u32 2147483647, %v1967
      %vm2063 = vcmp.eq.f32.partialorder %v2062, 8.507059e+37
      %v2064 = vand.u32 %v1967, 2147483648
      %v2065 = vor.u32 1.1754944e-38, %v2064
      %v2066 = vsel %vm2063, %v2065, %v2061
      %v2067 = vmul.f32 1.0, %v2066
      %v2068 = vrcp.pop %v1968
      %v2069 = vmul.f32 %v1968, %v2068
      %v2070 = vsub.f32 1.0, %v2069
      %v2071 = vmul.f32 %v2068, %v2070
      %v2072 = vadd.f32 %v2068, %v2071
      %vm2073 = vweird.f32 %v1968
      %vm2074 = vweird.f32 %v2068
      %vm2075 = vmor %vm2073, %vm2074
      %v2076 = vsel %vm2075, %v2068, %v2072
      %v2077 = vand.u32 2147483647, %v1968
      %vm2078 = vcmp.eq.f32.partialorder %v2077, 8.507059e+37
      %v2079 = vand.u32 %v1968, 2147483648
      %v2080 = vor.u32 1.1754944e-38, %v2079
      %v2081 = vsel %vm2078, %v2080, %v2076
      %v2082 = vmul.f32 1.0, %v2081
      %v2083 = vrcp.pop %v1969
      %v2084 = vmul.f32 %v1969, %v2083
      %v2085 = vsub.f32 1.0, %v2084
      %v2086 = vmul.f32 %v2083, %v2085
      %v2087 = vadd.f32 %v2083, %v2086
      %vm2088 = vweird.f32 %v1969
      %vm2089 = vweird.f32 %v2083
      %vm2090 = vmor %vm2088, %vm2089
      %v2091 = vsel %vm2090, %v2083, %v2087
      %v2092 = vand.u32 2147483647, %v1969
      %vm2093 = vcmp.eq.f32.partialorder %v2092, 8.507059e+37
      %v2094 = vand.u32 %v1969, 2147483648
      %v2095 = vor.u32 1.1754944e-38, %v2094
      %v2096 = vsel %vm2093, %v2095, %v2091
      %v2097 = vmul.f32 1.0, %v2096
      %v2098 = vrcp.pop %v1970
      %v2099 = vmul.f32 %v1970, %v2098
      %v2100 = vsub.f32 1.0, %v2099
      %v2101 = vmul.f32 %v2098, %v2100
      %v2102 = vadd.f32 %v2098, %v2101
      %vm2103 = vweird.f32 %v1970
      %vm2104 = vweird.f32 %v2098
      %vm2105 = vmor %vm2103, %vm2104
      %v2106 = vsel %vm2105, %v2098, %v2102
      %v2107 = vand.u32 2147483647, %v1970
      %vm2108 = vcmp.eq.f32.partialorder %v2107, 8.507059e+37
      %v2109 = vand.u32 %v1970, 2147483648
      %v2110 = vor.u32 1.1754944e-38, %v2109
      %v2111 = vsel %vm2108, %v2110, %v2106
      %v2112 = vmul.f32 1.0, %v2111
      %v2113 = vrcp.pop %v1971
      %v2114 = vmul.f32 %v1971, %v2113
      %v2115 = vsub.f32 1.0, %v2114
      %v2116 = vmul.f32 %v2113, %v2115
      %v2117 = vadd.f32 %v2113, %v2116
      %vm2118 = vweird.f32 %v1971
      %vm2119 = vweird.f32 %v2113
      %vm2120 = vmor %vm2118, %vm2119
      %v2121 = vsel %vm2120, %v2113, %v2117
      %v2122 = vand.u32 2147483647, %v1971
      %vm2123 = vcmp.eq.f32.partialorder %v2122, 8.507059e+37
      %v2124 = vand.u32 %v1971, 2147483648
      %v2125 = vor.u32 1.1754944e-38, %v2124
      %v2126 = vsel %vm2123, %v2125, %v2121
      %v2127 = vmul.f32 1.0, %v2126
      %v2128 = vrcp.pop %v1972
      %v2129 = vmul.f32 %v1972, %v2128
      %v2130 = vsub.f32 1.0, %v2129
      %v2131 = vmul.f32 %v2128, %v2130
      %v2132 = vadd.f32 %v2128, %v2131
      %vm2133 = vweird.f32 %v1972
      %vm2134 = vweird.f32 %v2128
      %vm2135 = vmor %vm2133, %vm2134
      %v2136 = vsel %vm2135, %v2128, %v2132
      %v2137 = vand.u32 2147483647, %v1972
      %vm2138 = vcmp.eq.f32.partialorder %v2137, 8.507059e+37
      %v2139 = vand.u32 %v1972, 2147483648
      %v2140 = vor.u32 1.1754944e-38, %v2139
      %v2141 = vsel %vm2138, %v2140, %v2136
      %v2142 = vmul.f32 1.0, %v2141
      %v2143 = vrcp.pop %v1973
      %v2144 = vmul.f32 %v1973, %v2143
      %v2145 = vsub.f32 1.0, %v2144
      %v2146 = vmul.f32 %v2143, %v2145
      %v2147 = vadd.f32 %v2143, %v2146
      %vm2148 = vweird.f32 %v1973
      %vm2149 = vweird.f32 %v2143
      %vm2150 = vmor %vm2148, %vm2149
      %v2151 = vsel %vm2150, %v2143, %v2147
      %v2152 = vand.u32 2147483647, %v1973
      %vm2153 = vcmp.eq.f32.partialorder %v2152, 8.507059e+37
      %v2154 = vand.u32 %v1973, 2147483648
      %v2155 = vor.u32 1.1754944e-38, %v2154
      %v2156 = vsel %vm2153, %v2155, %v2151
      %v2157 = vmul.f32 1.0, %v2156
      %v2158 = vrcp.pop %v1974
      %v2159 = vmul.f32 %v1974, %v2158
      %v2160 = vsub.f32 1.0, %v2159
      %v2161 = vmul.f32 %v2158, %v2160
      %v2162 = vadd.f32 %v2158, %v2161
      %vm2163 = vweird.f32 %v1974
      %vm2164 = vweird.f32 %v2158
      %vm2165 = vmor %vm2163, %vm2164
      %v2166 = vsel %vm2165, %v2158, %v2162
      %v2167 = vand.u32 2147483647, %v1974
      %vm2168 = vcmp.eq.f32.partialorder %v2167, 8.507059e+37
      %v2169 = vand.u32 %v1974, 2147483648
      %v2170 = vor.u32 1.1754944e-38, %v2169
      %v2171 = vsel %vm2168, %v2170, %v2166
      %v2172 = vmul.f32 1.0, %v2171
      %v2173 = vrcp.pop %v1975
      %v2174 = vmul.f32 %v1975, %v2173
      %v2175 = vsub.f32 1.0, %v2174
      %v2176 = vmul.f32 %v2173, %v2175
      %v2177 = vadd.f32 %v2173, %v2176
      %vm2178 = vweird.f32 %v1975
      %vm2179 = vweird.f32 %v2173
      %vm2180 = vmor %vm2178, %vm2179
      %v2181 = vsel %vm2180, %v2173, %v2177
      %v2182 = vand.u32 2147483647, %v1975
      %vm2183 = vcmp.eq.f32.partialorder %v2182, 8.507059e+37
      %v2184 = vand.u32 %v1975, 2147483648
      %v2185 = vor.u32 1.1754944e-38, %v2184
      %v2186 = vsel %vm2183, %v2185, %v2181
      %v2187 = vmul.f32 1.0, %v2186
      %v2188 = vrcp.pop %v1976
      %v2189 = vmul.f32 %v1976, %v2188
      %v2190 = vsub.f32 1.0, %v2189
      %v2191 = vmul.f32 %v2188, %v2190
      %v2192 = vadd.f32 %v2188, %v2191
      %vm2193 = vweird.f32 %v1976
      %vm2194 = vweird.f32 %v2188
      %vm2195 = vmor %vm2193, %vm2194
      %v2196 = vsel %vm2195, %v2188, %v2192
      %v2197 = vand.u32 2147483647, %v1976
      %vm2198 = vcmp.eq.f32.partialorder %v2197, 8.507059e+37
      %v2199 = vand.u32 %v1976, 2147483648
      %v2200 = vor.u32 1.1754944e-38, %v2199
      %v2201 = vsel %vm2198, %v2200, %v2196
      %v2202 = vmul.f32 1.0, %v2201
      %v2203 = vrcp.pop %v1977
      %v2204 = vmul.f32 %v1977, %v2203
      %v2205 = vsub.f32 1.0, %v2204
      %v2206 = vmul.f32 %v2203, %v2205
      %v2207 = vadd.f32 %v2203, %v2206
      %vm2208 = vweird.f32 %v1977
      %vm2209 = vweird.f32 %v2203
      %vm2210 = vmor %vm2208, %vm2209
      %v2211 = vsel %vm2210, %v2203, %v2207
      %v2212 = vand.u32 2147483647, %v1977
      %vm2213 = vcmp.eq.f32.partialorder %v2212, 8.507059e+37
      %v2214 = vand.u32 %v1977, 2147483648
      %v2215 = vor.u32 1.1754944e-38, %v2214
      %v2216 = vsel %vm2213, %v2215, %v2211
      %v2217 = vmul.f32 1.0, %v2216
      %v2218 = vld [vmem:[#allocation3] sm:$0xff]
      %v2219 = vld [vmem:[#allocation3 + $0x8] sm:$0xff]
      %v2220 = vld [vmem:[#allocation3 + $0x10] sm:$0xff]
      %v2221 = vld [vmem:[#allocation3 + $0x18] sm:$0xff]
      %v2222 = vld [vmem:[#allocation3 + $0x20] sm:$0xff]
      %v2223 = vld [vmem:[#allocation3 + $0x28] sm:$0xff]
      %v2224 = vld [vmem:[#allocation3 + $0x30] sm:$0xff]
      %v2225 = vld [vmem:[#allocation3 + $0x38] sm:$0xff]
      %v2226 = vld [vmem:[#allocation3 + $0x40] sm:$0xff]
      %v2227 = vld [vmem:[#allocation3 + $0x48] sm:$0xff]
      %v2228 = vld [vmem:[#allocation3 + $0x50] sm:$0xff]
      %v2229 = vld [vmem:[#allocation3 + $0x58] sm:$0xff]
      %v2230 = vld [vmem:[#allocation3 + $0x60] sm:$0xff]
      %v2231 = vld [vmem:[#allocation3 + $0x68] sm:$0xff]
      %v2232 = vld [vmem:[#allocation3 + $0x70] sm:$0xff]
      %v2233 = vld [vmem:[#allocation3 + $0x78] sm:$0xff]
      %v2234 = vmul.f32 %v1398, %v2218
      %v2235 = vmul.f32 %v1413, %v2219
      %v2236 = vmul.f32 %v1428, %v2220
      %v2237 = vmul.f32 %v1443, %v2221
      %v2238 = vmul.f32 %v1458, %v2222
      %v2239 = vmul.f32 %v1473, %v2223
      %v2240 = vmul.f32 %v1488, %v2224
      %v2241 = vmul.f32 %v1503, %v2225
      %v2242 = vmul.f32 %v1518, %v2226
      %v2243 = vmul.f32 %v1533, %v2227
      %v2244 = vmul.f32 %v1548, %v2228
      %v2245 = vmul.f32 %v1563, %v2229
      %v2246 = vmul.f32 %v1578, %v2230
      %v2247 = vmul.f32 %v1593, %v2231
      %v2248 = vmul.f32 %v1608, %v2232
      %v2249 = vmul.f32 %v1623, %v2233
      %v2250 = vmul.f32 %v957, %v1761
      %v2251 = vmul.f32 %v972, %v1762
      %v2252 = vmul.f32 %v987, %v1763
      %v2253 = vmul.f32 %v1002, %v1764
      %v2254 = vmul.f32 %v1017, %v1765
      %v2255 = vmul.f32 %v1032, %v1766
      %v2256 = vmul.f32 %v1047, %v1767
      %v2257 = vmul.f32 %v1062, %v1768
      %v2258 = vmul.f32 %v1077, %v1769
      %v2259 = vmul.f32 %v1092, %v1770
      %v2260 = vmul.f32 %v1107, %v1771
      %v2261 = vmul.f32 %v1122, %v1772
      %v2262 = vmul.f32 %v1137, %v1773
      %v2263 = vmul.f32 %v1152, %v1774
      %v2264 = vmul.f32 %v1167, %v1775
      %v2265 = vmul.f32 %v1182, %v1776
      %v2266 = vadd.f32 %v2234, %v2250
      %v2267 = vadd.f32 %v2235, %v2251
      %v2268 = vadd.f32 %v2236, %v2252
      %v2269 = vadd.f32 %v2237, %v2253
      %v2270 = vadd.f32 %v2238, %v2254
      %v2271 = vadd.f32 %v2239, %v2255
      %v2272 = vadd.f32 %v2240, %v2256
      %v2273 = vadd.f32 %v2241, %v2257
      %v2274 = vadd.f32 %v2242, %v2258
      %v2275 = vadd.f32 %v2243, %v2259
      %v2276 = vadd.f32 %v2244, %v2260
      %v2277 = vadd.f32 %v2245, %v2261
      %v2278 = vadd.f32 %v2246, %v2262
      %v2279 = vadd.f32 %v2247, %v2263
      %v2280 = vadd.f32 %v2248, %v2264
      %v2281 = vadd.f32 %v2249, %v2265
      %v2282 = vtanh.pop %v2266
      %v2283 = vtanh.pop %v2267
      %v2284 = vtanh.pop %v2268
      %v2285 = vtanh.pop %v2269
      %v2286 = vtanh.pop %v2270
      %v2287 = vtanh.pop %v2271
      %v2288 = vtanh.pop %v2272
      %v2289 = vtanh.pop %v2273
      %v2290 = vtanh.pop %v2274
      %v2291 = vtanh.pop %v2275
      %v2292 = vtanh.pop %v2276
      %v2293 = vtanh.pop %v2277
      %v2294 = vtanh.pop %v2278
      %v2295 = vtanh.pop %v2279
      %v2296 = vtanh.pop %v2280
      %v2297 = vtanh.pop %v2281
      %v2298 = vmul.f32 %v1992, %v2282
      %v2299 = vmul.f32 %v2007, %v2283
      %v2300 = vmul.f32 %v2022, %v2284
      %v2301 = vmul.f32 %v2037, %v2285
      %v2302 = vmul.f32 %v2052, %v2286
      %v2303 = vmul.f32 %v2067, %v2287
      %v2304 = vmul.f32 %v2082, %v2288
      %v2305 = vmul.f32 %v2097, %v2289
      %v2306 = vmul.f32 %v2112, %v2290
      %v2307 = vmul.f32 %v2127, %v2291
      %v2308 = vmul.f32 %v2142, %v2292
      %v2309 = vmul.f32 %v2157, %v2293
      %v2310 = vmul.f32 %v2172, %v2294
      %v2311 = vmul.f32 %v2187, %v2295
      %v2312 = vmul.f32 %v2202, %v2296
      %v2313 = vmul.f32 %v2217, %v2297
      %2314 = vst.msk [vmem:[#allocation3] sm:$0xff] %vm500, %v2266
      %2315 = vst.msk [vmem:[#allocation3 + $0x8] sm:$0xff] %vm500, %v2267
      %2316 = vst.msk [vmem:[#allocation3 + $0x10] sm:$0xff] %vm500, %v2268
      %2317 = vst.msk [vmem:[#allocation3 + $0x18] sm:$0xff] %vm500, %v2269
      %2318 = vst.msk [vmem:[#allocation3 + $0x20] sm:$0xff] %vm500, %v2270
      %2319 = vst.msk [vmem:[#allocation3 + $0x28] sm:$0xff] %vm500, %v2271
      %2320 = vst.msk [vmem:[#allocation3 + $0x30] sm:$0xff] %vm500, %v2272
      %2321 = vst.msk [vmem:[#allocation3 + $0x38] sm:$0xff] %vm500, %v2273
      %2322 = vst.msk [vmem:[#allocation3 + $0x40] sm:$0xff] %vm500, %v2274
      %2323 = vst.msk [vmem:[#allocation3 + $0x48] sm:$0xff] %vm500, %v2275
      %2324 = vst.msk [vmem:[#allocation3 + $0x50] sm:$0xff] %vm500, %v2276
      %2325 = vst.msk [vmem:[#allocation3 + $0x58] sm:$0xff] %vm500, %v2277
      %2326 = vst.msk [vmem:[#allocation3 + $0x60] sm:$0xff] %vm500, %v2278
      %2327 = vst.msk [vmem:[#allocation3 + $0x68] sm:$0xff] %vm500, %v2279
      %2328 = vst.msk [vmem:[#allocation3 + $0x70] sm:$0xff] %vm500, %v2280
      %2329 = vst.msk [vmem:[#allocation3 + $0x78] sm:$0xff] %vm500, %v2281
      %2330 = vst.msk [vmem:[#allocation2] sm:$0xff] %vm500, %v2298
      %2331 = vst.msk [vmem:[#allocation2 + $0x8] sm:$0xff] %vm500, %v2299
      %2332 = vst.msk [vmem:[#allocation2 + $0x10] sm:$0xff] %vm500, %v2300
      %2333 = vst.msk [vmem:[#allocation2 + $0x18] sm:$0xff] %vm500, %v2301
      %2334 = vst.msk [vmem:[#allocation2 + $0x20] sm:$0xff] %vm500, %v2302
      %2335 = vst.msk [vmem:[#allocation2 + $0x28] sm:$0xff] %vm500, %v2303
      %2336 = vst.msk [vmem:[#allocation2 + $0x30] sm:$0xff] %vm500, %v2304
      %2337 = vst.msk [vmem:[#allocation2 + $0x38] sm:$0xff] %vm500, %v2305
      %2338 = vst.msk [vmem:[#allocation2 + $0x40] sm:$0xff] %vm500, %v2306
      %2339 = vst.msk [vmem:[#allocation2 + $0x48] sm:$0xff] %vm500, %v2307
      %2340 = vst.msk [vmem:[#allocation2 + $0x50] sm:$0xff] %vm500, %v2308
      %2341 = vst.msk [vmem:[#allocation2 + $0x58] sm:$0xff] %vm500, %v2309
      %2342 = vst.msk [vmem:[#allocation2 + $0x60] sm:$0xff] %vm500, %v2310
      %2343 = vst.msk [vmem:[#allocation2 + $0x68] sm:$0xff] %vm500, %v2311
      %2344 = vst.msk [vmem:[#allocation2 + $0x70] sm:$0xff] %vm500, %v2312
      %2345 = vst.msk [vmem:[#allocation2 + $0x78] sm:$0xff] %vm500, %v2313
      %v2346 = vpack.c.bf16 %v2298, %v2298
      %v2347 = vpack.c.bf16 %v2299, %v2299
      %v2348 = vpack.c.bf16 %v2300, %v2300
      %v2349 = vpack.c.bf16 %v2301, %v2301
      %v2350 = vpack.c.bf16 %v2302, %v2302
      %v2351 = vpack.c.bf16 %v2303, %v2303
      %v2352 = vpack.c.bf16 %v2304, %v2304
      %v2353 = vpack.c.bf16 %v2305, %v2305
      %v2354 = vpack.c.bf16 %v2306, %v2306
      %v2355 = vpack.c.bf16 %v2307, %v2307
      %v2356 = vpack.c.bf16 %v2308, %v2308
      %v2357 = vpack.c.bf16 %v2309, %v2309
      %v2358 = vpack.c.bf16 %v2310, %v2310
      %v2359 = vpack.c.bf16 %v2311, %v2311
      %v2360 = vpack.c.bf16 %v2312, %v2312
      %v2361 = vpack.c.bf16 %v2313, %v2313
      %vm2362 = vcmask 125952
      %2363 = vst.msk [vmem:[%s305] sm:$0xf] %vm2362, %v2346
      %2364 = vst.msk [vmem:[%s305 + $0x4] sm:$0xf] %vm2362, %v2347
      %2365 = vst.msk [vmem:[%s305 + $0x8] sm:$0xf] %vm2362, %v2348
      %2366 = vst.msk [vmem:[%s305 + $0xc] sm:$0xf] %vm2362, %v2349
      %2367 = vst.msk [vmem:[%s305 + $0x10] sm:$0xf] %vm2362, %v2350
      %2368 = vst.msk [vmem:[%s305 + $0x14] sm:$0xf] %vm2362, %v2351
      %2369 = vst.msk [vmem:[%s305 + $0x18] sm:$0xf] %vm2362, %v2352
      %2370 = vst.msk [vmem:[%s305 + $0x1c] sm:$0xf] %vm2362, %v2353
      %2371 = vst.msk [vmem:[%s305 + $0x20] sm:$0xf] %vm2362, %v2354
      %2372 = vst.msk [vmem:[%s305 + $0x24] sm:$0xf] %vm2362, %v2355
      %2373 = vst.msk [vmem:[%s305 + $0x28] sm:$0xf] %vm2362, %v2356
      %2374 = vst.msk [vmem:[%s305 + $0x2c] sm:$0xf] %vm2362, %v2357
      %2375 = vst.msk [vmem:[%s305 + $0x30] sm:$0xf] %vm2362, %v2358
      %2376 = vst.msk [vmem:[%s305 + $0x34] sm:$0xf] %vm2362, %v2359
      %2377 = vst.msk [vmem:[%s305 + $0x38] sm:$0xf] %vm2362, %v2360
      %2378 = vst.msk [vmem:[%s305 + $0x3c] sm:$0xf] %vm2362, %v2361
      %p2379 = scmp.lt.s32.totalorder %s19, 2
      %s2380 = scalar_select %p2379, %s19, 2
      %s2381 = smul.addr %s2380, 16
      %s2382 = smul.addr %s2381, 4
      %s2383 = scalar_lea.vmem %s8, %s2382
      // Predicated region
      $region57: #{rcnn_forward.5} parent=51 // pred_check
        %p2384 = pneg %p210
      $region58: #{rcnn_forward.5} parent=51 // pred_check_branch
        %2386 = sbr.rel (%p2384) target = $region60
      $region59: #{rcnn_forward.5} parent=51 // pred_region
        _
      $region60: #{rcnn_forward.5} parent=51 // pred_fallthru
        _
    $region52: #{rcnn_forward.5} parent=5 // pred_fallthru
      _
    %p2387 = scmp.le.s32.totalorder 2, %s14
    // Predicated region
    $region61: #{rcnn_forward.5} parent=5 // pred_check
      %p2388 = pneg %p2387
    $region62: #{rcnn_forward.5} parent=5 // pred_check_branch
      %2390 = sbr.rel (%p2388) target = $region64
    $region63: #{rcnn_forward.5} parent=5 // pred_region
      %s2391 = ssub.s32 %s14, 2
      // Predicated region
      $region65: #{rcnn_forward.5} parent=63 // pred_check
        %p2392 = pneg %p216
      $region66: #{rcnn_forward.5} parent=63 // pred_check_branch
        %2394 = sbr.rel (%p2392) target = $region68
      $region67: #{rcnn_forward.5} parent=63 // pred_region
        %p2395 = scmp.lt.s32.totalorder %s20, 2
        %s2396 = scalar_select %p2395, %s20, 2
        %s2397 = smul.addr %s2396, 16
        %s2398 = smul.addr %s2397, 4
        %s2399 = scalar_lea.vmem %s8, %s2398
      $region68: #{rcnn_forward.5} parent=63 // pred_fallthru
        _
    $region64: #{rcnn_forward.5} parent=5 // pred_fallthru
      _
  $region6: #{rcnn_forward.5} parent=0 // loop_footer
    %s18 = sadd.s32 1, %s14
  $region7: #{rcnn_forward.5} parent=0 // loop_footer_branch
    %13 = sbr.rel target = $region3
  $region8: #{rcnn_forward.5} parent=0 // loop_exit
    _

// kernel: rcnn_forward.6
$region0: #{rcnn_forward.6}
  #allocation0 [shape = 'u32[]', space=smem, size = 0x4, offset = 0x4, fixed_abs, tag = 'smem constant byte address 0x4 - core index']
  #allocation1 [shape = 'u32[72,128]{1,0:T(1,128)}', space=vmem, size = 0x9000, scoped, tag = 'internal scratch']
  #allocation2 [shape = 'f32[32,32]{1,0:T(8,128)}', space=vmem, size = 0x4000, scoped, tag = 'scratch operand']
  #allocation3 [shape = 'f32[32,32]{1,0:T(8,128)}', space=vmem, size = 0x4000, scoped, tag = 'scratch operand']
  %s0 = inlined_call_operand.vmem [shape: bf16[3,32,144], index: 0, kind: input, shape index: {}]
  %s1 = inlined_call_operand.vmem [shape: bf16[144,32], index: 1, kind: input, shape index: {}]
  %s2 = inlined_call_operand.vmem [shape: f32[1,32], index: 2, kind: input, shape index: {}]
  %s3 = inlined_call_operand.vmem [shape: f32[1,32], index: 3, kind: input, shape index: {}]
  %s4 = inlined_call_operand.vmem [shape: f32[1,32], index: 4, kind: input, shape index: {}]
  %s5 = inlined_call_operand.vmem [shape: bf16[4,32,32], index: 5, kind: input, shape index: {}]
  %s6 = inlined_call_operand.vmem [shape: bf16[4,32,32], index: 6, kind: input, shape index: {}]
  %s7 = inlined_call_operand.vmem [shape: f32[4,1,32], index: 7, kind: input, shape index: {}]
  %s8 = inlined_call_operand.vmem [shape: bf16[3,32,32], index: 8, kind: output, shape index: {}]
  %s9 = sld [smem:[#allocation0]]
  $region69: #{rcnn_forward.6} parent=0
    _
  %s11 = ssub.s32 1, %s9
  %s12 = scalar_select 0, %s11, %s9
  loop: start=0, step=1, limit=5
  $region2: #{rcnn_forward.6} parent=0 // loop_pre_header
    _
  $region3: #{rcnn_forward.6} parent=0 // loop_header
    %s14 = sphi 0, %s18
    %p15 = scmp.ge.s32.totalorder %s14, 5
    %s24 = sphi 0, %s26
    %s27 = sphi 0, %s24
    %s28 = sphi 0, %s27
    %s44 = sphi 0, %s28
    %s48 = sphi 0, %s48
    %s50 = sphi 0, %s48
    %s51 = sphi 0, %s50
    %s65 = sphi 0, %s51
    %s69 = sphi 0, %s69
    %s71 = sphi 0, %s69
    %s72 = sphi 0, %s71
    %s86 = sphi 0, %s72
    %s90 = sphi 0, %s90
    %s92 = sphi 0, %s90
    %s93 = sphi 0, %s92
    %s107 = sphi 0, %s93
    %s111 = sphi 0, %s111
    %s113 = sphi 0, %s111
    %s114 = sphi 0, %s113
    %s128 = sphi 0, %s114
    %s132 = sphi 0, %s132
    %s134 = sphi 0, %s132
    %s135 = sphi 0, %s134
    %s149 = sphi 0, %s135
    %s153 = sphi 0, %s153
    %s155 = sphi 0, %s153
    %s156 = sphi 0, %s155
    %s170 = sphi 0, %s156
    %s174 = sphi 0, %s174
    %s176 = sphi 0, %s174
    %s177 = sphi 0, %s176
    %s191 = sphi 0, %s177
    %s197 = sphi 0, %s199
    %s200 = sphi 0, %s197
    %s201 = sphi 0, %s200
    %s217 = sphi 0, %s201
  $region4: #{rcnn_forward.6} parent=0 // loop_header_branch
    %17 = sbr.rel (%p15) target = $region8
  $region5: #{rcnn_forward.6} parent=0 // loop_body
    %s19 = ssub.s32 %s14, 1
    %s20 = ssub.s32 %s14, 2
    %s21 = sadd.s32 %s14, 1
    %s22 = ssub.s32 %s14, %s21
    %p23 = scmp.eq.s32.totalorder %s22, 0
    %s25 = sadd.s32 %s24, 1
    %s26 = scalar_select %p23, %s24, %s25
    %p29 = pneg %p23
    %p30 = scmp.eq.s32.totalorder %s14, 2
    %p31 = por %p29, %p30
    %p32 = scmp.ne.s32.totalorder %s24, %s27
    %p33 = scmp.eq.s32.totalorder %s14, 0
    %p34 = por %p32, %p33
    %p35 = scmp.ne.s32.totalorder %s24, %s27
    %p36 = scmp.eq.s32.totalorder %s19, 2
    %p37 = por %p35, %p36
    %p38 = scmp.ne.s32.totalorder %s27, %s28
    %p39 = scmp.eq.s32.totalorder %s19, 0
    %p40 = por %p38, %p39
    %p41 = scmp.ne.s32.totalorder %s27, %s28
    %p42 = scmp.eq.s32.totalorder %s20, 2
    %p43 = por %p41, %p42
    %p45 = scmp.ne.s32.totalorder %s28, %s44
    %p46 = scmp.eq.s32.totalorder %s20, 0
    %p47 = por %p45, %p46
    %s49 = sadd.s32 %s48, 1
    %p52 = scmp.eq.s32.totalorder %s14, 2
    %p53 = scmp.ne.s32.totalorder %s48, %s50
    %p54 = scmp.eq.s32.totalorder %s14, 0
    %p55 = por %p53, %p54
    %p56 = scmp.ne.s32.totalorder %s48, %s50
    %p57 = scmp.eq.s32.totalorder %s19, 2
    %p58 = por %p56, %p57
    %p59 = scmp.ne.s32.totalorder %s50, %s51
    %p60 = scmp.eq.s32.totalorder %s19, 0
    %p61 = por %p59, %p60
    %p62 = scmp.ne.s32.totalorder %s50, %s51
    %p63 = scmp.eq.s32.totalorder %s20, 2
    %p64 = por %p62, %p63
    %p66 = scmp.ne.s32.totalorder %s51, %s65
    %p67 = scmp.eq.s32.totalorder %s20, 0
    %p68 = por %p66, %p67
    %s70 = sadd.s32 %s69, 1
    %p73 = scmp.eq.s32.totalorder %s14, 2
    %p74 = scmp.ne.s32.totalorder %s69, %s71
    %p75 = scmp.eq.s32.totalorder %s14, 0
    %p76 = por %p74, %p75
    %p77 = scmp.ne.s32.totalorder %s69, %s71
    %p78 = scmp.eq.s32.totalorder %s19, 2
    %p79 = por %p77, %p78
    %p80 = scmp.ne.s32.totalorder %s71, %s72
    %p81 = scmp.eq.s32.totalorder %s19, 0
    %p82 = por %p80, %p81
    %p83 = scmp.ne.s32.totalorder %s71, %s72
    %p84 = scmp.eq.s32.totalorder %s20, 2
    %p85 = por %p83, %p84
    %p87 = scmp.ne.s32.totalorder %s72, %s86
    %p88 = scmp.eq.s32.totalorder %s20, 0
    %p89 = por %p87, %p88
    %s91 = sadd.s32 %s90, 1
    %p94 = scmp.eq.s32.totalorder %s14, 2
    %p95 = scmp.ne.s32.totalorder %s90, %s92
    %p96 = scmp.eq.s32.totalorder %s14, 0
    %p97 = por %p95, %p96
    %p98 = scmp.ne.s32.totalorder %s90, %s92
    %p99 = scmp.eq.s32.totalorder %s19, 2
    %p100 = por %p98, %p99
    %p101 = scmp.ne.s32.totalorder %s92, %s93
    %p102 = scmp.eq.s32.totalorder %s19, 0
    %p103 = por %p101, %p102
    %p104 = scmp.ne.s32.totalorder %s92, %s93
    %p105 = scmp.eq.s32.totalorder %s20, 2
    %p106 = por %p104, %p105
    %p108 = scmp.ne.s32.totalorder %s93, %s107
    %p109 = scmp.eq.s32.totalorder %s20, 0
    %p110 = por %p108, %p109
    %s112 = sadd.s32 %s111, 1
    %p115 = scmp.eq.s32.totalorder %s14, 2
    %p116 = scmp.ne.s32.totalorder %s111, %s113
    %p117 = scmp.eq.s32.totalorder %s14, 0
    %p118 = por %p116, %p117
    %p119 = scmp.ne.s32.totalorder %s111, %s113
    %p120 = scmp.eq.s32.totalorder %s19, 2
    %p121 = por %p119, %p120
    %p122 = scmp.ne.s32.totalorder %s113, %s114
    %p123 = scmp.eq.s32.totalorder %s19, 0
    %p124 = por %p122, %p123
    %p125 = scmp.ne.s32.totalorder %s113, %s114
    %p126 = scmp.eq.s32.totalorder %s20, 2
    %p127 = por %p125, %p126
    %p129 = scmp.ne.s32.totalorder %s114, %s128
    %p130 = scmp.eq.s32.totalorder %s20, 0
    %p131 = por %p129, %p130
    %s133 = sadd.s32 %s132, 1
    %p136 = scmp.eq.s32.totalorder %s14, 2
    %p137 = scmp.ne.s32.totalorder %s132, %s134
    %p138 = scmp.eq.s32.totalorder %s14, 0
    %p139 = por %p137, %p138
    %p140 = scmp.ne.s32.totalorder %s132, %s134
    %p141 = scmp.eq.s32.totalorder %s19, 2
    %p142 = por %p140, %p141
    %p143 = scmp.ne.s32.totalorder %s134, %s135
    %p144 = scmp.eq.s32.totalorder %s19, 0
    %p145 = por %p143, %p144
    %p146 = scmp.ne.s32.totalorder %s134, %s135
    %p147 = scmp.eq.s32.totalorder %s20, 2
    %p148 = por %p146, %p147
    %p150 = scmp.ne.s32.totalorder %s135, %s149
    %p151 = scmp.eq.s32.totalorder %s20, 0
    %p152 = por %p150, %p151
    %s154 = sadd.s32 %s153, 1
    %p157 = scmp.eq.s32.totalorder %s14, 2
    %p158 = scmp.ne.s32.totalorder %s153, %s155
    %p159 = scmp.eq.s32.totalorder %s14, 0
    %p160 = por %p158, %p159
    %p161 = scmp.ne.s32.totalorder %s153, %s155
    %p162 = scmp.eq.s32.totalorder %s19, 2
    %p163 = por %p161, %p162
    %p164 = scmp.ne.s32.totalorder %s155, %s156
    %p165 = scmp.eq.s32.totalorder %s19, 0
    %p166 = por %p164, %p165
    %p167 = scmp.ne.s32.totalorder %s155, %s156
    %p168 = scmp.eq.s32.totalorder %s20, 2
    %p169 = por %p167, %p168
    %p171 = scmp.ne.s32.totalorder %s156, %s170
    %p172 = scmp.eq.s32.totalorder %s20, 0
    %p173 = por %p171, %p172
    %s175 = sadd.s32 %s174, 1
    %p178 = scmp.eq.s32.totalorder %s14, 2
    %p179 = scmp.ne.s32.totalorder %s174, %s176
    %p180 = scmp.eq.s32.totalorder %s14, 0
    %p181 = por %p179, %p180
    %p182 = scmp.ne.s32.totalorder %s174, %s176
    %p183 = scmp.eq.s32.totalorder %s19, 2
    %p184 = por %p182, %p183
    %p185 = scmp.ne.s32.totalorder %s176, %s177
    %p186 = scmp.eq.s32.totalorder %s19, 0
    %p187 = por %p185, %p186
    %p188 = scmp.ne.s32.totalorder %s176, %s177
    %p189 = scmp.eq.s32.totalorder %s20, 2
    %p190 = por %p188, %p189
    %p192 = scmp.ne.s32.totalorder %s177, %s191
    %p193 = scmp.eq.s32.totalorder %s20, 0
    %p194 = por %p192, %p193
    %s195 = ssub.s32 %s14, %s21
    %p196 = scmp.eq.s32.totalorder %s195, 0
    %s198 = sadd.s32 %s197, 1
    %s199 = scalar_select %p196, %s197, %s198
    %p202 = pneg %p196
    %p203 = scmp.eq.s32.totalorder %s14, 2
    %p204 = por %p202, %p203
    %p205 = scmp.ne.s32.totalorder %s197, %s200
    %p206 = scmp.eq.s32.totalorder %s14, 0
    %p207 = por %p205, %p206
    %p208 = scmp.ne.s32.totalorder %s197, %s200
    %p209 = scmp.eq.s32.totalorder %s19, 2
    %p210 = por %p208, %p209
    %p211 = scmp.ne.s32.totalorder %s200, %s201
    %p212 = scmp.eq.s32.totalorder %s19, 0
    %p213 = por %p211, %p212
    %p214 = scmp.ne.s32.totalorder %s200, %s201
    %p215 = scmp.eq.s32.totalorder %s20, 2
    %p216 = por %p214, %p215
    %p218 = scmp.ne.s32.totalorder %s201, %s217
    %p219 = scmp.eq.s32.totalorder %s20, 0
    %p220 = por %p218, %p219
    %p221 = scmp.le.s32.totalorder 1, %s14
    %p222 = scmp.lt.s32.totalorder %s14, 4
    %p223 = pnand %p221, %p222
    %p224 = pneg %p223
    // Predicated region
    $region9: #{rcnn_forward.6} parent=5 // pred_check
      _
    $region10: #{rcnn_forward.6} parent=5 // pred_check_branch
      %226 = sbr.rel (%p223) target = $region12
    $region11: #{rcnn_forward.6} parent=5 // pred_region
      %s227 = ssub.s32 %s14, 1
      // Predicated region
      $region13: #{rcnn_forward.6} parent=11 // pred_check
        %p228 = pneg %p61
      $region14: #{rcnn_forward.6} parent=11 // pred_check_branch
        %230 = sbr.rel (%p228) target = $region16
      $region15: #{rcnn_forward.6} parent=11 // pred_region
        _
      $region16: #{rcnn_forward.6} parent=11 // pred_fallthru
        _
      // Predicated region
      $region17: #{rcnn_forward.6} parent=11 // pred_check
        %p231 = pneg %p82
      $region18: #{rcnn_forward.6} parent=11 // pred_check_branch
        %233 = sbr.rel (%p231) target = $region20
      $region19: #{rcnn_forward.6} parent=11 // pred_region
        _
      $region20: #{rcnn_forward.6} parent=11 // pred_fallthru
        _
      // Predicated region
      $region21: #{rcnn_forward.6} parent=11 // pred_check
        %p234 = pneg %p103
      $region22: #{rcnn_forward.6} parent=11 // pred_check_branch
        %236 = sbr.rel (%p234) target = $region24
      $region23: #{rcnn_forward.6} parent=11 // pred_region
        _
      $region24: #{rcnn_forward.6} parent=11 // pred_fallthru
        _
      // Predicated region
      $region25: #{rcnn_forward.6} parent=11 // pred_check
        %p237 = pneg %p124
      $region26: #{rcnn_forward.6} parent=11 // pred_check_branch
        %239 = sbr.rel (%p237) target = $region28
      $region27: #{rcnn_forward.6} parent=11 // pred_region
        _
      $region28: #{rcnn_forward.6} parent=11 // pred_fallthru
        _
      // Predicated region
      $region29: #{rcnn_forward.6} parent=11 // pred_check
        %p240 = pneg %p145
      $region30: #{rcnn_forward.6} parent=11 // pred_check_branch
        %242 = sbr.rel (%p240) target = $region32
      $region31: #{rcnn_forward.6} parent=11 // pred_region
        _
      $region32: #{rcnn_forward.6} parent=11 // pred_fallthru
        _
      // Predicated region
      $region33: #{rcnn_forward.6} parent=11 // pred_check
        %p243 = pneg %p166
      $region34: #{rcnn_forward.6} parent=11 // pred_check_branch
        %245 = sbr.rel (%p243) target = $region36
      $region35: #{rcnn_forward.6} parent=11 // pred_region
        _
      $region36: #{rcnn_forward.6} parent=11 // pred_fallthru
        _
      // Predicated region
      $region37: #{rcnn_forward.6} parent=11 // pred_check
        %p246 = pneg %p187
      $region38: #{rcnn_forward.6} parent=11 // pred_check_branch
        %248 = sbr.rel (%p246) target = $region40
      $region39: #{rcnn_forward.6} parent=11 // pred_region
        _
      $region40: #{rcnn_forward.6} parent=11 // pred_fallthru
        _
    $region12: #{rcnn_forward.6} parent=5 // pred_fallthru
      _
    %p249 = scmp.lt.s32.totalorder %s14, 3
    // Predicated region
    $region41: #{rcnn_forward.6} parent=5 // pred_check
      %p250 = pneg %p249
    $region42: #{rcnn_forward.6} parent=5 // pred_check_branch
      %252 = sbr.rel (%p250) target = $region44
    $region43: #{rcnn_forward.6} parent=5 // pred_region
      // Predicated region
      $region45: #{rcnn_forward.6} parent=43 // pred_check
        %p253 = pneg %p34
      $region46: #{rcnn_forward.6} parent=43 // pred_check_branch
        %255 = sbr.rel (%p253) target = $region48
      $region47: #{rcnn_forward.6} parent=43 // pred_region
        %p256 = scmp.lt.s32.totalorder %s14, 2
        %s257 = scalar_select %p256, %s14, 2
        %s258 = smul.addr %s257, 8
        %s259 = smul.addr %s258, 4
        %s260 = scalar_lea.vmem %s0, %s259
      $region48: #{rcnn_forward.6} parent=43 // pred_fallthru
        _
    $region44: #{rcnn_forward.6} parent=5 // pred_fallthru
      _
    %p261 = scmp.le.s32.totalorder 1, %s14
    %p262 = scmp.lt.s32.totalorder %s14, 4
    %p263 = pnand %p261, %p262
    %p264 = pneg %p263
    // Predicated region
    $region49: #{rcnn_forward.6} parent=5 // pred_check
      _
    $region50: #{rcnn_forward.6} parent=5 // pred_check_branch
      %266 = sbr.rel (%p263) target = $region52
    $region51: #{rcnn_forward.6} parent=5 // pred_region
      %s267 = ssub.s32 %s14, 1
      %p268 = scmp.lt.s32.totalorder %s19, 2
      %s269 = scalar_select %p268, %s19, 2
      %s270 = smul.addr %s269, 8
      %s271 = smul.addr %s270, 4
      %s272 = scalar_lea.vmem %s0, %s271
      %p273 = pneg %p40
      %p274 = pneg %p37
      %p275 = pneg %p61
      %p276 = pneg %p58
      %p277 = pneg %p82
      %p278 = pneg %p79
      %p279 = pneg %p103
      %p280 = pneg %p100
      %p281 = pneg %p124
      %p282 = pneg %p121
      %p283 = pneg %p145
      %p284 = pneg %p142
      %p285 = pneg %p166
      %p286 = pneg %p163
      %p287 = pneg %p187
      %p288 = pneg %p184
      %p289 = pneg %p213
      %p290 = pneg %p210
      %p291 = scmp.lt.s32.totalorder %s19, 2
      %s292 = scalar_select %p291, %s19, 2
      %s293 = smul.addr %s292, 4
      %s294 = smul.addr %s293, 4
      %s295 = scalar_lea.vmem %s8, %s294
      %p296 = scmp.lt.s32.totalorder %s19, 2
      %s297 = scalar_select %p296, %s19, 2
      %s298 = smul.addr %s297, 8
      %s299 = smul.addr %s298, 4
      %s300 = scalar_lea.vmem %s0, %s299
      %p301 = scmp.lt.s32.totalorder %s19, 2
      %s302 = scalar_select %p301, %s19, 2
      %s303 = smul.addr %s302, 4
      %s304 = smul.addr %s303, 4
      %s305 = scalar_lea.vmem %s8, %s304
      %p307 = scmp.eq.s32.totalorder %s19, 0
      // Predicated region
      $region53: #{rcnn_forward.6} parent=51 // pred_check
        %p308 = pneg %p307
      $region54: #{rcnn_forward.6} parent=51 // pred_check_branch
        %310 = sbr.rel (%p308) target = $region56
      $region55: #{rcnn_forward.6} parent=51 // pred_region
        %vm311 = vcmask 261120
        %312 = vst.msk [vmem:[#allocation2] sm:$0xff] %vm311, 0.0
        %313 = vst.msk [vmem:[#allocation2 + $0x8] sm:$0xff] %vm311, 0.0
        %314 = vst.msk [vmem:[#allocation2 + $0x10] sm:$0xff] %vm311, 0.0
        %315 = vst.msk [vmem:[#allocation2 + $0x18] sm:$0xff] %vm311, 0.0
        %316 = vst.msk [vmem:[#allocation3] sm:$0xff] %vm311, 0.0
        %317 = vst.msk [vmem:[#allocation3 + $0x8] sm:$0xff] %vm311, 0.0
        %318 = vst.msk [vmem:[#allocation3 + $0x10] sm:$0xff] %vm311, 0.0
        %319 = vst.msk [vmem:[#allocation3 + $0x18] sm:$0xff] %vm311, 0.0
      $region56: #{rcnn_forward.6} parent=51 // pred_fallthru
        _
      %v320 = vld [vmem:[%s300] sm:$0xff]
      %v321 = vld [vmem:[%s300 + $0x8] sm:$0xff]
      %v322 = vld [vmem:[%s300 + $0x10] sm:$0xff]
      %v323 = vld [vmem:[%s300 + $0x18] sm:$0xff]
      %v324 = vld [vmem:[%s1] sm:$0xf]
      %v325 = vld [vmem:[%s1 + $0x4] sm:$0xf]
      %v326 = vld [vmem:[%s1 + $0x8] sm:$0xf]
      %v327 = vld [vmem:[%s1 + $0xc] sm:$0xf]
      %v328 = vld [vmem:[%s1 + $0x10] sm:$0xf]
      %v329 = vld [vmem:[%s1 + $0x14] sm:$0xf]
      %v330 = vld [vmem:[%s1 + $0x18] sm:$0xf]
      %v331 = vld [vmem:[%s1 + $0x1c] sm:$0xf]
      %v332 = vld [vmem:[%s1 + $0x20] sm:$0xf]
      %v333 = vld [vmem:[%s1 + $0x24] sm:$0xf]
      %v334 = vld [vmem:[%s1 + $0x28] sm:$0xf]
      %v335 = vld [vmem:[%s1 + $0x2c] sm:$0xf]
      %v336 = vld [vmem:[%s1 + $0x30] sm:$0xf]
      %v337 = vld [vmem:[%s1 + $0x34] sm:$0xf]
      %v338 = vld [vmem:[%s1 + $0x38] sm:$0xf]
      %v339 = vld [vmem:[%s1 + $0x3c] sm:$0xf]
      %v340 = vld [vmem:[%s1 + $0x40] sm:$0xf]
      %v341 = vld [vmem:[%s1 + $0x44] sm:$0xf]
      %v342 = vld [vmem:[%s2] sm:$0x1]
      %v344 = vperm.slane %v342, 0
      %v350 = vunpack.c.l.b16 %v320
      %v351 = vunpack.c.h.b16 %v320
      %v352 = vunpack.c.l.b16 %v321
      %v353 = vunpack.c.h.b16 %v321
      %v354 = vunpack.c.l.b16 %v322
      %v355 = vunpack.c.h.b16 %v322
      %v356 = vunpack.c.l.b16 %v323
      %v357 = vunpack.c.h.b16 %v323
      %v358 = vpack.c.b16 %v352, %v350
      %v359 = vpack.c.b16 %v353, %v351
      %v360 = vpack.c.b16 %v356, %v354
      %v361 = vpack.c.b16 %v357, %v355
      %v382 = vunpack.c.l.b16 %v324
      %v383 = vunpack.c.l.b16 %v325
      %v384 = vunpack.c.l.b16 %v326
      %v385 = vunpack.c.l.b16 %v327
      %v386 = vunpack.c.l.b16 %v328
      %v387 = vunpack.c.l.b16 %v329
      %v388 = vunpack.c.l.b16 %v330
      %v389 = vunpack.c.l.b16 %v331
      %v390 = vunpack.c.l.b16 %v332
      %v391 = vunpack.c.l.b16 %v333
      %v392 = vunpack.c.l.b16 %v334
      %v393 = vunpack.c.l.b16 %v335
      %v394 = vunpack.c.l.b16 %v336
      %v395 = vunpack.c.l.b16 %v337
      %v396 = vunpack.c.l.b16 %v338
      %v397 = vunpack.c.l.b16 %v339
      %v398 = vunpack.c.l.b16 %v340
      %v399 = vunpack.c.l.b16 %v341
      %v400 = vpack.c.b16 %v383, %v382
      %v401 = vpack.c.b16 %v385, %v384
      %v402 = vpack.c.b16 %v387, %v386
      %v403 = vpack.c.b16 %v389, %v388
      %v404 = vpack.c.b16 %v391, %v390
      %v405 = vpack.c.b16 %v393, %v392
      %v406 = vpack.c.b16 %v395, %v394
      %v407 = vpack.c.b16 %v397, %v396
      %v408 = vpack.c.b16 %v399, %v398
      %vm418 = vcmask 130048
      %v420 = vsel %vm418, %v359, 0
      %v423 = vsel %vm418, %v361, 0
      %425 = vmatpush.bf16.msra.mxu0 %v407
      %426 = vmatpush.bf16.msra.mxu0 %v406
      %427 = vmatpush.bf16.msra.mxu0 %v405
      %428 = vmatpush.bf16.msra.mxu0 %v404
      %429 = vmatpush.bf16.msra.mxu0 %v403
      %430 = vmatpush.bf16.msra.mxu0 %v402
      %431 = vmatpush.bf16.msra.mxu0 %v401
      %432 = vmatpush.bf16.msra.mxu0 %v400
      %433 = vmatmul.bf16.gmra.mxu0 %v358
      %v434 = vpop.f32.mrf.mxu0
      %v435 = vadd.f32 %v344, %v434
      %v436 = vpop.f32.mrf.mxu0
      %v437 = vadd.f32 %v344, %v436
      %438 = vmatmul.bf16.gmra.mxu0 %v360
      %v439 = vpop.f32.mrf.mxu0
      %v440 = vadd.f32 %v344, %v439
      %v441 = vpop.f32.mrf.mxu0
      %v442 = vadd.f32 %v344, %v441
      %443 = vdwg.mxu0
      %444 = vmatpush.bf16.msra.mxu0 0
      %445 = vmatpush.bf16.msra.mxu0 0
      %446 = vmatpush.bf16.msra.mxu0 0
      %447 = vmatpush.bf16.msra.mxu0 0
      %448 = vmatpush.bf16.msra.mxu0 0
      %449 = vmatpush.bf16.msra.mxu0 0
      %450 = vmatpush.bf16.msra.mxu0 0
      %451 = vmatpush.bf16.msra.mxu0 %v408
      %452 = vmatmul.bf16.gmra.mxu0 %v420
      %v453 = vpop.f32.mrf.mxu0
      %v454 = vadd.f32 %v435, %v453
      %v455 = vpop.f32.mrf.mxu0
      %v456 = vadd.f32 %v437, %v455
      %457 = vmatmul.bf16.gmra.mxu0 %v423
      %v458 = vpop.f32.mrf.mxu0
      %v459 = vadd.f32 %v440, %v458
      %v460 = vpop.f32.mrf.mxu0
      %v461 = vadd.f32 %v442, %v460
      %462 = vdwg.mxu0
      %vm463 = vcmask 261120
      %v464 = vsel %vm463, %v454, 0.0
      %v465 = vsel %vm463, %v456, 0.0
      %v466 = vadd.f32 %v464, %v465
      %v467 = vsel %vm463, %v459, 0.0
      %v468 = vadd.f32 %v466, %v467
      %v469 = vsel %vm463, %v461, 0.0
      %v470 = vadd.f32 %v468, %v469
      %v471 = vrot.slane %v470, 4
      %v472 = vadd.f32 %v470, %v471
      %v473 = vrot.slane %v472, 2
      %v474 = vadd.f32 %v472, %v473
      %v475 = vrot.slane %v474, 1
      %v476 = vadd.f32 %v474, %v475
      %v477 = vmul.f32 %v476, 0.03125
      %v478 = vmul.f32 %v454, %v454
      %v479 = vmul.f32 %v456, %v456
      %v480 = vmul.f32 %v459, %v459
      %v481 = vmul.f32 %v461, %v461
      %v482 = vsel %vm463, %v478, 0.0
      %v483 = vsel %vm463, %v479, 0.0
      %v484 = vadd.f32 %v482, %v483
      %v485 = vsel %vm463, %v480, 0.0
      %v486 = vadd.f32 %v484, %v485
      %v487 = vsel %vm463, %v481, 0.0
      %v488 = vadd.f32 %v486, %v487
      %v489 = vrot.slane %v488, 4
      %v490 = vadd.f32 %v488, %v489
      %v491 = vrot.slane %v490, 2
      %v492 = vadd.f32 %v490, %v491
      %v493 = vrot.slane %v492, 1
      %v494 = vadd.f32 %v492, %v493
      %v495 = vmul.f32 %v494, 0.03125
      %v496 = vmul.f32 %v477, %v477
      %v497 = vsub.f32 %v495, %v496
      %v498 = vld [vmem:[%s3] sm:$0x1]
      %v499 = vadd.f32 %v497, 1e-05
      %v500 = vrsqrt.pop %v499
      %v501 = vmul.f32 %v500, %v499
      %v502 = vmul.f32 %v501, %v500
      %v503 = vmul.f32 0.5, %v502
      %v504 = vsub.f32 1.5, %v503
      %v505 = vmul.f32 %v500, %v504
      %vm506 = vweird.f32 %v499
      %vm507 = vweird.f32 %v500
      %vm508 = vmor %vm506, %vm507
      %v509 = vsel %vm508, %v500, %v505
      %v510 = vmul.f32 %v498, %v509
      %v511 = vld [vmem:[%s4] sm:$0x1]
      %v512 = vmul.f32 %v477, %v510
      %v513 = vsub.f32 %v511, %v512
      %v515 = vperm.slane %v510, 0
      %v517 = vmul.f32 %v454, %v515
      %v518 = vmul.f32 %v456, %v515
      %v519 = vmul.f32 %v459, %v515
      %v520 = vmul.f32 %v461, %v515
      %v522 = vperm.slane %v513, 0
      %v524 = vadd.f32 %v517, %v522
      %v525 = vadd.f32 %v518, %v522
      %v526 = vadd.f32 %v519, %v522
      %v527 = vadd.f32 %v520, %v522
      %v528 = vmax.f32 %v524, 0.0
      %v529 = vmax.f32 %v525, 0.0
      %v530 = vmax.f32 %v526, 0.0
      %v531 = vmax.f32 %v527, 0.0
      %v532 = vpack.c.bf16 %v529, %v528
      %v533 = vpack.c.bf16 %v531, %v530
      %v534 = vld [vmem:[#allocation2] sm:$0xff]
      %v535 = vld [vmem:[#allocation2 + $0x8] sm:$0xff]
      %v536 = vld [vmem:[#allocation2 + $0x10] sm:$0xff]
      %v537 = vld [vmem:[#allocation2 + $0x18] sm:$0xff]
      %v538 = vpack.c.bf16 %v535, %v534
      %v539 = vpack.c.bf16 %v537, %v536
      %v540 = vld [vmem:[%s5] sm:$0xf]
      %v541 = vld [vmem:[%s5 + $0x4] sm:$0xf]
      %v542 = vld [vmem:[%s5 + $0x8] sm:$0xf]
      %v543 = vld [vmem:[%s5 + $0xc] sm:$0xf]
      %v544 = vld [vmem:[%s6] sm:$0xf]
      %v545 = vld [vmem:[%s6 + $0x4] sm:$0xf]
      %v546 = vld [vmem:[%s6 + $0x8] sm:$0xf]
      %v547 = vld [vmem:[%s6 + $0xc] sm:$0xf]
      %v552 = vunpack.c.l.b16 %v544
      %v553 = vunpack.c.l.b16 %v545
      %v554 = vunpack.c.l.b16 %v546
      %v555 = vunpack.c.l.b16 %v547
      %v556 = vpack.c.b16 %v553, %v552
      %v557 = vpack.c.b16 %v555, %v554
      %v561 = vsel %vm463, %v538, 0
      %v564 = vsel %vm463, %v539, 0
      %566 = vmatpush.bf16.msra.mxu0 0
      %567 = vmatpush.bf16.msra.mxu0 0
      %568 = vmatpush.bf16.msra.mxu0 0
      %569 = vmatpush.bf16.msra.mxu0 0
      %570 = vmatpush.bf16.msra.mxu0 0
      %571 = vmatpush.bf16.msra.mxu0 0
      %572 = vmatpush.bf16.msra.mxu0 %v557
      %573 = vmatpush.bf16.msra.mxu0 %v556
      %574 = vmatmul.bf16.gmra.mxu0 %v561
      %v575 = vpop.f32.mrf.mxu0
      %v576 = vadd.f32 0.0, %v575
      %v577 = vpop.f32.mrf.mxu0
      %v578 = vadd.f32 0.0, %v577
      %579 = vmatmul.bf16.gmra.mxu0 %v564
      %v580 = vpop.f32.mrf.mxu0
      %v581 = vadd.f32 0.0, %v580
      %v582 = vpop.f32.mrf.mxu0
      %v583 = vadd.f32 0.0, %v582
      %584 = vdwg.mxu0
      %v589 = vunpack.c.l.b16 %v540
      %v590 = vunpack.c.l.b16 %v541
      %v591 = vunpack.c.l.b16 %v542
      %v592 = vunpack.c.l.b16 %v543
      %v593 = vpack.c.b16 %v590, %v589
      %v594 = vpack.c.b16 %v592, %v591
      %v598 = vsel %vm463, %v532, 0
      %v601 = vsel %vm463, %v533, 0
      %603 = vmatpush.bf16.msra.mxu0 0
      %604 = vmatpush.bf16.msra.mxu0 0
      %605 = vmatpush.bf16.msra.mxu0 0
      %606 = vmatpush.bf16.msra.mxu0 0
      %607 = vmatpush.bf16.msra.mxu0 0
      %608 = vmatpush.bf16.msra.mxu0 0
      %609 = vmatpush.bf16.msra.mxu0 %v594
      %610 = vmatpush.bf16.msra.mxu0 %v593
      %611 = vmatmul.bf16.gmra.mxu0 %v598
      %v612 = vpop.f32.mrf.mxu0
      %v613 = vadd.f32 %v576, %v612
      %v614 = vpop.f32.mrf.mxu0
      %v615 = vadd.f32 %v578, %v614
      %616 = vmatmul.bf16.gmra.mxu0 %v601
      %v617 = vpop.f32.mrf.mxu0
      %v618 = vadd.f32 %v581, %v617
      %v619 = vpop.f32.mrf.mxu0
      %v620 = vadd.f32 %v583, %v619
      %621 = vdwg.mxu0
      %v622 = vld [vmem:[%s7] sm:$0x1]
      %v624 = vperm.slane %v622, 0
      %v626 = vadd.f32 %v613, %v624
      %v627 = vadd.f32 %v615, %v624
      %v628 = vadd.f32 %v618, %v624
      %v629 = vadd.f32 %v620, %v624
      %v630 = vxor.u32 %v626, 2147483648
      %v631 = vxor.u32 %v627, 2147483648
      %v632 = vxor.u32 %v628, 2147483648
      %v633 = vxor.u32 %v629, 2147483648
      %v634 = vmul.f32 %v630, 1.442695
      %v635 = vpow.pop %v634
      %v636 = vmul.f32 %v631, 1.442695
      %v637 = vpow.pop %v636
      %v638 = vmul.f32 %v632, 1.442695
      %v639 = vpow.pop %v638
      %v640 = vmul.f32 %v633, 1.442695
      %v641 = vpow.pop %v640
      %v642 = vadd.f32 %v635, 1.0
      %v643 = vadd.f32 %v637, 1.0
      %v644 = vadd.f32 %v639, 1.0
      %v645 = vadd.f32 %v641, 1.0
      %v646 = vrcp.pop %v642
      %v647 = vmul.f32 %v642, %v646
      %v648 = vsub.f32 1.0, %v647
      %v649 = vmul.f32 %v646, %v648
      %v650 = vadd.f32 %v646, %v649
      %vm651 = vweird.f32 %v642
      %vm652 = vweird.f32 %v646
      %vm653 = vmor %vm651, %vm652
      %v654 = vsel %vm653, %v646, %v650
      %v655 = vand.u32 2147483647, %v642
      %vm656 = vcmp.eq.f32.partialorder %v655, 8.507059e+37
      %v657 = vand.u32 %v642, 2147483648
      %v658 = vor.u32 1.1754944e-38, %v657
      %v659 = vsel %vm656, %v658, %v654
      %v660 = vmul.f32 1.0, %v659
      %v661 = vrcp.pop %v643
      %v662 = vmul.f32 %v643, %v661
      %v663 = vsub.f32 1.0, %v662
      %v664 = vmul.f32 %v661, %v663
      %v665 = vadd.f32 %v661, %v664
      %vm666 = vweird.f32 %v643
      %vm667 = vweird.f32 %v661
      %vm668 = vmor %vm666, %vm667
      %v669 = vsel %vm668, %v661, %v665
      %v670 = vand.u32 2147483647, %v643
      %vm671 = vcmp.eq.f32.partialorder %v670, 8.507059e+37
      %v672 = vand.u32 %v643, 2147483648
      %v673 = vor.u32 1.1754944e-38, %v672
      %v674 = vsel %vm671, %v673, %v669
      %v675 = vmul.f32 1.0, %v674
      %v676 = vrcp.pop %v644
      %v677 = vmul.f32 %v644, %v676
      %v678 = vsub.f32 1.0, %v677
      %v679 = vmul.f32 %v676, %v678
      %v680 = vadd.f32 %v676, %v679
      %vm681 = vweird.f32 %v644
      %vm682 = vweird.f32 %v676
      %vm683 = vmor %vm681, %vm682
      %v684 = vsel %vm683, %v676, %v680
      %v685 = vand.u32 2147483647, %v644
      %vm686 = vcmp.eq.f32.partialorder %v685, 8.507059e+37
      %v687 = vand.u32 %v644, 2147483648
      %v688 = vor.u32 1.1754944e-38, %v687
      %v689 = vsel %vm686, %v688, %v684
      %v690 = vmul.f32 1.0, %v689
      %v691 = vrcp.pop %v645
      %v692 = vmul.f32 %v645, %v691
      %v693 = vsub.f32 1.0, %v692
      %v694 = vmul.f32 %v691, %v693
      %v695 = vadd.f32 %v691, %v694
      %vm696 = vweird.f32 %v645
      %vm697 = vweird.f32 %v691
      %vm698 = vmor %vm696, %vm697
      %v699 = vsel %vm698, %v691, %v695
      %v700 = vand.u32 2147483647, %v645
      %vm701 = vcmp.eq.f32.partialorder %v700, 8.507059e+37
      %v702 = vand.u32 %v645, 2147483648
      %v703 = vor.u32 1.1754944e-38, %v702
      %v704 = vsel %vm701, %v703, %v699
      %v705 = vmul.f32 1.0, %v704
      %s706 = scalar_lea.vmem %s5, 16
      %v707 = vld [vmem:[%s706] sm:$0xf]
      %v708 = vld [vmem:[%s706 + $0x4] sm:$0xf]
      %v709 = vld [vmem:[%s706 + $0x8] sm:$0xf]
      %v710 = vld [vmem:[%s706 + $0xc] sm:$0xf]
      %s711 = scalar_lea.vmem %s6, 16
      %v712 = vld [vmem:[%s711] sm:$0xf]
      %v713 = vld [vmem:[%s711 + $0x4] sm:$0xf]
      %v714 = vld [vmem:[%s711 + $0x8] sm:$0xf]
      %v715 = vld [vmem:[%s711 + $0xc] sm:$0xf]
      %v720 = vunpack.c.l.b16 %v712
      %v721 = vunpack.c.l.b16 %v713
      %v722 = vunpack.c.l.b16 %v714
      %v723 = vunpack.c.l.b16 %v715
      %v724 = vpack.c.b16 %v721, %v720
      %v725 = vpack.c.b16 %v723, %v722
      %728 = vmatpush.bf16.msra.mxu0 0
      %729 = vmatpush.bf16.msra.mxu0 0
      %730 = vmatpush.bf16.msra.mxu0 0
      %731 = vmatpush.bf16.msra.mxu0 0
      %732 = vmatpush.bf16.msra.mxu0 0
      %733 = vmatpush.bf16.msra.mxu0 0
      %734 = vmatpush.bf16.msra.mxu0 %v725
      %735 = vmatpush.bf16.msra.mxu0 %v724
      %736 = vmatmul.bf16.gmra.mxu0 %v561
      %v737 = vpop.f32.mrf.mxu0
      %v738 = vadd.f32 0.0, %v737
      %v739 = vpop.f32.mrf.mxu0
      %v740 = vadd.f32 0.0, %v739
      %741 = vmatmul.bf16.gmra.mxu0 %v564
      %v742 = vpop.f32.mrf.mxu0
      %v743 = vadd.f32 0.0, %v742
      %v744 = vpop.f32.mrf.mxu0
      %v745 = vadd.f32 0.0, %v744
      %746 = vdwg.mxu0
      %v751 = vunpack.c.l.b16 %v707
      %v752 = vunpack.c.l.b16 %v708
      %v753 = vunpack.c.l.b16 %v709
      %v754 = vunpack.c.l.b16 %v710
      %v755 = vpack.c.b16 %v752, %v751
      %v756 = vpack.c.b16 %v754, %v753
      %759 = vmatpush.bf16.msra.mxu0 0
      %760 = vmatpush.bf16.msra.mxu0 0
      %761 = vmatpush.bf16.msra.mxu0 0
      %762 = vmatpush.bf16.msra.mxu0 0
      %763 = vmatpush.bf16.msra.mxu0 0
      %764 = vmatpush.bf16.msra.mxu0 0
      %765 = vmatpush.bf16.msra.mxu0 %v756
      %766 = vmatpush.bf16.msra.mxu0 %v755
      %767 = vmatmul.bf16.gmra.mxu0 %v598
      %v768 = vpop.f32.mrf.mxu0
      %v769 = vadd.f32 %v738, %v768
      %v770 = vpop.f32.mrf.mxu0
      %v771 = vadd.f32 %v740, %v770
      %772 = vmatmul.bf16.gmra.mxu0 %v601
      %v773 = vpop.f32.mrf.mxu0
      %v774 = vadd.f32 %v743, %v773
      %v775 = vpop.f32.mrf.mxu0
      %v776 = vadd.f32 %v745, %v775
      %777 = vdwg.mxu0
      %s778 = scalar_lea.vmem %s7, 1
      %v779 = vld [vmem:[%s778] sm:$0x1]
      %v781 = vperm.slane %v779, 0
      %v783 = vadd.f32 %v769, %v781
      %v784 = vadd.f32 %v771, %v781
      %v785 = vadd.f32 %v774, %v781
      %v786 = vadd.f32 %v776, %v781
      %v787 = vxor.u32 %v783, 2147483648
      %v788 = vxor.u32 %v784, 2147483648
      %v789 = vxor.u32 %v785, 2147483648
      %v790 = vxor.u32 %v786, 2147483648
      %v791 = vmul.f32 %v787, 1.442695
      %v792 = vpow.pop %v791
      %v793 = vmul.f32 %v788, 1.442695
      %v794 = vpow.pop %v793
      %v795 = vmul.f32 %v789, 1.442695
      %v796 = vpow.pop %v795
      %v797 = vmul.f32 %v790, 1.442695
      %v798 = vpow.pop %v797
      %v799 = vadd.f32 %v792, 1.0
      %v800 = vadd.f32 %v794, 1.0
      %v801 = vadd.f32 %v796, 1.0
      %v802 = vadd.f32 %v798, 1.0
      %v803 = vrcp.pop %v799
      %v804 = vmul.f32 %v799, %v803
      %v805 = vsub.f32 1.0, %v804
      %v806 = vmul.f32 %v803, %v805
      %v807 = vadd.f32 %v803, %v806
      %vm808 = vweird.f32 %v799
      %vm809 = vweird.f32 %v803
      %vm810 = vmor %vm808, %vm809
      %v811 = vsel %vm810, %v803, %v807
      %v812 = vand.u32 2147483647, %v799
      %vm813 = vcmp.eq.f32.partialorder %v812, 8.507059e+37
      %v814 = vand.u32 %v799, 2147483648
      %v815 = vor.u32 1.1754944e-38, %v814
      %v816 = vsel %vm813, %v815, %v811
      %v817 = vmul.f32 1.0, %v816
      %v818 = vrcp.pop %v800
      %v819 = vmul.f32 %v800, %v818
      %v820 = vsub.f32 1.0, %v819
      %v821 = vmul.f32 %v818, %v820
      %v822 = vadd.f32 %v818, %v821
      %vm823 = vweird.f32 %v800
      %vm824 = vweird.f32 %v818
      %vm825 = vmor %vm823, %vm824
      %v826 = vsel %vm825, %v818, %v822
      %v827 = vand.u32 2147483647, %v800
      %vm828 = vcmp.eq.f32.partialorder %v827, 8.507059e+37
      %v829 = vand.u32 %v800, 2147483648
      %v830 = vor.u32 1.1754944e-38, %v829
      %v831 = vsel %vm828, %v830, %v826
      %v832 = vmul.f32 1.0, %v831
      %v833 = vrcp.pop %v801
      %v834 = vmul.f32 %v801, %v833
      %v835 = vsub.f32 1.0, %v834
      %v836 = vmul.f32 %v833, %v835
      %v837 = vadd.f32 %v833, %v836
      %vm838 = vweird.f32 %v801
      %vm839 = vweird.f32 %v833
      %vm840 = vmor %vm838, %vm839
      %v841 = vsel %vm840, %v833, %v837
      %v842 = vand.u32 2147483647, %v801
      %vm843 = vcmp.eq.f32.partialorder %v842, 8.507059e+37
      %v844 = vand.u32 %v801, 2147483648
      %v845 = vor.u32 1.1754944e-38, %v844
      %v846 = vsel %vm843, %v845, %v841
      %v847 = vmul.f32 1.0, %v846
      %v848 = vrcp.pop %v802
      %v849 = vmul.f32 %v802, %v848
      %v850 = vsub.f32 1.0, %v849
      %v851 = vmul.f32 %v848, %v850
      %v852 = vadd.f32 %v848, %v851
      %vm853 = vweird.f32 %v802
      %vm854 = vweird.f32 %v848
      %vm855 = vmor %vm853, %vm854
      %v856 = vsel %vm855, %v848, %v852
      %v857 = vand.u32 2147483647, %v802
      %vm858 = vcmp.eq.f32.partialorder %v857, 8.507059e+37
      %v859 = vand.u32 %v802, 2147483648
      %v860 = vor.u32 1.1754944e-38, %v859
      %v861 = vsel %vm858, %v860, %v856
      %v862 = vmul.f32 1.0, %v861
      %s863 = scalar_lea.vmem %s5, 32
      %v864 = vld [vmem:[%s863] sm:$0xf]
      %v865 = vld [vmem:[%s863 + $0x4] sm:$0xf]
      %v866 = vld [vmem:[%s863 + $0x8] sm:$0xf]
      %v867 = vld [vmem:[%s863 + $0xc] sm:$0xf]
      %s868 = scalar_lea.vmem %s6, 32
      %v869 = vld [vmem:[%s868] sm:$0xf]
      %v870 = vld [vmem:[%s868 + $0x4] sm:$0xf]
      %v871 = vld [vmem:[%s868 + $0x8] sm:$0xf]
      %v872 = vld [vmem:[%s868 + $0xc] sm:$0xf]
      %v877 = vunpack.c.l.b16 %v869
      %v878 = vunpack.c.l.b16 %v870
      %v879 = vunpack.c.l.b16 %v871
      %v880 = vunpack.c.l.b16 %v872
      %v881 = vpack.c.b16 %v878, %v877
      %v882 = vpack.c.b16 %v880, %v879
      %885 = vmatpush.bf16.msra.mxu0 0
      %886 = vmatpush.bf16.msra.mxu0 0
      %887 = vmatpush.bf16.msra.mxu0 0
      %888 = vmatpush.bf16.msra.mxu0 0
      %889 = vmatpush.bf16.msra.mxu0 0
      %890 = vmatpush.bf16.msra.mxu0 0
      %891 = vmatpush.bf16.msra.mxu0 %v882
      %892 = vmatpush.bf16.msra.mxu0 %v881
      %893 = vmatmul.bf16.gmra.mxu0 %v561
      %v894 = vpop.f32.mrf.mxu0
      %v895 = vadd.f32 0.0, %v894
      %v896 = vpop.f32.mrf.mxu0
      %v897 = vadd.f32 0.0, %v896
      %898 = vmatmul.bf16.gmra.mxu0 %v564
      %v899 = vpop.f32.mrf.mxu0
      %v900 = vadd.f32 0.0, %v899
      %v901 = vpop.f32.mrf.mxu0
      %v902 = vadd.f32 0.0, %v901
      %903 = vdwg.mxu0
      %v908 = vunpack.c.l.b16 %v864
      %v909 = vunpack.c.l.b16 %v865
      %v910 = vunpack.c.l.b16 %v866
      %v911 = vunpack.c.l.b16 %v867
      %v912 = vpack.c.b16 %v909, %v908
      %v913 = vpack.c.b16 %v911, %v910
      %916 = vmatpush.bf16.msra.mxu0 0
      %917 = vmatpush.bf16.msra.mxu0 0
      %918 = vmatpush.bf16.msra.mxu0 0
      %919 = vmatpush.bf16.msra.mxu0 0
      %920 = vmatpush.bf16.msra.mxu0 0
      %921 = vmatpush.bf16.msra.mxu0 0
      %922 = vmatpush.bf16.msra.mxu0 %v913
      %923 = vmatpush.bf16.msra.mxu0 %v912
      %924 = vmatmul.bf16.gmra.mxu0 %v598
      %v925 = vpop.f32.mrf.mxu0
      %v926 = vadd.f32 %v895, %v925
      %v927 = vpop.f32.mrf.mxu0
      %v928 = vadd.f32 %v897, %v927
      %929 = vmatmul.bf16.gmra.mxu0 %v601
      %v930 = vpop.f32.mrf.mxu0
      %v931 = vadd.f32 %v900, %v930
      %v932 = vpop.f32.mrf.mxu0
      %v933 = vadd.f32 %v902, %v932
      %934 = vdwg.mxu0
      %s935 = scalar_lea.vmem %s7, 2
      %v936 = vld [vmem:[%s935] sm:$0x1]
      %v938 = vperm.slane %v936, 0
      %v940 = vadd.f32 %v926, %v938
      %v941 = vadd.f32 %v928, %v938
      %v942 = vadd.f32 %v931, %v938
      %v943 = vadd.f32 %v933, %v938
      %v944 = vtanh.pop %v940
      %v945 = vtanh.pop %v941
      %v946 = vtanh.pop %v942
      %v947 = vtanh.pop %v943
      %s948 = scalar_lea.vmem %s5, 48
      %v949 = vld [vmem:[%s948] sm:$0xf]
      %v950 = vld [vmem:[%s948 + $0x4] sm:$0xf]
      %v951 = vld [vmem:[%s948 + $0x8] sm:$0xf]
      %v952 = vld [vmem:[%s948 + $0xc] sm:$0xf]
      %s953 = scalar_lea.vmem %s6, 48
      %v954 = vld [vmem:[%s953] sm:$0xf]
      %v955 = vld [vmem:[%s953 + $0x4] sm:$0xf]
      %v956 = vld [vmem:[%s953 + $0x8] sm:$0xf]
      %v957 = vld [vmem:[%s953 + $0xc] sm:$0xf]
      %v962 = vunpack.c.l.b16 %v954
      %v963 = vunpack.c.l.b16 %v955
      %v964 = vunpack.c.l.b16 %v956
      %v965 = vunpack.c.l.b16 %v957
      %v966 = vpack.c.b16 %v963, %v962
      %v967 = vpack.c.b16 %v965, %v964
      %970 = vmatpush.bf16.msra.mxu0 0
      %971 = vmatpush.bf16.msra.mxu0 0
      %972 = vmatpush.bf16.msra.mxu0 0
      %973 = vmatpush.bf16.msra.mxu0 0
      %974 = vmatpush.bf16.msra.mxu0 0
      %975 = vmatpush.bf16.msra.mxu0 0
      %976 = vmatpush.bf16.msra.mxu0 %v967
      %977 = vmatpush.bf16.msra.mxu0 %v966
      %978 = vmatmul.bf16.gmra.mxu0 %v561
      %v979 = vpop.f32.mrf.mxu0
      %v980 = vadd.f32 0.0, %v979
      %v981 = vpop.f32.mrf.mxu0
      %v982 = vadd.f32 0.0, %v981
      %983 = vmatmul.bf16.gmra.mxu0 %v564
      %v984 = vpop.f32.mrf.mxu0
      %v985 = vadd.f32 0.0, %v984
      %v986 = vpop.f32.mrf.mxu0
      %v987 = vadd.f32 0.0, %v986
      %988 = vdwg.mxu0
      %v993 = vunpack.c.l.b16 %v949
      %v994 = vunpack.c.l.b16 %v950
      %v995 = vunpack.c.l.b16 %v951
      %v996 = vunpack.c.l.b16 %v952
      %v997 = vpack.c.b16 %v994, %v993
      %v998 = vpack.c.b16 %v996, %v995
      %1001 = vmatpush.bf16.msra.mxu0 0
      %1002 = vmatpush.bf16.msra.mxu0 0
      %1003 = vmatpush.bf16.msra.mxu0 0
      %1004 = vmatpush.bf16.msra.mxu0 0
      %1005 = vmatpush.bf16.msra.mxu0 0
      %1006 = vmatpush.bf16.msra.mxu0 0
      %1007 = vmatpush.bf16.msra.mxu0 %v998
      %1008 = vmatpush.bf16.msra.mxu0 %v997
      %1009 = vmatmul.bf16.gmra.mxu0 %v598
      %v1010 = vpop.f32.mrf.mxu0
      %v1011 = vadd.f32 %v980, %v1010
      %v1012 = vpop.f32.mrf.mxu0
      %v1013 = vadd.f32 %v982, %v1012
      %1014 = vmatmul.bf16.gmra.mxu0 %v601
      %v1015 = vpop.f32.mrf.mxu0
      %v1016 = vadd.f32 %v985, %v1015
      %v1017 = vpop.f32.mrf.mxu0
      %v1018 = vadd.f32 %v987, %v1017
      %1019 = vdwg.mxu0
      %s1020 = scalar_lea.vmem %s7, 3
      %v1021 = vld [vmem:[%s1020] sm:$0x1]
      %v1023 = vperm.slane %v1021, 0
      %v1025 = vadd.f32 %v1011, %v1023
      %v1026 = vadd.f32 %v1013, %v1023
      %v1027 = vadd.f32 %v1016, %v1023
      %v1028 = vadd.f32 %v1018, %v1023
      %v1029 = vxor.u32 %v1025, 2147483648
      %v1030 = vxor.u32 %v1026, 2147483648
      %v1031 = vxor.u32 %v1027, 2147483648
      %v1032 = vxor.u32 %v1028, 2147483648
      %v1033 = vmul.f32 %v1029, 1.442695
      %v1034 = vpow.pop %v1033
      %v1035 = vmul.f32 %v1030, 1.442695
      %v1036 = vpow.pop %v1035
      %v1037 = vmul.f32 %v1031, 1.442695
      %v1038 = vpow.pop %v1037
      %v1039 = vmul.f32 %v1032, 1.442695
      %v1040 = vpow.pop %v1039
      %v1041 = vadd.f32 %v1034, 1.0
      %v1042 = vadd.f32 %v1036, 1.0
      %v1043 = vadd.f32 %v1038, 1.0
      %v1044 = vadd.f32 %v1040, 1.0
      %v1045 = vrcp.pop %v1041
      %v1046 = vmul.f32 %v1041, %v1045
      %v1047 = vsub.f32 1.0, %v1046
      %v1048 = vmul.f32 %v1045, %v1047
      %v1049 = vadd.f32 %v1045, %v1048
      %vm1050 = vweird.f32 %v1041
      %vm1051 = vweird.f32 %v1045
      %vm1052 = vmor %vm1050, %vm1051
      %v1053 = vsel %vm1052, %v1045, %v1049
      %v1054 = vand.u32 2147483647, %v1041
      %vm1055 = vcmp.eq.f32.partialorder %v1054, 8.507059e+37
      %v1056 = vand.u32 %v1041, 2147483648
      %v1057 = vor.u32 1.1754944e-38, %v1056
      %v1058 = vsel %vm1055, %v1057, %v1053
      %v1059 = vmul.f32 1.0, %v1058
      %v1060 = vrcp.pop %v1042
      %v1061 = vmul.f32 %v1042, %v1060
      %v1062 = vsub.f32 1.0, %v1061
      %v1063 = vmul.f32 %v1060, %v1062
      %v1064 = vadd.f32 %v1060, %v1063
      %vm1065 = vweird.f32 %v1042
      %vm1066 = vweird.f32 %v1060
      %vm1067 = vmor %vm1065, %vm1066
      %v1068 = vsel %vm1067, %v1060, %v1064
      %v1069 = vand.u32 2147483647, %v1042
      %vm1070 = vcmp.eq.f32.partialorder %v1069, 8.507059e+37
      %v1071 = vand.u32 %v1042, 2147483648
      %v1072 = vor.u32 1.1754944e-38, %v1071
      %v1073 = vsel %vm1070, %v1072, %v1068
      %v1074 = vmul.f32 1.0, %v1073
      %v1075 = vrcp.pop %v1043
      %v1076 = vmul.f32 %v1043, %v1075
      %v1077 = vsub.f32 1.0, %v1076
      %v1078 = vmul.f32 %v1075, %v1077
      %v1079 = vadd.f32 %v1075, %v1078
      %vm1080 = vweird.f32 %v1043
      %vm1081 = vweird.f32 %v1075
      %vm1082 = vmor %vm1080, %vm1081
      %v1083 = vsel %vm1082, %v1075, %v1079
      %v1084 = vand.u32 2147483647, %v1043
      %vm1085 = vcmp.eq.f32.partialorder %v1084, 8.507059e+37
      %v1086 = vand.u32 %v1043, 2147483648
      %v1087 = vor.u32 1.1754944e-38, %v1086
      %v1088 = vsel %vm1085, %v1087, %v1083
      %v1089 = vmul.f32 1.0, %v1088
      %v1090 = vrcp.pop %v1044
      %v1091 = vmul.f32 %v1044, %v1090
      %v1092 = vsub.f32 1.0, %v1091
      %v1093 = vmul.f32 %v1090, %v1092
      %v1094 = vadd.f32 %v1090, %v1093
      %vm1095 = vweird.f32 %v1044
      %vm1096 = vweird.f32 %v1090
      %vm1097 = vmor %vm1095, %vm1096
      %v1098 = vsel %vm1097, %v1090, %v1094
      %v1099 = vand.u32 2147483647, %v1044
      %vm1100 = vcmp.eq.f32.partialorder %v1099, 8.507059e+37
      %v1101 = vand.u32 %v1044, 2147483648
      %v1102 = vor.u32 1.1754944e-38, %v1101
      %v1103 = vsel %vm1100, %v1102, %v1098
      %v1104 = vmul.f32 1.0, %v1103
      %v1105 = vld [vmem:[#allocation3] sm:$0xff]
      %v1106 = vld [vmem:[#allocation3 + $0x8] sm:$0xff]
      %v1107 = vld [vmem:[#allocation3 + $0x10] sm:$0xff]
      %v1108 = vld [vmem:[#allocation3 + $0x18] sm:$0xff]
      %v1109 = vmul.f32 %v817, %v1105
      %v1110 = vmul.f32 %v832, %v1106
      %v1111 = vmul.f32 %v847, %v1107
      %v1112 = vmul.f32 %v862, %v1108
      %v1113 = vmul.f32 %v660, %v944
      %v1114 = vmul.f32 %v675, %v945
      %v1115 = vmul.f32 %v690, %v946
      %v1116 = vmul.f32 %v705, %v947
      %v1117 = vadd.f32 %v1109, %v1113
      %v1118 = vadd.f32 %v1110, %v1114
      %v1119 = vadd.f32 %v1111, %v1115
      %v1120 = vadd.f32 %v1112, %v1116
      %v1121 = vtanh.pop %v1117
      %v1122 = vtanh.pop %v1118
      %v1123 = vtanh.pop %v1119
      %v1124 = vtanh.pop %v1120
      %v1125 = vmul.f32 %v1059, %v1121
      %v1126 = vmul.f32 %v1074, %v1122
      %v1127 = vmul.f32 %v1089, %v1123
      %v1128 = vmul.f32 %v1104, %v1124
      %1129 = vst.msk [vmem:[#allocation3] sm:$0xff] %vm463, %v1117
      %1130 = vst.msk [vmem:[#allocation3 + $0x8] sm:$0xff] %vm463, %v1118
      %1131 = vst.msk [vmem:[#allocation3 + $0x10] sm:$0xff] %vm463, %v1119
      %1132 = vst.msk [vmem:[#allocation3 + $0x18] sm:$0xff] %vm463, %v1120
      %1133 = vst.msk [vmem:[#allocation2] sm:$0xff] %vm463, %v1125
      %1134 = vst.msk [vmem:[#allocation2 + $0x8] sm:$0xff] %vm463, %v1126
      %1135 = vst.msk [vmem:[#allocation2 + $0x10] sm:$0xff] %vm463, %v1127
      %1136 = vst.msk [vmem:[#allocation2 + $0x18] sm:$0xff] %vm463, %v1128
      %v1137 = vpack.c.bf16 %v1125, %v1125
      %v1138 = vpack.c.bf16 %v1126, %v1126
      %v1139 = vpack.c.bf16 %v1127, %v1127
      %v1140 = vpack.c.bf16 %v1128, %v1128
      %vm1141 = vcmask 257024
      %1142 = vst.msk [vmem:[%s305] sm:$0xf] %vm1141, %v1137
      %1143 = vst.msk [vmem:[%s305 + $0x4] sm:$0xf] %vm1141, %v1138
      %1144 = vst.msk [vmem:[%s305 + $0x8] sm:$0xf] %vm1141, %v1139
      %1145 = vst.msk [vmem:[%s305 + $0xc] sm:$0xf] %vm1141, %v1140
      %p1146 = scmp.lt.s32.totalorder %s19, 2
      %s1147 = scalar_select %p1146, %s19, 2
      %s1148 = smul.addr %s1147, 4
      %s1149 = smul.addr %s1148, 4
      %s1150 = scalar_lea.vmem %s8, %s1149
      // Predicated region
      $region57: #{rcnn_forward.6} parent=51 // pred_check
        %p1151 = pneg %p210
      $region58: #{rcnn_forward.6} parent=51 // pred_check_branch
        %1153 = sbr.rel (%p1151) target = $region60
      $region59: #{rcnn_forward.6} parent=51 // pred_region
        _
      $region60: #{rcnn_forward.6} parent=51 // pred_fallthru
        _
    $region52: #{rcnn_forward.6} parent=5 // pred_fallthru
      _
    %p1154 = scmp.le.s32.totalorder 2, %s14
    // Predicated region
    $region61: #{rcnn_forward.6} parent=5 // pred_check
      %p1155 = pneg %p1154
    $region62: #{rcnn_forward.6} parent=5 // pred_check_branch
      %1157 = sbr.rel (%p1155) target = $region64
    $region63: #{rcnn_forward.6} parent=5 // pred_region
      %s1158 = ssub.s32 %s14, 2
      // Predicated region
      $region65: #{rcnn_forward.6} parent=63 // pred_check
        %p1159 = pneg %p216
      $region66: #{rcnn_forward.6} parent=63 // pred_check_branch
        %1161 = sbr.rel (%p1159) target = $region68
      $region67: #{rcnn_forward.6} parent=63 // pred_region
        %p1162 = scmp.lt.s32.totalorder %s20, 2
        %s1163 = scalar_select %p1162, %s20, 2
        %s1164 = smul.addr %s1163, 4
        %s1165 = smul.addr %s1164, 4
        %s1166 = scalar_lea.vmem %s8, %s1165
      $region68: #{rcnn_forward.6} parent=63 // pred_fallthru
        _
    $region64: #{rcnn_forward.6} parent=5 // pred_fallthru
      _
  $region6: #{rcnn_forward.6} parent=0 // loop_footer
    %s18 = sadd.s32 1, %s14
  $region7: #{rcnn_forward.6} parent=0 // loop_footer_branch
    %13 = sbr.rel target = $region3
  $region8: #{rcnn_forward.6} parent=0 // loop_exit
    _

// kernel: rcnn_forward.7
$region0: #{rcnn_forward.7}
  #allocation0 [shape = 'u32[]', space=smem, size = 0x4, offset = 0x4, fixed_abs, tag = 'smem constant byte address 0x4 - core index']
  #allocation1 [shape = 'u32[72,128]{1,0:T(1,128)}', space=vmem, size = 0x9000, scoped, tag = 'internal scratch']
  #allocation2 [shape = 'f32[8,64]{1,0:T(8,128)}', space=vmem, size = 0x1000, scoped, tag = 'scratch operand']
  #allocation3 [shape = 'f32[8,64]{1,0:T(8,128)}', space=vmem, size = 0x1000, scoped, tag = 'scratch operand']
  %s0 = inlined_call_operand.vmem [shape: bf16[3,8,288], index: 0, kind: input, shape index: {}]
  %s1 = inlined_call_operand.vmem [shape: bf16[288,64], index: 1, kind: input, shape index: {}]
  %s2 = inlined_call_operand.vmem [shape: f32[1,64], index: 2, kind: input, shape index: {}]
  %s3 = inlined_call_operand.vmem [shape: f32[1,64], index: 3, kind: input, shape index: {}]
  %s4 = inlined_call_operand.vmem [shape: f32[1,64], index: 4, kind: input, shape index: {}]
  %s5 = inlined_call_operand.vmem [shape: bf16[4,64,64], index: 5, kind: input, shape index: {}]
  %s6 = inlined_call_operand.vmem [shape: bf16[4,64,64], index: 6, kind: input, shape index: {}]
  %s7 = inlined_call_operand.vmem [shape: f32[4,1,64], index: 7, kind: input, shape index: {}]
  %s8 = inlined_call_operand.vmem [shape: bf16[3,8,64], index: 8, kind: output, shape index: {}]
  %s9 = sld [smem:[#allocation0]]
  $region69: #{rcnn_forward.7} parent=0
    _
  %s11 = ssub.s32 1, %s9
  %s12 = scalar_select 0, %s11, %s9
  loop: start=0, step=1, limit=5
  $region2: #{rcnn_forward.7} parent=0 // loop_pre_header
    _
  $region3: #{rcnn_forward.7} parent=0 // loop_header
    %s14 = sphi 0, %s18
    %p15 = scmp.ge.s32.totalorder %s14, 5
    %s24 = sphi 0, %s26
    %s27 = sphi 0, %s24
    %s28 = sphi 0, %s27
    %s44 = sphi 0, %s28
    %s48 = sphi 0, %s48
    %s50 = sphi 0, %s48
    %s51 = sphi 0, %s50
    %s65 = sphi 0, %s51
    %s69 = sphi 0, %s69
    %s71 = sphi 0, %s69
    %s72 = sphi 0, %s71
    %s86 = sphi 0, %s72
    %s90 = sphi 0, %s90
    %s92 = sphi 0, %s90
    %s93 = sphi 0, %s92
    %s107 = sphi 0, %s93
    %s111 = sphi 0, %s111
    %s113 = sphi 0, %s111
    %s114 = sphi 0, %s113
    %s128 = sphi 0, %s114
    %s132 = sphi 0, %s132
    %s134 = sphi 0, %s132
    %s135 = sphi 0, %s134
    %s149 = sphi 0, %s135
    %s153 = sphi 0, %s153
    %s155 = sphi 0, %s153
    %s156 = sphi 0, %s155
    %s170 = sphi 0, %s156
    %s174 = sphi 0, %s174
    %s176 = sphi 0, %s174
    %s177 = sphi 0, %s176
    %s191 = sphi 0, %s177
    %s197 = sphi 0, %s199
    %s200 = sphi 0, %s197
    %s201 = sphi 0, %s200
    %s217 = sphi 0, %s201
  $region4: #{rcnn_forward.7} parent=0 // loop_header_branch
    %17 = sbr.rel (%p15) target = $region8
  $region5: #{rcnn_forward.7} parent=0 // loop_body
    %s19 = ssub.s32 %s14, 1
    %s20 = ssub.s32 %s14, 2
    %s21 = sadd.s32 %s14, 1
    %s22 = ssub.s32 %s14, %s21
    %p23 = scmp.eq.s32.totalorder %s22, 0
    %s25 = sadd.s32 %s24, 1
    %s26 = scalar_select %p23, %s24, %s25
    %p29 = pneg %p23
    %p30 = scmp.eq.s32.totalorder %s14, 2
    %p31 = por %p29, %p30
    %p32 = scmp.ne.s32.totalorder %s24, %s27
    %p33 = scmp.eq.s32.totalorder %s14, 0
    %p34 = por %p32, %p33
    %p35 = scmp.ne.s32.totalorder %s24, %s27
    %p36 = scmp.eq.s32.totalorder %s19, 2
    %p37 = por %p35, %p36
    %p38 = scmp.ne.s32.totalorder %s27, %s28
    %p39 = scmp.eq.s32.totalorder %s19, 0
    %p40 = por %p38, %p39
    %p41 = scmp.ne.s32.totalorder %s27, %s28
    %p42 = scmp.eq.s32.totalorder %s20, 2
    %p43 = por %p41, %p42
    %p45 = scmp.ne.s32.totalorder %s28, %s44
    %p46 = scmp.eq.s32.totalorder %s20, 0
    %p47 = por %p45, %p46
    %s49 = sadd.s32 %s48, 1
    %p52 = scmp.eq.s32.totalorder %s14, 2
    %p53 = scmp.ne.s32.totalorder %s48, %s50
    %p54 = scmp.eq.s32.totalorder %s14, 0
    %p55 = por %p53, %p54
    %p56 = scmp.ne.s32.totalorder %s48, %s50
    %p57 = scmp.eq.s32.totalorder %s19, 2
    %p58 = por %p56, %p57
    %p59 = scmp.ne.s32.totalorder %s50, %s51
    %p60 = scmp.eq.s32.totalorder %s19, 0
    %p61 = por %p59, %p60
    %p62 = scmp.ne.s32.totalorder %s50, %s51
    %p63 = scmp.eq.s32.totalorder %s20, 2
    %p64 = por %p62, %p63
    %p66 = scmp.ne.s32.totalorder %s51, %s65
    %p67 = scmp.eq.s32.totalorder %s20, 0
    %p68 = por %p66, %p67
    %s70 = sadd.s32 %s69, 1
    %p73 = scmp.eq.s32.totalorder %s14, 2
    %p74 = scmp.ne.s32.totalorder %s69, %s71
    %p75 = scmp.eq.s32.totalorder %s14, 0
    %p76 = por %p74, %p75
    %p77 = scmp.ne.s32.totalorder %s69, %s71
    %p78 = scmp.eq.s32.totalorder %s19, 2
    %p79 = por %p77, %p78
    %p80 = scmp.ne.s32.totalorder %s71, %s72
    %p81 = scmp.eq.s32.totalorder %s19, 0
    %p82 = por %p80, %p81
    %p83 = scmp.ne.s32.totalorder %s71, %s72
    %p84 = scmp.eq.s32.totalorder %s20, 2
    %p85 = por %p83, %p84
    %p87 = scmp.ne.s32.totalorder %s72, %s86
    %p88 = scmp.eq.s32.totalorder %s20, 0
    %p89 = por %p87, %p88
    %s91 = sadd.s32 %s90, 1
    %p94 = scmp.eq.s32.totalorder %s14, 2
    %p95 = scmp.ne.s32.totalorder %s90, %s92
    %p96 = scmp.eq.s32.totalorder %s14, 0
    %p97 = por %p95, %p96
    %p98 = scmp.ne.s32.totalorder %s90, %s92
    %p99 = scmp.eq.s32.totalorder %s19, 2
    %p100 = por %p98, %p99
    %p101 = scmp.ne.s32.totalorder %s92, %s93
    %p102 = scmp.eq.s32.totalorder %s19, 0
    %p103 = por %p101, %p102
    %p104 = scmp.ne.s32.totalorder %s92, %s93
    %p105 = scmp.eq.s32.totalorder %s20, 2
    %p106 = por %p104, %p105
    %p108 = scmp.ne.s32.totalorder %s93, %s107
    %p109 = scmp.eq.s32.totalorder %s20, 0
    %p110 = por %p108, %p109
    %s112 = sadd.s32 %s111, 1
    %p115 = scmp.eq.s32.totalorder %s14, 2
    %p116 = scmp.ne.s32.totalorder %s111, %s113
    %p117 = scmp.eq.s32.totalorder %s14, 0
    %p118 = por %p116, %p117
    %p119 = scmp.ne.s32.totalorder %s111, %s113
    %p120 = scmp.eq.s32.totalorder %s19, 2
    %p121 = por %p119, %p120
    %p122 = scmp.ne.s32.totalorder %s113, %s114
    %p123 = scmp.eq.s32.totalorder %s19, 0
    %p124 = por %p122, %p123
    %p125 = scmp.ne.s32.totalorder %s113, %s114
    %p126 = scmp.eq.s32.totalorder %s20, 2
    %p127 = por %p125, %p126
    %p129 = scmp.ne.s32.totalorder %s114, %s128
    %p130 = scmp.eq.s32.totalorder %s20, 0
    %p131 = por %p129, %p130
    %s133 = sadd.s32 %s132, 1
    %p136 = scmp.eq.s32.totalorder %s14, 2
    %p137 = scmp.ne.s32.totalorder %s132, %s134
    %p138 = scmp.eq.s32.totalorder %s14, 0
    %p139 = por %p137, %p138
    %p140 = scmp.ne.s32.totalorder %s132, %s134
    %p141 = scmp.eq.s32.totalorder %s19, 2
    %p142 = por %p140, %p141
    %p143 = scmp.ne.s32.totalorder %s134, %s135
    %p144 = scmp.eq.s32.totalorder %s19, 0
    %p145 = por %p143, %p144
    %p146 = scmp.ne.s32.totalorder %s134, %s135
    %p147 = scmp.eq.s32.totalorder %s20, 2
    %p148 = por %p146, %p147
    %p150 = scmp.ne.s32.totalorder %s135, %s149
    %p151 = scmp.eq.s32.totalorder %s20, 0
    %p152 = por %p150, %p151
    %s154 = sadd.s32 %s153, 1
    %p157 = scmp.eq.s32.totalorder %s14, 2
    %p158 = scmp.ne.s32.totalorder %s153, %s155
    %p159 = scmp.eq.s32.totalorder %s14, 0
    %p160 = por %p158, %p159
    %p161 = scmp.ne.s32.totalorder %s153, %s155
    %p162 = scmp.eq.s32.totalorder %s19, 2
    %p163 = por %p161, %p162
    %p164 = scmp.ne.s32.totalorder %s155, %s156
    %p165 = scmp.eq.s32.totalorder %s19, 0
    %p166 = por %p164, %p165
    %p167 = scmp.ne.s32.totalorder %s155, %s156
    %p168 = scmp.eq.s32.totalorder %s20, 2
    %p169 = por %p167, %p168
    %p171 = scmp.ne.s32.totalorder %s156, %s170
    %p172 = scmp.eq.s32.totalorder %s20, 0
    %p173 = por %p171, %p172
    %s175 = sadd.s32 %s174, 1
    %p178 = scmp.eq.s32.totalorder %s14, 2
    %p179 = scmp.ne.s32.totalorder %s174, %s176
    %p180 = scmp.eq.s32.totalorder %s14, 0
    %p181 = por %p179, %p180
    %p182 = scmp.ne.s32.totalorder %s174, %s176
    %p183 = scmp.eq.s32.totalorder %s19, 2
    %p184 = por %p182, %p183
    %p185 = scmp.ne.s32.totalorder %s176, %s177
    %p186 = scmp.eq.s32.totalorder %s19, 0
    %p187 = por %p185, %p186
    %p188 = scmp.ne.s32.totalorder %s176, %s177
    %p189 = scmp.eq.s32.totalorder %s20, 2
    %p190 = por %p188, %p189
    %p192 = scmp.ne.s32.totalorder %s177, %s191
    %p193 = scmp.eq.s32.totalorder %s20, 0
    %p194 = por %p192, %p193
    %s195 = ssub.s32 %s14, %s21
    %p196 = scmp.eq.s32.totalorder %s195, 0
    %s198 = sadd.s32 %s197, 1
    %s199 = scalar_select %p196, %s197, %s198
    %p202 = pneg %p196
    %p203 = scmp.eq.s32.totalorder %s14, 2
    %p204 = por %p202, %p203
    %p205 = scmp.ne.s32.totalorder %s197, %s200
    %p206 = scmp.eq.s32.totalorder %s14, 0
    %p207 = por %p205, %p206
    %p208 = scmp.ne.s32.totalorder %s197, %s200
    %p209 = scmp.eq.s32.totalorder %s19, 2
    %p210 = por %p208, %p209
    %p211 = scmp.ne.s32.totalorder %s200, %s201
    %p212 = scmp.eq.s32.totalorder %s19, 0
    %p213 = por %p211, %p212
    %p214 = scmp.ne.s32.totalorder %s200, %s201
    %p215 = scmp.eq.s32.totalorder %s20, 2
    %p216 = por %p214, %p215
    %p218 = scmp.ne.s32.totalorder %s201, %s217
    %p219 = scmp.eq.s32.totalorder %s20, 0
    %p220 = por %p218, %p219
    %p221 = scmp.le.s32.totalorder 1, %s14
    %p222 = scmp.lt.s32.totalorder %s14, 4
    %p223 = pnand %p221, %p222
    %p224 = pneg %p223
    // Predicated region
    $region9: #{rcnn_forward.7} parent=5 // pred_check
      _
    $region10: #{rcnn_forward.7} parent=5 // pred_check_branch
      %226 = sbr.rel (%p223) target = $region12
    $region11: #{rcnn_forward.7} parent=5 // pred_region
      %s227 = ssub.s32 %s14, 1
      // Predicated region
      $region13: #{rcnn_forward.7} parent=11 // pred_check
        %p228 = pneg %p61
      $region14: #{rcnn_forward.7} parent=11 // pred_check_branch
        %230 = sbr.rel (%p228) target = $region16
      $region15: #{rcnn_forward.7} parent=11 // pred_region
        _
      $region16: #{rcnn_forward.7} parent=11 // pred_fallthru
        _
      // Predicated region
      $region17: #{rcnn_forward.7} parent=11 // pred_check
        %p231 = pneg %p82
      $region18: #{rcnn_forward.7} parent=11 // pred_check_branch
        %233 = sbr.rel (%p231) target = $region20
      $region19: #{rcnn_forward.7} parent=11 // pred_region
        _
      $region20: #{rcnn_forward.7} parent=11 // pred_fallthru
        _
      // Predicated region
      $region21: #{rcnn_forward.7} parent=11 // pred_check
        %p234 = pneg %p103
      $region22: #{rcnn_forward.7} parent=11 // pred_check_branch
        %236 = sbr.rel (%p234) target = $region24
      $region23: #{rcnn_forward.7} parent=11 // pred_region
        _
      $region24: #{rcnn_forward.7} parent=11 // pred_fallthru
        _
      // Predicated region
      $region25: #{rcnn_forward.7} parent=11 // pred_check
        %p237 = pneg %p124
      $region26: #{rcnn_forward.7} parent=11 // pred_check_branch
        %239 = sbr.rel (%p237) target = $region28
      $region27: #{rcnn_forward.7} parent=11 // pred_region
        _
      $region28: #{rcnn_forward.7} parent=11 // pred_fallthru
        _
      // Predicated region
      $region29: #{rcnn_forward.7} parent=11 // pred_check
        %p240 = pneg %p145
      $region30: #{rcnn_forward.7} parent=11 // pred_check_branch
        %242 = sbr.rel (%p240) target = $region32
      $region31: #{rcnn_forward.7} parent=11 // pred_region
        _
      $region32: #{rcnn_forward.7} parent=11 // pred_fallthru
        _
      // Predicated region
      $region33: #{rcnn_forward.7} parent=11 // pred_check
        %p243 = pneg %p166
      $region34: #{rcnn_forward.7} parent=11 // pred_check_branch
        %245 = sbr.rel (%p243) target = $region36
      $region35: #{rcnn_forward.7} parent=11 // pred_region
        _
      $region36: #{rcnn_forward.7} parent=11 // pred_fallthru
        _
      // Predicated region
      $region37: #{rcnn_forward.7} parent=11 // pred_check
        %p246 = pneg %p187
      $region38: #{rcnn_forward.7} parent=11 // pred_check_branch
        %248 = sbr.rel (%p246) target = $region40
      $region39: #{rcnn_forward.7} parent=11 // pred_region
        _
      $region40: #{rcnn_forward.7} parent=11 // pred_fallthru
        _
    $region12: #{rcnn_forward.7} parent=5 // pred_fallthru
      _
    %p249 = scmp.lt.s32.totalorder %s14, 3
    // Predicated region
    $region41: #{rcnn_forward.7} parent=5 // pred_check
      %p250 = pneg %p249
    $region42: #{rcnn_forward.7} parent=5 // pred_check_branch
      %252 = sbr.rel (%p250) target = $region44
    $region43: #{rcnn_forward.7} parent=5 // pred_region
      // Predicated region
      $region45: #{rcnn_forward.7} parent=43 // pred_check
        %p253 = pneg %p34
      $region46: #{rcnn_forward.7} parent=43 // pred_check_branch
        %255 = sbr.rel (%p253) target = $region48
      $region47: #{rcnn_forward.7} parent=43 // pred_region
        %p256 = scmp.lt.s32.totalorder %s14, 2
        %s257 = scalar_select %p256, %s14, 2
        %s258 = smul.addr %s257, 3
        %s259 = smul.addr %s258, 4
        %s260 = scalar_lea.vmem %s0, %s259
      $region48: #{rcnn_forward.7} parent=43 // pred_fallthru
        _
    $region44: #{rcnn_forward.7} parent=5 // pred_fallthru
      _
    %p261 = scmp.le.s32.totalorder 1, %s14
    %p262 = scmp.lt.s32.totalorder %s14, 4
    %p263 = pnand %p261, %p262
    %p264 = pneg %p263
    // Predicated region
    $region49: #{rcnn_forward.7} parent=5 // pred_check
      _
    $region50: #{rcnn_forward.7} parent=5 // pred_check_branch
      %266 = sbr.rel (%p263) target = $region52
    $region51: #{rcnn_forward.7} parent=5 // pred_region
      %s267 = ssub.s32 %s14, 1
      %p268 = scmp.lt.s32.totalorder %s19, 2
      %s269 = scalar_select %p268, %s19, 2
      %s270 = smul.addr %s269, 3
      %s271 = smul.addr %s270, 4
      %s272 = scalar_lea.vmem %s0, %s271
      %p273 = pneg %p40
      %p274 = pneg %p37
      %p275 = pneg %p61
      %p276 = pneg %p58
      %p277 = pneg %p82
      %p278 = pneg %p79
      %p279 = pneg %p103
      %p280 = pneg %p100
      %p281 = pneg %p124
      %p282 = pneg %p121
      %p283 = pneg %p145
      %p284 = pneg %p142
      %p285 = pneg %p166
      %p286 = pneg %p163
      %p287 = pneg %p187
      %p288 = pneg %p184
      %p289 = pneg %p213
      %p290 = pneg %p210
      %p291 = scmp.lt.s32.totalorder %s19, 2
      %s292 = scalar_select %p291, %s19, 2
      %s293 = smul.addr %s292, 4
      %s294 = scalar_lea.vmem %s8, %s293
      %p295 = scmp.lt.s32.totalorder %s19, 2
      %s296 = scalar_select %p295, %s19, 2
      %s297 = smul.addr %s296, 3
      %s298 = smul.addr %s297, 4
      %s299 = scalar_lea.vmem %s0, %s298
      %p300 = scmp.lt.s32.totalorder %s19, 2
      %s301 = scalar_select %p300, %s19, 2
      %s302 = smul.addr %s301, 4
      %s303 = scalar_lea.vmem %s8, %s302
      %p305 = scmp.eq.s32.totalorder %s19, 0
      // Predicated region
      $region53: #{rcnn_forward.7} parent=51 // pred_check
        %p306 = pneg %p305
      $region54: #{rcnn_forward.7} parent=51 // pred_check_branch
        %308 = sbr.rel (%p306) target = $region56
      $region55: #{rcnn_forward.7} parent=51 // pred_region
        %vm309 = vcmask 523264
        %310 = vst.msk [vmem:[#allocation2] sm:$0xff] %vm309, 0.0
        %311 = vst.msk [vmem:[#allocation3] sm:$0xff] %vm309, 0.0
      $region56: #{rcnn_forward.7} parent=51 // pred_fallthru
        _
      %v312 = vld [vmem:[%s299] sm:$0xff]
      %v313 = vld [vmem:[%s299 + $0x8] sm:$0xf]
      %v314 = vld [vmem:[%s1] sm:$0xf]
      %v315 = vld [vmem:[%s1 + $0x4] sm:$0xf]
      %v316 = vld [vmem:[%s1 + $0x8] sm:$0xf]
      %v317 = vld [vmem:[%s1 + $0xc] sm:$0xf]
      %v318 = vld [vmem:[%s1 + $0x10] sm:$0xf]
      %v319 = vld [vmem:[%s1 + $0x14] sm:$0xf]
      %v320 = vld [vmem:[%s1 + $0x18] sm:$0xf]
      %v321 = vld [vmem:[%s1 + $0x1c] sm:$0xf]
      %v322 = vld [vmem:[%s1 + $0x20] sm:$0xf]
      %v323 = vld [vmem:[%s1 + $0x24] sm:$0xf]
      %v324 = vld [vmem:[%s1 + $0x28] sm:$0xf]
      %v325 = vld [vmem:[%s1 + $0x2c] sm:$0xf]
      %v326 = vld [vmem:[%s1 + $0x30] sm:$0xf]
      %v327 = vld [vmem:[%s1 + $0x34] sm:$0xf]
      %v328 = vld [vmem:[%s1 + $0x38] sm:$0xf]
      %v329 = vld [vmem:[%s1 + $0x3c] sm:$0xf]
      %v330 = vld [vmem:[%s1 + $0x40] sm:$0xf]
      %v331 = vld [vmem:[%s1 + $0x44] sm:$0xf]
      %v332 = vld [vmem:[%s1 + $0x48] sm:$0xf]
      %v333 = vld [vmem:[%s1 + $0x4c] sm:$0xf]
      %v334 = vld [vmem:[%s1 + $0x50] sm:$0xf]
      %v335 = vld [vmem:[%s1 + $0x54] sm:$0xf]
      %v336 = vld [vmem:[%s1 + $0x58] sm:$0xf]
      %v337 = vld [vmem:[%s1 + $0x5c] sm:$0xf]
      %v338 = vld [vmem:[%s1 + $0x60] sm:$0xf]
      %v339 = vld [vmem:[%s1 + $0x64] sm:$0xf]
      %v340 = vld [vmem:[%s1 + $0x68] sm:$0xf]
      %v341 = vld [vmem:[%s1 + $0x6c] sm:$0xf]
      %v342 = vld [vmem:[%s1 + $0x70] sm:$0xf]
      %v343 = vld [vmem:[%s1 + $0x74] sm:$0xf]
      %v344 = vld [vmem:[%s1 + $0x78] sm:$0xf]
      %v345 = vld [vmem:[%s1 + $0x7c] sm:$0xf]
      %v346 = vld [vmem:[%s1 + $0x80] sm:$0xf]
      %v347 = vld [vmem:[%s1 + $0x84] sm:$0xf]
      %v348 = vld [vmem:[%s1 + $0x88] sm:$0xf]
      %v349 = vld [vmem:[%s1 + $0x8c] sm:$0xf]
      %v350 = vld [vmem:[%s2] sm:$0x1]
      %v352 = vperm.slane %v350, 0
      %v356 = vunpack.c.l.b16 %v312
      %v357 = vunpack.c.h.b16 %v312
      %v358 = vunpack.c.l.b16 %v313
      %v359 = vpack.c.b16 %v356, %v356
      %v360 = vpack.c.b16 %v357, %v357
      %v361 = vpack.c.b16 %v358, %v358
      %v400 = vunpack.c.l.b16 %v314
      %v401 = vunpack.c.l.b16 %v315
      %v402 = vunpack.c.l.b16 %v316
      %v403 = vunpack.c.l.b16 %v317
      %v404 = vunpack.c.l.b16 %v318
      %v405 = vunpack.c.l.b16 %v319
      %v406 = vunpack.c.l.b16 %v320
      %v407 = vunpack.c.l.b16 %v321
      %v408 = vunpack.c.l.b16 %v322
      %v409 = vunpack.c.l.b16 %v323
      %v410 = vunpack.c.l.b16 %v324
      %v411 = vunpack.c.l.b16 %v325
      %v412 = vunpack.c.l.b16 %v326
      %v413 = vunpack.c.l.b16 %v327
      %v414 = vunpack.c.l.b16 %v328
      %v415 = vunpack.c.l.b16 %v329
      %v416 = vunpack.c.l.b16 %v330
      %v417 = vunpack.c.l.b16 %v331
      %v418 = vunpack.c.l.b16 %v332
      %v419 = vunpack.c.l.b16 %v333
      %v420 = vunpack.c.l.b16 %v334
      %v421 = vunpack.c.l.b16 %v335
      %v422 = vunpack.c.l.b16 %v336
      %v423 = vunpack.c.l.b16 %v337
      %v424 = vunpack.c.l.b16 %v338
      %v425 = vunpack.c.l.b16 %v339
      %v426 = vunpack.c.l.b16 %v340
      %v427 = vunpack.c.l.b16 %v341
      %v428 = vunpack.c.l.b16 %v342
      %v429 = vunpack.c.l.b16 %v343
      %v430 = vunpack.c.l.b16 %v344
      %v431 = vunpack.c.l.b16 %v345
      %v432 = vunpack.c.l.b16 %v346
      %v433 = vunpack.c.l.b16 %v347
      %v434 = vunpack.c.l.b16 %v348
      %v435 = vunpack.c.l.b16 %v349
      %v436 = vpack.c.b16 %v401, %v400
      %v437 = vpack.c.b16 %v403, %v402
      %v438 = vpack.c.b16 %v405, %v404
      %v439 = vpack.c.b16 %v407, %v406
      %v440 = vpack.c.b16 %v409, %v408
      %v441 = vpack.c.b16 %v411, %v410
      %v442 = vpack.c.b16 %v413, %v412
      %v443 = vpack.c.b16 %v415, %v414
      %v444 = vpack.c.b16 %v417, %v416
      %v445 = vpack.c.b16 %v419, %v418
      %v446 = vpack.c.b16 %v421, %v420
      %v447 = vpack.c.b16 %v423, %v422
      %v448 = vpack.c.b16 %v425, %v424
      %v449 = vpack.c.b16 %v427, %v426
      %v450 = vpack.c.b16 %v429, %v428
      %v451 = vpack.c.b16 %v431, %v430
      %v452 = vpack.c.b16 %v433, %v432
      %v453 = vpack.c.b16 %v435, %v434
      %vm472 = vcmask 261120
      %v474 = vsel %vm472, %v361, 0
      %476 = vmatpush.bf16.msra.mxu0 %v443
      %477 = vmatpush.bf16.msra.mxu0 %v442
      %478 = vmatpush.bf16.msra.mxu0 %v441
      %479 = vmatpush.bf16.msra.mxu0 %v440
      %480 = vmatpush.bf16.msra.mxu0 %v439
      %481 = vmatpush.bf16.msra.mxu0 %v438
      %482 = vmatpush.bf16.msra.mxu0 %v437
      %483 = vmatpush.bf16.msra.mxu0 %v436
      %484 = vmatmul.bf16.gmra.mxu0 %v359
      %v485 = vpop.f32.mrf.mxu0
      %v486 = vadd.f32 %v352, %v485
      %v487 = vpop.f32.mrf.mxu0
      %488 = vdwg.mxu0
      %489 = vmatpush.bf16.msra.mxu0 %v451
      %490 = vmatpush.bf16.msra.mxu0 %v450
      %491 = vmatpush.bf16.msra.mxu0 %v449
      %492 = vmatpush.bf16.msra.mxu0 %v448
      %493 = vmatpush.bf16.msra.mxu0 %v447
      %494 = vmatpush.bf16.msra.mxu0 %v446
      %495 = vmatpush.bf16.msra.mxu0 %v445
      %496 = vmatpush.bf16.msra.mxu0 %v444
      %497 = vmatmul.bf16.gmra.mxu0 %v360
      %v498 = vpop.f32.mrf.mxu0
      %v499 = vadd.f32 %v486, %v498
      %v500 = vpop.f32.mrf.mxu0
      %501 = vdwg.mxu0
      %502 = vmatpush.bf16.msra.mxu0 0
      %503 = vmatpush.bf16.msra.mxu0 0
      %504 = vmatpush.bf16.msra.mxu0 0
      %505 = vmatpush.bf16.msra.mxu0 0
      %506 = vmatpush.bf16.msra.mxu0 0
      %507 = vmatpush.bf16.msra.mxu0 0
      %508 = vmatpush.bf16.msra.mxu0 %v453
      %509 = vmatpush.bf16.msra.mxu0 %v452
      %510 = vmatmul.bf16.gmra.mxu0 %v474
      %v511 = vpop.f32.mrf.mxu0
      %v512 = vadd.f32 %v499, %v511
      %v513 = vpop.f32.mrf.mxu0
      %514 = vdwg.mxu0
      %vm515 = vcmask 523264
      %v516 = vsel %vm515, %v512, 0.0
      %v517 = vrot.slane %v516, 4
      %v518 = vadd.f32 %v516, %v517
      %v519 = vrot.slane %v518, 2
      %v520 = vadd.f32 %v518, %v519
      %v521 = vrot.slane %v520, 1
      %v522 = vadd.f32 %v520, %v521
      %v523 = vmul.f32 %v522, 0.125
      %v524 = vmul.f32 %v512, %v512
      %v525 = vsel %vm515, %v524, 0.0
      %v526 = vrot.slane %v525, 4
      %v527 = vadd.f32 %v525, %v526
      %v528 = vrot.slane %v527, 2
      %v529 = vadd.f32 %v527, %v528
      %v530 = vrot.slane %v529, 1
      %v531 = vadd.f32 %v529, %v530
      %v532 = vmul.f32 %v531, 0.125
      %v533 = vmul.f32 %v523, %v523
      %v534 = vsub.f32 %v532, %v533
      %v535 = vld [vmem:[%s3] sm:$0x1]
      %v536 = vadd.f32 %v534, 1e-05
      %v537 = vrsqrt.pop %v536
      %v538 = vmul.f32 %v537, %v536
      %v539 = vmul.f32 %v538, %v537
      %v540 = vmul.f32 0.5, %v539
      %v541 = vsub.f32 1.5, %v540
      %v542 = vmul.f32 %v537, %v541
      %vm543 = vweird.f32 %v536
      %vm544 = vweird.f32 %v537
      %vm545 = vmor %vm543, %vm544
      %v546 = vsel %vm545, %v537, %v542
      %v547 = vmul.f32 %v535, %v546
      %v548 = vld [vmem:[%s4] sm:$0x1]
      %v549 = vmul.f32 %v523, %v547
      %v550 = vsub.f32 %v548, %v549
      %v552 = vperm.slane %v547, 0
      %v554 = vmul.f32 %v512, %v552
      %v556 = vperm.slane %v550, 0
      %v558 = vadd.f32 %v554, %v556
      %v559 = vmax.f32 %v558, 0.0
      %v560 = vpack.c.bf16 %v559, %v559
      %v561 = vld [vmem:[#allocation2] sm:$0xff]
      %v562 = vpack.c.bf16 %v561, %v561
      %v563 = vld [vmem:[%s5] sm:$0xf]
      %v564 = vld [vmem:[%s5 + $0x4] sm:$0xf]
      %v565 = vld [vmem:[%s5 + $0x8] sm:$0xf]
      %v566 = vld [vmem:[%s5 + $0xc] sm:$0xf]
      %v567 = vld [vmem:[%s5 + $0x10] sm:$0xf]
      %v568 = vld [vmem:[%s5 + $0x14] sm:$0xf]
      %v569 = vld [vmem:[%s5 + $0x18] sm:$0xf]
      %v570 = vld [vmem:[%s5 + $0x1c] sm:$0xf]
      %v571 = vld [vmem:[%s6] sm:$0xf]
      %v572 = vld [vmem:[%s6 + $0x4] sm:$0xf]
      %v573 = vld [vmem:[%s6 + $0x8] sm:$0xf]
      %v574 = vld [vmem:[%s6 + $0xc] sm:$0xf]
      %v575 = vld [vmem:[%s6 + $0x10] sm:$0xf]
      %v576 = vld [vmem:[%s6 + $0x14] sm:$0xf]
      %v577 = vld [vmem:[%s6 + $0x18] sm:$0xf]
      %v578 = vld [vmem:[%s6 + $0x1c] sm:$0xf]
      %v587 = vunpack.c.l.b16 %v571
      %v588 = vunpack.c.l.b16 %v572
      %v589 = vunpack.c.l.b16 %v573
      %v590 = vunpack.c.l.b16 %v574
      %v591 = vunpack.c.l.b16 %v575
      %v592 = vunpack.c.l.b16 %v576
      %v593 = vunpack.c.l.b16 %v577
      %v594 = vunpack.c.l.b16 %v578
      %v595 = vpack.c.b16 %v588, %v587
      %v596 = vpack.c.b16 %v590, %v589
      %v597 = vpack.c.b16 %v592, %v591
      %v598 = vpack.c.b16 %v594, %v593
      %v604 = vsel %vm515, %v562, 0
      %606 = vmatpush.bf16.msra.mxu0 0
      %607 = vmatpush.bf16.msra.mxu0 0
      %608 = vmatpush.bf16.msra.mxu0 0
      %609 = vmatpush.bf16.msra.mxu0 0
      %610 = vmatpush.bf16.msra.mxu0 %v598
      %611 = vmatpush.bf16.msra.mxu0 %v597
      %612 = vmatpush.bf16.msra.mxu0 %v596
      %613 = vmatpush.bf16.msra.mxu0 %v595
      %614 = vmatmul.bf16.gmra.mxu0 %v604
      %v615 = vpop.f32.mrf.mxu0
      %v616 = vadd.f32 0.0, %v615
      %v617 = vpop.f32.mrf.mxu0
      %618 = vdwg.mxu0
      %v627 = vunpack.c.l.b16 %v563
      %v628 = vunpack.c.l.b16 %v564
      %v629 = vunpack.c.l.b16 %v565
      %v630 = vunpack.c.l.b16 %v566
      %v631 = vunpack.c.l.b16 %v567
      %v632 = vunpack.c.l.b16 %v568
      %v633 = vunpack.c.l.b16 %v569
      %v634 = vunpack.c.l.b16 %v570
      %v635 = vpack.c.b16 %v628, %v627
      %v636 = vpack.c.b16 %v630, %v629
      %v637 = vpack.c.b16 %v632, %v631
      %v638 = vpack.c.b16 %v634, %v633
      %v644 = vsel %vm515, %v560, 0
      %646 = vmatpush.bf16.msra.mxu0 0
      %647 = vmatpush.bf16.msra.mxu0 0
      %648 = vmatpush.bf16.msra.mxu0 0
      %649 = vmatpush.bf16.msra.mxu0 0
      %650 = vmatpush.bf16.msra.mxu0 %v638
      %651 = vmatpush.bf16.msra.mxu0 %v637
      %652 = vmatpush.bf16.msra.mxu0 %v636
      %653 = vmatpush.bf16.msra.mxu0 %v635
      %654 = vmatmul.bf16.gmra.mxu0 %v644
      %v655 = vpop.f32.mrf.mxu0
      %v656 = vadd.f32 %v616, %v655
      %v657 = vpop.f32.mrf.mxu0
      %658 = vdwg.mxu0
      %v659 = vld [vmem:[%s7] sm:$0x1]
      %v661 = vperm.slane %v659, 0
      %v663 = vadd.f32 %v656, %v661
      %v664 = vxor.u32 %v663, 2147483648
      %v665 = vmul.f32 %v664, 1.442695
      %v666 = vpow.pop %v665
      %v667 = vadd.f32 %v666, 1.0
      %v668 = vrcp.pop %v667
      %v669 = vmul.f32 %v667, %v668
      %v670 = vsub.f32 1.0, %v669
      %v671 = vmul.f32 %v668, %v670
      %v672 = vadd.f32 %v668, %v671
      %vm673 = vweird.f32 %v667
      %vm674 = vweird.f32 %v668
      %vm675 = vmor %vm673, %vm674
      %v676 = vsel %vm675, %v668, %v672
      %v677 = vand.u32 2147483647, %v667
      %vm678 = vcmp.eq.f32.partialorder %v677, 8.507059e+37
      %v679 = vand.u32 %v667, 2147483648
      %v680 = vor.u32 1.1754944e-38, %v679
      %v681 = vsel %vm678, %v680, %v676
      %v682 = vmul.f32 1.0, %v681
      %s683 = scalar_lea.vmem %s5, 32
      %v684 = vld [vmem:[%s683] sm:$0xf]
      %v685 = vld [vmem:[%s683 + $0x4] sm:$0xf]
      %v686 = vld [vmem:[%s683 + $0x8] sm:$0xf]
      %v687 = vld [vmem:[%s683 + $0xc] sm:$0xf]
      %v688 = vld [vmem:[%s683 + $0x10] sm:$0xf]
      %v689 = vld [vmem:[%s683 + $0x14] sm:$0xf]
      %v690 = vld [vmem:[%s683 + $0x18] sm:$0xf]
      %v691 = vld [vmem:[%s683 + $0x1c] sm:$0xf]
      %s692 = scalar_lea.vmem %s6, 32
      %v693 = vld [vmem:[%s692] sm:$0xf]
      %v694 = vld [vmem:[%s692 + $0x4] sm:$0xf]
      %v695 = vld [vmem:[%s692 + $0x8] sm:$0xf]
      %v696 = vld [vmem:[%s692 + $0xc] sm:$0xf]
      %v697 = vld [vmem:[%s692 + $0x10] sm:$0xf]
      %v698 = vld [vmem:[%s692 + $0x14] sm:$0xf]
      %v699 = vld [vmem:[%s692 + $0x18] sm:$0xf]
      %v700 = vld [vmem:[%s692 + $0x1c] sm:$0xf]
      %v709 = vunpack.c.l.b16 %v693
      %v710 = vunpack.c.l.b16 %v694
      %v711 = vunpack.c.l.b16 %v695
      %v712 = vunpack.c.l.b16 %v696
      %v713 = vunpack.c.l.b16 %v697
      %v714 = vunpack.c.l.b16 %v698
      %v715 = vunpack.c.l.b16 %v699
      %v716 = vunpack.c.l.b16 %v700
      %v717 = vpack.c.b16 %v710, %v709
      %v718 = vpack.c.b16 %v712, %v711
      %v719 = vpack.c.b16 %v714, %v713
      %v720 = vpack.c.b16 %v716, %v715
      %725 = vmatpush.bf16.msra.mxu0 0
      %726 = vmatpush.bf16.msra.mxu0 0
      %727 = vmatpush.bf16.msra.mxu0 0
      %728 = vmatpush.bf16.msra.mxu0 0
      %729 = vmatpush.bf16.msra.mxu0 %v720
      %730 = vmatpush.bf16.msra.mxu0 %v719
      %731 = vmatpush.bf16.msra.mxu0 %v718
      %732 = vmatpush.bf16.msra.mxu0 %v717
      %733 = vmatmul.bf16.gmra.mxu0 %v604
      %v734 = vpop.f32.mrf.mxu0
      %v735 = vadd.f32 0.0, %v734
      %v736 = vpop.f32.mrf.mxu0
      %737 = vdwg.mxu0
      %v746 = vunpack.c.l.b16 %v684
      %v747 = vunpack.c.l.b16 %v685
      %v748 = vunpack.c.l.b16 %v686
      %v749 = vunpack.c.l.b16 %v687
      %v750 = vunpack.c.l.b16 %v688
      %v751 = vunpack.c.l.b16 %v689
      %v752 = vunpack.c.l.b16 %v690
      %v753 = vunpack.c.l.b16 %v691
      %v754 = vpack.c.b16 %v747, %v746
      %v755 = vpack.c.b16 %v749, %v748
      %v756 = vpack.c.b16 %v751, %v750
      %v757 = vpack.c.b16 %v753, %v752
      %762 = vmatpush.bf16.msra.mxu0 0
      %763 = vmatpush.bf16.msra.mxu0 0
      %764 = vmatpush.bf16.msra.mxu0 0
      %765 = vmatpush.bf16.msra.mxu0 0
      %766 = vmatpush.bf16.msra.mxu0 %v757
      %767 = vmatpush.bf16.msra.mxu0 %v756
      %768 = vmatpush.bf16.msra.mxu0 %v755
      %769 = vmatpush.bf16.msra.mxu0 %v754
      %770 = vmatmul.bf16.gmra.mxu0 %v644
      %v771 = vpop.f32.mrf.mxu0
      %v772 = vadd.f32 %v735, %v771
      %v773 = vpop.f32.mrf.mxu0
      %774 = vdwg.mxu0
      %s775 = scalar_lea.vmem %s7, 1
      %v776 = vld [vmem:[%s775] sm:$0x1]
      %v778 = vperm.slane %v776, 0
      %v780 = vadd.f32 %v772, %v778
      %v781 = vxor.u32 %v780, 2147483648
      %v782 = vmul.f32 %v781, 1.442695
      %v783 = vpow.pop %v782
      %v784 = vadd.f32 %v783, 1.0
      %v785 = vrcp.pop %v784
      %v786 = vmul.f32 %v784, %v785
      %v787 = vsub.f32 1.0, %v786
      %v788 = vmul.f32 %v785, %v787
      %v789 = vadd.f32 %v785, %v788
      %vm790 = vweird.f32 %v784
      %vm791 = vweird.f32 %v785
      %vm792 = vmor %vm790, %vm791
      %v793 = vsel %vm792, %v785, %v789
      %v794 = vand.u32 2147483647, %v784
      %vm795 = vcmp.eq.f32.partialorder %v794, 8.507059e+37
      %v796 = vand.u32 %v784, 2147483648
      %v797 = vor.u32 1.1754944e-38, %v796
      %v798 = vsel %vm795, %v797, %v793
      %v799 = vmul.f32 1.0, %v798
      %s800 = scalar_lea.vmem %s5, 64
      %v801 = vld [vmem:[%s800] sm:$0xf]
      %v802 = vld [vmem:[%s800 + $0x4] sm:$0xf]
      %v803 = vld [vmem:[%s800 + $0x8] sm:$0xf]
      %v804 = vld [vmem:[%s800 + $0xc] sm:$0xf]
      %v805 = vld [vmem:[%s800 + $0x10] sm:$0xf]
      %v806 = vld [vmem:[%s800 + $0x14] sm:$0xf]
      %v807 = vld [vmem:[%s800 + $0x18] sm:$0xf]
      %v808 = vld [vmem:[%s800 + $0x1c] sm:$0xf]
      %s809 = scalar_lea.vmem %s6, 64
      %v810 = vld [vmem:[%s809] sm:$0xf]
      %v811 = vld [vmem:[%s809 + $0x4] sm:$0xf]
      %v812 = vld [vmem:[%s809 + $0x8] sm:$0xf]
      %v813 = vld [vmem:[%s809 + $0xc] sm:$0xf]
      %v814 = vld [vmem:[%s809 + $0x10] sm:$0xf]
      %v815 = vld [vmem:[%s809 + $0x14] sm:$0xf]
      %v816 = vld [vmem:[%s809 + $0x18] sm:$0xf]
      %v817 = vld [vmem:[%s809 + $0x1c] sm:$0xf]
      %v826 = vunpack.c.l.b16 %v810
      %v827 = vunpack.c.l.b16 %v811
      %v828 = vunpack.c.l.b16 %v812
      %v829 = vunpack.c.l.b16 %v813
      %v830 = vunpack.c.l.b16 %v814
      %v831 = vunpack.c.l.b16 %v815
      %v832 = vunpack.c.l.b16 %v816
      %v833 = vunpack.c.l.b16 %v817
      %v834 = vpack.c.b16 %v827, %v826
      %v835 = vpack.c.b16 %v829, %v828
      %v836 = vpack.c.b16 %v831, %v830
      %v837 = vpack.c.b16 %v833, %v832
      %842 = vmatpush.bf16.msra.mxu0 0
      %843 = vmatpush.bf16.msra.mxu0 0
      %844 = vmatpush.bf16.msra.mxu0 0
      %845 = vmatpush.bf16.msra.mxu0 0
      %846 = vmatpush.bf16.msra.mxu0 %v837
      %847 = vmatpush.bf16.msra.mxu0 %v836
      %848 = vmatpush.bf16.msra.mxu0 %v835
      %849 = vmatpush.bf16.msra.mxu0 %v834
      %850 = vmatmul.bf16.gmra.mxu0 %v604
      %v851 = vpop.f32.mrf.mxu0
      %v852 = vadd.f32 0.0, %v851
      %v853 = vpop.f32.mrf.mxu0
      %854 = vdwg.mxu0
      %v863 = vunpack.c.l.b16 %v801
      %v864 = vunpack.c.l.b16 %v802
      %v865 = vunpack.c.l.b16 %v803
      %v866 = vunpack.c.l.b16 %v804
      %v867 = vunpack.c.l.b16 %v805
      %v868 = vunpack.c.l.b16 %v806
      %v869 = vunpack.c.l.b16 %v807
      %v870 = vunpack.c.l.b16 %v808
      %v871 = vpack.c.b16 %v864, %v863
      %v872 = vpack.c.b16 %v866, %v865
      %v873 = vpack.c.b16 %v868, %v867
      %v874 = vpack.c.b16 %v870, %v869
      %879 = vmatpush.bf16.msra.mxu0 0
      %880 = vmatpush.bf16.msra.mxu0 0
      %881 = vmatpush.bf16.msra.mxu0 0
      %882 = vmatpush.bf16.msra.mxu0 0
      %883 = vmatpush.bf16.msra.mxu0 %v874
      %884 = vmatpush.bf16.msra.mxu0 %v873
      %885 = vmatpush.bf16.msra.mxu0 %v872
      %886 = vmatpush.bf16.msra.mxu0 %v871
      %887 = vmatmul.bf16.gmra.mxu0 %v644
      %v888 = vpop.f32.mrf.mxu0
      %v889 = vadd.f32 %v852, %v888
      %v890 = vpop.f32.mrf.mxu0
      %891 = vdwg.mxu0
      %s892 = scalar_lea.vmem %s7, 2
      %v893 = vld [vmem:[%s892] sm:$0x1]
      %v895 = vperm.slane %v893, 0
      %v897 = vadd.f32 %v889, %v895
      %v898 = vtanh.pop %v897
      %s899 = scalar_lea.vmem %s5, 96
      %v900 = vld [vmem:[%s899] sm:$0xf]
      %v901 = vld [vmem:[%s899 + $0x4] sm:$0xf]
      %v902 = vld [vmem:[%s899 + $0x8] sm:$0xf]
      %v903 = vld [vmem:[%s899 + $0xc] sm:$0xf]
      %v904 = vld [vmem:[%s899 + $0x10] sm:$0xf]
      %v905 = vld [vmem:[%s899 + $0x14] sm:$0xf]
      %v906 = vld [vmem:[%s899 + $0x18] sm:$0xf]
      %v907 = vld [vmem:[%s899 + $0x1c] sm:$0xf]
      %s908 = scalar_lea.vmem %s6, 96
      %v909 = vld [vmem:[%s908] sm:$0xf]
      %v910 = vld [vmem:[%s908 + $0x4] sm:$0xf]
      %v911 = vld [vmem:[%s908 + $0x8] sm:$0xf]
      %v912 = vld [vmem:[%s908 + $0xc] sm:$0xf]
      %v913 = vld [vmem:[%s908 + $0x10] sm:$0xf]
      %v914 = vld [vmem:[%s908 + $0x14] sm:$0xf]
      %v915 = vld [vmem:[%s908 + $0x18] sm:$0xf]
      %v916 = vld [vmem:[%s908 + $0x1c] sm:$0xf]
      %v925 = vunpack.c.l.b16 %v909
      %v926 = vunpack.c.l.b16 %v910
      %v927 = vunpack.c.l.b16 %v911
      %v928 = vunpack.c.l.b16 %v912
      %v929 = vunpack.c.l.b16 %v913
      %v930 = vunpack.c.l.b16 %v914
      %v931 = vunpack.c.l.b16 %v915
      %v932 = vunpack.c.l.b16 %v916
      %v933 = vpack.c.b16 %v926, %v925
      %v934 = vpack.c.b16 %v928, %v927
      %v935 = vpack.c.b16 %v930, %v929
      %v936 = vpack.c.b16 %v932, %v931
      %941 = vmatpush.bf16.msra.mxu0 0
      %942 = vmatpush.bf16.msra.mxu0 0
      %943 = vmatpush.bf16.msra.mxu0 0
      %944 = vmatpush.bf16.msra.mxu0 0
      %945 = vmatpush.bf16.msra.mxu0 %v936
      %946 = vmatpush.bf16.msra.mxu0 %v935
      %947 = vmatpush.bf16.msra.mxu0 %v934
      %948 = vmatpush.bf16.msra.mxu0 %v933
      %949 = vmatmul.bf16.gmra.mxu0 %v604
      %v950 = vpop.f32.mrf.mxu0
      %v951 = vadd.f32 0.0, %v950
      %v952 = vpop.f32.mrf.mxu0
      %953 = vdwg.mxu0
      %v962 = vunpack.c.l.b16 %v900
      %v963 = vunpack.c.l.b16 %v901
      %v964 = vunpack.c.l.b16 %v902
      %v965 = vunpack.c.l.b16 %v903
      %v966 = vunpack.c.l.b16 %v904
      %v967 = vunpack.c.l.b16 %v905
      %v968 = vunpack.c.l.b16 %v906
      %v969 = vunpack.c.l.b16 %v907
      %v970 = vpack.c.b16 %v963, %v962
      %v971 = vpack.c.b16 %v965, %v964
      %v972 = vpack.c.b16 %v967, %v966
      %v973 = vpack.c.b16 %v969, %v968
      %978 = vmatpush.bf16.msra.mxu0 0
      %979 = vmatpush.bf16.msra.mxu0 0
      %980 = vmatpush.bf16.msra.mxu0 0
      %981 = vmatpush.bf16.msra.mxu0 0
      %982 = vmatpush.bf16.msra.mxu0 %v973
      %983 = vmatpush.bf16.msra.mxu0 %v972
      %984 = vmatpush.bf16.msra.mxu0 %v971
      %985 = vmatpush.bf16.msra.mxu0 %v970
      %986 = vmatmul.bf16.gmra.mxu0 %v644
      %v987 = vpop.f32.mrf.mxu0
      %v988 = vadd.f32 %v951, %v987
      %v989 = vpop.f32.mrf.mxu0
      %990 = vdwg.mxu0
      %s991 = scalar_lea.vmem %s7, 3
      %v992 = vld [vmem:[%s991] sm:$0x1]
      %v994 = vperm.slane %v992, 0
      %v996 = vadd.f32 %v988, %v994
      %v997 = vxor.u32 %v996, 2147483648
      %v998 = vmul.f32 %v997, 1.442695
      %v999 = vpow.pop %v998
      %v1000 = vadd.f32 %v999, 1.0
      %v1001 = vrcp.pop %v1000
      %v1002 = vmul.f32 %v1000, %v1001
      %v1003 = vsub.f32 1.0, %v1002
      %v1004 = vmul.f32 %v1001, %v1003
      %v1005 = vadd.f32 %v1001, %v1004
      %vm1006 = vweird.f32 %v1000
      %vm1007 = vweird.f32 %v1001
      %vm1008 = vmor %vm1006, %vm1007
      %v1009 = vsel %vm1008, %v1001, %v1005
      %v1010 = vand.u32 2147483647, %v1000
      %vm1011 = vcmp.eq.f32.partialorder %v1010, 8.507059e+37
      %v1012 = vand.u32 %v1000, 2147483648
      %v1013 = vor.u32 1.1754944e-38, %v1012
      %v1014 = vsel %vm1011, %v1013, %v1009
      %v1015 = vmul.f32 1.0, %v1014
      %v1016 = vld [vmem:[#allocation3] sm:$0xff]
      %v1017 = vmul.f32 %v799, %v1016
      %v1018 = vmul.f32 %v682, %v898
      %v1019 = vadd.f32 %v1017, %v1018
      %v1020 = vtanh.pop %v1019
      %v1021 = vmul.f32 %v1015, %v1020
      %1022 = vst.msk [vmem:[#allocation3] sm:$0xff] %vm515, %v1019
      %1023 = vst.msk [vmem:[#allocation2] sm:$0xff] %vm515, %v1021
      %v1024 = vpack.c.bf16 %v1021, %v1021
      %vm1025 = vcmask 519168
      %1026 = vst.msk [vmem:[%s303] sm:$0xf] %vm1025, %v1024
      %p1027 = scmp.lt.s32.totalorder %s19, 2
      %s1028 = scalar_select %p1027, %s19, 2
      %s1029 = smul.addr %s1028, 4
      %s1030 = scalar_lea.vmem %s8, %s1029
      // Predicated region
      $region57: #{rcnn_forward.7} parent=51 // pred_check
        %p1031 = pneg %p210
      $region58: #{rcnn_forward.7} parent=51 // pred_check_branch
        %1033 = sbr.rel (%p1031) target = $region60
      $region59: #{rcnn_forward.7} parent=51 // pred_region
        _
      $region60: #{rcnn_forward.7} parent=51 // pred_fallthru
        _
    $region52: #{rcnn_forward.7} parent=5 // pred_fallthru
      _
    %p1034 = scmp.le.s32.totalorder 2, %s14
    // Predicated region
    $region61: #{rcnn_forward.7} parent=5 // pred_check
      %p1035 = pneg %p1034
    $region62: #{rcnn_forward.7} parent=5 // pred_check_branch
      %1037 = sbr.rel (%p1035) target = $region64
    $region63: #{rcnn_forward.7} parent=5 // pred_region
      %s1038 = ssub.s32 %s14, 2
      // Predicated region
      $region65: #{rcnn_forward.7} parent=63 // pred_check
        %p1039 = pneg %p216
      $region66: #{rcnn_forward.7} parent=63 // pred_check_branch
        %1041 = sbr.rel (%p1039) target = $region68
      $region67: #{rcnn_forward.7} parent=63 // pred_region
        %p1042 = scmp.lt.s32.totalorder %s20, 2
        %s1043 = scalar_select %p1042, %s20, 2
        %s1044 = smul.addr %s1043, 4
        %s1045 = scalar_lea.vmem %s8, %s1044
      $region68: #{rcnn_forward.7} parent=63 // pred_fallthru
        _
    $region64: #{rcnn_forward.7} parent=5 // pred_fallthru
      _
  $region6: #{rcnn_forward.7} parent=0 // loop_footer
    %s18 = sadd.s32 1, %s14
  $region7: #{rcnn_forward.7} parent=0 // loop_footer_branch
    %13 = sbr.rel target = $region3
  $region8: #{rcnn_forward.7} parent=0 // loop_exit
    _

// kernel: rcnn_forward.8
$region0: #{rcnn_forward.8}
  #allocation0 [shape = 'u32[]', space=smem, size = 0x4, offset = 0x4, fixed_abs, tag = 'smem constant byte address 0x4 - core index']
  #allocation1 [shape = 'u32[72,128]{1,0:T(1,128)}', space=vmem, size = 0x9000, scoped, tag = 'internal scratch']
  #allocation2 [shape = 'f32[2,128]{1,0:T(2,128)}', space=vmem, size = 0x400, scoped, tag = 'scratch operand']
  #allocation3 [shape = 'f32[2,128]{1,0:T(2,128)}', space=vmem, size = 0x400, scoped, tag = 'scratch operand']
  %s0 = inlined_call_operand.vmem [shape: bf16[3,2,576], index: 0, kind: input, shape index: {}]
  %s1 = inlined_call_operand.vmem [shape: bf16[576,128], index: 1, kind: input, shape index: {}]
  %s2 = inlined_call_operand.vmem [shape: f32[1,128], index: 2, kind: input, shape index: {}]
  %s3 = inlined_call_operand.vmem [shape: f32[1,128], index: 3, kind: input, shape index: {}]
  %s4 = inlined_call_operand.vmem [shape: f32[1,128], index: 4, kind: input, shape index: {}]
  %s5 = inlined_call_operand.vmem [shape: bf16[4,128,128], index: 5, kind: input, shape index: {}]
  %s6 = inlined_call_operand.vmem [shape: bf16[4,128,128], index: 6, kind: input, shape index: {}]
  %s7 = inlined_call_operand.vmem [shape: f32[4,1,128], index: 7, kind: input, shape index: {}]
  %s8 = inlined_call_operand.vmem [shape: bf16[3,2,128], index: 8, kind: output, shape index: {}]
  %s9 = sld [smem:[#allocation0]]
  $region69: #{rcnn_forward.8} parent=0
    _
  %s11 = ssub.s32 1, %s9
  %s12 = scalar_select 0, %s11, %s9
  loop: start=0, step=1, limit=5
  $region2: #{rcnn_forward.8} parent=0 // loop_pre_header
    _
  $region3: #{rcnn_forward.8} parent=0 // loop_header
    %s14 = sphi 0, %s18
    %p15 = scmp.ge.s32.totalorder %s14, 5
    %s24 = sphi 0, %s26
    %s27 = sphi 0, %s24
    %s28 = sphi 0, %s27
    %s44 = sphi 0, %s28
    %s48 = sphi 0, %s48
    %s50 = sphi 0, %s48
    %s51 = sphi 0, %s50
    %s65 = sphi 0, %s51
    %s69 = sphi 0, %s69
    %s71 = sphi 0, %s69
    %s72 = sphi 0, %s71
    %s86 = sphi 0, %s72
    %s90 = sphi 0, %s90
    %s92 = sphi 0, %s90
    %s93 = sphi 0, %s92
    %s107 = sphi 0, %s93
    %s111 = sphi 0, %s111
    %s113 = sphi 0, %s111
    %s114 = sphi 0, %s113
    %s128 = sphi 0, %s114
    %s132 = sphi 0, %s132
    %s134 = sphi 0, %s132
    %s135 = sphi 0, %s134
    %s149 = sphi 0, %s135
    %s153 = sphi 0, %s153
    %s155 = sphi 0, %s153
    %s156 = sphi 0, %s155
    %s170 = sphi 0, %s156
    %s174 = sphi 0, %s174
    %s176 = sphi 0, %s174
    %s177 = sphi 0, %s176
    %s191 = sphi 0, %s177
    %s197 = sphi 0, %s199
    %s200 = sphi 0, %s197
    %s201 = sphi 0, %s200
    %s217 = sphi 0, %s201
  $region4: #{rcnn_forward.8} parent=0 // loop_header_branch
    %17 = sbr.rel (%p15) target = $region8
  $region5: #{rcnn_forward.8} parent=0 // loop_body
    %s19 = ssub.s32 %s14, 1
    %s20 = ssub.s32 %s14, 2
    %s21 = sadd.s32 %s14, 1
    %s22 = ssub.s32 %s14, %s21
    %p23 = scmp.eq.s32.totalorder %s22, 0
    %s25 = sadd.s32 %s24, 1
    %s26 = scalar_select %p23, %s24, %s25
    %p29 = pneg %p23
    %p30 = scmp.eq.s32.totalorder %s14, 2
    %p31 = por %p29, %p30
    %p32 = scmp.ne.s32.totalorder %s24, %s27
    %p33 = scmp.eq.s32.totalorder %s14, 0
    %p34 = por %p32, %p33
    %p35 = scmp.ne.s32.totalorder %s24, %s27
    %p36 = scmp.eq.s32.totalorder %s19, 2
    %p37 = por %p35, %p36
    %p38 = scmp.ne.s32.totalorder %s27, %s28
    %p39 = scmp.eq.s32.totalorder %s19, 0
    %p40 = por %p38, %p39
    %p41 = scmp.ne.s32.totalorder %s27, %s28
    %p42 = scmp.eq.s32.totalorder %s20, 2
    %p43 = por %p41, %p42
    %p45 = scmp.ne.s32.totalorder %s28, %s44
    %p46 = scmp.eq.s32.totalorder %s20, 0
    %p47 = por %p45, %p46
    %s49 = sadd.s32 %s48, 1
    %p52 = scmp.eq.s32.totalorder %s14, 2
    %p53 = scmp.ne.s32.totalorder %s48, %s50
    %p54 = scmp.eq.s32.totalorder %s14, 0
    %p55 = por %p53, %p54
    %p56 = scmp.ne.s32.totalorder %s48, %s50
    %p57 = scmp.eq.s32.totalorder %s19, 2
    %p58 = por %p56, %p57
    %p59 = scmp.ne.s32.totalorder %s50, %s51
    %p60 = scmp.eq.s32.totalorder %s19, 0
    %p61 = por %p59, %p60
    %p62 = scmp.ne.s32.totalorder %s50, %s51
    %p63 = scmp.eq.s32.totalorder %s20, 2
    %p64 = por %p62, %p63
    %p66 = scmp.ne.s32.totalorder %s51, %s65
    %p67 = scmp.eq.s32.totalorder %s20, 0
    %p68 = por %p66, %p67
    %s70 = sadd.s32 %s69, 1
    %p73 = scmp.eq.s32.totalorder %s14, 2
    %p74 = scmp.ne.s32.totalorder %s69, %s71
    %p75 = scmp.eq.s32.totalorder %s14, 0
    %p76 = por %p74, %p75
    %p77 = scmp.ne.s32.totalorder %s69, %s71
    %p78 = scmp.eq.s32.totalorder %s19, 2
    %p79 = por %p77, %p78
    %p80 = scmp.ne.s32.totalorder %s71, %s72
    %p81 = scmp.eq.s32.totalorder %s19, 0
    %p82 = por %p80, %p81
    %p83 = scmp.ne.s32.totalorder %s71, %s72
    %p84 = scmp.eq.s32.totalorder %s20, 2
    %p85 = por %p83, %p84
    %p87 = scmp.ne.s32.totalorder %s72, %s86
    %p88 = scmp.eq.s32.totalorder %s20, 0
    %p89 = por %p87, %p88
    %s91 = sadd.s32 %s90, 1
    %p94 = scmp.eq.s32.totalorder %s14, 2
    %p95 = scmp.ne.s32.totalorder %s90, %s92
    %p96 = scmp.eq.s32.totalorder %s14, 0
    %p97 = por %p95, %p96
    %p98 = scmp.ne.s32.totalorder %s90, %s92
    %p99 = scmp.eq.s32.totalorder %s19, 2
    %p100 = por %p98, %p99
    %p101 = scmp.ne.s32.totalorder %s92, %s93
    %p102 = scmp.eq.s32.totalorder %s19, 0
    %p103 = por %p101, %p102
    %p104 = scmp.ne.s32.totalorder %s92, %s93
    %p105 = scmp.eq.s32.totalorder %s20, 2
    %p106 = por %p104, %p105
    %p108 = scmp.ne.s32.totalorder %s93, %s107
    %p109 = scmp.eq.s32.totalorder %s20, 0
    %p110 = por %p108, %p109
    %s112 = sadd.s32 %s111, 1
    %p115 = scmp.eq.s32.totalorder %s14, 2
    %p116 = scmp.ne.s32.totalorder %s111, %s113
    %p117 = scmp.eq.s32.totalorder %s14, 0
    %p118 = por %p116, %p117
    %p119 = scmp.ne.s32.totalorder %s111, %s113
    %p120 = scmp.eq.s32.totalorder %s19, 2
    %p121 = por %p119, %p120
    %p122 = scmp.ne.s32.totalorder %s113, %s114
    %p123 = scmp.eq.s32.totalorder %s19, 0
    %p124 = por %p122, %p123
    %p125 = scmp.ne.s32.totalorder %s113, %s114
    %p126 = scmp.eq.s32.totalorder %s20, 2
    %p127 = por %p125, %p126
    %p129 = scmp.ne.s32.totalorder %s114, %s128
    %p130 = scmp.eq.s32.totalorder %s20, 0
    %p131 = por %p129, %p130
    %s133 = sadd.s32 %s132, 1
    %p136 = scmp.eq.s32.totalorder %s14, 2
    %p137 = scmp.ne.s32.totalorder %s132, %s134
    %p138 = scmp.eq.s32.totalorder %s14, 0
    %p139 = por %p137, %p138
    %p140 = scmp.ne.s32.totalorder %s132, %s134
    %p141 = scmp.eq.s32.totalorder %s19, 2
    %p142 = por %p140, %p141
    %p143 = scmp.ne.s32.totalorder %s134, %s135
    %p144 = scmp.eq.s32.totalorder %s19, 0
    %p145 = por %p143, %p144
    %p146 = scmp.ne.s32.totalorder %s134, %s135
    %p147 = scmp.eq.s32.totalorder %s20, 2
    %p148 = por %p146, %p147
    %p150 = scmp.ne.s32.totalorder %s135, %s149
    %p151 = scmp.eq.s32.totalorder %s20, 0
    %p152 = por %p150, %p151
    %s154 = sadd.s32 %s153, 1
    %p157 = scmp.eq.s32.totalorder %s14, 2
    %p158 = scmp.ne.s32.totalorder %s153, %s155
    %p159 = scmp.eq.s32.totalorder %s14, 0
    %p160 = por %p158, %p159
    %p161 = scmp.ne.s32.totalorder %s153, %s155
    %p162 = scmp.eq.s32.totalorder %s19, 2
    %p163 = por %p161, %p162
    %p164 = scmp.ne.s32.totalorder %s155, %s156
    %p165 = scmp.eq.s32.totalorder %s19, 0
    %p166 = por %p164, %p165
    %p167 = scmp.ne.s32.totalorder %s155, %s156
    %p168 = scmp.eq.s32.totalorder %s20, 2
    %p169 = por %p167, %p168
    %p171 = scmp.ne.s32.totalorder %s156, %s170
    %p172 = scmp.eq.s32.totalorder %s20, 0
    %p173 = por %p171, %p172
    %s175 = sadd.s32 %s174, 1
    %p178 = scmp.eq.s32.totalorder %s14, 2
    %p179 = scmp.ne.s32.totalorder %s174, %s176
    %p180 = scmp.eq.s32.totalorder %s14, 0
    %p181 = por %p179, %p180
    %p182 = scmp.ne.s32.totalorder %s174, %s176
    %p183 = scmp.eq.s32.totalorder %s19, 2
    %p184 = por %p182, %p183
    %p185 = scmp.ne.s32.totalorder %s176, %s177
    %p186 = scmp.eq.s32.totalorder %s19, 0
    %p187 = por %p185, %p186
    %p188 = scmp.ne.s32.totalorder %s176, %s177
    %p189 = scmp.eq.s32.totalorder %s20, 2
    %p190 = por %p188, %p189
    %p192 = scmp.ne.s32.totalorder %s177, %s191
    %p193 = scmp.eq.s32.totalorder %s20, 0
    %p194 = por %p192, %p193
    %s195 = ssub.s32 %s14, %s21
    %p196 = scmp.eq.s32.totalorder %s195, 0
    %s198 = sadd.s32 %s197, 1
    %s199 = scalar_select %p196, %s197, %s198
    %p202 = pneg %p196
    %p203 = scmp.eq.s32.totalorder %s14, 2
    %p204 = por %p202, %p203
    %p205 = scmp.ne.s32.totalorder %s197, %s200
    %p206 = scmp.eq.s32.totalorder %s14, 0
    %p207 = por %p205, %p206
    %p208 = scmp.ne.s32.totalorder %s197, %s200
    %p209 = scmp.eq.s32.totalorder %s19, 2
    %p210 = por %p208, %p209
    %p211 = scmp.ne.s32.totalorder %s200, %s201
    %p212 = scmp.eq.s32.totalorder %s19, 0
    %p213 = por %p211, %p212
    %p214 = scmp.ne.s32.totalorder %s200, %s201
    %p215 = scmp.eq.s32.totalorder %s20, 2
    %p216 = por %p214, %p215
    %p218 = scmp.ne.s32.totalorder %s201, %s217
    %p219 = scmp.eq.s32.totalorder %s20, 0
    %p220 = por %p218, %p219
    %p221 = scmp.le.s32.totalorder 1, %s14
    %p222 = scmp.lt.s32.totalorder %s14, 4
    %p223 = pnand %p221, %p222
    %p224 = pneg %p223
    // Predicated region
    $region9: #{rcnn_forward.8} parent=5 // pred_check
      _
    $region10: #{rcnn_forward.8} parent=5 // pred_check_branch
      %226 = sbr.rel (%p223) target = $region12
    $region11: #{rcnn_forward.8} parent=5 // pred_region
      %s227 = ssub.s32 %s14, 1
      // Predicated region
      $region13: #{rcnn_forward.8} parent=11 // pred_check
        %p228 = pneg %p61
      $region14: #{rcnn_forward.8} parent=11 // pred_check_branch
        %230 = sbr.rel (%p228) target = $region16
      $region15: #{rcnn_forward.8} parent=11 // pred_region
        _
      $region16: #{rcnn_forward.8} parent=11 // pred_fallthru
        _
      // Predicated region
      $region17: #{rcnn_forward.8} parent=11 // pred_check
        %p231 = pneg %p82
      $region18: #{rcnn_forward.8} parent=11 // pred_check_branch
        %233 = sbr.rel (%p231) target = $region20
      $region19: #{rcnn_forward.8} parent=11 // pred_region
        _
      $region20: #{rcnn_forward.8} parent=11 // pred_fallthru
        _
      // Predicated region
      $region21: #{rcnn_forward.8} parent=11 // pred_check
        %p234 = pneg %p103
      $region22: #{rcnn_forward.8} parent=11 // pred_check_branch
        %236 = sbr.rel (%p234) target = $region24
      $region23: #{rcnn_forward.8} parent=11 // pred_region
        _
      $region24: #{rcnn_forward.8} parent=11 // pred_fallthru
        _
      // Predicated region
      $region25: #{rcnn_forward.8} parent=11 // pred_check
        %p237 = pneg %p124
      $region26: #{rcnn_forward.8} parent=11 // pred_check_branch
        %239 = sbr.rel (%p237) target = $region28
      $region27: #{rcnn_forward.8} parent=11 // pred_region
        _
      $region28: #{rcnn_forward.8} parent=11 // pred_fallthru
        _
      // Predicated region
      $region29: #{rcnn_forward.8} parent=11 // pred_check
        %p240 = pneg %p145
      $region30: #{rcnn_forward.8} parent=11 // pred_check_branch
        %242 = sbr.rel (%p240) target = $region32
      $region31: #{rcnn_forward.8} parent=11 // pred_region
        _
      $region32: #{rcnn_forward.8} parent=11 // pred_fallthru
        _
      // Predicated region
      $region33: #{rcnn_forward.8} parent=11 // pred_check
        %p243 = pneg %p166
      $region34: #{rcnn_forward.8} parent=11 // pred_check_branch
        %245 = sbr.rel (%p243) target = $region36
      $region35: #{rcnn_forward.8} parent=11 // pred_region
        _
      $region36: #{rcnn_forward.8} parent=11 // pred_fallthru
        _
      // Predicated region
      $region37: #{rcnn_forward.8} parent=11 // pred_check
        %p246 = pneg %p187
      $region38: #{rcnn_forward.8} parent=11 // pred_check_branch
        %248 = sbr.rel (%p246) target = $region40
      $region39: #{rcnn_forward.8} parent=11 // pred_region
        _
      $region40: #{rcnn_forward.8} parent=11 // pred_fallthru
        _
    $region12: #{rcnn_forward.8} parent=5 // pred_fallthru
      _
    %p249 = scmp.lt.s32.totalorder %s14, 3
    // Predicated region
    $region41: #{rcnn_forward.8} parent=5 // pred_check
      %p250 = pneg %p249
    $region42: #{rcnn_forward.8} parent=5 // pred_check_branch
      %252 = sbr.rel (%p250) target = $region44
    $region43: #{rcnn_forward.8} parent=5 // pred_region
      // Predicated region
      $region45: #{rcnn_forward.8} parent=43 // pred_check
        %p253 = pneg %p34
      $region46: #{rcnn_forward.8} parent=43 // pred_check_branch
        %255 = sbr.rel (%p253) target = $region48
      $region47: #{rcnn_forward.8} parent=43 // pred_region
        %p256 = scmp.lt.s32.totalorder %s14, 2
        %s257 = scalar_select %p256, %s14, 2
        %s258 = smul.addr %s257, 5
        %s259 = scalar_lea.vmem %s0, %s258
      $region48: #{rcnn_forward.8} parent=43 // pred_fallthru
        _
    $region44: #{rcnn_forward.8} parent=5 // pred_fallthru
      _
    %p260 = scmp.le.s32.totalorder 1, %s14
    %p261 = scmp.lt.s32.totalorder %s14, 4
    %p262 = pnand %p260, %p261
    %p263 = pneg %p262
    // Predicated region
    $region49: #{rcnn_forward.8} parent=5 // pred_check
      _
    $region50: #{rcnn_forward.8} parent=5 // pred_check_branch
      %265 = sbr.rel (%p262) target = $region52
    $region51: #{rcnn_forward.8} parent=5 // pred_region
      %s266 = ssub.s32 %s14, 1
      %p267 = scmp.lt.s32.totalorder %s19, 2
      %s268 = scalar_select %p267, %s19, 2
      %s269 = smul.addr %s268, 5
      %s270 = scalar_lea.vmem %s0, %s269
      %p271 = pneg %p40
      %p272 = pneg %p37
      %p273 = pneg %p61
      %p274 = pneg %p58
      %p275 = pneg %p82
      %p276 = pneg %p79
      %p277 = pneg %p103
      %p278 = pneg %p100
      %p279 = pneg %p124
      %p280 = pneg %p121
      %p281 = pneg %p145
      %p282 = pneg %p142
      %p283 = pneg %p166
      %p284 = pneg %p163
      %p285 = pneg %p187
      %p286 = pneg %p184
      %p287 = pneg %p213
      %p288 = pneg %p210
      %p289 = scmp.lt.s32.totalorder %s19, 2
      %s290 = scalar_select %p289, %s19, 2
      %s291 = scalar_lea.vmem %s8, %s290
      %p292 = scmp.lt.s32.totalorder %s19, 2
      %s293 = scalar_select %p292, %s19, 2
      %s294 = smul.addr %s293, 5
      %s295 = scalar_lea.vmem %s0, %s294
      %p296 = scmp.lt.s32.totalorder %s19, 2
      %s297 = scalar_select %p296, %s19, 2
      %s298 = scalar_lea.vmem %s8, %s297
      %p300 = scmp.eq.s32.totalorder %s19, 0
      // Predicated region
      $region53: #{rcnn_forward.8} parent=51 // pred_check
        %p301 = pneg %p300
      $region54: #{rcnn_forward.8} parent=51 // pred_check_branch
        %303 = sbr.rel (%p301) target = $region56
      $region55: #{rcnn_forward.8} parent=51 // pred_region
        %304 = vst [vmem:[#allocation2] sm:$0x3] 0.0
        %305 = vst [vmem:[#allocation3] sm:$0x3] 0.0
      $region56: #{rcnn_forward.8} parent=51 // pred_fallthru
        _
      %v306 = vld [vmem:[%s295] sm:$0x1f]
      %v307 = vld [vmem:[%s1] sm:$0xf]
      %v308 = vld [vmem:[%s1 + $0x4] sm:$0xf]
      %v309 = vld [vmem:[%s1 + $0x8] sm:$0xf]
      %v310 = vld [vmem:[%s1 + $0xc] sm:$0xf]
      %v311 = vld [vmem:[%s1 + $0x10] sm:$0xf]
      %v312 = vld [vmem:[%s1 + $0x14] sm:$0xf]
      %v313 = vld [vmem:[%s1 + $0x18] sm:$0xf]
      %v314 = vld [vmem:[%s1 + $0x1c] sm:$0xf]
      %v315 = vld [vmem:[%s1 + $0x20] sm:$0xf]
      %v316 = vld [vmem:[%s1 + $0x24] sm:$0xf]
      %v317 = vld [vmem:[%s1 + $0x28] sm:$0xf]
      %v318 = vld [vmem:[%s1 + $0x2c] sm:$0xf]
      %v319 = vld [vmem:[%s1 + $0x30] sm:$0xf]
      %v320 = vld [vmem:[%s1 + $0x34] sm:$0xf]
      %v321 = vld [vmem:[%s1 + $0x38] sm:$0xf]
      %v322 = vld [vmem:[%s1 + $0x3c] sm:$0xf]
      %v323 = vld [vmem:[%s1 + $0x40] sm:$0xf]
      %v324 = vld [vmem:[%s1 + $0x44] sm:$0xf]
      %v325 = vld [vmem:[%s1 + $0x48] sm:$0xf]
      %v326 = vld [vmem:[%s1 + $0x4c] sm:$0xf]
      %v327 = vld [vmem:[%s1 + $0x50] sm:$0xf]
      %v328 = vld [vmem:[%s1 + $0x54] sm:$0xf]
      %v329 = vld [vmem:[%s1 + $0x58] sm:$0xf]
      %v330 = vld [vmem:[%s1 + $0x5c] sm:$0xf]
      %v331 = vld [vmem:[%s1 + $0x60] sm:$0xf]
      %v332 = vld [vmem:[%s1 + $0x64] sm:$0xf]
      %v333 = vld [vmem:[%s1 + $0x68] sm:$0xf]
      %v334 = vld [vmem:[%s1 + $0x6c] sm:$0xf]
      %v335 = vld [vmem:[%s1 + $0x70] sm:$0xf]
      %v336 = vld [vmem:[%s1 + $0x74] sm:$0xf]
      %v337 = vld [vmem:[%s1 + $0x78] sm:$0xf]
      %v338 = vld [vmem:[%s1 + $0x7c] sm:$0xf]
      %v339 = vld [vmem:[%s1 + $0x80] sm:$0xf]
      %v340 = vld [vmem:[%s1 + $0x84] sm:$0xf]
      %v341 = vld [vmem:[%s1 + $0x88] sm:$0xf]
      %v342 = vld [vmem:[%s1 + $0x8c] sm:$0xf]
      %v343 = vld [vmem:[%s1 + $0x90] sm:$0xf]
      %v344 = vld [vmem:[%s1 + $0x94] sm:$0xf]
      %v345 = vld [vmem:[%s1 + $0x98] sm:$0xf]
      %v346 = vld [vmem:[%s1 + $0x9c] sm:$0xf]
      %v347 = vld [vmem:[%s1 + $0xa0] sm:$0xf]
      %v348 = vld [vmem:[%s1 + $0xa4] sm:$0xf]
      %v349 = vld [vmem:[%s1 + $0xa8] sm:$0xf]
      %v350 = vld [vmem:[%s1 + $0xac] sm:$0xf]
      %v351 = vld [vmem:[%s1 + $0xb0] sm:$0xf]
      %v352 = vld [vmem:[%s1 + $0xb4] sm:$0xf]
      %v353 = vld [vmem:[%s1 + $0xb8] sm:$0xf]
      %v354 = vld [vmem:[%s1 + $0xbc] sm:$0xf]
      %v355 = vld [vmem:[%s1 + $0xc0] sm:$0xf]
      %v356 = vld [vmem:[%s1 + $0xc4] sm:$0xf]
      %v357 = vld [vmem:[%s1 + $0xc8] sm:$0xf]
      %v358 = vld [vmem:[%s1 + $0xcc] sm:$0xf]
      %v359 = vld [vmem:[%s1 + $0xd0] sm:$0xf]
      %v360 = vld [vmem:[%s1 + $0xd4] sm:$0xf]
      %v361 = vld [vmem:[%s1 + $0xd8] sm:$0xf]
      %v362 = vld [vmem:[%s1 + $0xdc] sm:$0xf]
      %v363 = vld [vmem:[%s1 + $0xe0] sm:$0xf]
      %v364 = vld [vmem:[%s1 + $0xe4] sm:$0xf]
      %v365 = vld [vmem:[%s1 + $0xe8] sm:$0xf]
      %v366 = vld [vmem:[%s1 + $0xec] sm:$0xf]
      %v367 = vld [vmem:[%s1 + $0xf0] sm:$0xf]
      %v368 = vld [vmem:[%s1 + $0xf4] sm:$0xf]
      %v369 = vld [vmem:[%s1 + $0xf8] sm:$0xf]
      %v370 = vld [vmem:[%s1 + $0xfc] sm:$0xf]
      %v371 = vld [vmem:[%s1 + $0x100] sm:$0xf]
      %v372 = vld [vmem:[%s1 + $0x104] sm:$0xf]
      %v373 = vld [vmem:[%s1 + $0x108] sm:$0xf]
      %v374 = vld [vmem:[%s1 + $0x10c] sm:$0xf]
      %v375 = vld [vmem:[%s1 + $0x110] sm:$0xf]
      %v376 = vld [vmem:[%s1 + $0x114] sm:$0xf]
      %v377 = vld [vmem:[%s1 + $0x118] sm:$0xf]
      %v378 = vld [vmem:[%s1 + $0x11c] sm:$0xf]
      %v379 = vld [vmem:[%s2] sm:$0x1]
      %v381 = vperm.slane %v379, 0
      %384 = vst [vmem:[#allocation1] ss:$9 sm:$0xff] %v306
      %v385 = vld [vmem:[#allocation1] sm:$0xff]
      %v386 = vld [vmem:[#allocation1 + $0x9] sm:$0xff]
      %v387 = vld [vmem:[#allocation1 + $0x12] sm:$0xff]
      %v388 = vld [vmem:[#allocation1 + $0x1b] sm:$0xff]
      %v389 = vld [vmem:[#allocation1 + $0x24] sm:$0xff]
      %v466 = vunpack.c.l.b16 %v307
      %v467 = vunpack.c.l.b16 %v308
      %v468 = vunpack.c.l.b16 %v309
      %v469 = vunpack.c.l.b16 %v310
      %v470 = vunpack.c.l.b16 %v311
      %v471 = vunpack.c.l.b16 %v312
      %v472 = vunpack.c.l.b16 %v313
      %v473 = vunpack.c.l.b16 %v314
      %v474 = vunpack.c.l.b16 %v315
      %v475 = vunpack.c.l.b16 %v316
      %v476 = vunpack.c.l.b16 %v317
      %v477 = vunpack.c.l.b16 %v318
      %v478 = vunpack.c.l.b16 %v319
      %v479 = vunpack.c.l.b16 %v320
      %v480 = vunpack.c.l.b16 %v321
      %v481 = vunpack.c.l.b16 %v322
      %v482 = vunpack.c.l.b16 %v323
      %v483 = vunpack.c.l.b16 %v324
      %v484 = vunpack.c.l.b16 %v325
      %v485 = vunpack.c.l.b16 %v326
      %v486 = vunpack.c.l.b16 %v327
      %v487 = vunpack.c.l.b16 %v328
      %v488 = vunpack.c.l.b16 %v329
      %v489 = vunpack.c.l.b16 %v330
      %v490 = vunpack.c.l.b16 %v331
      %v491 = vunpack.c.l.b16 %v332
      %v492 = vunpack.c.l.b16 %v333
      %v493 = vunpack.c.l.b16 %v334
      %v494 = vunpack.c.l.b16 %v335
      %v495 = vunpack.c.l.b16 %v336
      %v496 = vunpack.c.l.b16 %v337
      %v497 = vunpack.c.l.b16 %v338
      %v498 = vunpack.c.l.b16 %v339
      %v499 = vunpack.c.l.b16 %v340
      %v500 = vunpack.c.l.b16 %v341
      %v501 = vunpack.c.l.b16 %v342
      %v502 = vunpack.c.l.b16 %v343
      %v503 = vunpack.c.l.b16 %v344
      %v504 = vunpack.c.l.b16 %v345
      %v505 = vunpack.c.l.b16 %v346
      %v506 = vunpack.c.l.b16 %v347
      %v507 = vunpack.c.l.b16 %v348
      %v508 = vunpack.c.l.b16 %v349
      %v509 = vunpack.c.l.b16 %v350
      %v510 = vunpack.c.l.b16 %v351
      %v511 = vunpack.c.l.b16 %v352
      %v512 = vunpack.c.l.b16 %v353
      %v513 = vunpack.c.l.b16 %v354
      %v514 = vunpack.c.l.b16 %v355
      %v515 = vunpack.c.l.b16 %v356
      %v516 = vunpack.c.l.b16 %v357
      %v517 = vunpack.c.l.b16 %v358
      %v518 = vunpack.c.l.b16 %v359
      %v519 = vunpack.c.l.b16 %v360
      %v520 = vunpack.c.l.b16 %v361
      %v521 = vunpack.c.l.b16 %v362
      %v522 = vunpack.c.l.b16 %v363
      %v523 = vunpack.c.l.b16 %v364
      %v524 = vunpack.c.l.b16 %v365
      %v525 = vunpack.c.l.b16 %v366
      %v526 = vunpack.c.l.b16 %v367
      %v527 = vunpack.c.l.b16 %v368
      %v528 = vunpack.c.l.b16 %v369
      %v529 = vunpack.c.l.b16 %v370
      %v530 = vunpack.c.l.b16 %v371
      %v531 = vunpack.c.l.b16 %v372
      %v532 = vunpack.c.l.b16 %v373
      %v533 = vunpack.c.l.b16 %v374
      %v534 = vunpack.c.l.b16 %v375
      %v535 = vunpack.c.l.b16 %v376
      %v536 = vunpack.c.l.b16 %v377
      %v537 = vunpack.c.l.b16 %v378
      %v538 = vpack.c.b16 %v467, %v466
      %v539 = vpack.c.b16 %v469, %v468
      %v540 = vpack.c.b16 %v471, %v470
      %v541 = vpack.c.b16 %v473, %v472
      %v542 = vpack.c.b16 %v475, %v474
      %v543 = vpack.c.b16 %v477, %v476
      %v544 = vpack.c.b16 %v479, %v478
      %v545 = vpack.c.b16 %v481, %v480
      %v546 = vpack.c.b16 %v483, %v482
      %v547 = vpack.c.b16 %v485, %v484
      %v548 = vpack.c.b16 %v487, %v486
      %v549 = vpack.c.b16 %v489, %v488
      %v550 = vpack.c.b16 %v491, %v490
      %v551 = vpack.c.b16 %v493, %v492
      %v552 = vpack.c.b16 %v495, %v494
      %v553 = vpack.c.b16 %v497, %v496
      %v554 = vpack.c.b16 %v499, %v498
      %v555 = vpack.c.b16 %v501, %v500
      %v556 = vpack.c.b16 %v503, %v502
      %v557 = vpack.c.b16 %v505, %v504
      %v558 = vpack.c.b16 %v507, %v506
      %v559 = vpack.c.b16 %v509, %v508
      %v560 = vpack.c.b16 %v511, %v510
      %v561 = vpack.c.b16 %v513, %v512
      %v562 = vpack.c.b16 %v515, %v514
      %v563 = vpack.c.b16 %v517, %v516
      %v564 = vpack.c.b16 %v519, %v518
      %v565 = vpack.c.b16 %v521, %v520
      %v566 = vpack.c.b16 %v523, %v522
      %v567 = vpack.c.b16 %v525, %v524
      %v568 = vpack.c.b16 %v527, %v526
      %v569 = vpack.c.b16 %v529, %v528
      %v570 = vpack.c.b16 %v531, %v530
      %v571 = vpack.c.b16 %v533, %v532
      %v572 = vpack.c.b16 %v535, %v534
      %v573 = vpack.c.b16 %v537, %v536
      %vm610 = vcmask 523264
      %v611 = vsel %vm610, %v389, 0
      %613 = vmatpush.bf16.msra.mxu0 %v545
      %614 = vmatpush.bf16.msra.mxu0 %v544
      %615 = vmatpush.bf16.msra.mxu0 %v543
      %616 = vmatpush.bf16.msra.mxu0 %v542
      %617 = vmatpush.bf16.msra.mxu0 %v541
      %618 = vmatpush.bf16.msra.mxu0 %v540
      %619 = vmatpush.bf16.msra.mxu0 %v539
      %620 = vmatpush.bf16.msra.mxu0 %v538
      %621 = vmatmul.bf16.gmra.mxu0 %v385
      %v622 = vpop.f32.mrf.mxu0
      %v623 = vadd.f32 %v381, %v622
      %v624 = vpop.f32.mrf.mxu0
      %625 = vdwg.mxu0
      %626 = vmatpush.bf16.msra.mxu0 %v553
      %627 = vmatpush.bf16.msra.mxu0 %v552
      %628 = vmatpush.bf16.msra.mxu0 %v551
      %629 = vmatpush.bf16.msra.mxu0 %v550
      %630 = vmatpush.bf16.msra.mxu0 %v549
      %631 = vmatpush.bf16.msra.mxu0 %v548
      %632 = vmatpush.bf16.msra.mxu0 %v547
      %633 = vmatpush.bf16.msra.mxu0 %v546
      %634 = vmatmul.bf16.gmra.mxu0 %v386
      %v635 = vpop.f32.mrf.mxu0
      %v636 = vadd.f32 %v623, %v635
      %v637 = vpop.f32.mrf.mxu0
      %638 = vdwg.mxu0
      %639 = vmatpush.bf16.msra.mxu0 %v561
      %640 = vmatpush.bf16.msra.mxu0 %v560
      %641 = vmatpush.bf16.msra.mxu0 %v559
      %642 = vmatpush.bf16.msra.mxu0 %v558
      %643 = vmatpush.bf16.msra.mxu0 %v557
      %644 = vmatpush.bf16.msra.mxu0 %v556
      %645 = vmatpush.bf16.msra.mxu0 %v555
      %646 = vmatpush.bf16.msra.mxu0 %v554
      %647 = vmatmul.bf16.gmra.mxu0 %v387
      %v648 = vpop.f32.mrf.mxu0
      %v649 = vadd.f32 %v636, %v648
      %v650 = vpop.f32.mrf.mxu0
      %651 = vdwg.mxu0
      %652 = vmatpush.bf16.msra.mxu0 %v569
      %653 = vmatpush.bf16.msra.mxu0 %v568
      %654 = vmatpush.bf16.msra.mxu0 %v567
      %655 = vmatpush.bf16.msra.mxu0 %v566
      %656 = vmatpush.bf16.msra.mxu0 %v565
      %657 = vmatpush.bf16.msra.mxu0 %v564
      %658 = vmatpush.bf16.msra.mxu0 %v563
      %659 = vmatpush.bf16.msra.mxu0 %v562
      %660 = vmatmul.bf16.gmra.mxu0 %v388
      %v661 = vpop.f32.mrf.mxu0
      %v662 = vadd.f32 %v649, %v661
      %v663 = vpop.f32.mrf.mxu0
      %664 = vdwg.mxu0
      %665 = vmatpush.bf16.msra.mxu0 0
      %666 = vmatpush.bf16.msra.mxu0 0
      %667 = vmatpush.bf16.msra.mxu0 0
      %668 = vmatpush.bf16.msra.mxu0 0
      %669 = vmatpush.bf16.msra.mxu0 %v573
      %670 = vmatpush.bf16.msra.mxu0 %v572
      %671 = vmatpush.bf16.msra.mxu0 %v571
      %672 = vmatpush.bf16.msra.mxu0 %v570
      %673 = vmatmul.bf16.gmra.mxu0 %v611
      %v674 = vpop.f32.mrf.mxu0
      %v675 = vadd.f32 %v662, %v674
      %v676 = vpop.f32.mrf.mxu0
      %677 = vdwg.mxu0
      %vm678 = vcmask 1041408
      %v679 = vsel %vm678, %v675, 0.0
      %v680 = vrot.slane %v679, 4
      %v681 = vadd.f32 %v679, %v680
      %v682 = vrot.slane %v681, 2
      %v683 = vadd.f32 %v681, %v682
      %v684 = vrot.slane %v683, 1
      %v685 = vadd.f32 %v683, %v684
      %v686 = vmul.f32 %v685, 0.5
      %v687 = vmul.f32 %v675, %v675
      %v688 = vsel %vm678, %v687, 0.0
      %v689 = vrot.slane %v688, 4
      %v690 = vadd.f32 %v688, %v689
      %v691 = vrot.slane %v690, 2
      %v692 = vadd.f32 %v690, %v691
      %v693 = vrot.slane %v692, 1
      %v694 = vadd.f32 %v692, %v693
      %v695 = vmul.f32 %v694, 0.5
      %v696 = vmul.f32 %v686, %v686
      %v697 = vsub.f32 %v695, %v696
      %v698 = vld [vmem:[%s3] sm:$0x1]
      %v699 = vadd.f32 %v697, 1e-05
      %v700 = vrsqrt.pop %v699
      %v701 = vmul.f32 %v700, %v699
      %v702 = vmul.f32 %v701, %v700
      %v703 = vmul.f32 0.5, %v702
      %v704 = vsub.f32 1.5, %v703
      %v705 = vmul.f32 %v700, %v704
      %vm706 = vweird.f32 %v699
      %vm707 = vweird.f32 %v700
      %vm708 = vmor %vm706, %vm707
      %v709 = vsel %vm708, %v700, %v705
      %v710 = vmul.f32 %v698, %v709
      %v711 = vld [vmem:[%s4] sm:$0x1]
      %v712 = vmul.f32 %v686, %v710
      %v713 = vsub.f32 %v711, %v712
      %v715 = vperm.slane %v710, 0
      %v717 = vmul.f32 %v675, %v715
      %v719 = vperm.slane %v713, 0
      %v721 = vadd.f32 %v717, %v719
      %v722 = vmax.f32 %v721, 0.0
      %v723 = vpack.c.bf16 %v722, %v722
      %v724 = vld [vmem:[#allocation2] sm:$0x3]
      %v725 = vpack.c.bf16 %v724, %v724
      %v726 = vld [vmem:[%s5] sm:$0xf]
      %v727 = vld [vmem:[%s5 + $0x4] sm:$0xf]
      %v728 = vld [vmem:[%s5 + $0x8] sm:$0xf]
      %v729 = vld [vmem:[%s5 + $0xc] sm:$0xf]
      %v730 = vld [vmem:[%s5 + $0x10] sm:$0xf]
      %v731 = vld [vmem:[%s5 + $0x14] sm:$0xf]
      %v732 = vld [vmem:[%s5 + $0x18] sm:$0xf]
      %v733 = vld [vmem:[%s5 + $0x1c] sm:$0xf]
      %v734 = vld [vmem:[%s5 + $0x20] sm:$0xf]
      %v735 = vld [vmem:[%s5 + $0x24] sm:$0xf]
      %v736 = vld [vmem:[%s5 + $0x28] sm:$0xf]
      %v737 = vld [vmem:[%s5 + $0x2c] sm:$0xf]
      %v738 = vld [vmem:[%s5 + $0x30] sm:$0xf]
      %v739 = vld [vmem:[%s5 + $0x34] sm:$0xf]
      %v740 = vld [vmem:[%s5 + $0x38] sm:$0xf]
      %v741 = vld [vmem:[%s5 + $0x3c] sm:$0xf]
      %v742 = vld [vmem:[%s6] sm:$0xf]
      %v743 = vld [vmem:[%s6 + $0x4] sm:$0xf]
      %v744 = vld [vmem:[%s6 + $0x8] sm:$0xf]
      %v745 = vld [vmem:[%s6 + $0xc] sm:$0xf]
      %v746 = vld [vmem:[%s6 + $0x10] sm:$0xf]
      %v747 = vld [vmem:[%s6 + $0x14] sm:$0xf]
      %v748 = vld [vmem:[%s6 + $0x18] sm:$0xf]
      %v749 = vld [vmem:[%s6 + $0x1c] sm:$0xf]
      %v750 = vld [vmem:[%s6 + $0x20] sm:$0xf]
      %v751 = vld [vmem:[%s6 + $0x24] sm:$0xf]
      %v752 = vld [vmem:[%s6 + $0x28] sm:$0xf]
      %v753 = vld [vmem:[%s6 + $0x2c] sm:$0xf]
      %v754 = vld [vmem:[%s6 + $0x30] sm:$0xf]
      %v755 = vld [vmem:[%s6 + $0x34] sm:$0xf]
      %v756 = vld [vmem:[%s6 + $0x38] sm:$0xf]
      %v757 = vld [vmem:[%s6 + $0x3c] sm:$0xf]
      %v774 = vunpack.c.l.b16 %v742
      %v775 = vunpack.c.l.b16 %v743
      %v776 = vunpack.c.l.b16 %v744
      %v777 = vunpack.c.l.b16 %v745
      %v778 = vunpack.c.l.b16 %v746
      %v779 = vunpack.c.l.b16 %v747
      %v780 = vunpack.c.l.b16 %v748
      %v781 = vunpack.c.l.b16 %v749
      %v782 = vunpack.c.l.b16 %v750
      %v783 = vunpack.c.l.b16 %v751
      %v784 = vunpack.c.l.b16 %v752
      %v785 = vunpack.c.l.b16 %v753
      %v786 = vunpack.c.l.b16 %v754
      %v787 = vunpack.c.l.b16 %v755
      %v788 = vunpack.c.l.b16 %v756
      %v789 = vunpack.c.l.b16 %v757
      %v790 = vpack.c.b16 %v775, %v774
      %v791 = vpack.c.b16 %v777, %v776
      %v792 = vpack.c.b16 %v779, %v778
      %v793 = vpack.c.b16 %v781, %v780
      %v794 = vpack.c.b16 %v783, %v782
      %v795 = vpack.c.b16 %v785, %v784
      %v796 = vpack.c.b16 %v787, %v786
      %v797 = vpack.c.b16 %v789, %v788
      %806 = vmatpush.bf16.msra.mxu0 %v797
      %807 = vmatpush.bf16.msra.mxu0 %v796
      %808 = vmatpush.bf16.msra.mxu0 %v795
      %809 = vmatpush.bf16.msra.mxu0 %v794
      %810 = vmatpush.bf16.msra.mxu0 %v793
      %811 = vmatpush.bf16.msra.mxu0 %v792
      %812 = vmatpush.bf16.msra.mxu0 %v791
      %813 = vmatpush.bf16.msra.mxu0 %v790
      %814 = vmatmul.bf16.gmra.mxu0 %v725
      %v815 = vpop.f32.mrf.mxu0
      %v816 = vadd.f32 0.0, %v815
      %v817 = vpop.f32.mrf.mxu0
      %818 = vdwg.mxu0
      %v835 = vunpack.c.l.b16 %v726
      %v836 = vunpack.c.l.b16 %v727
      %v837 = vunpack.c.l.b16 %v728
      %v838 = vunpack.c.l.b16 %v729
      %v839 = vunpack.c.l.b16 %v730
      %v840 = vunpack.c.l.b16 %v731
      %v841 = vunpack.c.l.b16 %v732
      %v842 = vunpack.c.l.b16 %v733
      %v843 = vunpack.c.l.b16 %v734
      %v844 = vunpack.c.l.b16 %v735
      %v845 = vunpack.c.l.b16 %v736
      %v846 = vunpack.c.l.b16 %v737
      %v847 = vunpack.c.l.b16 %v738
      %v848 = vunpack.c.l.b16 %v739
      %v849 = vunpack.c.l.b16 %v740
      %v850 = vunpack.c.l.b16 %v741
      %v851 = vpack.c.b16 %v836, %v835
      %v852 = vpack.c.b16 %v838, %v837
      %v853 = vpack.c.b16 %v840, %v839
      %v854 = vpack.c.b16 %v842, %v841
      %v855 = vpack.c.b16 %v844, %v843
      %v856 = vpack.c.b16 %v846, %v845
      %v857 = vpack.c.b16 %v848, %v847
      %v858 = vpack.c.b16 %v850, %v849
      %867 = vmatpush.bf16.msra.mxu0 %v858
      %868 = vmatpush.bf16.msra.mxu0 %v857
      %869 = vmatpush.bf16.msra.mxu0 %v856
      %870 = vmatpush.bf16.msra.mxu0 %v855
      %871 = vmatpush.bf16.msra.mxu0 %v854
      %872 = vmatpush.bf16.msra.mxu0 %v853
      %873 = vmatpush.bf16.msra.mxu0 %v852
      %874 = vmatpush.bf16.msra.mxu0 %v851
      %875 = vmatmul.bf16.gmra.mxu0 %v723
      %v876 = vpop.f32.mrf.mxu0
      %v877 = vadd.f32 %v816, %v876
      %v878 = vpop.f32.mrf.mxu0
      %879 = vdwg.mxu0
      %v880 = vld [vmem:[%s7] sm:$0x1]
      %v882 = vperm.slane %v880, 0
      %v884 = vadd.f32 %v877, %v882
      %v885 = vxor.u32 %v884, 2147483648
      %v886 = vmul.f32 %v885, 1.442695
      %v887 = vpow.pop %v886
      %v888 = vadd.f32 %v887, 1.0
      %v889 = vrcp.pop %v888
      %v890 = vmul.f32 %v888, %v889
      %v891 = vsub.f32 1.0, %v890
      %v892 = vmul.f32 %v889, %v891
      %v893 = vadd.f32 %v889, %v892
      %vm894 = vweird.f32 %v888
      %vm895 = vweird.f32 %v889
      %vm896 = vmor %vm894, %vm895
      %v897 = vsel %vm896, %v889, %v893
      %v898 = vand.u32 2147483647, %v888
      %vm899 = vcmp.eq.f32.partialorder %v898, 8.507059e+37
      %v900 = vand.u32 %v888, 2147483648
      %v901 = vor.u32 1.1754944e-38, %v900
      %v902 = vsel %vm899, %v901, %v897
      %v903 = vmul.f32 1.0, %v902
      %s904 = scalar_lea.vmem %s5, 64
      %v905 = vld [vmem:[%s904] sm:$0xf]
      %v906 = vld [vmem:[%s904 + $0x4] sm:$0xf]
      %v907 = vld [vmem:[%s904 + $0x8] sm:$0xf]
      %v908 = vld [vmem:[%s904 + $0xc] sm:$0xf]
      %v909 = vld [vmem:[%s904 + $0x10] sm:$0xf]
      %v910 = vld [vmem:[%s904 + $0x14] sm:$0xf]
      %v911 = vld [vmem:[%s904 + $0x18] sm:$0xf]
      %v912 = vld [vmem:[%s904 + $0x1c] sm:$0xf]
      %v913 = vld [vmem:[%s904 + $0x20] sm:$0xf]
      %v914 = vld [vmem:[%s904 + $0x24] sm:$0xf]
      %v915 = vld [vmem:[%s904 + $0x28] sm:$0xf]
      %v916 = vld [vmem:[%s904 + $0x2c] sm:$0xf]
      %v917 = vld [vmem:[%s904 + $0x30] sm:$0xf]
      %v918 = vld [vmem:[%s904 + $0x34] sm:$0xf]
      %v919 = vld [vmem:[%s904 + $0x38] sm:$0xf]
      %v920 = vld [vmem:[%s904 + $0x3c] sm:$0xf]
      %s921 = scalar_lea.vmem %s6, 64
      %v922 = vld [vmem:[%s921] sm:$0xf]
      %v923 = vld [vmem:[%s921 + $0x4] sm:$0xf]
      %v924 = vld [vmem:[%s921 + $0x8] sm:$0xf]
      %v925 = vld [vmem:[%s921 + $0xc] sm:$0xf]
      %v926 = vld [vmem:[%s921 + $0x10] sm:$0xf]
      %v927 = vld [vmem:[%s921 + $0x14] sm:$0xf]
      %v928 = vld [vmem:[%s921 + $0x18] sm:$0xf]
      %v929 = vld [vmem:[%s921 + $0x1c] sm:$0xf]
      %v930 = vld [vmem:[%s921 + $0x20] sm:$0xf]
      %v931 = vld [vmem:[%s921 + $0x24] sm:$0xf]
      %v932 = vld [vmem:[%s921 + $0x28] sm:$0xf]
      %v933 = vld [vmem:[%s921 + $0x2c] sm:$0xf]
      %v934 = vld [vmem:[%s921 + $0x30] sm:$0xf]
      %v935 = vld [vmem:[%s921 + $0x34] sm:$0xf]
      %v936 = vld [vmem:[%s921 + $0x38] sm:$0xf]
      %v937 = vld [vmem:[%s921 + $0x3c] sm:$0xf]
      %v954 = vunpack.c.l.b16 %v922
      %v955 = vunpack.c.l.b16 %v923
      %v956 = vunpack.c.l.b16 %v924
      %v957 = vunpack.c.l.b16 %v925
      %v958 = vunpack.c.l.b16 %v926
      %v959 = vunpack.c.l.b16 %v927
      %v960 = vunpack.c.l.b16 %v928
      %v961 = vunpack.c.l.b16 %v929
      %v962 = vunpack.c.l.b16 %v930
      %v963 = vunpack.c.l.b16 %v931
      %v964 = vunpack.c.l.b16 %v932
      %v965 = vunpack.c.l.b16 %v933
      %v966 = vunpack.c.l.b16 %v934
      %v967 = vunpack.c.l.b16 %v935
      %v968 = vunpack.c.l.b16 %v936
      %v969 = vunpack.c.l.b16 %v937
      %v970 = vpack.c.b16 %v955, %v954
      %v971 = vpack.c.b16 %v957, %v956
      %v972 = vpack.c.b16 %v959, %v958
      %v973 = vpack.c.b16 %v961, %v960
      %v974 = vpack.c.b16 %v963, %v962
      %v975 = vpack.c.b16 %v965, %v964
      %v976 = vpack.c.b16 %v967, %v966
      %v977 = vpack.c.b16 %v969, %v968
      %986 = vmatpush.bf16.msra.mxu0 %v977
      %987 = vmatpush.bf16.msra.mxu0 %v976
      %988 = vmatpush.bf16.msra.mxu0 %v975
      %989 = vmatpush.bf16.msra.mxu0 %v974
      %990 = vmatpush.bf16.msra.mxu0 %v973
      %991 = vmatpush.bf16.msra.mxu0 %v972
      %992 = vmatpush.bf16.msra.mxu0 %v971
      %993 = vmatpush.bf16.msra.mxu0 %v970
      %994 = vmatmul.bf16.gmra.mxu0 %v725
      %v995 = vpop.f32.mrf.mxu0
      %v996 = vadd.f32 0.0, %v995
      %v997 = vpop.f32.mrf.mxu0
      %998 = vdwg.mxu0
      %v1015 = vunpack.c.l.b16 %v905
      %v1016 = vunpack.c.l.b16 %v906
      %v1017 = vunpack.c.l.b16 %v907
      %v1018 = vunpack.c.l.b16 %v908
      %v1019 = vunpack.c.l.b16 %v909
      %v1020 = vunpack.c.l.b16 %v910
      %v1021 = vunpack.c.l.b16 %v911
      %v1022 = vunpack.c.l.b16 %v912
      %v1023 = vunpack.c.l.b16 %v913
      %v1024 = vunpack.c.l.b16 %v914
      %v1025 = vunpack.c.l.b16 %v915
      %v1026 = vunpack.c.l.b16 %v916
      %v1027 = vunpack.c.l.b16 %v917
      %v1028 = vunpack.c.l.b16 %v918
      %v1029 = vunpack.c.l.b16 %v919
      %v1030 = vunpack.c.l.b16 %v920
      %v1031 = vpack.c.b16 %v1016, %v1015
      %v1032 = vpack.c.b16 %v1018, %v1017
      %v1033 = vpack.c.b16 %v1020, %v1019
      %v1034 = vpack.c.b16 %v1022, %v1021
      %v1035 = vpack.c.b16 %v1024, %v1023
      %v1036 = vpack.c.b16 %v1026, %v1025
      %v1037 = vpack.c.b16 %v1028, %v1027
      %v1038 = vpack.c.b16 %v1030, %v1029
      %1047 = vmatpush.bf16.msra.mxu0 %v1038
      %1048 = vmatpush.bf16.msra.mxu0 %v1037
      %1049 = vmatpush.bf16.msra.mxu0 %v1036
      %1050 = vmatpush.bf16.msra.mxu0 %v1035
      %1051 = vmatpush.bf16.msra.mxu0 %v1034
      %1052 = vmatpush.bf16.msra.mxu0 %v1033
      %1053 = vmatpush.bf16.msra.mxu0 %v1032
      %1054 = vmatpush.bf16.msra.mxu0 %v1031
      %1055 = vmatmul.bf16.gmra.mxu0 %v723
      %v1056 = vpop.f32.mrf.mxu0
      %v1057 = vadd.f32 %v996, %v1056
      %v1058 = vpop.f32.mrf.mxu0
      %1059 = vdwg.mxu0
      %s1060 = scalar_lea.vmem %s7, 1
      %v1061 = vld [vmem:[%s1060] sm:$0x1]
      %v1063 = vperm.slane %v1061, 0
      %v1065 = vadd.f32 %v1057, %v1063
      %v1066 = vxor.u32 %v1065, 2147483648
      %v1067 = vmul.f32 %v1066, 1.442695
      %v1068 = vpow.pop %v1067
      %v1069 = vadd.f32 %v1068, 1.0
      %v1070 = vrcp.pop %v1069
      %v1071 = vmul.f32 %v1069, %v1070
      %v1072 = vsub.f32 1.0, %v1071
      %v1073 = vmul.f32 %v1070, %v1072
      %v1074 = vadd.f32 %v1070, %v1073
      %vm1075 = vweird.f32 %v1069
      %vm1076 = vweird.f32 %v1070
      %vm1077 = vmor %vm1075, %vm1076
      %v1078 = vsel %vm1077, %v1070, %v1074
      %v1079 = vand.u32 2147483647, %v1069
      %vm1080 = vcmp.eq.f32.partialorder %v1079, 8.507059e+37
      %v1081 = vand.u32 %v1069, 2147483648
      %v1082 = vor.u32 1.1754944e-38, %v1081
      %v1083 = vsel %vm1080, %v1082, %v1078
      %v1084 = vmul.f32 1.0, %v1083
      %s1085 = scalar_lea.vmem %s5, 128
      %v1086 = vld [vmem:[%s1085] sm:$0xf]
      %v1087 = vld [vmem:[%s1085 + $0x4] sm:$0xf]
      %v1088 = vld [vmem:[%s1085 + $0x8] sm:$0xf]
      %v1089 = vld [vmem:[%s1085 + $0xc] sm:$0xf]
      %v1090 = vld [vmem:[%s1085 + $0x10] sm:$0xf]
      %v1091 = vld [vmem:[%s1085 + $0x14] sm:$0xf]
      %v1092 = vld [vmem:[%s1085 + $0x18] sm:$0xf]
      %v1093 = vld [vmem:[%s1085 + $0x1c] sm:$0xf]
      %v1094 = vld [vmem:[%s1085 + $0x20] sm:$0xf]
      %v1095 = vld [vmem:[%s1085 + $0x24] sm:$0xf]
      %v1096 = vld [vmem:[%s1085 + $0x28] sm:$0xf]
      %v1097 = vld [vmem:[%s1085 + $0x2c] sm:$0xf]
      %v1098 = vld [vmem:[%s1085 + $0x30] sm:$0xf]
      %v1099 = vld [vmem:[%s1085 + $0x34] sm:$0xf]
      %v1100 = vld [vmem:[%s1085 + $0x38] sm:$0xf]
      %v1101 = vld [vmem:[%s1085 + $0x3c] sm:$0xf]
      %s1102 = scalar_lea.vmem %s6, 128
      %v1103 = vld [vmem:[%s1102] sm:$0xf]
      %v1104 = vld [vmem:[%s1102 + $0x4] sm:$0xf]
      %v1105 = vld [vmem:[%s1102 + $0x8] sm:$0xf]
      %v1106 = vld [vmem:[%s1102 + $0xc] sm:$0xf]
      %v1107 = vld [vmem:[%s1102 + $0x10] sm:$0xf]
      %v1108 = vld [vmem:[%s1102 + $0x14] sm:$0xf]
      %v1109 = vld [vmem:[%s1102 + $0x18] sm:$0xf]
      %v1110 = vld [vmem:[%s1102 + $0x1c] sm:$0xf]
      %v1111 = vld [vmem:[%s1102 + $0x20] sm:$0xf]
      %v1112 = vld [vmem:[%s1102 + $0x24] sm:$0xf]
      %v1113 = vld [vmem:[%s1102 + $0x28] sm:$0xf]
      %v1114 = vld [vmem:[%s1102 + $0x2c] sm:$0xf]
      %v1115 = vld [vmem:[%s1102 + $0x30] sm:$0xf]
      %v1116 = vld [vmem:[%s1102 + $0x34] sm:$0xf]
      %v1117 = vld [vmem:[%s1102 + $0x38] sm:$0xf]
      %v1118 = vld [vmem:[%s1102 + $0x3c] sm:$0xf]
      %v1135 = vunpack.c.l.b16 %v1103
      %v1136 = vunpack.c.l.b16 %v1104
      %v1137 = vunpack.c.l.b16 %v1105
      %v1138 = vunpack.c.l.b16 %v1106
      %v1139 = vunpack.c.l.b16 %v1107
      %v1140 = vunpack.c.l.b16 %v1108
      %v1141 = vunpack.c.l.b16 %v1109
      %v1142 = vunpack.c.l.b16 %v1110
      %v1143 = vunpack.c.l.b16 %v1111
      %v1144 = vunpack.c.l.b16 %v1112
      %v1145 = vunpack.c.l.b16 %v1113
      %v1146 = vunpack.c.l.b16 %v1114
      %v1147 = vunpack.c.l.b16 %v1115
      %v1148 = vunpack.c.l.b16 %v1116
      %v1149 = vunpack.c.l.b16 %v1117
      %v1150 = vunpack.c.l.b16 %v1118
      %v1151 = vpack.c.b16 %v1136, %v1135
      %v1152 = vpack.c.b16 %v1138, %v1137
      %v1153 = vpack.c.b16 %v1140, %v1139
      %v1154 = vpack.c.b16 %v1142, %v1141
      %v1155 = vpack.c.b16 %v1144, %v1143
      %v1156 = vpack.c.b16 %v1146, %v1145
      %v1157 = vpack.c.b16 %v1148, %v1147
      %v1158 = vpack.c.b16 %v1150, %v1149
      %1167 = vmatpush.bf16.msra.mxu0 %v1158
      %1168 = vmatpush.bf16.msra.mxu0 %v1157
      %1169 = vmatpush.bf16.msra.mxu0 %v1156
      %1170 = vmatpush.bf16.msra.mxu0 %v1155
      %1171 = vmatpush.bf16.msra.mxu0 %v1154
      %1172 = vmatpush.bf16.msra.mxu0 %v1153
      %1173 = vmatpush.bf16.msra.mxu0 %v1152
      %1174 = vmatpush.bf16.msra.mxu0 %v1151
      %1175 = vmatmul.bf16.gmra.mxu0 %v725
      %v1176 = vpop.f32.mrf.mxu0
      %v1177 = vadd.f32 0.0, %v1176
      %v1178 = vpop.f32.mrf.mxu0
      %1179 = vdwg.mxu0
      %v1196 = vunpack.c.l.b16 %v1086
      %v1197 = vunpack.c.l.b16 %v1087
      %v1198 = vunpack.c.l.b16 %v1088
      %v1199 = vunpack.c.l.b16 %v1089
      %v1200 = vunpack.c.l.b16 %v1090
      %v1201 = vunpack.c.l.b16 %v1091
      %v1202 = vunpack.c.l.b16 %v1092
      %v1203 = vunpack.c.l.b16 %v1093
      %v1204 = vunpack.c.l.b16 %v1094
      %v1205 = vunpack.c.l.b16 %v1095
      %v1206 = vunpack.c.l.b16 %v1096
      %v1207 = vunpack.c.l.b16 %v1097
      %v1208 = vunpack.c.l.b16 %v1098
      %v1209 = vunpack.c.l.b16 %v1099
      %v1210 = vunpack.c.l.b16 %v1100
      %v1211 = vunpack.c.l.b16 %v1101
      %v1212 = vpack.c.b16 %v1197, %v1196
      %v1213 = vpack.c.b16 %v1199, %v1198
      %v1214 = vpack.c.b16 %v1201, %v1200
      %v1215 = vpack.c.b16 %v1203, %v1202
      %v1216 = vpack.c.b16 %v1205, %v1204
      %v1217 = vpack.c.b16 %v1207, %v1206
      %v1218 = vpack.c.b16 %v1209, %v1208
      %v1219 = vpack.c.b16 %v1211, %v1210
      %1228 = vmatpush.bf16.msra.mxu0 %v1219
      %1229 = vmatpush.bf16.msra.mxu0 %v1218
      %1230 = vmatpush.bf16.msra.mxu0 %v1217
      %1231 = vmatpush.bf16.msra.mxu0 %v1216
      %1232 = vmatpush.bf16.msra.mxu0 %v1215
      %1233 = vmatpush.bf16.msra.mxu0 %v1214
      %1234 = vmatpush.bf16.msra.mxu0 %v1213
      %1235 = vmatpush.bf16.msra.mxu0 %v1212
      %1236 = vmatmul.bf16.gmra.mxu0 %v723
      %v1237 = vpop.f32.mrf.mxu0
      %v1238 = vadd.f32 %v1177, %v1237
      %v1239 = vpop.f32.mrf.mxu0
      %1240 = vdwg.mxu0
      %s1241 = scalar_lea.vmem %s7, 2
      %v1242 = vld [vmem:[%s1241] sm:$0x1]
      %v1244 = vperm.slane %v1242, 0
      %v1246 = vadd.f32 %v1238, %v1244
      %v1247 = vtanh.pop %v1246
      %s1248 = scalar_lea.vmem %s5, 192
      %v1249 = vld [vmem:[%s1248] sm:$0xf]
      %v1250 = vld [vmem:[%s1248 + $0x4] sm:$0xf]
      %v1251 = vld [vmem:[%s1248 + $0x8] sm:$0xf]
      %v1252 = vld [vmem:[%s1248 + $0xc] sm:$0xf]
      %v1253 = vld [vmem:[%s1248 + $0x10] sm:$0xf]
      %v1254 = vld [vmem:[%s1248 + $0x14] sm:$0xf]
      %v1255 = vld [vmem:[%s1248 + $0x18] sm:$0xf]
      %v1256 = vld [vmem:[%s1248 + $0x1c] sm:$0xf]
      %v1257 = vld [vmem:[%s1248 + $0x20] sm:$0xf]
      %v1258 = vld [vmem:[%s1248 + $0x24] sm:$0xf]
      %v1259 = vld [vmem:[%s1248 + $0x28] sm:$0xf]
      %v1260 = vld [vmem:[%s1248 + $0x2c] sm:$0xf]
      %v1261 = vld [vmem:[%s1248 + $0x30] sm:$0xf]
      %v1262 = vld [vmem:[%s1248 + $0x34] sm:$0xf]
      %v1263 = vld [vmem:[%s1248 + $0x38] sm:$0xf]
      %v1264 = vld [vmem:[%s1248 + $0x3c] sm:$0xf]
      %s1265 = scalar_lea.vmem %s6, 192
      %v1266 = vld [vmem:[%s1265] sm:$0xf]
      %v1267 = vld [vmem:[%s1265 + $0x4] sm:$0xf]
      %v1268 = vld [vmem:[%s1265 + $0x8] sm:$0xf]
      %v1269 = vld [vmem:[%s1265 + $0xc] sm:$0xf]
      %v1270 = vld [vmem:[%s1265 + $0x10] sm:$0xf]
      %v1271 = vld [vmem:[%s1265 + $0x14] sm:$0xf]
      %v1272 = vld [vmem:[%s1265 + $0x18] sm:$0xf]
      %v1273 = vld [vmem:[%s1265 + $0x1c] sm:$0xf]
      %v1274 = vld [vmem:[%s1265 + $0x20] sm:$0xf]
      %v1275 = vld [vmem:[%s1265 + $0x24] sm:$0xf]
      %v1276 = vld [vmem:[%s1265 + $0x28] sm:$0xf]
      %v1277 = vld [vmem:[%s1265 + $0x2c] sm:$0xf]
      %v1278 = vld [vmem:[%s1265 + $0x30] sm:$0xf]
      %v1279 = vld [vmem:[%s1265 + $0x34] sm:$0xf]
      %v1280 = vld [vmem:[%s1265 + $0x38] sm:$0xf]
      %v1281 = vld [vmem:[%s1265 + $0x3c] sm:$0xf]
      %v1298 = vunpack.c.l.b16 %v1266
      %v1299 = vunpack.c.l.b16 %v1267
      %v1300 = vunpack.c.l.b16 %v1268
      %v1301 = vunpack.c.l.b16 %v1269
      %v1302 = vunpack.c.l.b16 %v1270
      %v1303 = vunpack.c.l.b16 %v1271
      %v1304 = vunpack.c.l.b16 %v1272
      %v1305 = vunpack.c.l.b16 %v1273
      %v1306 = vunpack.c.l.b16 %v1274
      %v1307 = vunpack.c.l.b16 %v1275
      %v1308 = vunpack.c.l.b16 %v1276
      %v1309 = vunpack.c.l.b16 %v1277
      %v1310 = vunpack.c.l.b16 %v1278
      %v1311 = vunpack.c.l.b16 %v1279
      %v1312 = vunpack.c.l.b16 %v1280
      %v1313 = vunpack.c.l.b16 %v1281
      %v1314 = vpack.c.b16 %v1299, %v1298
      %v1315 = vpack.c.b16 %v1301, %v1300
      %v1316 = vpack.c.b16 %v1303, %v1302
      %v1317 = vpack.c.b16 %v1305, %v1304
      %v1318 = vpack.c.b16 %v1307, %v1306
      %v1319 = vpack.c.b16 %v1309, %v1308
      %v1320 = vpack.c.b16 %v1311, %v1310
      %v1321 = vpack.c.b16 %v1313, %v1312
      %1330 = vmatpush.bf16.msra.mxu0 %v1321
      %1331 = vmatpush.bf16.msra.mxu0 %v1320
      %1332 = vmatpush.bf16.msra.mxu0 %v1319
      %1333 = vmatpush.bf16.msra.mxu0 %v1318
      %1334 = vmatpush.bf16.msra.mxu0 %v1317
      %1335 = vmatpush.bf16.msra.mxu0 %v1316
      %1336 = vmatpush.bf16.msra.mxu0 %v1315
      %1337 = vmatpush.bf16.msra.mxu0 %v1314
      %1338 = vmatmul.bf16.gmra.mxu0 %v725
      %v1339 = vpop.f32.mrf.mxu0
      %v1340 = vadd.f32 0.0, %v1339
      %v1341 = vpop.f32.mrf.mxu0
      %1342 = vdwg.mxu0
      %v1359 = vunpack.c.l.b16 %v1249
      %v1360 = vunpack.c.l.b16 %v1250
      %v1361 = vunpack.c.l.b16 %v1251
      %v1362 = vunpack.c.l.b16 %v1252
      %v1363 = vunpack.c.l.b16 %v1253
      %v1364 = vunpack.c.l.b16 %v1254
      %v1365 = vunpack.c.l.b16 %v1255
      %v1366 = vunpack.c.l.b16 %v1256
      %v1367 = vunpack.c.l.b16 %v1257
      %v1368 = vunpack.c.l.b16 %v1258
      %v1369 = vunpack.c.l.b16 %v1259
      %v1370 = vunpack.c.l.b16 %v1260
      %v1371 = vunpack.c.l.b16 %v1261
      %v1372 = vunpack.c.l.b16 %v1262
      %v1373 = vunpack.c.l.b16 %v1263
      %v1374 = vunpack.c.l.b16 %v1264
      %v1375 = vpack.c.b16 %v1360, %v1359
      %v1376 = vpack.c.b16 %v1362, %v1361
      %v1377 = vpack.c.b16 %v1364, %v1363
      %v1378 = vpack.c.b16 %v1366, %v1365
      %v1379 = vpack.c.b16 %v1368, %v1367
      %v1380 = vpack.c.b16 %v1370, %v1369
      %v1381 = vpack.c.b16 %v1372, %v1371
      %v1382 = vpack.c.b16 %v1374, %v1373
      %1391 = vmatpush.bf16.msra.mxu0 %v1382
      %1392 = vmatpush.bf16.msra.mxu0 %v1381
      %1393 = vmatpush.bf16.msra.mxu0 %v1380
      %1394 = vmatpush.bf16.msra.mxu0 %v1379
      %1395 = vmatpush.bf16.msra.mxu0 %v1378
      %1396 = vmatpush.bf16.msra.mxu0 %v1377
      %1397 = vmatpush.bf16.msra.mxu0 %v1376
      %1398 = vmatpush.bf16.msra.mxu0 %v1375
      %1399 = vmatmul.bf16.gmra.mxu0 %v723
      %v1400 = vpop.f32.mrf.mxu0
      %v1401 = vadd.f32 %v1340, %v1400
      %v1402 = vpop.f32.mrf.mxu0
      %1403 = vdwg.mxu0
      %s1404 = scalar_lea.vmem %s7, 3
      %v1405 = vld [vmem:[%s1404] sm:$0x1]
      %v1407 = vperm.slane %v1405, 0
      %v1409 = vadd.f32 %v1401, %v1407
      %v1410 = vxor.u32 %v1409, 2147483648
      %v1411 = vmul.f32 %v1410, 1.442695
      %v1412 = vpow.pop %v1411
      %v1413 = vadd.f32 %v1412, 1.0
      %v1414 = vrcp.pop %v1413
      %v1415 = vmul.f32 %v1413, %v1414
      %v1416 = vsub.f32 1.0, %v1415
      %v1417 = vmul.f32 %v1414, %v1416
      %v1418 = vadd.f32 %v1414, %v1417
      %vm1419 = vweird.f32 %v1413
      %vm1420 = vweird.f32 %v1414
      %vm1421 = vmor %vm1419, %vm1420
      %v1422 = vsel %vm1421, %v1414, %v1418
      %v1423 = vand.u32 2147483647, %v1413
      %vm1424 = vcmp.eq.f32.partialorder %v1423, 8.507059e+37
      %v1425 = vand.u32 %v1413, 2147483648
      %v1426 = vor.u32 1.1754944e-38, %v1425
      %v1427 = vsel %vm1424, %v1426, %v1422
      %v1428 = vmul.f32 1.0, %v1427
      %v1429 = vld [vmem:[#allocation3] sm:$0x3]
      %v1430 = vmul.f32 %v1084, %v1429
      %v1431 = vmul.f32 %v903, %v1247
      %v1432 = vadd.f32 %v1430, %v1431
      %v1433 = vtanh.pop %v1432
      %v1434 = vmul.f32 %v1428, %v1433
      %1435 = vst [vmem:[#allocation3] sm:$0x3] %v1432
      %1436 = vst [vmem:[#allocation2] sm:$0x3] %v1434
      %v1437 = vpack.c.bf16 %v1434, %v1434
      %1438 = vst [vmem:[%s298] sm:$0x1] %v1437
      %p1439 = scmp.lt.s32.totalorder %s19, 2
      %s1440 = scalar_select %p1439, %s19, 2
      %s1441 = scalar_lea.vmem %s8, %s1440
      // Predicated region
      $region57: #{rcnn_forward.8} parent=51 // pred_check
        %p1442 = pneg %p210
      $region58: #{rcnn_forward.8} parent=51 // pred_check_branch
        %1444 = sbr.rel (%p1442) target = $region60
      $region59: #{rcnn_forward.8} parent=51 // pred_region
        _
      $region60: #{rcnn_forward.8} parent=51 // pred_fallthru
        _
    $region52: #{rcnn_forward.8} parent=5 // pred_fallthru
      _
    %p1445 = scmp.le.s32.totalorder 2, %s14
    // Predicated region
    $region61: #{rcnn_forward.8} parent=5 // pred_check
      %p1446 = pneg %p1445
    $region62: #{rcnn_forward.8} parent=5 // pred_check_branch
      %1448 = sbr.rel (%p1446) target = $region64
    $region63: #{rcnn_forward.8} parent=5 // pred_region
      %s1449 = ssub.s32 %s14, 2
      // Predicated region
      $region65: #{rcnn_forward.8} parent=63 // pred_check
        %p1450 = pneg %p216
      $region66: #{rcnn_forward.8} parent=63 // pred_check_branch
        %1452 = sbr.rel (%p1450) target = $region68
      $region67: #{rcnn_forward.8} parent=63 // pred_region
        %p1453 = scmp.lt.s32.totalorder %s20, 2
        %s1454 = scalar_select %p1453, %s20, 2
        %s1455 = scalar_lea.vmem %s8, %s1454
      $region68: #{rcnn_forward.8} parent=63 // pred_fallthru
        _
    $region64: #{rcnn_forward.8} parent=5 // pred_fallthru
      _
  $region6: #{rcnn_forward.8} parent=0 // loop_footer
    %s18 = sadd.s32 1, %s14
  $region7: #{rcnn_forward.8} parent=0 // loop_footer_branch
    %13 = sbr.rel target = $region3
  $region8: #{rcnn_forward.8} parent=0 // loop_exit
    _

// kernel: rcnn_forward.9
$region0: #{rcnn_forward.9}
  #allocation0 [shape = 'u32[]', space=smem, size = 0x4, offset = 0x4, fixed_abs, tag = 'smem constant byte address 0x4 - core index']
  #allocation1 [shape = 'u32[72,128]{1,0:T(1,128)}', space=vmem, size = 0x9000, scoped, tag = 'internal scratch']
  %s0 = inlined_call_operand.vmem [shape: bf16[3,2,128], index: 0, kind: input, shape index: {}]
  %s1 = inlined_call_operand.vmem [shape: bf16[128,1024], index: 1, kind: input, shape index: {}]
  %s2 = inlined_call_operand.vmem [shape: f32[1,1024], index: 2, kind: input, shape index: {}]
  %s3 = inlined_call_operand.vmem [shape: bf16[1024,256], index: 3, kind: input, shape index: {}]
  %s4 = inlined_call_operand.vmem [shape: f32[1,256], index: 4, kind: input, shape index: {}]
  %s5 = inlined_call_operand.vmem [shape: bf16[256,8], index: 5, kind: input, shape index: {}]
  %s6 = inlined_call_operand.vmem [shape: f32[1,8], index: 6, kind: input, shape index: {}]
  %s7 = inlined_call_operand.hbm [shape: f32[2,8], index: 7, kind: output, shape index: {}]
  %s8 = sld [smem:[#allocation0]]
  $region38: #{rcnn_forward.9} parent=0
    _
  %s10 = ssub.s32 1, %s8
  %s11 = scalar_select 0, %s10, %s8
  $region1: #{rcnn_forward.9} parent=0
    #allocation2 [shape = 'u8[1024]{0}', space=vmem, size = 0x400, scoped, tag = 'output window, operand 0, single buffered']
    #allocation3 [shape = 's32[1]{0}', space=sflag, size = 0x4, scoped, tag = 'scoped memory for rcnn_forward.9']
    %12 = vsyncpa [#allocation3], 0
    // Predicated region
    $region2: #{rcnn_forward.9} parent=1 // pred_check
      _
    $region3: #{rcnn_forward.9} parent=1 // pred_check_branch
      %14 = sbr.rel (0) target = $region5
    $region4: #{rcnn_forward.9} parent=1 // pred_region
      _
    $region5: #{rcnn_forward.9} parent=1 // pred_fallthru
      _
    // Predicated region
    $region6: #{rcnn_forward.9} parent=1 // pred_check
      _
    $region7: #{rcnn_forward.9} parent=1 // pred_check_branch
      %16 = sbr.rel (0) target = $region9
    $region8: #{rcnn_forward.9} parent=1 // pred_region
      _
    $region9: #{rcnn_forward.9} parent=1 // pred_fallthru
      _
    // Predicated region
    $region10: #{rcnn_forward.9} parent=1 // pred_check
      _
    $region11: #{rcnn_forward.9} parent=1 // pred_check_branch
      %18 = sbr.rel (0) target = $region13
    $region12: #{rcnn_forward.9} parent=1 // pred_region
      _
    $region13: #{rcnn_forward.9} parent=1 // pred_fallthru
      _
    // Predicated region
    $region14: #{rcnn_forward.9} parent=1 // pred_check
      _
    $region15: #{rcnn_forward.9} parent=1 // pred_check_branch
      %20 = sbr.rel (0) target = $region17
    $region16: #{rcnn_forward.9} parent=1 // pred_region
      _
    $region17: #{rcnn_forward.9} parent=1 // pred_fallthru
      _
    // Predicated region
    $region18: #{rcnn_forward.9} parent=1 // pred_check
      _
    $region19: #{rcnn_forward.9} parent=1 // pred_check_branch
      %22 = sbr.rel (0) target = $region21
    $region20: #{rcnn_forward.9} parent=1 // pred_region
      _
    $region21: #{rcnn_forward.9} parent=1 // pred_fallthru
      _
    // Predicated region
    $region22: #{rcnn_forward.9} parent=1 // pred_check
      _
    $region23: #{rcnn_forward.9} parent=1 // pred_check_branch
      %24 = sbr.rel (0) target = $region25
    $region24: #{rcnn_forward.9} parent=1 // pred_region
      _
    $region25: #{rcnn_forward.9} parent=1 // pred_fallthru
      _
    // Predicated region
    $region26: #{rcnn_forward.9} parent=1 // pred_check
      _
    $region27: #{rcnn_forward.9} parent=1 // pred_check_branch
      %26 = sbr.rel (0) target = $region29
    $region28: #{rcnn_forward.9} parent=1 // pred_region
      _
    $region29: #{rcnn_forward.9} parent=1 // pred_fallthru
      _
    %v27 = vld [vmem:[%s0] sm:$0x1]
    %v28 = vld [vmem:[%s0 + $0x1] sm:$0x1]
    %v29 = vld [vmem:[%s0 + $0x2] sm:$0x1]
    %v30 = vunpack.c.l.bf16 %v27
    %v31 = vunpack.c.l.bf16 %v28
    %v32 = vunpack.c.l.bf16 %v29
    %vm33 = vcmask 1041408
    %v34 = vsel %vm33, %v30, 0.0
    %v35 = vsel %vm33, %v31, 0.0
    %v36 = vadd.f32 %v34, %v35
    %v37 = vsel %vm33, %v32, 0.0
    %v38 = vadd.f32 %v36, %v37
    %v39 = vrcp.pop 3.0
    %v40 = vmul.f32 3.0, %v39
    %v41 = vsub.f32 1.0, %v40
    %v42 = vmul.f32 %v39, %v41
    %v43 = vadd.f32 %v39, %v42
    %vm44 = vweird.f32 %v39
    %v45 = vsel %vm44, %v39, %v43
    %v46 = vmul.f32 %v38, %v45
    %v47 = vpack.c.bf16 %v46, %v46
    %v48 = vld [vmem:[%s1] sm:$0xff]
    %v49 = vld [vmem:[%s1 + $0x8] sm:$0xff]
    %v50 = vld [vmem:[%s1 + $0x10] sm:$0xff]
    %v51 = vld [vmem:[%s1 + $0x18] sm:$0xff]
    %v52 = vld [vmem:[%s1 + $0x20] sm:$0xff]
    %v53 = vld [vmem:[%s1 + $0x28] sm:$0xff]
    %v54 = vld [vmem:[%s1 + $0x30] sm:$0xff]
    %v55 = vld [vmem:[%s1 + $0x38] sm:$0xff]
    %v56 = vld [vmem:[%s1 + $0x40] sm:$0xff]
    %v57 = vld [vmem:[%s1 + $0x48] sm:$0xff]
    %v58 = vld [vmem:[%s1 + $0x50] sm:$0xff]
    %v59 = vld [vmem:[%s1 + $0x58] sm:$0xff]
    %v60 = vld [vmem:[%s1 + $0x60] sm:$0xff]
    %v61 = vld [vmem:[%s1 + $0x68] sm:$0xff]
    %v62 = vld [vmem:[%s1 + $0x70] sm:$0xff]
    %v63 = vld [vmem:[%s1 + $0x78] sm:$0xff]
    %v64 = vld [vmem:[%s1 + $0x80] sm:$0xff]
    %v65 = vld [vmem:[%s1 + $0x88] sm:$0xff]
    %v66 = vld [vmem:[%s1 + $0x90] sm:$0xff]
    %v67 = vld [vmem:[%s1 + $0x98] sm:$0xff]
    %v68 = vld [vmem:[%s1 + $0xa0] sm:$0xff]
    %v69 = vld [vmem:[%s1 + $0xa8] sm:$0xff]
    %v70 = vld [vmem:[%s1 + $0xb0] sm:$0xff]
    %v71 = vld [vmem:[%s1 + $0xb8] sm:$0xff]
    %v72 = vld [vmem:[%s1 + $0xc0] sm:$0xff]
    %v73 = vld [vmem:[%s1 + $0xc8] sm:$0xff]
    %v74 = vld [vmem:[%s1 + $0xd0] sm:$0xff]
    %v75 = vld [vmem:[%s1 + $0xd8] sm:$0xff]
    %v76 = vld [vmem:[%s1 + $0xe0] sm:$0xff]
    %v77 = vld [vmem:[%s1 + $0xe8] sm:$0xff]
    %v78 = vld [vmem:[%s1 + $0xf0] sm:$0xff]
    %v79 = vld [vmem:[%s1 + $0xf8] sm:$0xff]
    %v80 = vld [vmem:[%s1 + $0x100] sm:$0xff]
    %v81 = vld [vmem:[%s1 + $0x108] sm:$0xff]
    %v82 = vld [vmem:[%s1 + $0x110] sm:$0xff]
    %v83 = vld [vmem:[%s1 + $0x118] sm:$0xff]
    %v84 = vld [vmem:[%s1 + $0x120] sm:$0xff]
    %v85 = vld [vmem:[%s1 + $0x128] sm:$0xff]
    %v86 = vld [vmem:[%s1 + $0x130] sm:$0xff]
    %v87 = vld [vmem:[%s1 + $0x138] sm:$0xff]
    %v88 = vld [vmem:[%s1 + $0x140] sm:$0xff]
    %v89 = vld [vmem:[%s1 + $0x148] sm:$0xff]
    %v90 = vld [vmem:[%s1 + $0x150] sm:$0xff]
    %v91 = vld [vmem:[%s1 + $0x158] sm:$0xff]
    %v92 = vld [vmem:[%s1 + $0x160] sm:$0xff]
    %v93 = vld [vmem:[%s1 + $0x168] sm:$0xff]
    %v94 = vld [vmem:[%s1 + $0x170] sm:$0xff]
    %v95 = vld [vmem:[%s1 + $0x178] sm:$0xff]
    %v96 = vld [vmem:[%s1 + $0x180] sm:$0xff]
    %v97 = vld [vmem:[%s1 + $0x188] sm:$0xff]
    %v98 = vld [vmem:[%s1 + $0x190] sm:$0xff]
    %v99 = vld [vmem:[%s1 + $0x198] sm:$0xff]
    %v100 = vld [vmem:[%s1 + $0x1a0] sm:$0xff]
    %v101 = vld [vmem:[%s1 + $0x1a8] sm:$0xff]
    %v102 = vld [vmem:[%s1 + $0x1b0] sm:$0xff]
    %v103 = vld [vmem:[%s1 + $0x1b8] sm:$0xff]
    %v104 = vld [vmem:[%s1 + $0x1c0] sm:$0xff]
    %v105 = vld [vmem:[%s1 + $0x1c8] sm:$0xff]
    %v106 = vld [vmem:[%s1 + $0x1d0] sm:$0xff]
    %v107 = vld [vmem:[%s1 + $0x1d8] sm:$0xff]
    %v108 = vld [vmem:[%s1 + $0x1e0] sm:$0xff]
    %v109 = vld [vmem:[%s1 + $0x1e8] sm:$0xff]
    %v110 = vld [vmem:[%s1 + $0x1f0] sm:$0xff]
    %v111 = vld [vmem:[%s1 + $0x1f8] sm:$0xff]
    %v112 = vld [vmem:[%s2] sm:$0xff]
    %v114 = vperm.slane %v112, 0
    %v115 = vperm.slane %v112, 1
    %v116 = vperm.slane %v112, 2
    %v117 = vperm.slane %v112, 3
    %v118 = vperm.slane %v112, 4
    %v119 = vperm.slane %v112, 5
    %v120 = vperm.slane %v112, 6
    %v121 = vperm.slane %v112, 7
    %v194 = vunpack.c.l.b16 %v48
    %v195 = vunpack.c.h.b16 %v48
    %v196 = vunpack.c.l.b16 %v49
    %v197 = vunpack.c.h.b16 %v49
    %v198 = vunpack.c.l.b16 %v50
    %v199 = vunpack.c.h.b16 %v50
    %v200 = vunpack.c.l.b16 %v51
    %v201 = vunpack.c.h.b16 %v51
    %v202 = vunpack.c.l.b16 %v52
    %v203 = vunpack.c.h.b16 %v52
    %v204 = vunpack.c.l.b16 %v53
    %v205 = vunpack.c.h.b16 %v53
    %v206 = vunpack.c.l.b16 %v54
    %v207 = vunpack.c.h.b16 %v54
    %v208 = vunpack.c.l.b16 %v55
    %v209 = vunpack.c.h.b16 %v55
    %v210 = vunpack.c.l.b16 %v56
    %v211 = vunpack.c.h.b16 %v56
    %v212 = vunpack.c.l.b16 %v57
    %v213 = vunpack.c.h.b16 %v57
    %v214 = vunpack.c.l.b16 %v58
    %v215 = vunpack.c.h.b16 %v58
    %v216 = vunpack.c.l.b16 %v59
    %v217 = vunpack.c.h.b16 %v59
    %v218 = vunpack.c.l.b16 %v60
    %v219 = vunpack.c.h.b16 %v60
    %v220 = vunpack.c.l.b16 %v61
    %v221 = vunpack.c.h.b16 %v61
    %v222 = vunpack.c.l.b16 %v62
    %v223 = vunpack.c.h.b16 %v62
    %v224 = vunpack.c.l.b16 %v63
    %v225 = vunpack.c.h.b16 %v63
    %v226 = vunpack.c.l.b16 %v64
    %v227 = vunpack.c.h.b16 %v64
    %v228 = vunpack.c.l.b16 %v65
    %v229 = vunpack.c.h.b16 %v65
    %v230 = vunpack.c.l.b16 %v66
    %v231 = vunpack.c.h.b16 %v66
    %v232 = vunpack.c.l.b16 %v67
    %v233 = vunpack.c.h.b16 %v67
    %v234 = vunpack.c.l.b16 %v68
    %v235 = vunpack.c.h.b16 %v68
    %v236 = vunpack.c.l.b16 %v69
    %v237 = vunpack.c.h.b16 %v69
    %v238 = vunpack.c.l.b16 %v70
    %v239 = vunpack.c.h.b16 %v70
    %v240 = vunpack.c.l.b16 %v71
    %v241 = vunpack.c.h.b16 %v71
    %v242 = vunpack.c.l.b16 %v72
    %v243 = vunpack.c.h.b16 %v72
    %v244 = vunpack.c.l.b16 %v73
    %v245 = vunpack.c.h.b16 %v73
    %v246 = vunpack.c.l.b16 %v74
    %v247 = vunpack.c.h.b16 %v74
    %v248 = vunpack.c.l.b16 %v75
    %v249 = vunpack.c.h.b16 %v75
    %v250 = vunpack.c.l.b16 %v76
    %v251 = vunpack.c.h.b16 %v76
    %v252 = vunpack.c.l.b16 %v77
    %v253 = vunpack.c.h.b16 %v77
    %v254 = vunpack.c.l.b16 %v78
    %v255 = vunpack.c.h.b16 %v78
    %v256 = vunpack.c.l.b16 %v79
    %v257 = vunpack.c.h.b16 %v79
    %v258 = vunpack.c.l.b16 %v80
    %v259 = vunpack.c.h.b16 %v80
    %v260 = vunpack.c.l.b16 %v81
    %v261 = vunpack.c.h.b16 %v81
    %v262 = vunpack.c.l.b16 %v82
    %v263 = vunpack.c.h.b16 %v82
    %v264 = vunpack.c.l.b16 %v83
    %v265 = vunpack.c.h.b16 %v83
    %v266 = vunpack.c.l.b16 %v84
    %v267 = vunpack.c.h.b16 %v84
    %v268 = vunpack.c.l.b16 %v85
    %v269 = vunpack.c.h.b16 %v85
    %v270 = vunpack.c.l.b16 %v86
    %v271 = vunpack.c.h.b16 %v86
    %v272 = vunpack.c.l.b16 %v87
    %v273 = vunpack.c.h.b16 %v87
    %v274 = vunpack.c.l.b16 %v88
    %v275 = vunpack.c.h.b16 %v88
    %v276 = vunpack.c.l.b16 %v89
    %v277 = vunpack.c.h.b16 %v89
    %v278 = vunpack.c.l.b16 %v90
    %v279 = vunpack.c.h.b16 %v90
    %v280 = vunpack.c.l.b16 %v91
    %v281 = vunpack.c.h.b16 %v91
    %v282 = vunpack.c.l.b16 %v92
    %v283 = vunpack.c.h.b16 %v92
    %v284 = vunpack.c.l.b16 %v93
    %v285 = vunpack.c.h.b16 %v93
    %v286 = vunpack.c.l.b16 %v94
    %v287 = vunpack.c.h.b16 %v94
    %v288 = vunpack.c.l.b16 %v95
    %v289 = vunpack.c.h.b16 %v95
    %v290 = vunpack.c.l.b16 %v96
    %v291 = vunpack.c.h.b16 %v96
    %v292 = vunpack.c.l.b16 %v97
    %v293 = vunpack.c.h.b16 %v97
    %v294 = vunpack.c.l.b16 %v98
    %v295 = vunpack.c.h.b16 %v98
    %v296 = vunpack.c.l.b16 %v99
    %v297 = vunpack.c.h.b16 %v99
    %v298 = vunpack.c.l.b16 %v100
    %v299 = vunpack.c.h.b16 %v100
    %v300 = vunpack.c.l.b16 %v101
    %v301 = vunpack.c.h.b16 %v101
    %v302 = vunpack.c.l.b16 %v102
    %v303 = vunpack.c.h.b16 %v102
    %v304 = vunpack.c.l.b16 %v103
    %v305 = vunpack.c.h.b16 %v103
    %v306 = vunpack.c.l.b16 %v104
    %v307 = vunpack.c.h.b16 %v104
    %v308 = vunpack.c.l.b16 %v105
    %v309 = vunpack.c.h.b16 %v105
    %v310 = vunpack.c.l.b16 %v106
    %v311 = vunpack.c.h.b16 %v106
    %v312 = vunpack.c.l.b16 %v107
    %v313 = vunpack.c.h.b16 %v107
    %v314 = vunpack.c.l.b16 %v108
    %v315 = vunpack.c.h.b16 %v108
    %v316 = vunpack.c.l.b16 %v109
    %v317 = vunpack.c.h.b16 %v109
    %v318 = vunpack.c.l.b16 %v110
    %v319 = vunpack.c.h.b16 %v110
    %v320 = vunpack.c.l.b16 %v111
    %v321 = vunpack.c.h.b16 %v111
    %v322 = vpack.c.b16 %v202, %v194
    %v323 = vpack.c.b16 %v203, %v195
    %v324 = vpack.c.b16 %v204, %v196
    %v325 = vpack.c.b16 %v205, %v197
    %v326 = vpack.c.b16 %v206, %v198
    %v327 = vpack.c.b16 %v207, %v199
    %v328 = vpack.c.b16 %v208, %v200
    %v329 = vpack.c.b16 %v209, %v201
    %v330 = vpack.c.b16 %v218, %v210
    %v331 = vpack.c.b16 %v219, %v211
    %v332 = vpack.c.b16 %v220, %v212
    %v333 = vpack.c.b16 %v221, %v213
    %v334 = vpack.c.b16 %v222, %v214
    %v335 = vpack.c.b16 %v223, %v215
    %v336 = vpack.c.b16 %v224, %v216
    %v337 = vpack.c.b16 %v225, %v217
    %v338 = vpack.c.b16 %v234, %v226
    %v339 = vpack.c.b16 %v235, %v227
    %v340 = vpack.c.b16 %v236, %v228
    %v341 = vpack.c.b16 %v237, %v229
    %v342 = vpack.c.b16 %v238, %v230
    %v343 = vpack.c.b16 %v239, %v231
    %v344 = vpack.c.b16 %v240, %v232
    %v345 = vpack.c.b16 %v241, %v233
    %v346 = vpack.c.b16 %v250, %v242
    %v347 = vpack.c.b16 %v251, %v243
    %v348 = vpack.c.b16 %v252, %v244
    %v349 = vpack.c.b16 %v253, %v245
    %v350 = vpack.c.b16 %v254, %v246
    %v351 = vpack.c.b16 %v255, %v247
    %v352 = vpack.c.b16 %v256, %v248
    %v353 = vpack.c.b16 %v257, %v249
    %v354 = vpack.c.b16 %v266, %v258
    %v355 = vpack.c.b16 %v267, %v259
    %v356 = vpack.c.b16 %v268, %v260
    %v357 = vpack.c.b16 %v269, %v261
    %v358 = vpack.c.b16 %v270, %v262
    %v359 = vpack.c.b16 %v271, %v263
    %v360 = vpack.c.b16 %v272, %v264
    %v361 = vpack.c.b16 %v273, %v265
    %v362 = vpack.c.b16 %v282, %v274
    %v363 = vpack.c.b16 %v283, %v275
    %v364 = vpack.c.b16 %v284, %v276
    %v365 = vpack.c.b16 %v285, %v277
    %v366 = vpack.c.b16 %v286, %v278
    %v367 = vpack.c.b16 %v287, %v279
    %v368 = vpack.c.b16 %v288, %v280
    %v369 = vpack.c.b16 %v289, %v281
    %v370 = vpack.c.b16 %v298, %v290
    %v371 = vpack.c.b16 %v299, %v291
    %v372 = vpack.c.b16 %v300, %v292
    %v373 = vpack.c.b16 %v301, %v293
    %v374 = vpack.c.b16 %v302, %v294
    %v375 = vpack.c.b16 %v303, %v295
    %v376 = vpack.c.b16 %v304, %v296
    %v377 = vpack.c.b16 %v305, %v297
    %v378 = vpack.c.b16 %v314, %v306
    %v379 = vpack.c.b16 %v315, %v307
    %v380 = vpack.c.b16 %v316, %v308
    %v381 = vpack.c.b16 %v317, %v309
    %v382 = vpack.c.b16 %v318, %v310
    %v383 = vpack.c.b16 %v319, %v311
    %v384 = vpack.c.b16 %v320, %v312
    %v385 = vpack.c.b16 %v321, %v313
    %450 = vmatpush.bf16.msra.mxu0 %v378
    %451 = vmatpush.bf16.msra.mxu0 %v370
    %452 = vmatpush.bf16.msra.mxu0 %v362
    %453 = vmatpush.bf16.msra.mxu0 %v354
    %454 = vmatpush.bf16.msra.mxu0 %v346
    %455 = vmatpush.bf16.msra.mxu0 %v338
    %456 = vmatpush.bf16.msra.mxu0 %v330
    %457 = vmatpush.bf16.msra.mxu0 %v322
    %458 = vmatmul.bf16.gmra.mxu0 %v47
    %v459 = vpop.f32.mrf.mxu0
    %v460 = vadd.f32 %v114, %v459
    %v461 = vpop.f32.mrf.mxu0
    %462 = vdwg.mxu0
    %463 = vmatpush.bf16.msra.mxu0 %v379
    %464 = vmatpush.bf16.msra.mxu0 %v371
    %465 = vmatpush.bf16.msra.mxu0 %v363
    %466 = vmatpush.bf16.msra.mxu0 %v355
    %467 = vmatpush.bf16.msra.mxu0 %v347
    %468 = vmatpush.bf16.msra.mxu0 %v339
    %469 = vmatpush.bf16.msra.mxu0 %v331
    %470 = vmatpush.bf16.msra.mxu0 %v323
    %471 = vmatmul.bf16.gmra.mxu0 %v47
    %v472 = vpop.f32.mrf.mxu0
    %v473 = vadd.f32 %v115, %v472
    %v474 = vpop.f32.mrf.mxu0
    %475 = vdwg.mxu0
    %476 = vmatpush.bf16.msra.mxu0 %v380
    %477 = vmatpush.bf16.msra.mxu0 %v372
    %478 = vmatpush.bf16.msra.mxu0 %v364
    %479 = vmatpush.bf16.msra.mxu0 %v356
    %480 = vmatpush.bf16.msra.mxu0 %v348
    %481 = vmatpush.bf16.msra.mxu0 %v340
    %482 = vmatpush.bf16.msra.mxu0 %v332
    %483 = vmatpush.bf16.msra.mxu0 %v324
    %484 = vmatmul.bf16.gmra.mxu0 %v47
    %v485 = vpop.f32.mrf.mxu0
    %v486 = vadd.f32 %v116, %v485
    %v487 = vpop.f32.mrf.mxu0
    %488 = vdwg.mxu0
    %489 = vmatpush.bf16.msra.mxu0 %v381
    %490 = vmatpush.bf16.msra.mxu0 %v373
    %491 = vmatpush.bf16.msra.mxu0 %v365
    %492 = vmatpush.bf16.msra.mxu0 %v357
    %493 = vmatpush.bf16.msra.mxu0 %v349
    %494 = vmatpush.bf16.msra.mxu0 %v341
    %495 = vmatpush.bf16.msra.mxu0 %v333
    %496 = vmatpush.bf16.msra.mxu0 %v325
    %497 = vmatmul.bf16.gmra.mxu0 %v47
    %v498 = vpop.f32.mrf.mxu0
    %v499 = vadd.f32 %v117, %v498
    %v500 = vpop.f32.mrf.mxu0
    %501 = vdwg.mxu0
    %502 = vmatpush.bf16.msra.mxu0 %v382
    %503 = vmatpush.bf16.msra.mxu0 %v374
    %504 = vmatpush.bf16.msra.mxu0 %v366
    %505 = vmatpush.bf16.msra.mxu0 %v358
    %506 = vmatpush.bf16.msra.mxu0 %v350
    %507 = vmatpush.bf16.msra.mxu0 %v342
    %508 = vmatpush.bf16.msra.mxu0 %v334
    %509 = vmatpush.bf16.msra.mxu0 %v326
    %510 = vmatmul.bf16.gmra.mxu0 %v47
    %v511 = vpop.f32.mrf.mxu0
    %v512 = vadd.f32 %v118, %v511
    %v513 = vpop.f32.mrf.mxu0
    %514 = vdwg.mxu0
    %515 = vmatpush.bf16.msra.mxu0 %v383
    %516 = vmatpush.bf16.msra.mxu0 %v375
    %517 = vmatpush.bf16.msra.mxu0 %v367
    %518 = vmatpush.bf16.msra.mxu0 %v359
    %519 = vmatpush.bf16.msra.mxu0 %v351
    %520 = vmatpush.bf16.msra.mxu0 %v343
    %521 = vmatpush.bf16.msra.mxu0 %v335
    %522 = vmatpush.bf16.msra.mxu0 %v327
    %523 = vmatmul.bf16.gmra.mxu0 %v47
    %v524 = vpop.f32.mrf.mxu0
    %v525 = vadd.f32 %v119, %v524
    %v526 = vpop.f32.mrf.mxu0
    %527 = vdwg.mxu0
    %528 = vmatpush.bf16.msra.mxu0 %v384
    %529 = vmatpush.bf16.msra.mxu0 %v376
    %530 = vmatpush.bf16.msra.mxu0 %v368
    %531 = vmatpush.bf16.msra.mxu0 %v360
    %532 = vmatpush.bf16.msra.mxu0 %v352
    %533 = vmatpush.bf16.msra.mxu0 %v344
    %534 = vmatpush.bf16.msra.mxu0 %v336
    %535 = vmatpush.bf16.msra.mxu0 %v328
    %536 = vmatmul.bf16.gmra.mxu0 %v47
    %v537 = vpop.f32.mrf.mxu0
    %v538 = vadd.f32 %v120, %v537
    %v539 = vpop.f32.mrf.mxu0
    %540 = vdwg.mxu0
    %541 = vmatpush.bf16.msra.mxu0 %v385
    %542 = vmatpush.bf16.msra.mxu0 %v377
    %543 = vmatpush.bf16.msra.mxu0 %v369
    %544 = vmatpush.bf16.msra.mxu0 %v361
    %545 = vmatpush.bf16.msra.mxu0 %v353
    %546 = vmatpush.bf16.msra.mxu0 %v345
    %547 = vmatpush.bf16.msra.mxu0 %v337
    %548 = vmatpush.bf16.msra.mxu0 %v329
    %549 = vmatmul.bf16.gmra.mxu0 %v47
    %v550 = vpop.f32.mrf.mxu0
    %v551 = vadd.f32 %v121, %v550
    %v552 = vpop.f32.mrf.mxu0
    %553 = vdwg.mxu0
    %v554 = vmax.f32 %v460, 0.0
    %v555 = vmax.f32 %v473, 0.0
    %v556 = vmax.f32 %v486, 0.0
    %v557 = vmax.f32 %v499, 0.0
    %v558 = vmax.f32 %v512, 0.0
    %v559 = vmax.f32 %v525, 0.0
    %v560 = vmax.f32 %v538, 0.0
    %v561 = vmax.f32 %v551, 0.0
    %v562 = vpack.c.bf16 %v554, %v554
    %v563 = vpack.c.bf16 %v555, %v555
    %v564 = vpack.c.bf16 %v556, %v556
    %v565 = vpack.c.bf16 %v557, %v557
    %v566 = vpack.c.bf16 %v558, %v558
    %v567 = vpack.c.bf16 %v559, %v559
    %v568 = vpack.c.bf16 %v560, %v560
    %v569 = vpack.c.bf16 %v561, %v561
    %v570 = vld [vmem:[%s3] sm:$0xff]
    %v571 = vld [vmem:[%s3 + $0x8] sm:$0xff]
    %v572 = vld [vmem:[%s3 + $0x10] sm:$0xff]
    %v573 = vld [vmem:[%s3 + $0x18] sm:$0xff]
    %v574 = vld [vmem:[%s3 + $0x20] sm:$0xff]
    %v575 = vld [vmem:[%s3 + $0x28] sm:$0xff]
    %v576 = vld [vmem:[%s3 + $0x30] sm:$0xff]
    %v577 = vld [vmem:[%s3 + $0x38] sm:$0xff]
    %v578 = vld [vmem:[%s3 + $0x40] sm:$0xff]
    %v579 = vld [vmem:[%s3 + $0x48] sm:$0xff]
    %v580 = vld [vmem:[%s3 + $0x50] sm:$0xff]
    %v581 = vld [vmem:[%s3 + $0x58] sm:$0xff]
    %v582 = vld [vmem:[%s3 + $0x60] sm:$0xff]
    %v583 = vld [vmem:[%s3 + $0x68] sm:$0xff]
    %v584 = vld [vmem:[%s3 + $0x70] sm:$0xff]
    %v585 = vld [vmem:[%s3 + $0x78] sm:$0xff]
    %v586 = vld [vmem:[%s3 + $0x80] sm:$0xff]
    %v587 = vld [vmem:[%s3 + $0x88] sm:$0xff]
    %v588 = vld [vmem:[%s3 + $0x90] sm:$0xff]
    %v589 = vld [vmem:[%s3 + $0x98] sm:$0xff]
    %v590 = vld [vmem:[%s3 + $0xa0] sm:$0xff]
    %v591 = vld [vmem:[%s3 + $0xa8] sm:$0xff]
    %v592 = vld [vmem:[%s3 + $0xb0] sm:$0xff]
    %v593 = vld [vmem:[%s3 + $0xb8] sm:$0xff]
    %v594 = vld [vmem:[%s3 + $0xc0] sm:$0xff]
    %v595 = vld [vmem:[%s3 + $0xc8] sm:$0xff]
    %v596 = vld [vmem:[%s3 + $0xd0] sm:$0xff]
    %v597 = vld [vmem:[%s3 + $0xd8] sm:$0xff]
    %v598 = vld [vmem:[%s3 + $0xe0] sm:$0xff]
    %v599 = vld [vmem:[%s3 + $0xe8] sm:$0xff]
    %v600 = vld [vmem:[%s3 + $0xf0] sm:$0xff]
    %v601 = vld [vmem:[%s3 + $0xf8] sm:$0xff]
    %v602 = vld [vmem:[%s3 + $0x100] sm:$0xff]
    %v603 = vld [vmem:[%s3 + $0x108] sm:$0xff]
    %v604 = vld [vmem:[%s3 + $0x110] sm:$0xff]
    %v605 = vld [vmem:[%s3 + $0x118] sm:$0xff]
    %v606 = vld [vmem:[%s3 + $0x120] sm:$0xff]
    %v607 = vld [vmem:[%s3 + $0x128] sm:$0xff]
    %v608 = vld [vmem:[%s3 + $0x130] sm:$0xff]
    %v609 = vld [vmem:[%s3 + $0x138] sm:$0xff]
    %v610 = vld [vmem:[%s3 + $0x140] sm:$0xff]
    %v611 = vld [vmem:[%s3 + $0x148] sm:$0xff]
    %v612 = vld [vmem:[%s3 + $0x150] sm:$0xff]
    %v613 = vld [vmem:[%s3 + $0x158] sm:$0xff]
    %v614 = vld [vmem:[%s3 + $0x160] sm:$0xff]
    %v615 = vld [vmem:[%s3 + $0x168] sm:$0xff]
    %v616 = vld [vmem:[%s3 + $0x170] sm:$0xff]
    %v617 = vld [vmem:[%s3 + $0x178] sm:$0xff]
    %v618 = vld [vmem:[%s3 + $0x180] sm:$0xff]
    %v619 = vld [vmem:[%s3 + $0x188] sm:$0xff]
    %v620 = vld [vmem:[%s3 + $0x190] sm:$0xff]
    %v621 = vld [vmem:[%s3 + $0x198] sm:$0xff]
    %v622 = vld [vmem:[%s3 + $0x1a0] sm:$0xff]
    %v623 = vld [vmem:[%s3 + $0x1a8] sm:$0xff]
    %v624 = vld [vmem:[%s3 + $0x1b0] sm:$0xff]
    %v625 = vld [vmem:[%s3 + $0x1b8] sm:$0xff]
    %v626 = vld [vmem:[%s3 + $0x1c0] sm:$0xff]
    %v627 = vld [vmem:[%s3 + $0x1c8] sm:$0xff]
    %v628 = vld [vmem:[%s3 + $0x1d0] sm:$0xff]
    %v629 = vld [vmem:[%s3 + $0x1d8] sm:$0xff]
    %v630 = vld [vmem:[%s3 + $0x1e0] sm:$0xff]
    %v631 = vld [vmem:[%s3 + $0x1e8] sm:$0xff]
    %v632 = vld [vmem:[%s3 + $0x1f0] sm:$0xff]
    %v633 = vld [vmem:[%s3 + $0x1f8] sm:$0xff]
    %v634 = vld [vmem:[%s3 + $0x200] sm:$0xff]
    %v635 = vld [vmem:[%s3 + $0x208] sm:$0xff]
    %v636 = vld [vmem:[%s3 + $0x210] sm:$0xff]
    %v637 = vld [vmem:[%s3 + $0x218] sm:$0xff]
    %v638 = vld [vmem:[%s3 + $0x220] sm:$0xff]
    %v639 = vld [vmem:[%s3 + $0x228] sm:$0xff]
    %v640 = vld [vmem:[%s3 + $0x230] sm:$0xff]
    %v641 = vld [vmem:[%s3 + $0x238] sm:$0xff]
    %v642 = vld [vmem:[%s3 + $0x240] sm:$0xff]
    %v643 = vld [vmem:[%s3 + $0x248] sm:$0xff]
    %v644 = vld [vmem:[%s3 + $0x250] sm:$0xff]
    %v645 = vld [vmem:[%s3 + $0x258] sm:$0xff]
    %v646 = vld [vmem:[%s3 + $0x260] sm:$0xff]
    %v647 = vld [vmem:[%s3 + $0x268] sm:$0xff]
    %v648 = vld [vmem:[%s3 + $0x270] sm:$0xff]
    %v649 = vld [vmem:[%s3 + $0x278] sm:$0xff]
    %v650 = vld [vmem:[%s3 + $0x280] sm:$0xff]
    %v651 = vld [vmem:[%s3 + $0x288] sm:$0xff]
    %v652 = vld [vmem:[%s3 + $0x290] sm:$0xff]
    %v653 = vld [vmem:[%s3 + $0x298] sm:$0xff]
    %v654 = vld [vmem:[%s3 + $0x2a0] sm:$0xff]
    %v655 = vld [vmem:[%s3 + $0x2a8] sm:$0xff]
    %v656 = vld [vmem:[%s3 + $0x2b0] sm:$0xff]
    %v657 = vld [vmem:[%s3 + $0x2b8] sm:$0xff]
    %v658 = vld [vmem:[%s3 + $0x2c0] sm:$0xff]
    %v659 = vld [vmem:[%s3 + $0x2c8] sm:$0xff]
    %v660 = vld [vmem:[%s3 + $0x2d0] sm:$0xff]
    %v661 = vld [vmem:[%s3 + $0x2d8] sm:$0xff]
    %v662 = vld [vmem:[%s3 + $0x2e0] sm:$0xff]
    %v663 = vld [vmem:[%s3 + $0x2e8] sm:$0xff]
    %v664 = vld [vmem:[%s3 + $0x2f0] sm:$0xff]
    %v665 = vld [vmem:[%s3 + $0x2f8] sm:$0xff]
    %v666 = vld [vmem:[%s3 + $0x300] sm:$0xff]
    %v667 = vld [vmem:[%s3 + $0x308] sm:$0xff]
    %v668 = vld [vmem:[%s3 + $0x310] sm:$0xff]
    %v669 = vld [vmem:[%s3 + $0x318] sm:$0xff]
    %v670 = vld [vmem:[%s3 + $0x320] sm:$0xff]
    %v671 = vld [vmem:[%s3 + $0x328] sm:$0xff]
    %v672 = vld [vmem:[%s3 + $0x330] sm:$0xff]
    %v673 = vld [vmem:[%s3 + $0x338] sm:$0xff]
    %v674 = vld [vmem:[%s3 + $0x340] sm:$0xff]
    %v675 = vld [vmem:[%s3 + $0x348] sm:$0xff]
    %v676 = vld [vmem:[%s3 + $0x350] sm:$0xff]
    %v677 = vld [vmem:[%s3 + $0x358] sm:$0xff]
    %v678 = vld [vmem:[%s3 + $0x360] sm:$0xff]
    %v679 = vld [vmem:[%s3 + $0x368] sm:$0xff]
    %v680 = vld [vmem:[%s3 + $0x370] sm:$0xff]
    %v681 = vld [vmem:[%s3 + $0x378] sm:$0xff]
    %v682 = vld [vmem:[%s3 + $0x380] sm:$0xff]
    %v683 = vld [vmem:[%s3 + $0x388] sm:$0xff]
    %v684 = vld [vmem:[%s3 + $0x390] sm:$0xff]
    %v685 = vld [vmem:[%s3 + $0x398] sm:$0xff]
    %v686 = vld [vmem:[%s3 + $0x3a0] sm:$0xff]
    %v687 = vld [vmem:[%s3 + $0x3a8] sm:$0xff]
    %v688 = vld [vmem:[%s3 + $0x3b0] sm:$0xff]
    %v689 = vld [vmem:[%s3 + $0x3b8] sm:$0xff]
    %v690 = vld [vmem:[%s3 + $0x3c0] sm:$0xff]
    %v691 = vld [vmem:[%s3 + $0x3c8] sm:$0xff]
    %v692 = vld [vmem:[%s3 + $0x3d0] sm:$0xff]
    %v693 = vld [vmem:[%s3 + $0x3d8] sm:$0xff]
    %v694 = vld [vmem:[%s3 + $0x3e0] sm:$0xff]
    %v695 = vld [vmem:[%s3 + $0x3e8] sm:$0xff]
    %v696 = vld [vmem:[%s3 + $0x3f0] sm:$0xff]
    %v697 = vld [vmem:[%s3 + $0x3f8] sm:$0xff]
    %v698 = vld [vmem:[%s4] sm:$0x3]
    %v700 = vperm.slane %v698, 0
    %v701 = vperm.slane %v698, 1
    %v832 = vunpack.c.l.b16 %v570
    %v833 = vunpack.c.h.b16 %v570
    %v834 = vunpack.c.l.b16 %v571
    %v835 = vunpack.c.h.b16 %v571
    %v836 = vunpack.c.l.b16 %v572
    %v837 = vunpack.c.h.b16 %v572
    %v838 = vunpack.c.l.b16 %v573
    %v839 = vunpack.c.h.b16 %v573
    %v840 = vunpack.c.l.b16 %v574
    %v841 = vunpack.c.h.b16 %v574
    %v842 = vunpack.c.l.b16 %v575
    %v843 = vunpack.c.h.b16 %v575
    %v844 = vunpack.c.l.b16 %v576
    %v845 = vunpack.c.h.b16 %v576
    %v846 = vunpack.c.l.b16 %v577
    %v847 = vunpack.c.h.b16 %v577
    %v848 = vunpack.c.l.b16 %v578
    %v849 = vunpack.c.h.b16 %v578
    %v850 = vunpack.c.l.b16 %v579
    %v851 = vunpack.c.h.b16 %v579
    %v852 = vunpack.c.l.b16 %v580
    %v853 = vunpack.c.h.b16 %v580
    %v854 = vunpack.c.l.b16 %v581
    %v855 = vunpack.c.h.b16 %v581
    %v856 = vunpack.c.l.b16 %v582
    %v857 = vunpack.c.h.b16 %v582
    %v858 = vunpack.c.l.b16 %v583
    %v859 = vunpack.c.h.b16 %v583
    %v860 = vunpack.c.l.b16 %v584
    %v861 = vunpack.c.h.b16 %v584
    %v862 = vunpack.c.l.b16 %v585
    %v863 = vunpack.c.h.b16 %v585
    %v864 = vunpack.c.l.b16 %v586
    %v865 = vunpack.c.h.b16 %v586
    %v866 = vunpack.c.l.b16 %v587
    %v867 = vunpack.c.h.b16 %v587
    %v868 = vunpack.c.l.b16 %v588
    %v869 = vunpack.c.h.b16 %v588
    %v870 = vunpack.c.l.b16 %v589
    %v871 = vunpack.c.h.b16 %v589
    %v872 = vunpack.c.l.b16 %v590
    %v873 = vunpack.c.h.b16 %v590
    %v874 = vunpack.c.l.b16 %v591
    %v875 = vunpack.c.h.b16 %v591
    %v876 = vunpack.c.l.b16 %v592
    %v877 = vunpack.c.h.b16 %v592
    %v878 = vunpack.c.l.b16 %v593
    %v879 = vunpack.c.h.b16 %v593
    %v880 = vunpack.c.l.b16 %v594
    %v881 = vunpack.c.h.b16 %v594
    %v882 = vunpack.c.l.b16 %v595
    %v883 = vunpack.c.h.b16 %v595
    %v884 = vunpack.c.l.b16 %v596
    %v885 = vunpack.c.h.b16 %v596
    %v886 = vunpack.c.l.b16 %v597
    %v887 = vunpack.c.h.b16 %v597
    %v888 = vunpack.c.l.b16 %v598
    %v889 = vunpack.c.h.b16 %v598
    %v890 = vunpack.c.l.b16 %v599
    %v891 = vunpack.c.h.b16 %v599
    %v892 = vunpack.c.l.b16 %v600
    %v893 = vunpack.c.h.b16 %v600
    %v894 = vunpack.c.l.b16 %v601
    %v895 = vunpack.c.h.b16 %v601
    %v896 = vunpack.c.l.b16 %v602
    %v897 = vunpack.c.h.b16 %v602
    %v898 = vunpack.c.l.b16 %v603
    %v899 = vunpack.c.h.b16 %v603
    %v900 = vunpack.c.l.b16 %v604
    %v901 = vunpack.c.h.b16 %v604
    %v902 = vunpack.c.l.b16 %v605
    %v903 = vunpack.c.h.b16 %v605
    %v904 = vunpack.c.l.b16 %v606
    %v905 = vunpack.c.h.b16 %v606
    %v906 = vunpack.c.l.b16 %v607
    %v907 = vunpack.c.h.b16 %v607
    %v908 = vunpack.c.l.b16 %v608
    %v909 = vunpack.c.h.b16 %v608
    %v910 = vunpack.c.l.b16 %v609
    %v911 = vunpack.c.h.b16 %v609
    %v912 = vunpack.c.l.b16 %v610
    %v913 = vunpack.c.h.b16 %v610
    %v914 = vunpack.c.l.b16 %v611
    %v915 = vunpack.c.h.b16 %v611
    %v916 = vunpack.c.l.b16 %v612
    %v917 = vunpack.c.h.b16 %v612
    %v918 = vunpack.c.l.b16 %v613
    %v919 = vunpack.c.h.b16 %v613
    %v920 = vunpack.c.l.b16 %v614
    %v921 = vunpack.c.h.b16 %v614
    %v922 = vunpack.c.l.b16 %v615
    %v923 = vunpack.c.h.b16 %v615
    %v924 = vunpack.c.l.b16 %v616
    %v925 = vunpack.c.h.b16 %v616
    %v926 = vunpack.c.l.b16 %v617
    %v927 = vunpack.c.h.b16 %v617
    %v928 = vunpack.c.l.b16 %v618
    %v929 = vunpack.c.h.b16 %v618
    %v930 = vunpack.c.l.b16 %v619
    %v931 = vunpack.c.h.b16 %v619
    %v932 = vunpack.c.l.b16 %v620
    %v933 = vunpack.c.h.b16 %v620
    %v934 = vunpack.c.l.b16 %v621
    %v935 = vunpack.c.h.b16 %v621
    %v936 = vunpack.c.l.b16 %v622
    %v937 = vunpack.c.h.b16 %v622
    %v938 = vunpack.c.l.b16 %v623
    %v939 = vunpack.c.h.b16 %v623
    %v940 = vunpack.c.l.b16 %v624
    %v941 = vunpack.c.h.b16 %v624
    %v942 = vunpack.c.l.b16 %v625
    %v943 = vunpack.c.h.b16 %v625
    %v944 = vunpack.c.l.b16 %v626
    %v945 = vunpack.c.h.b16 %v626
    %v946 = vunpack.c.l.b16 %v627
    %v947 = vunpack.c.h.b16 %v627
    %v948 = vunpack.c.l.b16 %v628
    %v949 = vunpack.c.h.b16 %v628
    %v950 = vunpack.c.l.b16 %v629
    %v951 = vunpack.c.h.b16 %v629
    %v952 = vunpack.c.l.b16 %v630
    %v953 = vunpack.c.h.b16 %v630
    %v954 = vunpack.c.l.b16 %v631
    %v955 = vunpack.c.h.b16 %v631
    %v956 = vunpack.c.l.b16 %v632
    %v957 = vunpack.c.h.b16 %v632
    %v958 = vunpack.c.l.b16 %v633
    %v959 = vunpack.c.h.b16 %v633
    %v960 = vunpack.c.l.b16 %v634
    %v961 = vunpack.c.h.b16 %v634
    %v962 = vunpack.c.l.b16 %v635
    %v963 = vunpack.c.h.b16 %v635
    %v964 = vunpack.c.l.b16 %v636
    %v965 = vunpack.c.h.b16 %v636
    %v966 = vunpack.c.l.b16 %v637
    %v967 = vunpack.c.h.b16 %v637
    %v968 = vunpack.c.l.b16 %v638
    %v969 = vunpack.c.h.b16 %v638
    %v970 = vunpack.c.l.b16 %v639
    %v971 = vunpack.c.h.b16 %v639
    %v972 = vunpack.c.l.b16 %v640
    %v973 = vunpack.c.h.b16 %v640
    %v974 = vunpack.c.l.b16 %v641
    %v975 = vunpack.c.h.b16 %v641
    %v976 = vunpack.c.l.b16 %v642
    %v977 = vunpack.c.h.b16 %v642
    %v978 = vunpack.c.l.b16 %v643
    %v979 = vunpack.c.h.b16 %v643
    %v980 = vunpack.c.l.b16 %v644
    %v981 = vunpack.c.h.b16 %v644
    %v982 = vunpack.c.l.b16 %v645
    %v983 = vunpack.c.h.b16 %v645
    %v984 = vunpack.c.l.b16 %v646
    %v985 = vunpack.c.h.b16 %v646
    %v986 = vunpack.c.l.b16 %v647
    %v987 = vunpack.c.h.b16 %v647
    %v988 = vunpack.c.l.b16 %v648
    %v989 = vunpack.c.h.b16 %v648
    %v990 = vunpack.c.l.b16 %v649
    %v991 = vunpack.c.h.b16 %v649
    %v992 = vunpack.c.l.b16 %v650
    %v993 = vunpack.c.h.b16 %v650
    %v994 = vunpack.c.l.b16 %v651
    %v995 = vunpack.c.h.b16 %v651
    %v996 = vunpack.c.l.b16 %v652
    %v997 = vunpack.c.h.b16 %v652
    %v998 = vunpack.c.l.b16 %v653
    %v999 = vunpack.c.h.b16 %v653
    %v1000 = vunpack.c.l.b16 %v654
    %v1001 = vunpack.c.h.b16 %v654
    %v1002 = vunpack.c.l.b16 %v655
    %v1003 = vunpack.c.h.b16 %v655
    %v1004 = vunpack.c.l.b16 %v656
    %v1005 = vunpack.c.h.b16 %v656
    %v1006 = vunpack.c.l.b16 %v657
    %v1007 = vunpack.c.h.b16 %v657
    %v1008 = vunpack.c.l.b16 %v658
    %v1009 = vunpack.c.h.b16 %v658
    %v1010 = vunpack.c.l.b16 %v659
    %v1011 = vunpack.c.h.b16 %v659
    %v1012 = vunpack.c.l.b16 %v660
    %v1013 = vunpack.c.h.b16 %v660
    %v1014 = vunpack.c.l.b16 %v661
    %v1015 = vunpack.c.h.b16 %v661
    %v1016 = vunpack.c.l.b16 %v662
    %v1017 = vunpack.c.h.b16 %v662
    %v1018 = vunpack.c.l.b16 %v663
    %v1019 = vunpack.c.h.b16 %v663
    %v1020 = vunpack.c.l.b16 %v664
    %v1021 = vunpack.c.h.b16 %v664
    %v1022 = vunpack.c.l.b16 %v665
    %v1023 = vunpack.c.h.b16 %v665
    %v1024 = vunpack.c.l.b16 %v666
    %v1025 = vunpack.c.h.b16 %v666
    %v1026 = vunpack.c.l.b16 %v667
    %v1027 = vunpack.c.h.b16 %v667
    %v1028 = vunpack.c.l.b16 %v668
    %v1029 = vunpack.c.h.b16 %v668
    %v1030 = vunpack.c.l.b16 %v669
    %v1031 = vunpack.c.h.b16 %v669
    %v1032 = vunpack.c.l.b16 %v670
    %v1033 = vunpack.c.h.b16 %v670
    %v1034 = vunpack.c.l.b16 %v671
    %v1035 = vunpack.c.h.b16 %v671
    %v1036 = vunpack.c.l.b16 %v672
    %v1037 = vunpack.c.h.b16 %v672
    %v1038 = vunpack.c.l.b16 %v673
    %v1039 = vunpack.c.h.b16 %v673
    %v1040 = vunpack.c.l.b16 %v674
    %v1041 = vunpack.c.h.b16 %v674
    %v1042 = vunpack.c.l.b16 %v675
    %v1043 = vunpack.c.h.b16 %v675
    %v1044 = vunpack.c.l.b16 %v676
    %v1045 = vunpack.c.h.b16 %v676
    %v1046 = vunpack.c.l.b16 %v677
    %v1047 = vunpack.c.h.b16 %v677
    %v1048 = vunpack.c.l.b16 %v678
    %v1049 = vunpack.c.h.b16 %v678
    %v1050 = vunpack.c.l.b16 %v679
    %v1051 = vunpack.c.h.b16 %v679
    %v1052 = vunpack.c.l.b16 %v680
    %v1053 = vunpack.c.h.b16 %v680
    %v1054 = vunpack.c.l.b16 %v681
    %v1055 = vunpack.c.h.b16 %v681
    %v1056 = vunpack.c.l.b16 %v682
    %v1057 = vunpack.c.h.b16 %v682
    %v1058 = vunpack.c.l.b16 %v683
    %v1059 = vunpack.c.h.b16 %v683
    %v1060 = vunpack.c.l.b16 %v684
    %v1061 = vunpack.c.h.b16 %v684
    %v1062 = vunpack.c.l.b16 %v685
    %v1063 = vunpack.c.h.b16 %v685
    %v1064 = vunpack.c.l.b16 %v686
    %v1065 = vunpack.c.h.b16 %v686
    %v1066 = vunpack.c.l.b16 %v687
    %v1067 = vunpack.c.h.b16 %v687
    %v1068 = vunpack.c.l.b16 %v688
    %v1069 = vunpack.c.h.b16 %v688
    %v1070 = vunpack.c.l.b16 %v689
    %v1071 = vunpack.c.h.b16 %v689
    %v1072 = vunpack.c.l.b16 %v690
    %v1073 = vunpack.c.h.b16 %v690
    %v1074 = vunpack.c.l.b16 %v691
    %v1075 = vunpack.c.h.b16 %v691
    %v1076 = vunpack.c.l.b16 %v692
    %v1077 = vunpack.c.h.b16 %v692
    %v1078 = vunpack.c.l.b16 %v693
    %v1079 = vunpack.c.h.b16 %v693
    %v1080 = vunpack.c.l.b16 %v694
    %v1081 = vunpack.c.h.b16 %v694
    %v1082 = vunpack.c.l.b16 %v695
    %v1083 = vunpack.c.h.b16 %v695
    %v1084 = vunpack.c.l.b16 %v696
    %v1085 = vunpack.c.h.b16 %v696
    %v1086 = vunpack.c.l.b16 %v697
    %v1087 = vunpack.c.h.b16 %v697
    %v1088 = vpack.c.b16 %v834, %v832
    %v1089 = vpack.c.b16 %v835, %v833
    %v1090 = vpack.c.b16 %v838, %v836
    %v1091 = vpack.c.b16 %v839, %v837
    %v1092 = vpack.c.b16 %v842, %v840
    %v1093 = vpack.c.b16 %v843, %v841
    %v1094 = vpack.c.b16 %v846, %v844
    %v1095 = vpack.c.b16 %v847, %v845
    %v1096 = vpack.c.b16 %v850, %v848
    %v1097 = vpack.c.b16 %v851, %v849
    %v1098 = vpack.c.b16 %v854, %v852
    %v1099 = vpack.c.b16 %v855, %v853
    %v1100 = vpack.c.b16 %v858, %v856
    %v1101 = vpack.c.b16 %v859, %v857
    %v1102 = vpack.c.b16 %v862, %v860
    %v1103 = vpack.c.b16 %v863, %v861
    %v1104 = vpack.c.b16 %v866, %v864
    %v1105 = vpack.c.b16 %v867, %v865
    %v1106 = vpack.c.b16 %v870, %v868
    %v1107 = vpack.c.b16 %v871, %v869
    %v1108 = vpack.c.b16 %v874, %v872
    %v1109 = vpack.c.b16 %v875, %v873
    %v1110 = vpack.c.b16 %v878, %v876
    %v1111 = vpack.c.b16 %v879, %v877
    %v1112 = vpack.c.b16 %v882, %v880
    %v1113 = vpack.c.b16 %v883, %v881
    %v1114 = vpack.c.b16 %v886, %v884
    %v1115 = vpack.c.b16 %v887, %v885
    %v1116 = vpack.c.b16 %v890, %v888
    %v1117 = vpack.c.b16 %v891, %v889
    %v1118 = vpack.c.b16 %v894, %v892
    %v1119 = vpack.c.b16 %v895, %v893
    %v1120 = vpack.c.b16 %v898, %v896
    %v1121 = vpack.c.b16 %v899, %v897
    %v1122 = vpack.c.b16 %v902, %v900
    %v1123 = vpack.c.b16 %v903, %v901
    %v1124 = vpack.c.b16 %v906, %v904
    %v1125 = vpack.c.b16 %v907, %v905
    %v1126 = vpack.c.b16 %v910, %v908
    %v1127 = vpack.c.b16 %v911, %v909
    %v1128 = vpack.c.b16 %v914, %v912
    %v1129 = vpack.c.b16 %v915, %v913
    %v1130 = vpack.c.b16 %v918, %v916
    %v1131 = vpack.c.b16 %v919, %v917
    %v1132 = vpack.c.b16 %v922, %v920
    %v1133 = vpack.c.b16 %v923, %v921
    %v1134 = vpack.c.b16 %v926, %v924
    %v1135 = vpack.c.b16 %v927, %v925
    %v1136 = vpack.c.b16 %v930, %v928
    %v1137 = vpack.c.b16 %v931, %v929
    %v1138 = vpack.c.b16 %v934, %v932
    %v1139 = vpack.c.b16 %v935, %v933
    %v1140 = vpack.c.b16 %v938, %v936
    %v1141 = vpack.c.b16 %v939, %v937
    %v1142 = vpack.c.b16 %v942, %v940
    %v1143 = vpack.c.b16 %v943, %v941
    %v1144 = vpack.c.b16 %v946, %v944
    %v1145 = vpack.c.b16 %v947, %v945
    %v1146 = vpack.c.b16 %v950, %v948
    %v1147 = vpack.c.b16 %v951, %v949
    %v1148 = vpack.c.b16 %v954, %v952
    %v1149 = vpack.c.b16 %v955, %v953
    %v1150 = vpack.c.b16 %v958, %v956
    %v1151 = vpack.c.b16 %v959, %v957
    %v1152 = vpack.c.b16 %v962, %v960
    %v1153 = vpack.c.b16 %v963, %v961
    %v1154 = vpack.c.b16 %v966, %v964
    %v1155 = vpack.c.b16 %v967, %v965
    %v1156 = vpack.c.b16 %v970, %v968
    %v1157 = vpack.c.b16 %v971, %v969
    %v1158 = vpack.c.b16 %v974, %v972
    %v1159 = vpack.c.b16 %v975, %v973
    %v1160 = vpack.c.b16 %v978, %v976
    %v1161 = vpack.c.b16 %v979, %v977
    %v1162 = vpack.c.b16 %v982, %v980
    %v1163 = vpack.c.b16 %v983, %v981
    %v1164 = vpack.c.b16 %v986, %v984
    %v1165 = vpack.c.b16 %v987, %v985
    %v1166 = vpack.c.b16 %v990, %v988
    %v1167 = vpack.c.b16 %v991, %v989
    %v1168 = vpack.c.b16 %v994, %v992
    %v1169 = vpack.c.b16 %v995, %v993
    %v1170 = vpack.c.b16 %v998, %v996
    %v1171 = vpack.c.b16 %v999, %v997
    %v1172 = vpack.c.b16 %v1002, %v1000
    %v1173 = vpack.c.b16 %v1003, %v1001
    %v1174 = vpack.c.b16 %v1006, %v1004
    %v1175 = vpack.c.b16 %v1007, %v1005
    %v1176 = vpack.c.b16 %v1010, %v1008
    %v1177 = vpack.c.b16 %v1011, %v1009
    %v1178 = vpack.c.b16 %v1014, %v1012
    %v1179 = vpack.c.b16 %v1015, %v1013
    %v1180 = vpack.c.b16 %v1018, %v1016
    %v1181 = vpack.c.b16 %v1019, %v1017
    %v1182 = vpack.c.b16 %v1022, %v1020
    %v1183 = vpack.c.b16 %v1023, %v1021
    %v1184 = vpack.c.b16 %v1026, %v1024
    %v1185 = vpack.c.b16 %v1027, %v1025
    %v1186 = vpack.c.b16 %v1030, %v1028
    %v1187 = vpack.c.b16 %v1031, %v1029
    %v1188 = vpack.c.b16 %v1034, %v1032
    %v1189 = vpack.c.b16 %v1035, %v1033
    %v1190 = vpack.c.b16 %v1038, %v1036
    %v1191 = vpack.c.b16 %v1039, %v1037
    %v1192 = vpack.c.b16 %v1042, %v1040
    %v1193 = vpack.c.b16 %v1043, %v1041
    %v1194 = vpack.c.b16 %v1046, %v1044
    %v1195 = vpack.c.b16 %v1047, %v1045
    %v1196 = vpack.c.b16 %v1050, %v1048
    %v1197 = vpack.c.b16 %v1051, %v1049
    %v1198 = vpack.c.b16 %v1054, %v1052
    %v1199 = vpack.c.b16 %v1055, %v1053
    %v1200 = vpack.c.b16 %v1058, %v1056
    %v1201 = vpack.c.b16 %v1059, %v1057
    %v1202 = vpack.c.b16 %v1062, %v1060
    %v1203 = vpack.c.b16 %v1063, %v1061
    %v1204 = vpack.c.b16 %v1066, %v1064
    %v1205 = vpack.c.b16 %v1067, %v1065
    %v1206 = vpack.c.b16 %v1070, %v1068
    %v1207 = vpack.c.b16 %v1071, %v1069
    %v1208 = vpack.c.b16 %v1074, %v1072
    %v1209 = vpack.c.b16 %v1075, %v1073
    %v1210 = vpack.c.b16 %v1078, %v1076
    %v1211 = vpack.c.b16 %v1079, %v1077
    %v1212 = vpack.c.b16 %v1082, %v1080
    %v1213 = vpack.c.b16 %v1083, %v1081
    %v1214 = vpack.c.b16 %v1086, %v1084
    %v1215 = vpack.c.b16 %v1087, %v1085
    %1344 = vmatpush.bf16.msra.mxu0 %v1102
    %1345 = vmatpush.bf16.msra.mxu0 %v1100
    %1346 = vmatpush.bf16.msra.mxu0 %v1098
    %1347 = vmatpush.bf16.msra.mxu0 %v1096
    %1348 = vmatpush.bf16.msra.mxu0 %v1094
    %1349 = vmatpush.bf16.msra.mxu0 %v1092
    %1350 = vmatpush.bf16.msra.mxu0 %v1090
    %1351 = vmatpush.bf16.msra.mxu0 %v1088
    %1352 = vmatmul.bf16.gmra.mxu0 %v562
    %v1353 = vpop.f32.mrf.mxu0
    %v1354 = vadd.f32 %v700, %v1353
    %v1355 = vpop.f32.mrf.mxu0
    %1356 = vdwg.mxu0
    %1357 = vmatpush.bf16.msra.mxu0 %v1118
    %1358 = vmatpush.bf16.msra.mxu0 %v1116
    %1359 = vmatpush.bf16.msra.mxu0 %v1114
    %1360 = vmatpush.bf16.msra.mxu0 %v1112
    %1361 = vmatpush.bf16.msra.mxu0 %v1110
    %1362 = vmatpush.bf16.msra.mxu0 %v1108
    %1363 = vmatpush.bf16.msra.mxu0 %v1106
    %1364 = vmatpush.bf16.msra.mxu0 %v1104
    %1365 = vmatmul.bf16.gmra.mxu0 %v563
    %v1366 = vpop.f32.mrf.mxu0
    %v1367 = vadd.f32 %v1354, %v1366
    %v1368 = vpop.f32.mrf.mxu0
    %1369 = vdwg.mxu0
    %1370 = vmatpush.bf16.msra.mxu0 %v1134
    %1371 = vmatpush.bf16.msra.mxu0 %v1132
    %1372 = vmatpush.bf16.msra.mxu0 %v1130
    %1373 = vmatpush.bf16.msra.mxu0 %v1128
    %1374 = vmatpush.bf16.msra.mxu0 %v1126
    %1375 = vmatpush.bf16.msra.mxu0 %v1124
    %1376 = vmatpush.bf16.msra.mxu0 %v1122
    %1377 = vmatpush.bf16.msra.mxu0 %v1120
    %1378 = vmatmul.bf16.gmra.mxu0 %v564
    %v1379 = vpop.f32.mrf.mxu0
    %v1380 = vadd.f32 %v1367, %v1379
    %v1381 = vpop.f32.mrf.mxu0
    %1382 = vdwg.mxu0
    %1383 = vmatpush.bf16.msra.mxu0 %v1150
    %1384 = vmatpush.bf16.msra.mxu0 %v1148
    %1385 = vmatpush.bf16.msra.mxu0 %v1146
    %1386 = vmatpush.bf16.msra.mxu0 %v1144
    %1387 = vmatpush.bf16.msra.mxu0 %v1142
    %1388 = vmatpush.bf16.msra.mxu0 %v1140
    %1389 = vmatpush.bf16.msra.mxu0 %v1138
    %1390 = vmatpush.bf16.msra.mxu0 %v1136
    %1391 = vmatmul.bf16.gmra.mxu0 %v565
    %v1392 = vpop.f32.mrf.mxu0
    %v1393 = vadd.f32 %v1380, %v1392
    %v1394 = vpop.f32.mrf.mxu0
    %1395 = vdwg.mxu0
    %1396 = vmatpush.bf16.msra.mxu0 %v1166
    %1397 = vmatpush.bf16.msra.mxu0 %v1164
    %1398 = vmatpush.bf16.msra.mxu0 %v1162
    %1399 = vmatpush.bf16.msra.mxu0 %v1160
    %1400 = vmatpush.bf16.msra.mxu0 %v1158
    %1401 = vmatpush.bf16.msra.mxu0 %v1156
    %1402 = vmatpush.bf16.msra.mxu0 %v1154
    %1403 = vmatpush.bf16.msra.mxu0 %v1152
    %1404 = vmatmul.bf16.gmra.mxu0 %v566
    %v1405 = vpop.f32.mrf.mxu0
    %v1406 = vadd.f32 %v1393, %v1405
    %v1407 = vpop.f32.mrf.mxu0
    %1408 = vdwg.mxu0
    %1409 = vmatpush.bf16.msra.mxu0 %v1182
    %1410 = vmatpush.bf16.msra.mxu0 %v1180
    %1411 = vmatpush.bf16.msra.mxu0 %v1178
    %1412 = vmatpush.bf16.msra.mxu0 %v1176
    %1413 = vmatpush.bf16.msra.mxu0 %v1174
    %1414 = vmatpush.bf16.msra.mxu0 %v1172
    %1415 = vmatpush.bf16.msra.mxu0 %v1170
    %1416 = vmatpush.bf16.msra.mxu0 %v1168
    %1417 = vmatmul.bf16.gmra.mxu0 %v567
    %v1418 = vpop.f32.mrf.mxu0
    %v1419 = vadd.f32 %v1406, %v1418
    %v1420 = vpop.f32.mrf.mxu0
    %1421 = vdwg.mxu0
    %1422 = vmatpush.bf16.msra.mxu0 %v1198
    %1423 = vmatpush.bf16.msra.mxu0 %v1196
    %1424 = vmatpush.bf16.msra.mxu0 %v1194
    %1425 = vmatpush.bf16.msra.mxu0 %v1192
    %1426 = vmatpush.bf16.msra.mxu0 %v1190
    %1427 = vmatpush.bf16.msra.mxu0 %v1188
    %1428 = vmatpush.bf16.msra.mxu0 %v1186
    %1429 = vmatpush.bf16.msra.mxu0 %v1184
    %1430 = vmatmul.bf16.gmra.mxu0 %v568
    %v1431 = vpop.f32.mrf.mxu0
    %v1432 = vadd.f32 %v1419, %v1431
    %v1433 = vpop.f32.mrf.mxu0
    %1434 = vdwg.mxu0
    %1435 = vmatpush.bf16.msra.mxu0 %v1214
    %1436 = vmatpush.bf16.msra.mxu0 %v1212
    %1437 = vmatpush.bf16.msra.mxu0 %v1210
    %1438 = vmatpush.bf16.msra.mxu0 %v1208
    %1439 = vmatpush.bf16.msra.mxu0 %v1206
    %1440 = vmatpush.bf16.msra.mxu0 %v1204
    %1441 = vmatpush.bf16.msra.mxu0 %v1202
    %1442 = vmatpush.bf16.msra.mxu0 %v1200
    %1443 = vmatmul.bf16.gmra.mxu0 %v569
    %v1444 = vpop.f32.mrf.mxu0
    %v1445 = vadd.f32 %v1432, %v1444
    %v1446 = vpop.f32.mrf.mxu0
    %1447 = vdwg.mxu0
    %1448 = vmatpush.bf16.msra.mxu0 %v1103
    %1449 = vmatpush.bf16.msra.mxu0 %v1101
    %1450 = vmatpush.bf16.msra.mxu0 %v1099
    %1451 = vmatpush.bf16.msra.mxu0 %v1097
    %1452 = vmatpush.bf16.msra.mxu0 %v1095
    %1453 = vmatpush.bf16.msra.mxu0 %v1093
    %1454 = vmatpush.bf16.msra.mxu0 %v1091
    %1455 = vmatpush.bf16.msra.mxu0 %v1089
    %1456 = vmatmul.bf16.gmra.mxu0 %v562
    %v1457 = vpop.f32.mrf.mxu0
    %v1458 = vadd.f32 %v701, %v1457
    %v1459 = vpop.f32.mrf.mxu0
    %1460 = vdwg.mxu0
    %1461 = vmatpush.bf16.msra.mxu0 %v1119
    %1462 = vmatpush.bf16.msra.mxu0 %v1117
    %1463 = vmatpush.bf16.msra.mxu0 %v1115
    %1464 = vmatpush.bf16.msra.mxu0 %v1113
    %1465 = vmatpush.bf16.msra.mxu0 %v1111
    %1466 = vmatpush.bf16.msra.mxu0 %v1109
    %1467 = vmatpush.bf16.msra.mxu0 %v1107
    %1468 = vmatpush.bf16.msra.mxu0 %v1105
    %1469 = vmatmul.bf16.gmra.mxu0 %v563
    %v1470 = vpop.f32.mrf.mxu0
    %v1471 = vadd.f32 %v1458, %v1470
    %v1472 = vpop.f32.mrf.mxu0
    %1473 = vdwg.mxu0
    %1474 = vmatpush.bf16.msra.mxu0 %v1135
    %1475 = vmatpush.bf16.msra.mxu0 %v1133
    %1476 = vmatpush.bf16.msra.mxu0 %v1131
    %1477 = vmatpush.bf16.msra.mxu0 %v1129
    %1478 = vmatpush.bf16.msra.mxu0 %v1127
    %1479 = vmatpush.bf16.msra.mxu0 %v1125
    %1480 = vmatpush.bf16.msra.mxu0 %v1123
    %1481 = vmatpush.bf16.msra.mxu0 %v1121
    %1482 = vmatmul.bf16.gmra.mxu0 %v564
    %v1483 = vpop.f32.mrf.mxu0
    %v1484 = vadd.f32 %v1471, %v1483
    %v1485 = vpop.f32.mrf.mxu0
    %1486 = vdwg.mxu0
    %1487 = vmatpush.bf16.msra.mxu0 %v1151
    %1488 = vmatpush.bf16.msra.mxu0 %v1149
    %1489 = vmatpush.bf16.msra.mxu0 %v1147
    %1490 = vmatpush.bf16.msra.mxu0 %v1145
    %1491 = vmatpush.bf16.msra.mxu0 %v1143
    %1492 = vmatpush.bf16.msra.mxu0 %v1141
    %1493 = vmatpush.bf16.msra.mxu0 %v1139
    %1494 = vmatpush.bf16.msra.mxu0 %v1137
    %1495 = vmatmul.bf16.gmra.mxu0 %v565
    %v1496 = vpop.f32.mrf.mxu0
    %v1497 = vadd.f32 %v1484, %v1496
    %v1498 = vpop.f32.mrf.mxu0
    %1499 = vdwg.mxu0
    %1500 = vmatpush.bf16.msra.mxu0 %v1167
    %1501 = vmatpush.bf16.msra.mxu0 %v1165
    %1502 = vmatpush.bf16.msra.mxu0 %v1163
    %1503 = vmatpush.bf16.msra.mxu0 %v1161
    %1504 = vmatpush.bf16.msra.mxu0 %v1159
    %1505 = vmatpush.bf16.msra.mxu0 %v1157
    %1506 = vmatpush.bf16.msra.mxu0 %v1155
    %1507 = vmatpush.bf16.msra.mxu0 %v1153
    %1508 = vmatmul.bf16.gmra.mxu0 %v566
    %v1509 = vpop.f32.mrf.mxu0
    %v1510 = vadd.f32 %v1497, %v1509
    %v1511 = vpop.f32.mrf.mxu0
    %1512 = vdwg.mxu0
    %1513 = vmatpush.bf16.msra.mxu0 %v1183
    %1514 = vmatpush.bf16.msra.mxu0 %v1181
    %1515 = vmatpush.bf16.msra.mxu0 %v1179
    %1516 = vmatpush.bf16.msra.mxu0 %v1177
    %1517 = vmatpush.bf16.msra.mxu0 %v1175
    %1518 = vmatpush.bf16.msra.mxu0 %v1173
    %1519 = vmatpush.bf16.msra.mxu0 %v1171
    %1520 = vmatpush.bf16.msra.mxu0 %v1169
    %1521 = vmatmul.bf16.gmra.mxu0 %v567
    %v1522 = vpop.f32.mrf.mxu0
    %v1523 = vadd.f32 %v1510, %v1522
    %v1524 = vpop.f32.mrf.mxu0
    %1525 = vdwg.mxu0
    %1526 = vmatpush.bf16.msra.mxu0 %v1199
    %1527 = vmatpush.bf16.msra.mxu0 %v1197
    %1528 = vmatpush.bf16.msra.mxu0 %v1195
    %1529 = vmatpush.bf16.msra.mxu0 %v1193
    %1530 = vmatpush.bf16.msra.mxu0 %v1191
    %1531 = vmatpush.bf16.msra.mxu0 %v1189
    %1532 = vmatpush.bf16.msra.mxu0 %v1187
    %1533 = vmatpush.bf16.msra.mxu0 %v1185
    %1534 = vmatmul.bf16.gmra.mxu0 %v568
    %v1535 = vpop.f32.mrf.mxu0
    %v1536 = vadd.f32 %v1523, %v1535
    %v1537 = vpop.f32.mrf.mxu0
    %1538 = vdwg.mxu0
    %1539 = vmatpush.bf16.msra.mxu0 %v1215
    %1540 = vmatpush.bf16.msra.mxu0 %v1213
    %1541 = vmatpush.bf16.msra.mxu0 %v1211
    %1542 = vmatpush.bf16.msra.mxu0 %v1209
    %1543 = vmatpush.bf16.msra.mxu0 %v1207
    %1544 = vmatpush.bf16.msra.mxu0 %v1205
    %1545 = vmatpush.bf16.msra.mxu0 %v1203
    %1546 = vmatpush.bf16.msra.mxu0 %v1201
    %1547 = vmatmul.bf16.gmra.mxu0 %v569
    %v1548 = vpop.f32.mrf.mxu0
    %v1549 = vadd.f32 %v1536, %v1548
    %v1550 = vpop.f32.mrf.mxu0
    %1551 = vdwg.mxu0
    %v1552 = vmax.f32 %v1445, 0.0
    %v1553 = vmax.f32 %v1549, 0.0
    %v1554 = vpack.c.bf16 %v1552, %v1552
    %v1555 = vpack.c.bf16 %v1553, %v1553
    %v1556 = vld [vmem:[%s5] sm:$0xf]
    %v1557 = vld [vmem:[%s5 + $0x4] sm:$0xf]
    %v1558 = vld [vmem:[%s5 + $0x8] sm:$0xf]
    %v1559 = vld [vmem:[%s5 + $0xc] sm:$0xf]
    %v1560 = vld [vmem:[%s5 + $0x10] sm:$0xf]
    %v1561 = vld [vmem:[%s5 + $0x14] sm:$0xf]
    %v1562 = vld [vmem:[%s5 + $0x18] sm:$0xf]
    %v1563 = vld [vmem:[%s5 + $0x1c] sm:$0xf]
    %v1564 = vld [vmem:[%s5 + $0x20] sm:$0xf]
    %v1565 = vld [vmem:[%s5 + $0x24] sm:$0xf]
    %v1566 = vld [vmem:[%s5 + $0x28] sm:$0xf]
    %v1567 = vld [vmem:[%s5 + $0x2c] sm:$0xf]
    %v1568 = vld [vmem:[%s5 + $0x30] sm:$0xf]
    %v1569 = vld [vmem:[%s5 + $0x34] sm:$0xf]
    %v1570 = vld [vmem:[%s5 + $0x38] sm:$0xf]
    %v1571 = vld [vmem:[%s5 + $0x3c] sm:$0xf]
    %v1572 = vld [vmem:[%s5 + $0x40] sm:$0xf]
    %v1573 = vld [vmem:[%s5 + $0x44] sm:$0xf]
    %v1574 = vld [vmem:[%s5 + $0x48] sm:$0xf]
    %v1575 = vld [vmem:[%s5 + $0x4c] sm:$0xf]
    %v1576 = vld [vmem:[%s5 + $0x50] sm:$0xf]
    %v1577 = vld [vmem:[%s5 + $0x54] sm:$0xf]
    %v1578 = vld [vmem:[%s5 + $0x58] sm:$0xf]
    %v1579 = vld [vmem:[%s5 + $0x5c] sm:$0xf]
    %v1580 = vld [vmem:[%s5 + $0x60] sm:$0xf]
    %v1581 = vld [vmem:[%s5 + $0x64] sm:$0xf]
    %v1582 = vld [vmem:[%s5 + $0x68] sm:$0xf]
    %v1583 = vld [vmem:[%s5 + $0x6c] sm:$0xf]
    %v1584 = vld [vmem:[%s5 + $0x70] sm:$0xf]
    %v1585 = vld [vmem:[%s5 + $0x74] sm:$0xf]
    %v1586 = vld [vmem:[%s5 + $0x78] sm:$0xf]
    %v1587 = vld [vmem:[%s5 + $0x7c] sm:$0xf]
    %v1588 = vld [vmem:[%s6] sm:$0x1]
    %v1590 = vperm.slane %v1588, 0
    %v1624 = vunpack.c.l.b16 %v1556
    %v1625 = vunpack.c.l.b16 %v1557
    %v1626 = vunpack.c.l.b16 %v1558
    %v1627 = vunpack.c.l.b16 %v1559
    %v1628 = vunpack.c.l.b16 %v1560
    %v1629 = vunpack.c.l.b16 %v1561
    %v1630 = vunpack.c.l.b16 %v1562
    %v1631 = vunpack.c.l.b16 %v1563
    %v1632 = vunpack.c.l.b16 %v1564
    %v1633 = vunpack.c.l.b16 %v1565
    %v1634 = vunpack.c.l.b16 %v1566
    %v1635 = vunpack.c.l.b16 %v1567
    %v1636 = vunpack.c.l.b16 %v1568
    %v1637 = vunpack.c.l.b16 %v1569
    %v1638 = vunpack.c.l.b16 %v1570
    %v1639 = vunpack.c.l.b16 %v1571
    %v1640 = vunpack.c.l.b16 %v1572
    %v1641 = vunpack.c.l.b16 %v1573
    %v1642 = vunpack.c.l.b16 %v1574
    %v1643 = vunpack.c.l.b16 %v1575
    %v1644 = vunpack.c.l.b16 %v1576
    %v1645 = vunpack.c.l.b16 %v1577
    %v1646 = vunpack.c.l.b16 %v1578
    %v1647 = vunpack.c.l.b16 %v1579
    %v1648 = vunpack.c.l.b16 %v1580
    %v1649 = vunpack.c.l.b16 %v1581
    %v1650 = vunpack.c.l.b16 %v1582
    %v1651 = vunpack.c.l.b16 %v1583
    %v1652 = vunpack.c.l.b16 %v1584
    %v1653 = vunpack.c.l.b16 %v1585
    %v1654 = vunpack.c.l.b16 %v1586
    %v1655 = vunpack.c.l.b16 %v1587
    %v1656 = vpack.c.b16 %v1625, %v1624
    %v1657 = vpack.c.b16 %v1627, %v1626
    %v1658 = vpack.c.b16 %v1629, %v1628
    %v1659 = vpack.c.b16 %v1631, %v1630
    %v1660 = vpack.c.b16 %v1633, %v1632
    %v1661 = vpack.c.b16 %v1635, %v1634
    %v1662 = vpack.c.b16 %v1637, %v1636
    %v1663 = vpack.c.b16 %v1639, %v1638
    %v1664 = vpack.c.b16 %v1641, %v1640
    %v1665 = vpack.c.b16 %v1643, %v1642
    %v1666 = vpack.c.b16 %v1645, %v1644
    %v1667 = vpack.c.b16 %v1647, %v1646
    %v1668 = vpack.c.b16 %v1649, %v1648
    %v1669 = vpack.c.b16 %v1651, %v1650
    %v1670 = vpack.c.b16 %v1653, %v1652
    %v1671 = vpack.c.b16 %v1655, %v1654
    %1688 = vmatpush.bf16.msra.mxu0 %v1663
    %1689 = vmatpush.bf16.msra.mxu0 %v1662
    %1690 = vmatpush.bf16.msra.mxu0 %v1661
    %1691 = vmatpush.bf16.msra.mxu0 %v1660
    %1692 = vmatpush.bf16.msra.mxu0 %v1659
    %1693 = vmatpush.bf16.msra.mxu0 %v1658
    %1694 = vmatpush.bf16.msra.mxu0 %v1657
    %1695 = vmatpush.bf16.msra.mxu0 %v1656
    %1696 = vmatmul.bf16.gmra.mxu0 %v1554
    %v1697 = vpop.f32.mrf.mxu0
    %v1698 = vadd.f32 %v1590, %v1697
    %v1699 = vpop.f32.mrf.mxu0
    %1700 = vdwg.mxu0
    %1701 = vmatpush.bf16.msra.mxu0 %v1671
    %1702 = vmatpush.bf16.msra.mxu0 %v1670
    %1703 = vmatpush.bf16.msra.mxu0 %v1669
    %1704 = vmatpush.bf16.msra.mxu0 %v1668
    %1705 = vmatpush.bf16.msra.mxu0 %v1667
    %1706 = vmatpush.bf16.msra.mxu0 %v1666
    %1707 = vmatpush.bf16.msra.mxu0 %v1665
    %1708 = vmatpush.bf16.msra.mxu0 %v1664
    %1709 = vmatmul.bf16.gmra.mxu0 %v1555
    %v1710 = vpop.f32.mrf.mxu0
    %v1711 = vadd.f32 %v1698, %v1710
    %v1712 = vpop.f32.mrf.mxu0
    %1713 = vdwg.mxu0
    %vm1714 = vcmask 58368
    %1715 = vst.msk [vmem:[#allocation2] sm:$0x3] %vm1714, %v1711
    // Predicated region
    $region30: #{rcnn_forward.9} parent=1 // pred_check
      _
    $region31: #{rcnn_forward.9} parent=1 // pred_check_branch
      %1717 = sbr.rel (0) target = $region33
    $region32: #{rcnn_forward.9} parent=1 // pred_region
      %1719 = vsyncadd [#allocation3], 0
      %s1721 = sshll.u32 [#allocation2], 4
      %s1722 = int_to_ptr.vmem [resolvable:$true] %s1721
      %s1723 = sshll.u32 %s7, 4
      %s1724 = int_to_ptr.hbm [resolvable:$true] %s1723
      %1726 = dma.vmem_to_hbm [thread:$0]  %s1722, 32, %s1724, [#allocation3]
    $region33: #{rcnn_forward.9} parent=1 // pred_fallthru
      _
    // Predicated region
    $region34: #{rcnn_forward.9} parent=1 // pred_check
      _
    $region35: #{rcnn_forward.9} parent=1 // pred_check_branch
      %1728 = sbr.rel (0) target = $region37
    $region36: #{rcnn_forward.9} parent=1 // pred_region
      %1730 = dma.done [#allocation3], 32
    $region37: #{rcnn_forward.9} parent=1 // pred_fallthru
      _
    %1731 = vsyncpa [#allocation3], 1

</llo_original>
